<compile_context>
chip_gen: v7x
topology: tpu7x:2x2x1
jax: 0.10.0
libtpu: 0.0.40
codegen_flags: <defaults>
</compile_context>

<pallas_src>
import jax
import jax.numpy as jnp
from jax.experimental import pallas as pl
from jax.experimental.pallas import tpu as pltpu

HIDDEN = 10
INPUT_SIZE = 1
NUM_LAYERS = 2
OUTPUT_SIZE = 1

LB = 128            # one 128-lane block holds one gate for BOTH directions
DOFF = 16           # lane offset of the backward direction inside a block
GW = 4 * LB         # i|f|g|o blocks -> 512-lane gate row
H = HIDDEN


# ----------------------------------------------------------------------------
# Fused Pallas kernel
# ----------------------------------------------------------------------------
def _fused_lstm_kernel(x_ref, xrev_ref, wih0f_ref, wih0b_ref, b0_ref, whh0_ref,
                       w1_ref, b1_ref, whh1_ref, wfc_ref, bfc_ref,
                       out_ref, pre_sc, hcat_sc):
    """Entire LSTMPredictor forward.

    x_ref   : (T, B, 1)     time-major input
    xrev_ref: (T, B, 1)     time-reversed input (for the backward direction)
    wih0f/b : (1, GW)       layer-0 input->gate rows (fwd / bwd lane groups), f32
    b0, b1  : (1, GW)       combined biases (b_ih + b_hh, both directions), f32
    whh0/1  : (LB, GW)      recurrent weights, bf16
    w1      : (2*LB, GW)    layer-1 input weights over hcat rows, bf16
    wfc     : (2*LB, LB)    fc weights (only column 0 used), bf16
    bfc     : (1, LB)       fc bias (column 0)
    out_ref : (B, LB)       padded output; caller slices [:, :OUTPUT_SIZE]
    pre_sc  : (T, B, GW)    VMEM scratch: per-step gate input projections
    hcat_sc : (T, B, 2*LB)  VMEM scratch: layer-0 output in both time orders

    Lane layout: gate g's fwd units at lanes [g*LB, g*LB+H), bwd units at
    [g*LB+DOFF, g*LB+DOFF+H).  Padded lanes stay exactly zero (zero weight /
    bias padding, zero initial state, g-gate pad = tanh(0) = 0).
    """
    T, B, _ = x_ref.shape

    def run_layer(whh_ref, write_seq):
        # State layout: fwd at lanes 0..H-1, bwd at lanes DOFF..DOFF+H-1.
        # At step t the fwd direction is at time t, the bwd direction at T-1-t.
        h = jnp.zeros((B, LB), jnp.float32)
        c = jnp.zeros((B, LB), jnp.float32)
        h_first = None
        for t in range(T):                 # static unroll; only h, c carry over
            rec = jnp.dot(h.astype(jnp.bfloat16), whh_ref[...],
                          preferred_element_type=jnp.float32)        # (B, GW)
            pre = pre_sc[t] + rec
            i_a = jax.nn.sigmoid(pre[:, 0 * LB:1 * LB])
            f_a = jax.nn.sigmoid(pre[:, 1 * LB:2 * LB])
            g_a = jnp.tanh(pre[:, 2 * LB:3 * LB])
            o_a = jax.nn.sigmoid(pre[:, 3 * LB:4 * LB])
            c = f_a * c + i_a * g_a
            h = o_a * jnp.tanh(c)
            if write_seq:
                # full-vreg, 128-aligned stores (no masking):
                hcat_sc[t, :, 0:LB] = h                # h(step t) at position t
                hcat_sc[T - 1 - t, :, LB:2 * LB] = h   # h(step t) at position T-1-t
            if t == 0:
                h_first = h                 # [y_fwd(0) | y_bwd(T-1)]
        return h_first, h                   # h_last = [y_fwd(T-1) | y_bwd(0)]

    # ---- layer 0 input projection, all timesteps & both directions at once.
    # Backward-direction gate lanes are fed the time-reversed input so that
    # pre_sc[t] already holds [fwd gates for time t | bwd gates for time T-1-t].
    pre_sc[...] = (x_ref[...] * wih0f_ref[...]
                   + xrev_ref[...] * wih0b_ref[...]
                   + b0_ref[...])
    run_layer(whh0_ref, write_seq=True)

    # ---- layer 1 input projection: one batched bf16 MXU matmul for all T.
    # hcat row t = [h(step t) | h(step T-1-t)]; w1 routes each feature group to
    # the correct gate lanes so pre_sc[t] again has fwd@t / bwd@(T-1-t).
    z = hcat_sc[...].reshape(T * B, 2 * LB).astype(jnp.bfloat16)
    pre1 = jnp.dot(z, w1_ref[...], preferred_element_type=jnp.float32) + b1_ref[...]
    pre_sc[...] = pre1.reshape(T, B, GW)
    h_first, h_last = run_layer(whh1_ref, write_seq=False)

    # ---- fc(out[:, -1, :]): fwd hidden from the last step, bwd hidden from the
    # first step (both correspond to original time position T-1).
    fc_in = jnp.concatenate([h_last, h_first], axis=-1).astype(jnp.bfloat16)
    out_ref[...] = (jnp.dot(fc_in, wfc_ref[...], preferred_element_type=jnp.float32)
                    + bfc_ref[...])


# ----------------------------------------------------------------------------
# Weight packing (PyTorch layout -> compact lane-block kernel layout)
# ----------------------------------------------------------------------------
def _scatter_gates(w_t, lane_off):
    """(rows, 4H) -> (rows, GW): gate g's H cols land at lanes [g*LB+lane_off, +H)."""
    out = jnp.zeros((w_t.shape[0], GW), jnp.float32)
    for g in range(4):
        out = out.at[:, g * LB + lane_off:g * LB + lane_off + H].set(
            w_t[:, g * H:(g + 1) * H])
    return out


def pack_params(raw):
    (wih0_f, whh0_f, bih0_f, bhh0_f), (wih0_b, whh0_b, bih0_b, bhh0_b) = raw["lstm"][0]
    (wih1_f, whh1_f, bih1_f, bhh1_f), (wih1_b, whh1_b, bih1_b, bhh1_b) = raw["lstm"][1]

    # layer-0 input rows (input_size == 1) and biases
    wih0f = _scatter_gates(wih0_f.T, 0)                                  # (1, GW)
    wih0b = _scatter_gates(wih0_b.T, DOFF)                               # (1, GW)
    b0 = (_scatter_gates((bih0_f + bhh0_f)[None, :], 0)
          + _scatter_gates((bih0_b + bhh0_b)[None, :], DOFF))            # (1, GW)

    def rec_weights(whh_f, whh_b):
        m = jnp.zeros((LB, GW), jnp.float32)
        m = m.at[0:H].set(_scatter_gates(whh_f.T, 0))                    # h_f rows
        m = m.at[DOFF:DOFF + H].set(_scatter_gates(whh_b.T, DOFF))       # h_b rows
        return m.astype(jnp.bfloat16)

    whh0 = rec_weights(whh0_f, whh0_b)
    whh1 = rec_weights(whh1_f, whh1_b)

    # layer-1 input weights over hcat rows:
    #   rows   0.. 9 : y_fwd(t)      -> fwd gates     (wih1_fwd[:, :H])
    #   rows  16..25 : y_bwd(T-1-t)  -> bwd gates     (wih1_bwd[:, H:])
    #   rows 128..137: y_fwd(T-1-t)  -> bwd gates     (wih1_bwd[:, :H])
    #   rows 144..153: y_bwd(t)      -> fwd gates     (wih1_fwd[:, H:])
    w1 = jnp.zeros((2 * LB, GW), jnp.float32)
    w1 = w1.at[0:H].set(_scatter_gates(wih1_f[:, 0:H].T, 0))
    w1 = w1.at[DOFF:DOFF + H].set(_scatter_gates(wih1_b[:, H:2 * H].T, DOFF))
    w1 = w1.at[LB:LB + H].set(_scatter_gates(wih1_b[:, 0:H].T, DOFF))
    w1 = w1.at[LB + DOFF:LB + DOFF + H].set(_scatter_gates(wih1_f[:, H:2 * H].T, 0))
    w1 = w1.astype(jnp.bfloat16)

    b1 = (_scatter_gates((bih1_f + bhh1_f)[None, :], 0)
          + _scatter_gates((bih1_b + bhh1_b)[None, :], DOFF))            # (1, GW)

    # fc over concat([h_last, h_first]):
    #   rows 0..9           <- y_fwd(T-1)   (from h_last)
    #   rows 128+16..128+25 <- y_bwd(T-1)   (from h_first)
    w_fc, b_fc = raw["fc"]                                               # (O, 2H), (O,)
    wfc = jnp.zeros((2 * LB, LB), jnp.float32)
    wfc = wfc.at[0:H, 0:OUTPUT_SIZE].set(w_fc[:, 0:H].T)
    wfc = wfc.at[LB + DOFF:LB + DOFF + H, 0:OUTPUT_SIZE].set(w_fc[:, H:2 * H].T)
    wfc = wfc.astype(jnp.bfloat16)
    bfc = jnp.zeros((1, LB), jnp.float32).at[0, 0:OUTPUT_SIZE].set(b_fc)

    return (wih0f, wih0b, b0, whh0, w1, b1, whh1, wfc, bfc)


def init_raw_params(key):
    """PyTorch default init: uniform(-k, k), k = 1/sqrt(hidden_size)."""
    k = 1.0 / jnp.sqrt(jnp.float32(HIDDEN))
    keys = jax.random.split(key, NUM_LAYERS * 2 * 4 + 2)
    ki = 0
    raw = {"lstm": [], "fc": None}
    for layer in range(NUM_LAYERS):
        in_dim = INPUT_SIZE if layer == 0 else 2 * HIDDEN
        dirs = []
        for _d in range(2):
            w_ih = jax.random.uniform(keys[ki], (4 * HIDDEN, in_dim), jnp.float32, -k, k); ki += 1
            w_hh = jax.random.uniform(keys[ki], (4 * HIDDEN, HIDDEN), jnp.float32, -k, k); ki += 1
            b_ih = jax.random.uniform(keys[ki], (4 * HIDDEN,), jnp.float32, -k, k); ki += 1
            b_hh = jax.random.uniform(keys[ki], (4 * HIDDEN,), jnp.float32, -k, k); ki += 1
            dirs.append((w_ih, w_hh, b_ih, b_hh))
        raw["lstm"].append(tuple(dirs))
    kf = 1.0 / jnp.sqrt(jnp.float32(2 * HIDDEN))
    w_fc = jax.random.uniform(keys[ki], (OUTPUT_SIZE, 2 * HIDDEN), jnp.float32, -kf, kf); ki += 1
    b_fc = jax.random.uniform(keys[ki], (OUTPUT_SIZE,), jnp.float32, -kf, kf); ki += 1
    raw["fc"] = (w_fc, b_fc)
    return raw


# ----------------------------------------------------------------------------
# Wrapper (single pallas_call for the whole forward)
# ----------------------------------------------------------------------------
def lstm_predictor_forward(x, params):
    """x: (B, T, 1) batch-first (PyTorch convention). Returns (B, OUTPUT_SIZE)."""
    B, T, _ = x.shape
    x_tm = jnp.transpose(x, (1, 0, 2)).astype(jnp.float32)      # (T, B, 1)
    x_rev = x_tm[::-1]
    (wih0f, wih0b, b0, whh0, w1, b1, whh1, wfc, bfc) = params
    out = pl.pallas_call(
        _fused_lstm_kernel,
        out_shape=jax.ShapeDtypeStruct((B, LB), jnp.float32),
        in_specs=[pl.BlockSpec(memory_space=pltpu.MemorySpace.VMEM)] * 11,
        out_specs=pl.BlockSpec(memory_space=pltpu.MemorySpace.VMEM),
        scratch_shapes=[
            pltpu.VMEM((T, B, GW), jnp.float32),       # per-step gate input projections
            pltpu.VMEM((T, B, 2 * LB), jnp.float32),   # layer-0 output, both time orders
        ],
    )(x_tm, x_rev, wih0f, wih0b, b0, whh0, w1, b1, whh1, wfc, bfc)
    return out[:, :OUTPUT_SIZE]


# ----------------------------------------------------------------------------
# Pure-JAX reference (mirrors PyTorch nn.LSTM semantics) for correctness check
# ----------------------------------------------------------------------------
def reference_forward(x, raw):
    def run_dir(seq, w_ih, w_hh, b_ih, b_hh):
        T, B, _ = seq.shape
        h = jnp.zeros((B, HIDDEN), jnp.float32)
        c = jnp.zeros((B, HIDDEN), jnp.float32)
        ys = []
        for t in range(T):
            g = seq[t] @ w_ih.T + h @ w_hh.T + b_ih + b_hh
            i = jax.nn.sigmoid(g[:, :HIDDEN])
            f = jax.nn.sigmoid(g[:, HIDDEN:2 * HIDDEN])
            gg = jnp.tanh(g[:, 2 * HIDDEN:3 * HIDDEN])
            o = jax.nn.sigmoid(g[:, 3 * HIDDEN:])
            c = f * c + i * gg
            h = o * jnp.tanh(c)
            ys.append(h)
        return jnp.stack(ys)

    layer_in = jnp.transpose(x, (1, 0, 2)).astype(jnp.float32)
    for layer in range(NUM_LAYERS):
        fwd, bwd = raw["lstm"][layer]
        yf = run_dir(layer_in, *fwd)
        yb = run_dir(layer_in[::-1], *bwd)[::-1]
        layer_in = jnp.concatenate([yf, yb], axis=-1)
    w_fc, b_fc = raw["fc"]
    return layer_in[-1] @ w_fc.T + b_fc


if __name__ == "__main__":
    key = jax.random.PRNGKey(0)
    k_x, k_p = jax.random.split(key)

    B, T = 8, 12
    x = jax.random.normal(k_x, (B, T, INPUT_SIZE), dtype=jnp.float32)

    raw = init_raw_params(k_p)
    params = pack_params(raw)

    out = lstm_predictor_forward(x, params)
    out = jax.block_until_ready(out)

    assert out.shape == (B, OUTPUT_SIZE), out.shape
    assert bool(jnp.all(jnp.isfinite(out)))

    ref = reference_forward(x, raw)
    max_err = jnp.max(jnp.abs(out - ref))
    assert bool(jnp.allclose(out, ref, atol=3e-2, rtol=3e-2)), float(max_err)

    print("KERNEL_OK")
</pallas_src>

<mosaic_0001>
module attributes {stable_mosaic.version = 11 : i64} {
  func.func @_fused_lstm_kernel(%arg0: memref<12x8x1xf32, #tpu.memory_space<vmem>>, %arg1: memref<12x8x1xf32, #tpu.memory_space<vmem>>, %arg2: memref<1x512xf32, #tpu.memory_space<vmem>>, %arg3: memref<1x512xf32, #tpu.memory_space<vmem>>, %arg4: memref<1x512xf32, #tpu.memory_space<vmem>>, %arg5: memref<128x512xbf16, #tpu.memory_space<vmem>>, %arg6: memref<256x512xbf16, #tpu.memory_space<vmem>>, %arg7: memref<1x512xf32, #tpu.memory_space<vmem>>, %arg8: memref<128x512xbf16, #tpu.memory_space<vmem>>, %arg9: memref<256x128xbf16, #tpu.memory_space<vmem>>, %arg10: memref<1x128xf32, #tpu.memory_space<vmem>>, %arg11: memref<8x128xf32, #tpu.memory_space<vmem>>, %arg12: memref<12x8x512xf32, #tpu.memory_space<vmem>>, %arg13: memref<12x8x256xf32, #tpu.memory_space<vmem>>) attributes {dimension_semantics = [], scalar_prefetch = 0 : i64, scratch_operands = 2 : i64, tpu.core_type = #tpu.core_type<tc>} {
    %c0 = arith.constant 0 : index
    %c0_0 = arith.constant 0 : index
    %c0_1 = arith.constant 0 : index
    %0 = vector.load %arg0[%c0, %c0_0, %c0_1] : memref<12x8x1xf32, #tpu.memory_space<vmem>>, vector<12x8x1xf32>
    %c0_2 = arith.constant 0 : index
    %c0_3 = arith.constant 0 : index
    %1 = vector.load %arg2[%c0_2, %c0_3] : memref<1x512xf32, #tpu.memory_space<vmem>>, vector<1x512xf32>
    %2 = vector.shape_cast %1 : vector<1x512xf32> to vector<1x1x512xf32>
    %3 = vector.broadcast %0 : vector<12x8x1xf32> to vector<12x8x512xf32>
    %4 = vector.broadcast %2 : vector<1x1x512xf32> to vector<12x8x512xf32>
    %5 = arith.mulf %3, %4 : vector<12x8x512xf32>
    %c0_4 = arith.constant 0 : index
    %c0_5 = arith.constant 0 : index
    %c0_6 = arith.constant 0 : index
    %6 = vector.load %arg1[%c0_4, %c0_5, %c0_6] : memref<12x8x1xf32, #tpu.memory_space<vmem>>, vector<12x8x1xf32>
    %c0_7 = arith.constant 0 : index
    %c0_8 = arith.constant 0 : index
    %7 = vector.load %arg3[%c0_7, %c0_8] : memref<1x512xf32, #tpu.memory_space<vmem>>, vector<1x512xf32>
    %8 = vector.shape_cast %7 : vector<1x512xf32> to vector<1x1x512xf32>
    %9 = vector.broadcast %6 : vector<12x8x1xf32> to vector<12x8x512xf32>
    %10 = vector.broadcast %8 : vector<1x1x512xf32> to vector<12x8x512xf32>
    %11 = arith.mulf %9, %10 : vector<12x8x512xf32>
    %12 = arith.addf %5, %11 : vector<12x8x512xf32>
    %c0_9 = arith.constant 0 : index
    %c0_10 = arith.constant 0 : index
    %13 = vector.load %arg4[%c0_9, %c0_10] : memref<1x512xf32, #tpu.memory_space<vmem>>, vector<1x512xf32>
    %14 = vector.shape_cast %13 : vector<1x512xf32> to vector<1x1x512xf32>
    %15 = vector.broadcast %14 : vector<1x1x512xf32> to vector<12x8x512xf32>
    %16 = arith.addf %12, %15 : vector<12x8x512xf32>
    %c0_11 = arith.constant 0 : index
    %c0_12 = arith.constant 0 : index
    %c0_13 = arith.constant 0 : index
    %17 = vector.load %arg12[%c0_11, %c0_12, %c0_13] : memref<12x8x512xf32, #tpu.memory_space<vmem>>, vector<12x8x512xf32>
    tpu.vector_store %arg12[%c0_11, %c0_12, %c0_13], %16 {strides = array<i32>} : memref<12x8x512xf32, #tpu.memory_space<vmem>>, vector<12x8x512xf32>,
    %cst = arith.constant 0.000000e+00 : f32
    %18 = vector.broadcast %cst : f32 to vector<8x128xf32>
    %cst_14 = arith.constant 0.000000e+00 : f32
    %19 = vector.broadcast %cst_14 : f32 to vector<8x128xf32>
    %20 = arith.truncf %18 : vector<8x128xf32> to vector<8x128xbf16>
    %c0_15 = arith.constant 0 : index
    %c0_16 = arith.constant 0 : index
    %21 = vector.load %arg5[%c0_15, %c0_16] : memref<128x512xbf16, #tpu.memory_space<vmem>>, vector<128x512xbf16>
    %cst_17 = arith.constant dense<0.000000e+00> : vector<8x512xf32>
    %22 = tpu.matmul %20, %21, %cst_17 {dimension_numbers = #tpu.dot_dimension_numbers<[1], [0], [0], [1], [0, 0, 1, 1], [], []>} : vector<8x128xbf16>, vector<128x512xbf16>, vector<8x512xf32> -> vector<8x512xf32>
    %c0_18 = arith.constant 0 : index
    %c0_19 = arith.constant 0 : index
    %c0_20 = arith.constant 0 : index
    %23 = vector.load %arg12[%c0_18, %c0_19, %c0_20] : memref<12x8x512xf32, #tpu.memory_space<vmem>>, vector<1x8x512xf32>
    %24 = vector.shape_cast %23 : vector<1x8x512xf32> to vector<8x512xf32>
    %25 = arith.addf %24, %22 : vector<8x512xf32>
    %26 = vector.extract_strided_slice %25 {offsets = [0, 0], sizes = [8, 128], strides = [1, 1]} : vector<8x512xf32> to vector<8x128xf32>
    %27 = arith.negf %26 : vector<8x128xf32>
    %28 = math.exp %27 : vector<8x128xf32>
    %cst_21 = arith.constant 1.000000e+00 : f32
    %29 = vector.broadcast %cst_21 : f32 to vector<8x128xf32>
    %30 = arith.addf %29, %28 : vector<8x128xf32>
    %31 = arith.divf %29, %30 : vector<8x128xf32>
    %32 = vector.extract_strided_slice %25 {offsets = [0, 128], sizes = [8, 128], strides = [1, 1]} : vector<8x512xf32> to vector<8x128xf32>
    %33 = arith.negf %32 : vector<8x128xf32>
    %34 = math.exp %33 : vector<8x128xf32>
    %cst_22 = arith.constant 1.000000e+00 : f32
    %35 = vector.broadcast %cst_22 : f32 to vector<8x128xf32>
    %36 = arith.addf %35, %34 : vector<8x128xf32>
    %37 = arith.divf %35, %36 : vector<8x128xf32>
    %38 = vector.extract_strided_slice %25 {offsets = [0, 256], sizes = [8, 128], strides = [1, 1]} : vector<8x512xf32> to vector<8x128xf32>
    %39 = math.tanh %38 : vector<8x128xf32>
    %40 = vector.extract_strided_slice %25 {offsets = [0, 384], sizes = [8, 128], strides = [1, 1]} : vector<8x512xf32> to vector<8x128xf32>
    %41 = arith.negf %40 : vector<8x128xf32>
    %42 = math.exp %41 : vector<8x128xf32>
    %cst_23 = arith.constant 1.000000e+00 : f32
    %43 = vector.broadcast %cst_23 : f32 to vector<8x128xf32>
    %44 = arith.addf %43, %42 : vector<8x128xf32>
    %45 = arith.divf %43, %44 : vector<8x128xf32>
    %46 = arith.mulf %37, %19 : vector<8x128xf32>
    %47 = arith.mulf %31, %39 : vector<8x128xf32>
    %48 = arith.addf %46, %47 : vector<8x128xf32>
    %49 = math.tanh %48 : vector<8x128xf32>
    %50 = arith.mulf %45, %49 : vector<8x128xf32>
    %c0_24 = arith.constant 0 : index
    %c0_25 = arith.constant 0 : index
    %c0_26 = arith.constant 0 : index
    %51 = vector.load %arg13[%c0_24, %c0_25, %c0_26] : memref<12x8x256xf32, #tpu.memory_space<vmem>>, vector<1x8x128xf32>
    %52 = vector.shape_cast %51 : vector<1x8x128xf32> to vector<8x128xf32>
    %53 = vector.shape_cast %50 : vector<8x128xf32> to vector<1x8x128xf32>
    tpu.vector_store %arg13[%c0_24, %c0_25, %c0_26], %53 {strides = array<i32>} : memref<12x8x256xf32, #tpu.memory_space<vmem>>, vector<1x8x128xf32>,
    %c11 = arith.constant 11 : index
    %c0_27 = arith.constant 0 : index
    %c128 = arith.constant 128 : index
    %54 = vector.load %arg13[%c11, %c0_27, %c128] : memref<12x8x256xf32, #tpu.memory_space<vmem>>, vector<1x8x128xf32>
    %55 = vector.shape_cast %54 : vector<1x8x128xf32> to vector<8x128xf32>
    %56 = vector.shape_cast %50 : vector<8x128xf32> to vector<1x8x128xf32>
    tpu.vector_store %arg13[%c11, %c0_27, %c128], %56 {strides = array<i32>} : memref<12x8x256xf32, #tpu.memory_space<vmem>>, vector<1x8x128xf32>,
    %57 = arith.truncf %50 : vector<8x128xf32> to vector<8x128xbf16>
    %c0_28 = arith.constant 0 : index
    %c0_29 = arith.constant 0 : index
    %58 = vector.load %arg5[%c0_28, %c0_29] : memref<128x512xbf16, #tpu.memory_space<vmem>>, vector<128x512xbf16>
    %cst_30 = arith.constant dense<0.000000e+00> : vector<8x512xf32>
    %59 = tpu.matmul %57, %58, %cst_30 {dimension_numbers = #tpu.dot_dimension_numbers<[1], [0], [0], [1], [0, 0, 1, 1], [], []>} : vector<8x128xbf16>, vector<128x512xbf16>, vector<8x512xf32> -> vector<8x512xf32>
    %c1 = arith.constant 1 : index
    %c0_31 = arith.constant 0 : index
    %c0_32 = arith.constant 0 : index
    %60 = vector.load %arg12[%c1, %c0_31, %c0_32] : memref<12x8x512xf32, #tpu.memory_space<vmem>>, vector<1x8x512xf32>
    %61 = vector.shape_cast %60 : vector<1x8x512xf32> to vector<8x512xf32>
    %62 = arith.addf %61, %59 : vector<8x512xf32>
    %63 = vector.extract_strided_slice %62 {offsets = [0, 0], sizes = [8, 128], strides = [1, 1]} : vector<8x512xf32> to vector<8x128xf32>
    %64 = arith.negf %63 : vector<8x128xf32>
    %65 = math.exp %64 : vector<8x128xf32>
    %cst_33 = arith.constant 1.000000e+00 : f32
    %66 = vector.broadcast %cst_33 : f32 to vector<8x128xf32>
    %67 = arith.addf %66, %65 : vector<8x128xf32>
    %68 = arith.divf %66, %67 : vector<8x128xf32>
    %69 = vector.extract_strided_slice %62 {offsets = [0, 128], sizes = [8, 128], strides = [1, 1]} : vector<8x512xf32> to vector<8x128xf32>
    %70 = arith.negf %69 : vector<8x128xf32>
    %71 = math.exp %70 : vector<8x128xf32>
    %cst_34 = arith.constant 1.000000e+00 : f32
    %72 = vector.broadcast %cst_34 : f32 to vector<8x128xf32>
    %73 = arith.addf %72, %71 : vector<8x128xf32>
    %74 = arith.divf %72, %73 : vector<8x128xf32>
    %75 = vector.extract_strided_slice %62 {offsets = [0, 256], sizes = [8, 128], strides = [1, 1]} : vector<8x512xf32> to vector<8x128xf32>
    %76 = math.tanh %75 : vector<8x128xf32>
    %77 = vector.extract_strided_slice %62 {offsets = [0, 384], sizes = [8, 128], strides = [1, 1]} : vector<8x512xf32> to vector<8x128xf32>
    %78 = arith.negf %77 : vector<8x128xf32>
    %79 = math.exp %78 : vector<8x128xf32>
    %cst_35 = arith.constant 1.000000e+00 : f32
    %80 = vector.broadcast %cst_35 : f32 to vector<8x128xf32>
    %81 = arith.addf %80, %79 : vector<8x128xf32>
    %82 = arith.divf %80, %81 : vector<8x128xf32>
    %83 = arith.mulf %74, %48 : vector<8x128xf32>
    %84 = arith.mulf %68, %76 : vector<8x128xf32>
    %85 = arith.addf %83, %84 : vector<8x128xf32>
    %86 = math.tanh %85 : vector<8x128xf32>
    %87 = arith.mulf %82, %86 : vector<8x128xf32>
    %c1_36 = arith.constant 1 : index
    %c0_37 = arith.constant 0 : index
    %c0_38 = arith.constant 0 : index
    %88 = vector.load %arg13[%c1_36, %c0_37, %c0_38] : memref<12x8x256xf32, #tpu.memory_space<vmem>>, vector<1x8x128xf32>
    %89 = vector.shape_cast %88 : vector<1x8x128xf32> to vector<8x128xf32>
    %90 = vector.shape_cast %87 : vector<8x128xf32> to vector<1x8x128xf32>
    tpu.vector_store %arg13[%c1_36, %c0_37, %c0_38], %90 {strides = array<i32>} : memref<12x8x256xf32, #tpu.memory_space<vmem>>, vector<1x8x128xf32>,
    %c10 = arith.constant 10 : index
    %c0_39 = arith.constant 0 : index
    %c128_40 = arith.constant 128 : index
    %91 = vector.load %arg13[%c10, %c0_39, %c128_40] : memref<12x8x256xf32, #tpu.memory_space<vmem>>, vector<1x8x128xf32>
    %92 = vector.shape_cast %91 : vector<1x8x128xf32> to vector<8x128xf32>
    %93 = vector.shape_cast %87 : vector<8x128xf32> to vector<1x8x128xf32>
    tpu.vector_store %arg13[%c10, %c0_39, %c128_40], %93 {strides = array<i32>} : memref<12x8x256xf32, #tpu.memory_space<vmem>>, vector<1x8x128xf32>,
    %94 = arith.truncf %87 : vector<8x128xf32> to vector<8x128xbf16>
    %c0_41 = arith.constant 0 : index
    %c0_42 = arith.constant 0 : index
    %95 = vector.load %arg5[%c0_41, %c0_42] : memref<128x512xbf16, #tpu.memory_space<vmem>>, vector<128x512xbf16>
    %cst_43 = arith.constant dense<0.000000e+00> : vector<8x512xf32>
    %96 = tpu.matmul %94, %95, %cst_43 {dimension_numbers = #tpu.dot_dimension_numbers<[1], [0], [0], [1], [0, 0, 1, 1], [], []>} : vector<8x128xbf16>, vector<128x512xbf16>, vector<8x512xf32> -> vector<8x512xf32>
    %c2 = arith.constant 2 : index
    %c0_44 = arith.constant 0 : index
    %c0_45 = arith.constant 0 : index
    %97 = vector.load %arg12[%c2, %c0_44, %c0_45] : memref<12x8x512xf32, #tpu.memory_space<vmem>>, vector<1x8x512xf32>
    %98 = vector.shape_cast %97 : vector<1x8x512xf32> to vector<8x512xf32>
    %99 = arith.addf %98, %96 : vector<8x512xf32>
    %100 = vector.extract_strided_slice %99 {offsets = [0, 0], sizes = [8, 128], strides = [1, 1]} : vector<8x512xf32> to vector<8x128xf32>
    %101 = arith.negf %100 : vector<8x128xf32>
    %102 = math.exp %101 : vector<8x128xf32>
    %cst_46 = arith.constant 1.000000e+00 : f32
    %103 = vector.broadcast %cst_46 : f32 to vector<8x128xf32>
    %104 = arith.addf %103, %102 : vector<8x128xf32>
    %105 = arith.divf %103, %104 : vector<8x128xf32>
    %106 = vector.extract_strided_slice %99 {offsets = [0, 128], sizes = [8, 128], strides = [1, 1]} : vector<8x512xf32> to vector<8x128xf32>
    %107 = arith.negf %106 : vector<8x128xf32>
    %108 = math.exp %107 : vector<8x128xf32>
    %cst_47 = arith.constant 1.000000e+00 : f32
    %109 = vector.broadcast %cst_47 : f32 to vector<8x128xf32>
    %110 = arith.addf %109, %108 : vector<8x128xf32>
    %111 = arith.divf %109, %110 : vector<8x128xf32>
    %112 = vector.extract_strided_slice %99 {offsets = [0, 256], sizes = [8, 128], strides = [1, 1]} : vector<8x512xf32> to vector<8x128xf32>
    %113 = math.tanh %112 : vector<8x128xf32>
    %114 = vector.extract_strided_slice %99 {offsets = [0, 384], sizes = [8, 128], strides = [1, 1]} : vector<8x512xf32> to vector<8x128xf32>
    %115 = arith.negf %114 : vector<8x128xf32>
    %116 = math.exp %115 : vector<8x128xf32>
    %cst_48 = arith.constant 1.000000e+00 : f32
    %117 = vector.broadcast %cst_48 : f32 to vector<8x128xf32>
    %118 = arith.addf %117, %116 : vector<8x128xf32>
    %119 = arith.divf %117, %118 : vector<8x128xf32>
    %120 = arith.mulf %111, %85 : vector<8x128xf32>
    %121 = arith.mulf %105, %113 : vector<8x128xf32>
    %122 = arith.addf %120, %121 : vector<8x128xf32>
    %123 = math.tanh %122 : vector<8x128xf32>
    %124 = arith.mulf %119, %123 : vector<8x128xf32>
    %c2_49 = arith.constant 2 : index
    %c0_50 = arith.constant 0 : index
    %c0_51 = arith.constant 0 : index
    %125 = vector.load %arg13[%c2_49, %c0_50, %c0_51] : memref<12x8x256xf32, #tpu.memory_space<vmem>>, vector<1x8x128xf32>
    %126 = vector.shape_cast %125 : vector<1x8x128xf32> to vector<8x128xf32>
    %127 = vector.shape_cast %124 : vector<8x128xf32> to vector<1x8x128xf32>
    tpu.vector_store %arg13[%c2_49, %c0_50, %c0_51], %127 {strides = array<i32>} : memref<12x8x256xf32, #tpu.memory_space<vmem>>, vector<1x8x128xf32>,
    %c9 = arith.constant 9 : index
    %c0_52 = arith.constant 0 : index
    %c128_53 = arith.constant 128 : index
    %128 = vector.load %arg13[%c9, %c0_52, %c128_53] : memref<12x8x256xf32, #tpu.memory_space<vmem>>, vector<1x8x128xf32>
    %129 = vector.shape_cast %128 : vector<1x8x128xf32> to vector<8x128xf32>
    %130 = vector.shape_cast %124 : vector<8x128xf32> to vector<1x8x128xf32>
    tpu.vector_store %arg13[%c9, %c0_52, %c128_53], %130 {strides = array<i32>} : memref<12x8x256xf32, #tpu.memory_space<vmem>>, vector<1x8x128xf32>,
    %131 = arith.truncf %124 : vector<8x128xf32> to vector<8x128xbf16>
    %c0_54 = arith.constant 0 : index
    %c0_55 = arith.constant 0 : index
    %132 = vector.load %arg5[%c0_54, %c0_55] : memref<128x512xbf16, #tpu.memory_space<vmem>>, vector<128x512xbf16>
    %cst_56 = arith.constant dense<0.000000e+00> : vector<8x512xf32>
    %133 = tpu.matmul %131, %132, %cst_56 {dimension_numbers = #tpu.dot_dimension_numbers<[1], [0], [0], [1], [0, 0, 1, 1], [], []>} : vector<8x128xbf16>, vector<128x512xbf16>, vector<8x512xf32> -> vector<8x512xf32>
    %c3 = arith.constant 3 : index
    %c0_57 = arith.constant 0 : index
    %c0_58 = arith.constant 0 : index
    %134 = vector.load %arg12[%c3, %c0_57, %c0_58] : memref<12x8x512xf32, #tpu.memory_space<vmem>>, vector<1x8x512xf32>
    %135 = vector.shape_cast %134 : vector<1x8x512xf32> to vector<8x512xf32>
    %136 = arith.addf %135, %133 : vector<8x512xf32>
    %137 = vector.extract_strided_slice %136 {offsets = [0, 0], sizes = [8, 128], strides = [1, 1]} : vector<8x512xf32> to vector<8x128xf32>
    %138 = arith.negf %137 : vector<8x128xf32>
    %139 = math.exp %138 : vector<8x128xf32>
    %cst_59 = arith.constant 1.000000e+00 : f32
    %140 = vector.broadcast %cst_59 : f32 to vector<8x128xf32>
    %141 = arith.addf %140, %139 : vector<8x128xf32>
    %142 = arith.divf %140, %141 : vector<8x128xf32>
    %143 = vector.extract_strided_slice %136 {offsets = [0, 128], sizes = [8, 128], strides = [1, 1]} : vector<8x512xf32> to vector<8x128xf32>
    %144 = arith.negf %143 : vector<8x128xf32>
    %145 = math.exp %144 : vector<8x128xf32>
    %cst_60 = arith.constant 1.000000e+00 : f32
    %146 = vector.broadcast %cst_60 : f32 to vector<8x128xf32>
    %147 = arith.addf %146, %145 : vector<8x128xf32>
    %148 = arith.divf %146, %147 : vector<8x128xf32>
    %149 = vector.extract_strided_slice %136 {offsets = [0, 256], sizes = [8, 128], strides = [1, 1]} : vector<8x512xf32> to vector<8x128xf32>
    %150 = math.tanh %149 : vector<8x128xf32>
    %151 = vector.extract_strided_slice %136 {offsets = [0, 384], sizes = [8, 128], strides = [1, 1]} : vector<8x512xf32> to vector<8x128xf32>
    %152 = arith.negf %151 : vector<8x128xf32>
    %153 = math.exp %152 : vector<8x128xf32>
    %cst_61 = arith.constant 1.000000e+00 : f32
    %154 = vector.broadcast %cst_61 : f32 to vector<8x128xf32>
    %155 = arith.addf %154, %153 : vector<8x128xf32>
    %156 = arith.divf %154, %155 : vector<8x128xf32>
    %157 = arith.mulf %148, %122 : vector<8x128xf32>
    %158 = arith.mulf %142, %150 : vector<8x128xf32>
    %159 = arith.addf %157, %158 : vector<8x128xf32>
    %160 = math.tanh %159 : vector<8x128xf32>
    %161 = arith.mulf %156, %160 : vector<8x128xf32>
    %c3_62 = arith.constant 3 : index
    %c0_63 = arith.constant 0 : index
    %c0_64 = arith.constant 0 : index
    %162 = vector.load %arg13[%c3_62, %c0_63, %c0_64] : memref<12x8x256xf32, #tpu.memory_space<vmem>>, vector<1x8x128xf32>
    %163 = vector.shape_cast %162 : vector<1x8x128xf32> to vector<8x128xf32>
    %164 = vector.shape_cast %161 : vector<8x128xf32> to vector<1x8x128xf32>
    tpu.vector_store %arg13[%c3_62, %c0_63, %c0_64], %164 {strides = array<i32>} : memref<12x8x256xf32, #tpu.memory_space<vmem>>, vector<1x8x128xf32>,
    %c8 = arith.constant 8 : index
    %c0_65 = arith.constant 0 : index
    %c128_66 = arith.constant 128 : index
    %165 = vector.load %arg13[%c8, %c0_65, %c128_66] : memref<12x8x256xf32, #tpu.memory_space<vmem>>, vector<1x8x128xf32>
    %166 = vector.shape_cast %165 : vector<1x8x128xf32> to vector<8x128xf32>
    %167 = vector.shape_cast %161 : vector<8x128xf32> to vector<1x8x128xf32>
    tpu.vector_store %arg13[%c8, %c0_65, %c128_66], %167 {strides = array<i32>} : memref<12x8x256xf32, #tpu.memory_space<vmem>>, vector<1x8x128xf32>,
    %168 = arith.truncf %161 : vector<8x128xf32> to vector<8x128xbf16>
    %c0_67 = arith.constant 0 : index
    %c0_68 = arith.constant 0 : index
    %169 = vector.load %arg5[%c0_67, %c0_68] : memref<128x512xbf16, #tpu.memory_space<vmem>>, vector<128x512xbf16>
    %cst_69 = arith.constant dense<0.000000e+00> : vector<8x512xf32>
    %170 = tpu.matmul %168, %169, %cst_69 {dimension_numbers = #tpu.dot_dimension_numbers<[1], [0], [0], [1], [0, 0, 1, 1], [], []>} : vector<8x128xbf16>, vector<128x512xbf16>, vector<8x512xf32> -> vector<8x512xf32>
    %c4 = arith.constant 4 : index
    %c0_70 = arith.constant 0 : index
    %c0_71 = arith.constant 0 : index
    %171 = vector.load %arg12[%c4, %c0_70, %c0_71] : memref<12x8x512xf32, #tpu.memory_space<vmem>>, vector<1x8x512xf32>
    %172 = vector.shape_cast %171 : vector<1x8x512xf32> to vector<8x512xf32>
    %173 = arith.addf %172, %170 : vector<8x512xf32>
    %174 = vector.extract_strided_slice %173 {offsets = [0, 0], sizes = [8, 128], strides = [1, 1]} : vector<8x512xf32> to vector<8x128xf32>
    %175 = arith.negf %174 : vector<8x128xf32>
    %176 = math.exp %175 : vector<8x128xf32>
    %cst_72 = arith.constant 1.000000e+00 : f32
    %177 = vector.broadcast %cst_72 : f32 to vector<8x128xf32>
    %178 = arith.addf %177, %176 : vector<8x128xf32>
    %179 = arith.divf %177, %178 : vector<8x128xf32>
    %180 = vector.extract_strided_slice %173 {offsets = [0, 128], sizes = [8, 128], strides = [1, 1]} : vector<8x512xf32> to vector<8x128xf32>
    %181 = arith.negf %180 : vector<8x128xf32>
    %182 = math.exp %181 : vector<8x128xf32>
    %cst_73 = arith.constant 1.000000e+00 : f32
    %183 = vector.broadcast %cst_73 : f32 to vector<8x128xf32>
    %184 = arith.addf %183, %182 : vector<8x128xf32>
    %185 = arith.divf %183, %184 : vector<8x128xf32>
    %186 = vector.extract_strided_slice %173 {offsets = [0, 256], sizes = [8, 128], strides = [1, 1]} : vector<8x512xf32> to vector<8x128xf32>
    %187 = math.tanh %186 : vector<8x128xf32>
    %188 = vector.extract_strided_slice %173 {offsets = [0, 384], sizes = [8, 128], strides = [1, 1]} : vector<8x512xf32> to vector<8x128xf32>
    %189 = arith.negf %188 : vector<8x128xf32>
    %190 = math.exp %189 : vector<8x128xf32>
    %cst_74 = arith.constant 1.000000e+00 : f32
    %191 = vector.broadcast %cst_74 : f32 to vector<8x128xf32>
    %192 = arith.addf %191, %190 : vector<8x128xf32>
    %193 = arith.divf %191, %192 : vector<8x128xf32>
    %194 = arith.mulf %185, %159 : vector<8x128xf32>
    %195 = arith.mulf %179, %187 : vector<8x128xf32>
    %196 = arith.addf %194, %195 : vector<8x128xf32>
    %197 = math.tanh %196 : vector<8x128xf32>
    %198 = arith.mulf %193, %197 : vector<8x128xf32>
    %c4_75 = arith.constant 4 : index
    %c0_76 = arith.constant 0 : index
    %c0_77 = arith.constant 0 : index
    %199 = vector.load %arg13[%c4_75, %c0_76, %c0_77] : memref<12x8x256xf32, #tpu.memory_space<vmem>>, vector<1x8x128xf32>
    %200 = vector.shape_cast %199 : vector<1x8x128xf32> to vector<8x128xf32>
    %201 = vector.shape_cast %198 : vector<8x128xf32> to vector<1x8x128xf32>
    tpu.vector_store %arg13[%c4_75, %c0_76, %c0_77], %201 {strides = array<i32>} : memref<12x8x256xf32, #tpu.memory_space<vmem>>, vector<1x8x128xf32>,
    %c7 = arith.constant 7 : index
    %c0_78 = arith.constant 0 : index
    %c128_79 = arith.constant 128 : index
    %202 = vector.load %arg13[%c7, %c0_78, %c128_79] : memref<12x8x256xf32, #tpu.memory_space<vmem>>, vector<1x8x128xf32>
    %203 = vector.shape_cast %202 : vector<1x8x128xf32> to vector<8x128xf32>
    %204 = vector.shape_cast %198 : vector<8x128xf32> to vector<1x8x128xf32>
    tpu.vector_store %arg13[%c7, %c0_78, %c128_79], %204 {strides = array<i32>} : memref<12x8x256xf32, #tpu.memory_space<vmem>>, vector<1x8x128xf32>,
    %205 = arith.truncf %198 : vector<8x128xf32> to vector<8x128xbf16>
    %c0_80 = arith.constant 0 : index
    %c0_81 = arith.constant 0 : index
    %206 = vector.load %arg5[%c0_80, %c0_81] : memref<128x512xbf16, #tpu.memory_space<vmem>>, vector<128x512xbf16>
    %cst_82 = arith.constant dense<0.000000e+00> : vector<8x512xf32>
    %207 = tpu.matmul %205, %206, %cst_82 {dimension_numbers = #tpu.dot_dimension_numbers<[1], [0], [0], [1], [0, 0, 1, 1], [], []>} : vector<8x128xbf16>, vector<128x512xbf16>, vector<8x512xf32> -> vector<8x512xf32>
    %c5 = arith.constant 5 : index
    %c0_83 = arith.constant 0 : index
    %c0_84 = arith.constant 0 : index
    %208 = vector.load %arg12[%c5, %c0_83, %c0_84] : memref<12x8x512xf32, #tpu.memory_space<vmem>>, vector<1x8x512xf32>
    %209 = vector.shape_cast %208 : vector<1x8x512xf32> to vector<8x512xf32>
    %210 = arith.addf %209, %207 : vector<8x512xf32>
    %211 = vector.extract_strided_slice %210 {offsets = [0, 0], sizes = [8, 128], strides = [1, 1]} : vector<8x512xf32> to vector<8x128xf32>
    %212 = arith.negf %211 : vector<8x128xf32>
    %213 = math.exp %212 : vector<8x128xf32>
    %cst_85 = arith.constant 1.000000e+00 : f32
    %214 = vector.broadcast %cst_85 : f32 to vector<8x128xf32>
    %215 = arith.addf %214, %213 : vector<8x128xf32>
    %216 = arith.divf %214, %215 : vector<8x128xf32>
    %217 = vector.extract_strided_slice %210 {offsets = [0, 128], sizes = [8, 128], strides = [1, 1]} : vector<8x512xf32> to vector<8x128xf32>
    %218 = arith.negf %217 : vector<8x128xf32>
    %219 = math.exp %218 : vector<8x128xf32>
    %cst_86 = arith.constant 1.000000e+00 : f32
    %220 = vector.broadcast %cst_86 : f32 to vector<8x128xf32>
    %221 = arith.addf %220, %219 : vector<8x128xf32>
    %222 = arith.divf %220, %221 : vector<8x128xf32>
    %223 = vector.extract_strided_slice %210 {offsets = [0, 256], sizes = [8, 128], strides = [1, 1]} : vector<8x512xf32> to vector<8x128xf32>
    %224 = math.tanh %223 : vector<8x128xf32>
    %225 = vector.extract_strided_slice %210 {offsets = [0, 384], sizes = [8, 128], strides = [1, 1]} : vector<8x512xf32> to vector<8x128xf32>
    %226 = arith.negf %225 : vector<8x128xf32>
    %227 = math.exp %226 : vector<8x128xf32>
    %cst_87 = arith.constant 1.000000e+00 : f32
    %228 = vector.broadcast %cst_87 : f32 to vector<8x128xf32>
    %229 = arith.addf %228, %227 : vector<8x128xf32>
    %230 = arith.divf %228, %229 : vector<8x128xf32>
    %231 = arith.mulf %222, %196 : vector<8x128xf32>
    %232 = arith.mulf %216, %224 : vector<8x128xf32>
    %233 = arith.addf %231, %232 : vector<8x128xf32>
    %234 = math.tanh %233 : vector<8x128xf32>
    %235 = arith.mulf %230, %234 : vector<8x128xf32>
    %c5_88 = arith.constant 5 : index
    %c0_89 = arith.constant 0 : index
    %c0_90 = arith.constant 0 : index
    %236 = vector.load %arg13[%c5_88, %c0_89, %c0_90] : memref<12x8x256xf32, #tpu.memory_space<vmem>>, vector<1x8x128xf32>
    %237 = vector.shape_cast %236 : vector<1x8x128xf32> to vector<8x128xf32>
    %238 = vector.shape_cast %235 : vector<8x128xf32> to vector<1x8x128xf32>
    tpu.vector_store %arg13[%c5_88, %c0_89, %c0_90], %238 {strides = array<i32>} : memref<12x8x256xf32, #tpu.memory_space<vmem>>, vector<1x8x128xf32>,
    %c6 = arith.constant 6 : index
    %c0_91 = arith.constant 0 : index
    %c128_92 = arith.constant 128 : index
    %239 = vector.load %arg13[%c6, %c0_91, %c128_92] : memref<12x8x256xf32, #tpu.memory_space<vmem>>, vector<1x8x128xf32>
    %240 = vector.shape_cast %239 : vector<1x8x128xf32> to vector<8x128xf32>
    %241 = vector.shape_cast %235 : vector<8x128xf32> to vector<1x8x128xf32>
    tpu.vector_store %arg13[%c6, %c0_91, %c128_92], %241 {strides = array<i32>} : memref<12x8x256xf32, #tpu.memory_space<vmem>>, vector<1x8x128xf32>,
    %242 = arith.truncf %235 : vector<8x128xf32> to vector<8x128xbf16>
    %c0_93 = arith.constant 0 : index
    %c0_94 = arith.constant 0 : index
    %243 = vector.load %arg5[%c0_93, %c0_94] : memref<128x512xbf16, #tpu.memory_space<vmem>>, vector<128x512xbf16>
    %cst_95 = arith.constant dense<0.000000e+00> : vector<8x512xf32>
    %244 = tpu.matmul %242, %243, %cst_95 {dimension_numbers = #tpu.dot_dimension_numbers<[1], [0], [0], [1], [0, 0, 1, 1], [], []>} : vector<8x128xbf16>, vector<128x512xbf16>, vector<8x512xf32> -> vector<8x512xf32>
    %c6_96 = arith.constant 6 : index
    %c0_97 = arith.constant 0 : index
    %c0_98 = arith.constant 0 : index
    %245 = vector.load %arg12[%c6_96, %c0_97, %c0_98] : memref<12x8x512xf32, #tpu.memory_space<vmem>>, vector<1x8x512xf32>
    %246 = vector.shape_cast %245 : vector<1x8x512xf32> to vector<8x512xf32>
    %247 = arith.addf %246, %244 : vector<8x512xf32>
    %248 = vector.extract_strided_slice %247 {offsets = [0, 0], sizes = [8, 128], strides = [1, 1]} : vector<8x512xf32> to vector<8x128xf32>
    %249 = arith.negf %248 : vector<8x128xf32>
    %250 = math.exp %249 : vector<8x128xf32>
    %cst_99 = arith.constant 1.000000e+00 : f32
    %251 = vector.broadcast %cst_99 : f32 to vector<8x128xf32>
    %252 = arith.addf %251, %250 : vector<8x128xf32>
    %253 = arith.divf %251, %252 : vector<8x128xf32>
    %254 = vector.extract_strided_slice %247 {offsets = [0, 128], sizes = [8, 128], strides = [1, 1]} : vector<8x512xf32> to vector<8x128xf32>
    %255 = arith.negf %254 : vector<8x128xf32>
    %256 = math.exp %255 : vector<8x128xf32>
    %cst_100 = arith.constant 1.000000e+00 : f32
    %257 = vector.broadcast %cst_100 : f32 to vector<8x128xf32>
    %258 = arith.addf %257, %256 : vector<8x128xf32>
    %259 = arith.divf %257, %258 : vector<8x128xf32>
    %260 = vector.extract_strided_slice %247 {offsets = [0, 256], sizes = [8, 128], strides = [1, 1]} : vector<8x512xf32> to vector<8x128xf32>
    %261 = math.tanh %260 : vector<8x128xf32>
    %262 = vector.extract_strided_slice %247 {offsets = [0, 384], sizes = [8, 128], strides = [1, 1]} : vector<8x512xf32> to vector<8x128xf32>
    %263 = arith.negf %262 : vector<8x128xf32>
    %264 = math.exp %263 : vector<8x128xf32>
    %cst_101 = arith.constant 1.000000e+00 : f32
    %265 = vector.broadcast %cst_101 : f32 to vector<8x128xf32>
    %266 = arith.addf %265, %264 : vector<8x128xf32>
    %267 = arith.divf %265, %266 : vector<8x128xf32>
    %268 = arith.mulf %259, %233 : vector<8x128xf32>
    %269 = arith.mulf %253, %261 : vector<8x128xf32>
    %270 = arith.addf %268, %269 : vector<8x128xf32>
    %271 = math.tanh %270 : vector<8x128xf32>
    %272 = arith.mulf %267, %271 : vector<8x128xf32>
    %c6_102 = arith.constant 6 : index
    %c0_103 = arith.constant 0 : index
    %c0_104 = arith.constant 0 : index
    %273 = vector.load %arg13[%c6_102, %c0_103, %c0_104] : memref<12x8x256xf32, #tpu.memory_space<vmem>>, vector<1x8x128xf32>
    %274 = vector.shape_cast %273 : vector<1x8x128xf32> to vector<8x128xf32>
    %275 = vector.shape_cast %272 : vector<8x128xf32> to vector<1x8x128xf32>
    tpu.vector_store %arg13[%c6_102, %c0_103, %c0_104], %275 {strides = array<i32>} : memref<12x8x256xf32, #tpu.memory_space<vmem>>, vector<1x8x128xf32>,
    %c5_105 = arith.constant 5 : index
    %c0_106 = arith.constant 0 : index
    %c128_107 = arith.constant 128 : index
    %276 = vector.load %arg13[%c5_105, %c0_106, %c128_107] : memref<12x8x256xf32, #tpu.memory_space<vmem>>, vector<1x8x128xf32>
    %277 = vector.shape_cast %276 : vector<1x8x128xf32> to vector<8x128xf32>
    %278 = vector.shape_cast %272 : vector<8x128xf32> to vector<1x8x128xf32>
    tpu.vector_store %arg13[%c5_105, %c0_106, %c128_107], %278 {strides = array<i32>} : memref<12x8x256xf32, #tpu.memory_space<vmem>>, vector<1x8x128xf32>,
    %279 = arith.truncf %272 : vector<8x128xf32> to vector<8x128xbf16>
    %c0_108 = arith.constant 0 : index
    %c0_109 = arith.constant 0 : index
    %280 = vector.load %arg5[%c0_108, %c0_109] : memref<128x512xbf16, #tpu.memory_space<vmem>>, vector<128x512xbf16>
    %cst_110 = arith.constant dense<0.000000e+00> : vector<8x512xf32>
    %281 = tpu.matmul %279, %280, %cst_110 {dimension_numbers = #tpu.dot_dimension_numbers<[1], [0], [0], [1], [0, 0, 1, 1], [], []>} : vector<8x128xbf16>, vector<128x512xbf16>, vector<8x512xf32> -> vector<8x512xf32>
    %c7_111 = arith.constant 7 : index
    %c0_112 = arith.constant 0 : index
    %c0_113 = arith.constant 0 : index
    %282 = vector.load %arg12[%c7_111, %c0_112, %c0_113] : memref<12x8x512xf32, #tpu.memory_space<vmem>>, vector<1x8x512xf32>
    %283 = vector.shape_cast %282 : vector<1x8x512xf32> to vector<8x512xf32>
    %284 = arith.addf %283, %281 : vector<8x512xf32>
    %285 = vector.extract_strided_slice %284 {offsets = [0, 0], sizes = [8, 128], strides = [1, 1]} : vector<8x512xf32> to vector<8x128xf32>
    %286 = arith.negf %285 : vector<8x128xf32>
    %287 = math.exp %286 : vector<8x128xf32>
    %cst_114 = arith.constant 1.000000e+00 : f32
    %288 = vector.broadcast %cst_114 : f32 to vector<8x128xf32>
    %289 = arith.addf %288, %287 : vector<8x128xf32>
    %290 = arith.divf %288, %289 : vector<8x128xf32>
    %291 = vector.extract_strided_slice %284 {offsets = [0, 128], sizes = [8, 128], strides = [1, 1]} : vector<8x512xf32> to vector<8x128xf32>
    %292 = arith.negf %291 : vector<8x128xf32>
    %293 = math.exp %292 : vector<8x128xf32>
    %cst_115 = arith.constant 1.000000e+00 : f32
    %294 = vector.broadcast %cst_115 : f32 to vector<8x128xf32>
    %295 = arith.addf %294, %293 : vector<8x128xf32>
    %296 = arith.divf %294, %295 : vector<8x128xf32>
    %297 = vector.extract_strided_slice %284 {offsets = [0, 256], sizes = [8, 128], strides = [1, 1]} : vector<8x512xf32> to vector<8x128xf32>
    %298 = math.tanh %297 : vector<8x128xf32>
    %299 = vector.extract_strided_slice %284 {offsets = [0, 384], sizes = [8, 128], strides = [1, 1]} : vector<8x512xf32> to vector<8x128xf32>
    %300 = arith.negf %299 : vector<8x128xf32>
    %301 = math.exp %300 : vector<8x128xf32>
    %cst_116 = arith.constant 1.000000e+00 : f32
    %302 = vector.broadcast %cst_116 : f32 to vector<8x128xf32>
    %303 = arith.addf %302, %301 : vector<8x128xf32>
    %304 = arith.divf %302, %303 : vector<8x128xf32>
    %305 = arith.mulf %296, %270 : vector<8x128xf32>
    %306 = arith.mulf %290, %298 : vector<8x128xf32>
    %307 = arith.addf %305, %306 : vector<8x128xf32>
    %308 = math.tanh %307 : vector<8x128xf32>
    %309 = arith.mulf %304, %308 : vector<8x128xf32>
    %c7_117 = arith.constant 7 : index
    %c0_118 = arith.constant 0 : index
    %c0_119 = arith.constant 0 : index
    %310 = vector.load %arg13[%c7_117, %c0_118, %c0_119] : memref<12x8x256xf32, #tpu.memory_space<vmem>>, vector<1x8x128xf32>
    %311 = vector.shape_cast %310 : vector<1x8x128xf32> to vector<8x128xf32>
    %312 = vector.shape_cast %309 : vector<8x128xf32> to vector<1x8x128xf32>
    tpu.vector_store %arg13[%c7_117, %c0_118, %c0_119], %312 {strides = array<i32>} : memref<12x8x256xf32, #tpu.memory_space<vmem>>, vector<1x8x128xf32>,
    %c4_120 = arith.constant 4 : index
    %c0_121 = arith.constant 0 : index
    %c128_122 = arith.constant 128 : index
    %313 = vector.load %arg13[%c4_120, %c0_121, %c128_122] : memref<12x8x256xf32, #tpu.memory_space<vmem>>, vector<1x8x128xf32>
    %314 = vector.shape_cast %313 : vector<1x8x128xf32> to vector<8x128xf32>
    %315 = vector.shape_cast %309 : vector<8x128xf32> to vector<1x8x128xf32>
    tpu.vector_store %arg13[%c4_120, %c0_121, %c128_122], %315 {strides = array<i32>} : memref<12x8x256xf32, #tpu.memory_space<vmem>>, vector<1x8x128xf32>,
    %316 = arith.truncf %309 : vector<8x128xf32> to vector<8x128xbf16>
    %c0_123 = arith.constant 0 : index
    %c0_124 = arith.constant 0 : index
    %317 = vector.load %arg5[%c0_123, %c0_124] : memref<128x512xbf16, #tpu.memory_space<vmem>>, vector<128x512xbf16>
    %cst_125 = arith.constant dense<0.000000e+00> : vector<8x512xf32>
    %318 = tpu.matmul %316, %317, %cst_125 {dimension_numbers = #tpu.dot_dimension_numbers<[1], [0], [0], [1], [0, 0, 1, 1], [], []>} : vector<8x128xbf16>, vector<128x512xbf16>, vector<8x512xf32> -> vector<8x512xf32>
    %c8_126 = arith.constant 8 : index
    %c0_127 = arith.constant 0 : index
    %c0_128 = arith.constant 0 : index
    %319 = vector.load %arg12[%c8_126, %c0_127, %c0_128] : memref<12x8x512xf32, #tpu.memory_space<vmem>>, vector<1x8x512xf32>
    %320 = vector.shape_cast %319 : vector<1x8x512xf32> to vector<8x512xf32>
    %321 = arith.addf %320, %318 : vector<8x512xf32>
    %322 = vector.extract_strided_slice %321 {offsets = [0, 0], sizes = [8, 128], strides = [1, 1]} : vector<8x512xf32> to vector<8x128xf32>
    %323 = arith.negf %322 : vector<8x128xf32>
    %324 = math.exp %323 : vector<8x128xf32>
    %cst_129 = arith.constant 1.000000e+00 : f32
    %325 = vector.broadcast %cst_129 : f32 to vector<8x128xf32>
    %326 = arith.addf %325, %324 : vector<8x128xf32>
    %327 = arith.divf %325, %326 : vector<8x128xf32>
    %328 = vector.extract_strided_slice %321 {offsets = [0, 128], sizes = [8, 128], strides = [1, 1]} : vector<8x512xf32> to vector<8x128xf32>
    %329 = arith.negf %328 : vector<8x128xf32>
    %330 = math.exp %329 : vector<8x128xf32>
    %cst_130 = arith.constant 1.000000e+00 : f32
    %331 = vector.broadcast %cst_130 : f32 to vector<8x128xf32>
    %332 = arith.addf %331, %330 : vector<8x128xf32>
    %333 = arith.divf %331, %332 : vector<8x128xf32>
    %334 = vector.extract_strided_slice %321 {offsets = [0, 256], sizes = [8, 128], strides = [1, 1]} : vector<8x512xf32> to vector<8x128xf32>
    %335 = math.tanh %334 : vector<8x128xf32>
    %336 = vector.extract_strided_slice %321 {offsets = [0, 384], sizes = [8, 128], strides = [1, 1]} : vector<8x512xf32> to vector<8x128xf32>
    %337 = arith.negf %336 : vector<8x128xf32>
    %338 = math.exp %337 : vector<8x128xf32>
    %cst_131 = arith.constant 1.000000e+00 : f32
    %339 = vector.broadcast %cst_131 : f32 to vector<8x128xf32>
    %340 = arith.addf %339, %338 : vector<8x128xf32>
    %341 = arith.divf %339, %340 : vector<8x128xf32>
    %342 = arith.mulf %333, %307 : vector<8x128xf32>
    %343 = arith.mulf %327, %335 : vector<8x128xf32>
    %344 = arith.addf %342, %343 : vector<8x128xf32>
    %345 = math.tanh %344 : vector<8x128xf32>
    %346 = arith.mulf %341, %345 : vector<8x128xf32>
    %c8_132 = arith.constant 8 : index
    %c0_133 = arith.constant 0 : index
    %c0_134 = arith.constant 0 : index
    %347 = vector.load %arg13[%c8_132, %c0_133, %c0_134] : memref<12x8x256xf32, #tpu.memory_space<vmem>>, vector<1x8x128xf32>
    %348 = vector.shape_cast %347 : vector<1x8x128xf32> to vector<8x128xf32>
    %349 = vector.shape_cast %346 : vector<8x128xf32> to vector<1x8x128xf32>
    tpu.vector_store %arg13[%c8_132, %c0_133, %c0_134], %349 {strides = array<i32>} : memref<12x8x256xf32, #tpu.memory_space<vmem>>, vector<1x8x128xf32>,
    %c3_135 = arith.constant 3 : index
    %c0_136 = arith.constant 0 : index
    %c128_137 = arith.constant 128 : index
    %350 = vector.load %arg13[%c3_135, %c0_136, %c128_137] : memref<12x8x256xf32, #tpu.memory_space<vmem>>, vector<1x8x128xf32>
    %351 = vector.shape_cast %350 : vector<1x8x128xf32> to vector<8x128xf32>
    %352 = vector.shape_cast %346 : vector<8x128xf32> to vector<1x8x128xf32>
    tpu.vector_store %arg13[%c3_135, %c0_136, %c128_137], %352 {strides = array<i32>} : memref<12x8x256xf32, #tpu.memory_space<vmem>>, vector<1x8x128xf32>,
    %353 = arith.truncf %346 : vector<8x128xf32> to vector<8x128xbf16>
    %c0_138 = arith.constant 0 : index
    %c0_139 = arith.constant 0 : index
    %354 = vector.load %arg5[%c0_138, %c0_139] : memref<128x512xbf16, #tpu.memory_space<vmem>>, vector<128x512xbf16>
    %cst_140 = arith.constant dense<0.000000e+00> : vector<8x512xf32>
    %355 = tpu.matmul %353, %354, %cst_140 {dimension_numbers = #tpu.dot_dimension_numbers<[1], [0], [0], [1], [0, 0, 1, 1], [], []>} : vector<8x128xbf16>, vector<128x512xbf16>, vector<8x512xf32> -> vector<8x512xf32>
    %c9_141 = arith.constant 9 : index
    %c0_142 = arith.constant 0 : index
    %c0_143 = arith.constant 0 : index
    %356 = vector.load %arg12[%c9_141, %c0_142, %c0_143] : memref<12x8x512xf32, #tpu.memory_space<vmem>>, vector<1x8x512xf32>
    %357 = vector.shape_cast %356 : vector<1x8x512xf32> to vector<8x512xf32>
    %358 = arith.addf %357, %355 : vector<8x512xf32>
    %359 = vector.extract_strided_slice %358 {offsets = [0, 0], sizes = [8, 128], strides = [1, 1]} : vector<8x512xf32> to vector<8x128xf32>
    %360 = arith.negf %359 : vector<8x128xf32>
    %361 = math.exp %360 : vector<8x128xf32>
    %cst_144 = arith.constant 1.000000e+00 : f32
    %362 = vector.broadcast %cst_144 : f32 to vector<8x128xf32>
    %363 = arith.addf %362, %361 : vector<8x128xf32>
    %364 = arith.divf %362, %363 : vector<8x128xf32>
    %365 = vector.extract_strided_slice %358 {offsets = [0, 128], sizes = [8, 128], strides = [1, 1]} : vector<8x512xf32> to vector<8x128xf32>
    %366 = arith.negf %365 : vector<8x128xf32>
    %367 = math.exp %366 : vector<8x128xf32>
    %cst_145 = arith.constant 1.000000e+00 : f32
    %368 = vector.broadcast %cst_145 : f32 to vector<8x128xf32>
    %369 = arith.addf %368, %367 : vector<8x128xf32>
    %370 = arith.divf %368, %369 : vector<8x128xf32>
    %371 = vector.extract_strided_slice %358 {offsets = [0, 256], sizes = [8, 128], strides = [1, 1]} : vector<8x512xf32> to vector<8x128xf32>
    %372 = math.tanh %371 : vector<8x128xf32>
    %373 = vector.extract_strided_slice %358 {offsets = [0, 384], sizes = [8, 128], strides = [1, 1]} : vector<8x512xf32> to vector<8x128xf32>
    %374 = arith.negf %373 : vector<8x128xf32>
    %375 = math.exp %374 : vector<8x128xf32>
    %cst_146 = arith.constant 1.000000e+00 : f32
    %376 = vector.broadcast %cst_146 : f32 to vector<8x128xf32>
    %377 = arith.addf %376, %375 : vector<8x128xf32>
    %378 = arith.divf %376, %377 : vector<8x128xf32>
    %379 = arith.mulf %370, %344 : vector<8x128xf32>
    %380 = arith.mulf %364, %372 : vector<8x128xf32>
    %381 = arith.addf %379, %380 : vector<8x128xf32>
    %382 = math.tanh %381 : vector<8x128xf32>
    %383 = arith.mulf %378, %382 : vector<8x128xf32>
    %c9_147 = arith.constant 9 : index
    %c0_148 = arith.constant 0 : index
    %c0_149 = arith.constant 0 : index
    %384 = vector.load %arg13[%c9_147, %c0_148, %c0_149] : memref<12x8x256xf32, #tpu.memory_space<vmem>>, vector<1x8x128xf32>
    %385 = vector.shape_cast %384 : vector<1x8x128xf32> to vector<8x128xf32>
    %386 = vector.shape_cast %383 : vector<8x128xf32> to vector<1x8x128xf32>
    tpu.vector_store %arg13[%c9_147, %c0_148, %c0_149], %386 {strides = array<i32>} : memref<12x8x256xf32, #tpu.memory_space<vmem>>, vector<1x8x128xf32>,
    %c2_150 = arith.constant 2 : index
    %c0_151 = arith.constant 0 : index
    %c128_152 = arith.constant 128 : index
    %387 = vector.load %arg13[%c2_150, %c0_151, %c128_152] : memref<12x8x256xf32, #tpu.memory_space<vmem>>, vector<1x8x128xf32>
    %388 = vector.shape_cast %387 : vector<1x8x128xf32> to vector<8x128xf32>
    %389 = vector.shape_cast %383 : vector<8x128xf32> to vector<1x8x128xf32>
    tpu.vector_store %arg13[%c2_150, %c0_151, %c128_152], %389 {strides = array<i32>} : memref<12x8x256xf32, #tpu.memory_space<vmem>>, vector<1x8x128xf32>,
    %390 = arith.truncf %383 : vector<8x128xf32> to vector<8x128xbf16>
    %c0_153 = arith.constant 0 : index
    %c0_154 = arith.constant 0 : index
    %391 = vector.load %arg5[%c0_153, %c0_154] : memref<128x512xbf16, #tpu.memory_space<vmem>>, vector<128x512xbf16>
    %cst_155 = arith.constant dense<0.000000e+00> : vector<8x512xf32>
    %392 = tpu.matmul %390, %391, %cst_155 {dimension_numbers = #tpu.dot_dimension_numbers<[1], [0], [0], [1], [0, 0, 1, 1], [], []>} : vector<8x128xbf16>, vector<128x512xbf16>, vector<8x512xf32> -> vector<8x512xf32>
    %c10_156 = arith.constant 10 : index
    %c0_157 = arith.constant 0 : index
    %c0_158 = arith.constant 0 : index
    %393 = vector.load %arg12[%c10_156, %c0_157, %c0_158] : memref<12x8x512xf32, #tpu.memory_space<vmem>>, vector<1x8x512xf32>
    %394 = vector.shape_cast %393 : vector<1x8x512xf32> to vector<8x512xf32>
    %395 = arith.addf %394, %392 : vector<8x512xf32>
    %396 = vector.extract_strided_slice %395 {offsets = [0, 0], sizes = [8, 128], strides = [1, 1]} : vector<8x512xf32> to vector<8x128xf32>
    %397 = arith.negf %396 : vector<8x128xf32>
    %398 = math.exp %397 : vector<8x128xf32>
    %cst_159 = arith.constant 1.000000e+00 : f32
    %399 = vector.broadcast %cst_159 : f32 to vector<8x128xf32>
    %400 = arith.addf %399, %398 : vector<8x128xf32>
    %401 = arith.divf %399, %400 : vector<8x128xf32>
    %402 = vector.extract_strided_slice %395 {offsets = [0, 128], sizes = [8, 128], strides = [1, 1]} : vector<8x512xf32> to vector<8x128xf32>
    %403 = arith.negf %402 : vector<8x128xf32>
    %404 = math.exp %403 : vector<8x128xf32>
    %cst_160 = arith.constant 1.000000e+00 : f32
    %405 = vector.broadcast %cst_160 : f32 to vector<8x128xf32>
    %406 = arith.addf %405, %404 : vector<8x128xf32>
    %407 = arith.divf %405, %406 : vector<8x128xf32>
    %408 = vector.extract_strided_slice %395 {offsets = [0, 256], sizes = [8, 128], strides = [1, 1]} : vector<8x512xf32> to vector<8x128xf32>
    %409 = math.tanh %408 : vector<8x128xf32>
    %410 = vector.extract_strided_slice %395 {offsets = [0, 384], sizes = [8, 128], strides = [1, 1]} : vector<8x512xf32> to vector<8x128xf32>
    %411 = arith.negf %410 : vector<8x128xf32>
    %412 = math.exp %411 : vector<8x128xf32>
    %cst_161 = arith.constant 1.000000e+00 : f32
    %413 = vector.broadcast %cst_161 : f32 to vector<8x128xf32>
    %414 = arith.addf %413, %412 : vector<8x128xf32>
    %415 = arith.divf %413, %414 : vector<8x128xf32>
    %416 = arith.mulf %407, %381 : vector<8x128xf32>
    %417 = arith.mulf %401, %409 : vector<8x128xf32>
    %418 = arith.addf %416, %417 : vector<8x128xf32>
    %419 = math.tanh %418 : vector<8x128xf32>
    %420 = arith.mulf %415, %419 : vector<8x128xf32>
    %c10_162 = arith.constant 10 : index
    %c0_163 = arith.constant 0 : index
    %c0_164 = arith.constant 0 : index
    %421 = vector.load %arg13[%c10_162, %c0_163, %c0_164] : memref<12x8x256xf32, #tpu.memory_space<vmem>>, vector<1x8x128xf32>
    %422 = vector.shape_cast %421 : vector<1x8x128xf32> to vector<8x128xf32>
    %423 = vector.shape_cast %420 : vector<8x128xf32> to vector<1x8x128xf32>
    tpu.vector_store %arg13[%c10_162, %c0_163, %c0_164], %423 {strides = array<i32>} : memref<12x8x256xf32, #tpu.memory_space<vmem>>, vector<1x8x128xf32>,
    %c1_165 = arith.constant 1 : index
    %c0_166 = arith.constant 0 : index
    %c128_167 = arith.constant 128 : index
    %424 = vector.load %arg13[%c1_165, %c0_166, %c128_167] : memref<12x8x256xf32, #tpu.memory_space<vmem>>, vector<1x8x128xf32>
    %425 = vector.shape_cast %424 : vector<1x8x128xf32> to vector<8x128xf32>
    %426 = vector.shape_cast %420 : vector<8x128xf32> to vector<1x8x128xf32>
    tpu.vector_store %arg13[%c1_165, %c0_166, %c128_167], %426 {strides = array<i32>} : memref<12x8x256xf32, #tpu.memory_space<vmem>>, vector<1x8x128xf32>,
    %427 = arith.truncf %420 : vector<8x128xf32> to vector<8x128xbf16>
    %c0_168 = arith.constant 0 : index
    %c0_169 = arith.constant 0 : index
    %428 = vector.load %arg5[%c0_168, %c0_169] : memref<128x512xbf16, #tpu.memory_space<vmem>>, vector<128x512xbf16>
    %cst_170 = arith.constant dense<0.000000e+00> : vector<8x512xf32>
    %429 = tpu.matmul %427, %428, %cst_170 {dimension_numbers = #tpu.dot_dimension_numbers<[1], [0], [0], [1], [0, 0, 1, 1], [], []>} : vector<8x128xbf16>, vector<128x512xbf16>, vector<8x512xf32> -> vector<8x512xf32>
    %c11_171 = arith.constant 11 : index
    %c0_172 = arith.constant 0 : index
    %c0_173 = arith.constant 0 : index
    %430 = vector.load %arg12[%c11_171, %c0_172, %c0_173] : memref<12x8x512xf32, #tpu.memory_space<vmem>>, vector<1x8x512xf32>
    %431 = vector.shape_cast %430 : vector<1x8x512xf32> to vector<8x512xf32>
    %432 = arith.addf %431, %429 : vector<8x512xf32>
    %433 = vector.extract_strided_slice %432 {offsets = [0, 0], sizes = [8, 128], strides = [1, 1]} : vector<8x512xf32> to vector<8x128xf32>
    %434 = arith.negf %433 : vector<8x128xf32>
    %435 = math.exp %434 : vector<8x128xf32>
    %cst_174 = arith.constant 1.000000e+00 : f32
    %436 = vector.broadcast %cst_174 : f32 to vector<8x128xf32>
    %437 = arith.addf %436, %435 : vector<8x128xf32>
    %438 = arith.divf %436, %437 : vector<8x128xf32>
    %439 = vector.extract_strided_slice %432 {offsets = [0, 128], sizes = [8, 128], strides = [1, 1]} : vector<8x512xf32> to vector<8x128xf32>
    %440 = arith.negf %439 : vector<8x128xf32>
    %441 = math.exp %440 : vector<8x128xf32>
    %cst_175 = arith.constant 1.000000e+00 : f32
    %442 = vector.broadcast %cst_175 : f32 to vector<8x128xf32>
    %443 = arith.addf %442, %441 : vector<8x128xf32>
    %444 = arith.divf %442, %443 : vector<8x128xf32>
    %445 = vector.extract_strided_slice %432 {offsets = [0, 256], sizes = [8, 128], strides = [1, 1]} : vector<8x512xf32> to vector<8x128xf32>
    %446 = math.tanh %445 : vector<8x128xf32>
    %447 = vector.extract_strided_slice %432 {offsets = [0, 384], sizes = [8, 128], strides = [1, 1]} : vector<8x512xf32> to vector<8x128xf32>
    %448 = arith.negf %447 : vector<8x128xf32>
    %449 = math.exp %448 : vector<8x128xf32>
    %cst_176 = arith.constant 1.000000e+00 : f32
    %450 = vector.broadcast %cst_176 : f32 to vector<8x128xf32>
    %451 = arith.addf %450, %449 : vector<8x128xf32>
    %452 = arith.divf %450, %451 : vector<8x128xf32>
    %453 = arith.mulf %444, %418 : vector<8x128xf32>
    %454 = arith.mulf %438, %446 : vector<8x128xf32>
    %455 = arith.addf %453, %454 : vector<8x128xf32>
    %456 = math.tanh %455 : vector<8x128xf32>
    %457 = arith.mulf %452, %456 : vector<8x128xf32>
    %c11_177 = arith.constant 11 : index
    %c0_178 = arith.constant 0 : index
    %c0_179 = arith.constant 0 : index
    %458 = vector.load %arg13[%c11_177, %c0_178, %c0_179] : memref<12x8x256xf32, #tpu.memory_space<vmem>>, vector<1x8x128xf32>
    %459 = vector.shape_cast %458 : vector<1x8x128xf32> to vector<8x128xf32>
    %460 = vector.shape_cast %457 : vector<8x128xf32> to vector<1x8x128xf32>
    tpu.vector_store %arg13[%c11_177, %c0_178, %c0_179], %460 {strides = array<i32>} : memref<12x8x256xf32, #tpu.memory_space<vmem>>, vector<1x8x128xf32>,
    %c0_180 = arith.constant 0 : index
    %c0_181 = arith.constant 0 : index
    %c128_182 = arith.constant 128 : index
    %461 = vector.load %arg13[%c0_180, %c0_181, %c128_182] : memref<12x8x256xf32, #tpu.memory_space<vmem>>, vector<1x8x128xf32>
    %462 = vector.shape_cast %461 : vector<1x8x128xf32> to vector<8x128xf32>
    %463 = vector.shape_cast %457 : vector<8x128xf32> to vector<1x8x128xf32>
    tpu.vector_store %arg13[%c0_180, %c0_181, %c128_182], %463 {strides = array<i32>} : memref<12x8x256xf32, #tpu.memory_space<vmem>>, vector<1x8x128xf32>,
    %c0_183 = arith.constant 0 : index
    %c0_184 = arith.constant 0 : index
    %c0_185 = arith.constant 0 : index
    %464 = vector.load %arg13[%c0_183, %c0_184, %c0_185] : memref<12x8x256xf32, #tpu.memory_space<vmem>>, vector<12x8x256xf32>
    %465 = vector.shape_cast %464 : vector<12x8x256xf32> to vector<96x256xf32>
    %466 = arith.truncf %465 : vector<96x256xf32> to vector<96x256xbf16>
    %c0_186 = arith.constant 0 : index
    %c0_187 = arith.constant 0 : index
    %467 = vector.load %arg6[%c0_186, %c0_187] : memref<256x512xbf16, #tpu.memory_space<vmem>>, vector<256x512xbf16>
    %cst_188 = arith.constant dense<0.000000e+00> : vector<96x512xf32>
    %468 = tpu.matmul %466, %467, %cst_188 {dimension_numbers = #tpu.dot_dimension_numbers<[1], [0], [0], [1], [0, 0, 1, 1], [], []>} : vector<96x256xbf16>, vector<256x512xbf16>, vector<96x512xf32> -> vector<96x512xf32>
    %c0_189 = arith.constant 0 : index
    %c0_190 = arith.constant 0 : index
    %469 = vector.load %arg7[%c0_189, %c0_190] : memref<1x512xf32, #tpu.memory_space<vmem>>, vector<1x512xf32>
    %470 = vector.broadcast %469 : vector<1x512xf32> to vector<96x512xf32>
    %471 = arith.addf %468, %470 : vector<96x512xf32>
    %472 = vector.shape_cast %471 : vector<96x512xf32> to vector<12x8x512xf32>
    %c0_191 = arith.constant 0 : index
    %c0_192 = arith.constant 0 : index
    %c0_193 = arith.constant 0 : index
    %473 = vector.load %arg12[%c0_191, %c0_192, %c0_193] : memref<12x8x512xf32, #tpu.memory_space<vmem>>, vector<12x8x512xf32>
    tpu.vector_store %arg12[%c0_191, %c0_192, %c0_193], %472 {strides = array<i32>} : memref<12x8x512xf32, #tpu.memory_space<vmem>>, vector<12x8x512xf32>,
    %cst_194 = arith.constant 0.000000e+00 : f32
    %474 = vector.broadcast %cst_194 : f32 to vector<8x128xf32>
    %cst_195 = arith.constant 0.000000e+00 : f32
    %475 = vector.broadcast %cst_195 : f32 to vector<8x128xf32>
    %476 = arith.truncf %474 : vector<8x128xf32> to vector<8x128xbf16>
    %c0_196 = arith.constant 0 : index
    %c0_197 = arith.constant 0 : index
    %477 = vector.load %arg8[%c0_196, %c0_197] : memref<128x512xbf16, #tpu.memory_space<vmem>>, vector<128x512xbf16>
    %cst_198 = arith.constant dense<0.000000e+00> : vector<8x512xf32>
    %478 = tpu.matmul %476, %477, %cst_198 {dimension_numbers = #tpu.dot_dimension_numbers<[1], [0], [0], [1], [0, 0, 1, 1], [], []>} : vector<8x128xbf16>, vector<128x512xbf16>, vector<8x512xf32> -> vector<8x512xf32>
    %c0_199 = arith.constant 0 : index
    %c0_200 = arith.constant 0 : index
    %c0_201 = arith.constant 0 : index
    %479 = vector.load %arg12[%c0_199, %c0_200, %c0_201] : memref<12x8x512xf32, #tpu.memory_space<vmem>>, vector<1x8x512xf32>
    %480 = vector.shape_cast %479 : vector<1x8x512xf32> to vector<8x512xf32>
    %481 = arith.addf %480, %478 : vector<8x512xf32>
    %482 = vector.extract_strided_slice %481 {offsets = [0, 0], sizes = [8, 128], strides = [1, 1]} : vector<8x512xf32> to vector<8x128xf32>
    %483 = arith.negf %482 : vector<8x128xf32>
    %484 = math.exp %483 : vector<8x128xf32>
    %cst_202 = arith.constant 1.000000e+00 : f32
    %485 = vector.broadcast %cst_202 : f32 to vector<8x128xf32>
    %486 = arith.addf %485, %484 : vector<8x128xf32>
    %487 = arith.divf %485, %486 : vector<8x128xf32>
    %488 = vector.extract_strided_slice %481 {offsets = [0, 128], sizes = [8, 128], strides = [1, 1]} : vector<8x512xf32> to vector<8x128xf32>
    %489 = arith.negf %488 : vector<8x128xf32>
    %490 = math.exp %489 : vector<8x128xf32>
    %cst_203 = arith.constant 1.000000e+00 : f32
    %491 = vector.broadcast %cst_203 : f32 to vector<8x128xf32>
    %492 = arith.addf %491, %490 : vector<8x128xf32>
    %493 = arith.divf %491, %492 : vector<8x128xf32>
    %494 = vector.extract_strided_slice %481 {offsets = [0, 256], sizes = [8, 128], strides = [1, 1]} : vector<8x512xf32> to vector<8x128xf32>
    %495 = math.tanh %494 : vector<8x128xf32>
    %496 = vector.extract_strided_slice %481 {offsets = [0, 384], sizes = [8, 128], strides = [1, 1]} : vector<8x512xf32> to vector<8x128xf32>
    %497 = arith.negf %496 : vector<8x128xf32>
    %498 = math.exp %497 : vector<8x128xf32>
    %cst_204 = arith.constant 1.000000e+00 : f32
    %499 = vector.broadcast %cst_204 : f32 to vector<8x128xf32>
    %500 = arith.addf %499, %498 : vector<8x128xf32>
    %501 = arith.divf %499, %500 : vector<8x128xf32>
    %502 = arith.mulf %493, %475 : vector<8x128xf32>
    %503 = arith.mulf %487, %495 : vector<8x128xf32>
    %504 = arith.addf %502, %503 : vector<8x128xf32>
    %505 = math.tanh %504 : vector<8x128xf32>
    %506 = arith.mulf %501, %505 : vector<8x128xf32>
    %507 = arith.truncf %506 : vector<8x128xf32> to vector<8x128xbf16>
    %c0_205 = arith.constant 0 : index
    %c0_206 = arith.constant 0 : index
    %508 = vector.load %arg8[%c0_205, %c0_206] : memref<128x512xbf16, #tpu.memory_space<vmem>>, vector<128x512xbf16>
    %cst_207 = arith.constant dense<0.000000e+00> : vector<8x512xf32>
    %509 = tpu.matmul %507, %508, %cst_207 {dimension_numbers = #tpu.dot_dimension_numbers<[1], [0], [0], [1], [0, 0, 1, 1], [], []>} : vector<8x128xbf16>, vector<128x512xbf16>, vector<8x512xf32> -> vector<8x512xf32>
    %c1_208 = arith.constant 1 : index
    %c0_209 = arith.constant 0 : index
    %c0_210 = arith.constant 0 : index
    %510 = vector.load %arg12[%c1_208, %c0_209, %c0_210] : memref<12x8x512xf32, #tpu.memory_space<vmem>>, vector<1x8x512xf32>
    %511 = vector.shape_cast %510 : vector<1x8x512xf32> to vector<8x512xf32>
    %512 = arith.addf %511, %509 : vector<8x512xf32>
    %513 = vector.extract_strided_slice %512 {offsets = [0, 0], sizes = [8, 128], strides = [1, 1]} : vector<8x512xf32> to vector<8x128xf32>
    %514 = arith.negf %513 : vector<8x128xf32>
    %515 = math.exp %514 : vector<8x128xf32>
    %cst_211 = arith.constant 1.000000e+00 : f32
    %516 = vector.broadcast %cst_211 : f32 to vector<8x128xf32>
    %517 = arith.addf %516, %515 : vector<8x128xf32>
    %518 = arith.divf %516, %517 : vector<8x128xf32>
    %519 = vector.extract_strided_slice %512 {offsets = [0, 128], sizes = [8, 128], strides = [1, 1]} : vector<8x512xf32> to vector<8x128xf32>
    %520 = arith.negf %519 : vector<8x128xf32>
    %521 = math.exp %520 : vector<8x128xf32>
    %cst_212 = arith.constant 1.000000e+00 : f32
    %522 = vector.broadcast %cst_212 : f32 to vector<8x128xf32>
    %523 = arith.addf %522, %521 : vector<8x128xf32>
    %524 = arith.divf %522, %523 : vector<8x128xf32>
    %525 = vector.extract_strided_slice %512 {offsets = [0, 256], sizes = [8, 128], strides = [1, 1]} : vector<8x512xf32> to vector<8x128xf32>
    %526 = math.tanh %525 : vector<8x128xf32>
    %527 = vector.extract_strided_slice %512 {offsets = [0, 384], sizes = [8, 128], strides = [1, 1]} : vector<8x512xf32> to vector<8x128xf32>
    %528 = arith.negf %527 : vector<8x128xf32>
    %529 = math.exp %528 : vector<8x128xf32>
    %cst_213 = arith.constant 1.000000e+00 : f32
    %530 = vector.broadcast %cst_213 : f32 to vector<8x128xf32>
    %531 = arith.addf %530, %529 : vector<8x128xf32>
    %532 = arith.divf %530, %531 : vector<8x128xf32>
    %533 = arith.mulf %524, %504 : vector<8x128xf32>
    %534 = arith.mulf %518, %526 : vector<8x128xf32>
    %535 = arith.addf %533, %534 : vector<8x128xf32>
    %536 = math.tanh %535 : vector<8x128xf32>
    %537 = arith.mulf %532, %536 : vector<8x128xf32>
    %538 = arith.truncf %537 : vector<8x128xf32> to vector<8x128xbf16>
    %c0_214 = arith.constant 0 : index
    %c0_215 = arith.constant 0 : index
    %539 = vector.load %arg8[%c0_214, %c0_215] : memref<128x512xbf16, #tpu.memory_space<vmem>>, vector<128x512xbf16>
    %cst_216 = arith.constant dense<0.000000e+00> : vector<8x512xf32>
    %540 = tpu.matmul %538, %539, %cst_216 {dimension_numbers = #tpu.dot_dimension_numbers<[1], [0], [0], [1], [0, 0, 1, 1], [], []>} : vector<8x128xbf16>, vector<128x512xbf16>, vector<8x512xf32> -> vector<8x512xf32>
    %c2_217 = arith.constant 2 : index
    %c0_218 = arith.constant 0 : index
    %c0_219 = arith.constant 0 : index
    %541 = vector.load %arg12[%c2_217, %c0_218, %c0_219] : memref<12x8x512xf32, #tpu.memory_space<vmem>>, vector<1x8x512xf32>
    %542 = vector.shape_cast %541 : vector<1x8x512xf32> to vector<8x512xf32>
    %543 = arith.addf %542, %540 : vector<8x512xf32>
    %544 = vector.extract_strided_slice %543 {offsets = [0, 0], sizes = [8, 128], strides = [1, 1]} : vector<8x512xf32> to vector<8x128xf32>
    %545 = arith.negf %544 : vector<8x128xf32>
    %546 = math.exp %545 : vector<8x128xf32>
    %cst_220 = arith.constant 1.000000e+00 : f32
    %547 = vector.broadcast %cst_220 : f32 to vector<8x128xf32>
    %548 = arith.addf %547, %546 : vector<8x128xf32>
    %549 = arith.divf %547, %548 : vector<8x128xf32>
    %550 = vector.extract_strided_slice %543 {offsets = [0, 128], sizes = [8, 128], strides = [1, 1]} : vector<8x512xf32> to vector<8x128xf32>
    %551 = arith.negf %550 : vector<8x128xf32>
    %552 = math.exp %551 : vector<8x128xf32>
    %cst_221 = arith.constant 1.000000e+00 : f32
    %553 = vector.broadcast %cst_221 : f32 to vector<8x128xf32>
    %554 = arith.addf %553, %552 : vector<8x128xf32>
    %555 = arith.divf %553, %554 : vector<8x128xf32>
    %556 = vector.extract_strided_slice %543 {offsets = [0, 256], sizes = [8, 128], strides = [1, 1]} : vector<8x512xf32> to vector<8x128xf32>
    %557 = math.tanh %556 : vector<8x128xf32>
    %558 = vector.extract_strided_slice %543 {offsets = [0, 384], sizes = [8, 128], strides = [1, 1]} : vector<8x512xf32> to vector<8x128xf32>
    %559 = arith.negf %558 : vector<8x128xf32>
    %560 = math.exp %559 : vector<8x128xf32>
    %cst_222 = arith.constant 1.000000e+00 : f32
    %561 = vector.broadcast %cst_222 : f32 to vector<8x128xf32>
    %562 = arith.addf %561, %560 : vector<8x128xf32>
    %563 = arith.divf %561, %562 : vector<8x128xf32>
    %564 = arith.mulf %555, %535 : vector<8x128xf32>
    %565 = arith.mulf %549, %557 : vector<8x128xf32>
    %566 = arith.addf %564, %565 : vector<8x128xf32>
    %567 = math.tanh %566 : vector<8x128xf32>
    %568 = arith.mulf %563, %567 : vector<8x128xf32>
    %569 = arith.truncf %568 : vector<8x128xf32> to vector<8x128xbf16>
    %c0_223 = arith.constant 0 : index
    %c0_224 = arith.constant 0 : index
    %570 = vector.load %arg8[%c0_223, %c0_224] : memref<128x512xbf16, #tpu.memory_space<vmem>>, vector<128x512xbf16>
    %cst_225 = arith.constant dense<0.000000e+00> : vector<8x512xf32>
    %571 = tpu.matmul %569, %570, %cst_225 {dimension_numbers = #tpu.dot_dimension_numbers<[1], [0], [0], [1], [0, 0, 1, 1], [], []>} : vector<8x128xbf16>, vector<128x512xbf16>, vector<8x512xf32> -> vector<8x512xf32>
    %c3_226 = arith.constant 3 : index
    %c0_227 = arith.constant 0 : index
    %c0_228 = arith.constant 0 : index
    %572 = vector.load %arg12[%c3_226, %c0_227, %c0_228] : memref<12x8x512xf32, #tpu.memory_space<vmem>>, vector<1x8x512xf32>
    %573 = vector.shape_cast %572 : vector<1x8x512xf32> to vector<8x512xf32>
    %574 = arith.addf %573, %571 : vector<8x512xf32>
    %575 = vector.extract_strided_slice %574 {offsets = [0, 0], sizes = [8, 128], strides = [1, 1]} : vector<8x512xf32> to vector<8x128xf32>
    %576 = arith.negf %575 : vector<8x128xf32>
    %577 = math.exp %576 : vector<8x128xf32>
    %cst_229 = arith.constant 1.000000e+00 : f32
    %578 = vector.broadcast %cst_229 : f32 to vector<8x128xf32>
    %579 = arith.addf %578, %577 : vector<8x128xf32>
    %580 = arith.divf %578, %579 : vector<8x128xf32>
    %581 = vector.extract_strided_slice %574 {offsets = [0, 128], sizes = [8, 128], strides = [1, 1]} : vector<8x512xf32> to vector<8x128xf32>
    %582 = arith.negf %581 : vector<8x128xf32>
    %583 = math.exp %582 : vector<8x128xf32>
    %cst_230 = arith.constant 1.000000e+00 : f32
    %584 = vector.broadcast %cst_230 : f32 to vector<8x128xf32>
    %585 = arith.addf %584, %583 : vector<8x128xf32>
    %586 = arith.divf %584, %585 : vector<8x128xf32>
    %587 = vector.extract_strided_slice %574 {offsets = [0, 256], sizes = [8, 128], strides = [1, 1]} : vector<8x512xf32> to vector<8x128xf32>
    %588 = math.tanh %587 : vector<8x128xf32>
    %589 = vector.extract_strided_slice %574 {offsets = [0, 384], sizes = [8, 128], strides = [1, 1]} : vector<8x512xf32> to vector<8x128xf32>
    %590 = arith.negf %589 : vector<8x128xf32>
    %591 = math.exp %590 : vector<8x128xf32>
    %cst_231 = arith.constant 1.000000e+00 : f32
    %592 = vector.broadcast %cst_231 : f32 to vector<8x128xf32>
    %593 = arith.addf %592, %591 : vector<8x128xf32>
    %594 = arith.divf %592, %593 : vector<8x128xf32>
    %595 = arith.mulf %586, %566 : vector<8x128xf32>
    %596 = arith.mulf %580, %588 : vector<8x128xf32>
    %597 = arith.addf %595, %596 : vector<8x128xf32>
    %598 = math.tanh %597 : vector<8x128xf32>
    %599 = arith.mulf %594, %598 : vector<8x128xf32>
    %600 = arith.truncf %599 : vector<8x128xf32> to vector<8x128xbf16>
    %c0_232 = arith.constant 0 : index
    %c0_233 = arith.constant 0 : index
    %601 = vector.load %arg8[%c0_232, %c0_233] : memref<128x512xbf16, #tpu.memory_space<vmem>>, vector<128x512xbf16>
    %cst_234 = arith.constant dense<0.000000e+00> : vector<8x512xf32>
    %602 = tpu.matmul %600, %601, %cst_234 {dimension_numbers = #tpu.dot_dimension_numbers<[1], [0], [0], [1], [0, 0, 1, 1], [], []>} : vector<8x128xbf16>, vector<128x512xbf16>, vector<8x512xf32> -> vector<8x512xf32>
    %c4_235 = arith.constant 4 : index
    %c0_236 = arith.constant 0 : index
    %c0_237 = arith.constant 0 : index
    %603 = vector.load %arg12[%c4_235, %c0_236, %c0_237] : memref<12x8x512xf32, #tpu.memory_space<vmem>>, vector<1x8x512xf32>
    %604 = vector.shape_cast %603 : vector<1x8x512xf32> to vector<8x512xf32>
    %605 = arith.addf %604, %602 : vector<8x512xf32>
    %606 = vector.extract_strided_slice %605 {offsets = [0, 0], sizes = [8, 128], strides = [1, 1]} : vector<8x512xf32> to vector<8x128xf32>
    %607 = arith.negf %606 : vector<8x128xf32>
    %608 = math.exp %607 : vector<8x128xf32>
    %cst_238 = arith.constant 1.000000e+00 : f32
    %609 = vector.broadcast %cst_238 : f32 to vector<8x128xf32>
    %610 = arith.addf %609, %608 : vector<8x128xf32>
    %611 = arith.divf %609, %610 : vector<8x128xf32>
    %612 = vector.extract_strided_slice %605 {offsets = [0, 128], sizes = [8, 128], strides = [1, 1]} : vector<8x512xf32> to vector<8x128xf32>
    %613 = arith.negf %612 : vector<8x128xf32>
    %614 = math.exp %613 : vector<8x128xf32>
    %cst_239 = arith.constant 1.000000e+00 : f32
    %615 = vector.broadcast %cst_239 : f32 to vector<8x128xf32>
    %616 = arith.addf %615, %614 : vector<8x128xf32>
    %617 = arith.divf %615, %616 : vector<8x128xf32>
    %618 = vector.extract_strided_slice %605 {offsets = [0, 256], sizes = [8, 128], strides = [1, 1]} : vector<8x512xf32> to vector<8x128xf32>
    %619 = math.tanh %618 : vector<8x128xf32>
    %620 = vector.extract_strided_slice %605 {offsets = [0, 384], sizes = [8, 128], strides = [1, 1]} : vector<8x512xf32> to vector<8x128xf32>
    %621 = arith.negf %620 : vector<8x128xf32>
    %622 = math.exp %621 : vector<8x128xf32>
    %cst_240 = arith.constant 1.000000e+00 : f32
    %623 = vector.broadcast %cst_240 : f32 to vector<8x128xf32>
    %624 = arith.addf %623, %622 : vector<8x128xf32>
    %625 = arith.divf %623, %624 : vector<8x128xf32>
    %626 = arith.mulf %617, %597 : vector<8x128xf32>
    %627 = arith.mulf %611, %619 : vector<8x128xf32>
    %628 = arith.addf %626, %627 : vector<8x128xf32>
    %629 = math.tanh %628 : vector<8x128xf32>
    %630 = arith.mulf %625, %629 : vector<8x128xf32>
    %631 = arith.truncf %630 : vector<8x128xf32> to vector<8x128xbf16>
    %c0_241 = arith.constant 0 : index
    %c0_242 = arith.constant 0 : index
    %632 = vector.load %arg8[%c0_241, %c0_242] : memref<128x512xbf16, #tpu.memory_space<vmem>>, vector<128x512xbf16>
    %cst_243 = arith.constant dense<0.000000e+00> : vector<8x512xf32>
    %633 = tpu.matmul %631, %632, %cst_243 {dimension_numbers = #tpu.dot_dimension_numbers<[1], [0], [0], [1], [0, 0, 1, 1], [], []>} : vector<8x128xbf16>, vector<128x512xbf16>, vector<8x512xf32> -> vector<8x512xf32>
    %c5_244 = arith.constant 5 : index
    %c0_245 = arith.constant 0 : index
    %c0_246 = arith.constant 0 : index
    %634 = vector.load %arg12[%c5_244, %c0_245, %c0_246] : memref<12x8x512xf32, #tpu.memory_space<vmem>>, vector<1x8x512xf32>
    %635 = vector.shape_cast %634 : vector<1x8x512xf32> to vector<8x512xf32>
    %636 = arith.addf %635, %633 : vector<8x512xf32>
    %637 = vector.extract_strided_slice %636 {offsets = [0, 0], sizes = [8, 128], strides = [1, 1]} : vector<8x512xf32> to vector<8x128xf32>
    %638 = arith.negf %637 : vector<8x128xf32>
    %639 = math.exp %638 : vector<8x128xf32>
    %cst_247 = arith.constant 1.000000e+00 : f32
    %640 = vector.broadcast %cst_247 : f32 to vector<8x128xf32>
    %641 = arith.addf %640, %639 : vector<8x128xf32>
    %642 = arith.divf %640, %641 : vector<8x128xf32>
    %643 = vector.extract_strided_slice %636 {offsets = [0, 128], sizes = [8, 128], strides = [1, 1]} : vector<8x512xf32> to vector<8x128xf32>
    %644 = arith.negf %643 : vector<8x128xf32>
    %645 = math.exp %644 : vector<8x128xf32>
    %cst_248 = arith.constant 1.000000e+00 : f32
    %646 = vector.broadcast %cst_248 : f32 to vector<8x128xf32>
    %647 = arith.addf %646, %645 : vector<8x128xf32>
    %648 = arith.divf %646, %647 : vector<8x128xf32>
    %649 = vector.extract_strided_slice %636 {offsets = [0, 256], sizes = [8, 128], strides = [1, 1]} : vector<8x512xf32> to vector<8x128xf32>
    %650 = math.tanh %649 : vector<8x128xf32>
    %651 = vector.extract_strided_slice %636 {offsets = [0, 384], sizes = [8, 128], strides = [1, 1]} : vector<8x512xf32> to vector<8x128xf32>
    %652 = arith.negf %651 : vector<8x128xf32>
    %653 = math.exp %652 : vector<8x128xf32>
    %cst_249 = arith.constant 1.000000e+00 : f32
    %654 = vector.broadcast %cst_249 : f32 to vector<8x128xf32>
    %655 = arith.addf %654, %653 : vector<8x128xf32>
    %656 = arith.divf %654, %655 : vector<8x128xf32>
    %657 = arith.mulf %648, %628 : vector<8x128xf32>
    %658 = arith.mulf %642, %650 : vector<8x128xf32>
    %659 = arith.addf %657, %658 : vector<8x128xf32>
    %660 = math.tanh %659 : vector<8x128xf32>
    %661 = arith.mulf %656, %660 : vector<8x128xf32>
    %662 = arith.truncf %661 : vector<8x128xf32> to vector<8x128xbf16>
    %c0_250 = arith.constant 0 : index
    %c0_251 = arith.constant 0 : index
    %663 = vector.load %arg8[%c0_250, %c0_251] : memref<128x512xbf16, #tpu.memory_space<vmem>>, vector<128x512xbf16>
    %cst_252 = arith.constant dense<0.000000e+00> : vector<8x512xf32>
    %664 = tpu.matmul %662, %663, %cst_252 {dimension_numbers = #tpu.dot_dimension_numbers<[1], [0], [0], [1], [0, 0, 1, 1], [], []>} : vector<8x128xbf16>, vector<128x512xbf16>, vector<8x512xf32> -> vector<8x512xf32>
    %c6_253 = arith.constant 6 : index
    %c0_254 = arith.constant 0 : index
    %c0_255 = arith.constant 0 : index
    %665 = vector.load %arg12[%c6_253, %c0_254, %c0_255] : memref<12x8x512xf32, #tpu.memory_space<vmem>>, vector<1x8x512xf32>
    %666 = vector.shape_cast %665 : vector<1x8x512xf32> to vector<8x512xf32>
    %667 = arith.addf %666, %664 : vector<8x512xf32>
    %668 = vector.extract_strided_slice %667 {offsets = [0, 0], sizes = [8, 128], strides = [1, 1]} : vector<8x512xf32> to vector<8x128xf32>
    %669 = arith.negf %668 : vector<8x128xf32>
    %670 = math.exp %669 : vector<8x128xf32>
    %cst_256 = arith.constant 1.000000e+00 : f32
    %671 = vector.broadcast %cst_256 : f32 to vector<8x128xf32>
    %672 = arith.addf %671, %670 : vector<8x128xf32>
    %673 = arith.divf %671, %672 : vector<8x128xf32>
    %674 = vector.extract_strided_slice %667 {offsets = [0, 128], sizes = [8, 128], strides = [1, 1]} : vector<8x512xf32> to vector<8x128xf32>
    %675 = arith.negf %674 : vector<8x128xf32>
    %676 = math.exp %675 : vector<8x128xf32>
    %cst_257 = arith.constant 1.000000e+00 : f32
    %677 = vector.broadcast %cst_257 : f32 to vector<8x128xf32>
    %678 = arith.addf %677, %676 : vector<8x128xf32>
    %679 = arith.divf %677, %678 : vector<8x128xf32>
    %680 = vector.extract_strided_slice %667 {offsets = [0, 256], sizes = [8, 128], strides = [1, 1]} : vector<8x512xf32> to vector<8x128xf32>
    %681 = math.tanh %680 : vector<8x128xf32>
    %682 = vector.extract_strided_slice %667 {offsets = [0, 384], sizes = [8, 128], strides = [1, 1]} : vector<8x512xf32> to vector<8x128xf32>
    %683 = arith.negf %682 : vector<8x128xf32>
    %684 = math.exp %683 : vector<8x128xf32>
    %cst_258 = arith.constant 1.000000e+00 : f32
    %685 = vector.broadcast %cst_258 : f32 to vector<8x128xf32>
    %686 = arith.addf %685, %684 : vector<8x128xf32>
    %687 = arith.divf %685, %686 : vector<8x128xf32>
    %688 = arith.mulf %679, %659 : vector<8x128xf32>
    %689 = arith.mulf %673, %681 : vector<8x128xf32>
    %690 = arith.addf %688, %689 : vector<8x128xf32>
    %691 = math.tanh %690 : vector<8x128xf32>
    %692 = arith.mulf %687, %691 : vector<8x128xf32>
    %693 = arith.truncf %692 : vector<8x128xf32> to vector<8x128xbf16>
    %c0_259 = arith.constant 0 : index
    %c0_260 = arith.constant 0 : index
    %694 = vector.load %arg8[%c0_259, %c0_260] : memref<128x512xbf16, #tpu.memory_space<vmem>>, vector<128x512xbf16>
    %cst_261 = arith.constant dense<0.000000e+00> : vector<8x512xf32>
    %695 = tpu.matmul %693, %694, %cst_261 {dimension_numbers = #tpu.dot_dimension_numbers<[1], [0], [0], [1], [0, 0, 1, 1], [], []>} : vector<8x128xbf16>, vector<128x512xbf16>, vector<8x512xf32> -> vector<8x512xf32>
    %c7_262 = arith.constant 7 : index
    %c0_263 = arith.constant 0 : index
    %c0_264 = arith.constant 0 : index
    %696 = vector.load %arg12[%c7_262, %c0_263, %c0_264] : memref<12x8x512xf32, #tpu.memory_space<vmem>>, vector<1x8x512xf32>
    %697 = vector.shape_cast %696 : vector<1x8x512xf32> to vector<8x512xf32>
    %698 = arith.addf %697, %695 : vector<8x512xf32>
    %699 = vector.extract_strided_slice %698 {offsets = [0, 0], sizes = [8, 128], strides = [1, 1]} : vector<8x512xf32> to vector<8x128xf32>
    %700 = arith.negf %699 : vector<8x128xf32>
    %701 = math.exp %700 : vector<8x128xf32>
    %cst_265 = arith.constant 1.000000e+00 : f32
    %702 = vector.broadcast %cst_265 : f32 to vector<8x128xf32>
    %703 = arith.addf %702, %701 : vector<8x128xf32>
    %704 = arith.divf %702, %703 : vector<8x128xf32>
    %705 = vector.extract_strided_slice %698 {offsets = [0, 128], sizes = [8, 128], strides = [1, 1]} : vector<8x512xf32> to vector<8x128xf32>
    %706 = arith.negf %705 : vector<8x128xf32>
    %707 = math.exp %706 : vector<8x128xf32>
    %cst_266 = arith.constant 1.000000e+00 : f32
    %708 = vector.broadcast %cst_266 : f32 to vector<8x128xf32>
    %709 = arith.addf %708, %707 : vector<8x128xf32>
    %710 = arith.divf %708, %709 : vector<8x128xf32>
    %711 = vector.extract_strided_slice %698 {offsets = [0, 256], sizes = [8, 128], strides = [1, 1]} : vector<8x512xf32> to vector<8x128xf32>
    %712 = math.tanh %711 : vector<8x128xf32>
    %713 = vector.extract_strided_slice %698 {offsets = [0, 384], sizes = [8, 128], strides = [1, 1]} : vector<8x512xf32> to vector<8x128xf32>
    %714 = arith.negf %713 : vector<8x128xf32>
    %715 = math.exp %714 : vector<8x128xf32>
    %cst_267 = arith.constant 1.000000e+00 : f32
    %716 = vector.broadcast %cst_267 : f32 to vector<8x128xf32>
    %717 = arith.addf %716, %715 : vector<8x128xf32>
    %718 = arith.divf %716, %717 : vector<8x128xf32>
    %719 = arith.mulf %710, %690 : vector<8x128xf32>
    %720 = arith.mulf %704, %712 : vector<8x128xf32>
    %721 = arith.addf %719, %720 : vector<8x128xf32>
    %722 = math.tanh %721 : vector<8x128xf32>
    %723 = arith.mulf %718, %722 : vector<8x128xf32>
    %724 = arith.truncf %723 : vector<8x128xf32> to vector<8x128xbf16>
    %c0_268 = arith.constant 0 : index
    %c0_269 = arith.constant 0 : index
    %725 = vector.load %arg8[%c0_268, %c0_269] : memref<128x512xbf16, #tpu.memory_space<vmem>>, vector<128x512xbf16>
    %cst_270 = arith.constant dense<0.000000e+00> : vector<8x512xf32>
    %726 = tpu.matmul %724, %725, %cst_270 {dimension_numbers = #tpu.dot_dimension_numbers<[1], [0], [0], [1], [0, 0, 1, 1], [], []>} : vector<8x128xbf16>, vector<128x512xbf16>, vector<8x512xf32> -> vector<8x512xf32>
    %c8_271 = arith.constant 8 : index
    %c0_272 = arith.constant 0 : index
    %c0_273 = arith.constant 0 : index
    %727 = vector.load %arg12[%c8_271, %c0_272, %c0_273] : memref<12x8x512xf32, #tpu.memory_space<vmem>>, vector<1x8x512xf32>
    %728 = vector.shape_cast %727 : vector<1x8x512xf32> to vector<8x512xf32>
    %729 = arith.addf %728, %726 : vector<8x512xf32>
    %730 = vector.extract_strided_slice %729 {offsets = [0, 0], sizes = [8, 128], strides = [1, 1]} : vector<8x512xf32> to vector<8x128xf32>
    %731 = arith.negf %730 : vector<8x128xf32>
    %732 = math.exp %731 : vector<8x128xf32>
    %cst_274 = arith.constant 1.000000e+00 : f32
    %733 = vector.broadcast %cst_274 : f32 to vector<8x128xf32>
    %734 = arith.addf %733, %732 : vector<8x128xf32>
    %735 = arith.divf %733, %734 : vector<8x128xf32>
    %736 = vector.extract_strided_slice %729 {offsets = [0, 128], sizes = [8, 128], strides = [1, 1]} : vector<8x512xf32> to vector<8x128xf32>
    %737 = arith.negf %736 : vector<8x128xf32>
    %738 = math.exp %737 : vector<8x128xf32>
    %cst_275 = arith.constant 1.000000e+00 : f32
    %739 = vector.broadcast %cst_275 : f32 to vector<8x128xf32>
    %740 = arith.addf %739, %738 : vector<8x128xf32>
    %741 = arith.divf %739, %740 : vector<8x128xf32>
    %742 = vector.extract_strided_slice %729 {offsets = [0, 256], sizes = [8, 128], strides = [1, 1]} : vector<8x512xf32> to vector<8x128xf32>
    %743 = math.tanh %742 : vector<8x128xf32>
    %744 = vector.extract_strided_slice %729 {offsets = [0, 384], sizes = [8, 128], strides = [1, 1]} : vector<8x512xf32> to vector<8x128xf32>
    %745 = arith.negf %744 : vector<8x128xf32>
    %746 = math.exp %745 : vector<8x128xf32>
    %cst_276 = arith.constant 1.000000e+00 : f32
    %747 = vector.broadcast %cst_276 : f32 to vector<8x128xf32>
    %748 = arith.addf %747, %746 : vector<8x128xf32>
    %749 = arith.divf %747, %748 : vector<8x128xf32>
    %750 = arith.mulf %741, %721 : vector<8x128xf32>
    %751 = arith.mulf %735, %743 : vector<8x128xf32>
    %752 = arith.addf %750, %751 : vector<8x128xf32>
    %753 = math.tanh %752 : vector<8x128xf32>
    %754 = arith.mulf %749, %753 : vector<8x128xf32>
    %755 = arith.truncf %754 : vector<8x128xf32> to vector<8x128xbf16>
    %c0_277 = arith.constant 0 : index
    %c0_278 = arith.constant 0 : index
    %756 = vector.load %arg8[%c0_277, %c0_278] : memref<128x512xbf16, #tpu.memory_space<vmem>>, vector<128x512xbf16>
    %cst_279 = arith.constant dense<0.000000e+00> : vector<8x512xf32>
    %757 = tpu.matmul %755, %756, %cst_279 {dimension_numbers = #tpu.dot_dimension_numbers<[1], [0], [0], [1], [0, 0, 1, 1], [], []>} : vector<8x128xbf16>, vector<128x512xbf16>, vector<8x512xf32> -> vector<8x512xf32>
    %c9_280 = arith.constant 9 : index
    %c0_281 = arith.constant 0 : index
    %c0_282 = arith.constant 0 : index
    %758 = vector.load %arg12[%c9_280, %c0_281, %c0_282] : memref<12x8x512xf32, #tpu.memory_space<vmem>>, vector<1x8x512xf32>
    %759 = vector.shape_cast %758 : vector<1x8x512xf32> to vector<8x512xf32>
    %760 = arith.addf %759, %757 : vector<8x512xf32>
    %761 = vector.extract_strided_slice %760 {offsets = [0, 0], sizes = [8, 128], strides = [1, 1]} : vector<8x512xf32> to vector<8x128xf32>
    %762 = arith.negf %761 : vector<8x128xf32>
    %763 = math.exp %762 : vector<8x128xf32>
    %cst_283 = arith.constant 1.000000e+00 : f32
    %764 = vector.broadcast %cst_283 : f32 to vector<8x128xf32>
    %765 = arith.addf %764, %763 : vector<8x128xf32>
    %766 = arith.divf %764, %765 : vector<8x128xf32>
    %767 = vector.extract_strided_slice %760 {offsets = [0, 128], sizes = [8, 128], strides = [1, 1]} : vector<8x512xf32> to vector<8x128xf32>
    %768 = arith.negf %767 : vector<8x128xf32>
    %769 = math.exp %768 : vector<8x128xf32>
    %cst_284 = arith.constant 1.000000e+00 : f32
    %770 = vector.broadcast %cst_284 : f32 to vector<8x128xf32>
    %771 = arith.addf %770, %769 : vector<8x128xf32>
    %772 = arith.divf %770, %771 : vector<8x128xf32>
    %773 = vector.extract_strided_slice %760 {offsets = [0, 256], sizes = [8, 128], strides = [1, 1]} : vector<8x512xf32> to vector<8x128xf32>
    %774 = math.tanh %773 : vector<8x128xf32>
    %775 = vector.extract_strided_slice %760 {offsets = [0, 384], sizes = [8, 128], strides = [1, 1]} : vector<8x512xf32> to vector<8x128xf32>
    %776 = arith.negf %775 : vector<8x128xf32>
    %777 = math.exp %776 : vector<8x128xf32>
    %cst_285 = arith.constant 1.000000e+00 : f32
    %778 = vector.broadcast %cst_285 : f32 to vector<8x128xf32>
    %779 = arith.addf %778, %777 : vector<8x128xf32>
    %780 = arith.divf %778, %779 : vector<8x128xf32>
    %781 = arith.mulf %772, %752 : vector<8x128xf32>
    %782 = arith.mulf %766, %774 : vector<8x128xf32>
    %783 = arith.addf %781, %782 : vector<8x128xf32>
    %784 = math.tanh %783 : vector<8x128xf32>
    %785 = arith.mulf %780, %784 : vector<8x128xf32>
    %786 = arith.truncf %785 : vector<8x128xf32> to vector<8x128xbf16>
    %c0_286 = arith.constant 0 : index
    %c0_287 = arith.constant 0 : index
    %787 = vector.load %arg8[%c0_286, %c0_287] : memref<128x512xbf16, #tpu.memory_space<vmem>>, vector<128x512xbf16>
    %cst_288 = arith.constant dense<0.000000e+00> : vector<8x512xf32>
    %788 = tpu.matmul %786, %787, %cst_288 {dimension_numbers = #tpu.dot_dimension_numbers<[1], [0], [0], [1], [0, 0, 1, 1], [], []>} : vector<8x128xbf16>, vector<128x512xbf16>, vector<8x512xf32> -> vector<8x512xf32>
    %c10_289 = arith.constant 10 : index
    %c0_290 = arith.constant 0 : index
    %c0_291 = arith.constant 0 : index
    %789 = vector.load %arg12[%c10_289, %c0_290, %c0_291] : memref<12x8x512xf32, #tpu.memory_space<vmem>>, vector<1x8x512xf32>
    %790 = vector.shape_cast %789 : vector<1x8x512xf32> to vector<8x512xf32>
    %791 = arith.addf %790, %788 : vector<8x512xf32>
    %792 = vector.extract_strided_slice %791 {offsets = [0, 0], sizes = [8, 128], strides = [1, 1]} : vector<8x512xf32> to vector<8x128xf32>
    %793 = arith.negf %792 : vector<8x128xf32>
    %794 = math.exp %793 : vector<8x128xf32>
    %cst_292 = arith.constant 1.000000e+00 : f32
    %795 = vector.broadcast %cst_292 : f32 to vector<8x128xf32>
    %796 = arith.addf %795, %794 : vector<8x128xf32>
    %797 = arith.divf %795, %796 : vector<8x128xf32>
    %798 = vector.extract_strided_slice %791 {offsets = [0, 128], sizes = [8, 128], strides = [1, 1]} : vector<8x512xf32> to vector<8x128xf32>
    %799 = arith.negf %798 : vector<8x128xf32>
    %800 = math.exp %799 : vector<8x128xf32>
    %cst_293 = arith.constant 1.000000e+00 : f32
    %801 = vector.broadcast %cst_293 : f32 to vector<8x128xf32>
    %802 = arith.addf %801, %800 : vector<8x128xf32>
    %803 = arith.divf %801, %802 : vector<8x128xf32>
    %804 = vector.extract_strided_slice %791 {offsets = [0, 256], sizes = [8, 128], strides = [1, 1]} : vector<8x512xf32> to vector<8x128xf32>
    %805 = math.tanh %804 : vector<8x128xf32>
    %806 = vector.extract_strided_slice %791 {offsets = [0, 384], sizes = [8, 128], strides = [1, 1]} : vector<8x512xf32> to vector<8x128xf32>
    %807 = arith.negf %806 : vector<8x128xf32>
    %808 = math.exp %807 : vector<8x128xf32>
    %cst_294 = arith.constant 1.000000e+00 : f32
    %809 = vector.broadcast %cst_294 : f32 to vector<8x128xf32>
    %810 = arith.addf %809, %808 : vector<8x128xf32>
    %811 = arith.divf %809, %810 : vector<8x128xf32>
    %812 = arith.mulf %803, %783 : vector<8x128xf32>
    %813 = arith.mulf %797, %805 : vector<8x128xf32>
    %814 = arith.addf %812, %813 : vector<8x128xf32>
    %815 = math.tanh %814 : vector<8x128xf32>
    %816 = arith.mulf %811, %815 : vector<8x128xf32>
    %817 = arith.truncf %816 : vector<8x128xf32> to vector<8x128xbf16>
    %c0_295 = arith.constant 0 : index
    %c0_296 = arith.constant 0 : index
    %818 = vector.load %arg8[%c0_295, %c0_296] : memref<128x512xbf16, #tpu.memory_space<vmem>>, vector<128x512xbf16>
    %cst_297 = arith.constant dense<0.000000e+00> : vector<8x512xf32>
    %819 = tpu.matmul %817, %818, %cst_297 {dimension_numbers = #tpu.dot_dimension_numbers<[1], [0], [0], [1], [0, 0, 1, 1], [], []>} : vector<8x128xbf16>, vector<128x512xbf16>, vector<8x512xf32> -> vector<8x512xf32>
    %c11_298 = arith.constant 11 : index
    %c0_299 = arith.constant 0 : index
    %c0_300 = arith.constant 0 : index
    %820 = vector.load %arg12[%c11_298, %c0_299, %c0_300] : memref<12x8x512xf32, #tpu.memory_space<vmem>>, vector<1x8x512xf32>
    %821 = vector.shape_cast %820 : vector<1x8x512xf32> to vector<8x512xf32>
    %822 = arith.addf %821, %819 : vector<8x512xf32>
    %823 = vector.extract_strided_slice %822 {offsets = [0, 0], sizes = [8, 128], strides = [1, 1]} : vector<8x512xf32> to vector<8x128xf32>
    %824 = arith.negf %823 : vector<8x128xf32>
    %825 = math.exp %824 : vector<8x128xf32>
    %cst_301 = arith.constant 1.000000e+00 : f32
    %826 = vector.broadcast %cst_301 : f32 to vector<8x128xf32>
    %827 = arith.addf %826, %825 : vector<8x128xf32>
    %828 = arith.divf %826, %827 : vector<8x128xf32>
    %829 = vector.extract_strided_slice %822 {offsets = [0, 128], sizes = [8, 128], strides = [1, 1]} : vector<8x512xf32> to vector<8x128xf32>
    %830 = arith.negf %829 : vector<8x128xf32>
    %831 = math.exp %830 : vector<8x128xf32>
    %cst_302 = arith.constant 1.000000e+00 : f32
    %832 = vector.broadcast %cst_302 : f32 to vector<8x128xf32>
    %833 = arith.addf %832, %831 : vector<8x128xf32>
    %834 = arith.divf %832, %833 : vector<8x128xf32>
    %835 = vector.extract_strided_slice %822 {offsets = [0, 256], sizes = [8, 128], strides = [1, 1]} : vector<8x512xf32> to vector<8x128xf32>
    %836 = math.tanh %835 : vector<8x128xf32>
    %837 = vector.extract_strided_slice %822 {offsets = [0, 384], sizes = [8, 128], strides = [1, 1]} : vector<8x512xf32> to vector<8x128xf32>
    %838 = arith.negf %837 : vector<8x128xf32>
    %839 = math.exp %838 : vector<8x128xf32>
    %cst_303 = arith.constant 1.000000e+00 : f32
    %840 = vector.broadcast %cst_303 : f32 to vector<8x128xf32>
    %841 = arith.addf %840, %839 : vector<8x128xf32>
    %842 = arith.divf %840, %841 : vector<8x128xf32>
    %843 = arith.mulf %834, %814 : vector<8x128xf32>
    %844 = arith.mulf %828, %836 : vector<8x128xf32>
    %845 = arith.addf %843, %844 : vector<8x128xf32>
    %846 = math.tanh %845 : vector<8x128xf32>
    %847 = arith.mulf %842, %846 : vector<8x128xf32>
    %848 = tpu.concatenate %847, %506 in 1 : vector<8x128xf32>, vector<8x128xf32> -> vector<8x256xf32>
    %849 = arith.truncf %848 : vector<8x256xf32> to vector<8x256xbf16>
    %c0_304 = arith.constant 0 : index
    %c0_305 = arith.constant 0 : index
    %850 = vector.load %arg9[%c0_304, %c0_305] : memref<256x128xbf16, #tpu.memory_space<vmem>>, vector<256x128xbf16>
    %cst_306 = arith.constant dense<0.000000e+00> : vector<8x128xf32>
    %851 = tpu.matmul %849, %850, %cst_306 {dimension_numbers = #tpu.dot_dimension_numbers<[1], [0], [0], [1], [0, 0, 1, 1], [], []>} : vector<8x256xbf16>, vector<256x128xbf16>, vector<8x128xf32> -> vector<8x128xf32>
    %c0_307 = arith.constant 0 : index
    %c0_308 = arith.constant 0 : index
    %852 = vector.load %arg10[%c0_307, %c0_308] : memref<1x128xf32, #tpu.memory_space<vmem>>, vector<1x128xf32>
    %853 = vector.broadcast %852 : vector<1x128xf32> to vector<8x128xf32>
    %854 = arith.addf %851, %853 : vector<8x128xf32>
    %c0_309 = arith.constant 0 : index
    %c0_310 = arith.constant 0 : index
    %855 = vector.load %arg11[%c0_309, %c0_310] : memref<8x128xf32, #tpu.memory_space<vmem>>, vector<8x128xf32>
    tpu.vector_store %arg11[%c0_309, %c0_310], %854 {strides = array<i32>} : memref<8x128xf32, #tpu.memory_space<vmem>>, vector<8x128xf32>,
    return
  }
}

</mosaic_0001>

<llo_original>
// kernel: tpu_custom_call.1
$region0: #{tpu_custom_call.1}
  #allocation0 [shape = 'u32[]', space=smem, size = 0x4, offset = 0x4, fixed_abs, tag = 'smem constant byte address 0x4 - core index']
  #allocation1 [shape = 'u32[144,128]{1,0:T(1,128)}', space=vmem, size = 0x12000, scoped, tag = 'internal scratch']
  #allocation2 [shape = 'f32[12,8,512]{2,1,0:T(8,128)}', space=vmem, size = 0x30000, scoped, tag = 'scratch operand']
  #allocation3 [shape = 'f32[12,8,256]{2,1,0:T(8,128)}', space=vmem, size = 0x18000, scoped, tag = 'scratch operand']
  %s0 = inlined_call_operand.vmem [shape: f32[12,8,1], index: 0, kind: input, shape index: {}]
  %s1 = inlined_call_operand.vmem [shape: f32[12,8,1], index: 1, kind: input, shape index: {}]
  %s2 = inlined_call_operand.vmem [shape: f32[1,512], index: 2, kind: input, shape index: {}]
  %s3 = inlined_call_operand.vmem [shape: f32[1,512], index: 3, kind: input, shape index: {}]
  %s4 = inlined_call_operand.vmem [shape: f32[1,512], index: 4, kind: input, shape index: {}]
  %s5 = inlined_call_operand.hbm [shape: bf16[128,512], index: 5, kind: input, shape index: {}]
  %s6 = inlined_call_operand.hbm [shape: bf16[256,512], index: 6, kind: input, shape index: {}]
  %s7 = inlined_call_operand.vmem [shape: f32[1,512], index: 7, kind: input, shape index: {}]
  %s8 = inlined_call_operand.hbm [shape: bf16[128,512], index: 8, kind: input, shape index: {}]
  %s9 = inlined_call_operand.vmem [shape: bf16[256,128], index: 9, kind: input, shape index: {}]
  %s10 = inlined_call_operand.vmem [shape: f32[1,128], index: 10, kind: input, shape index: {}]
  %s11 = inlined_call_operand.hbm [shape: f32[8,128], index: 11, kind: output, shape index: {}]
  %s12 = sld [smem:[#allocation0]]
  $region66: #{tpu_custom_call.1} parent=0
    _
  %s14 = ssub.s32 1, %s12
  %s15 = scalar_select 0, %s14, %s12
  $region1: #{tpu_custom_call.1} parent=0
    #allocation4 [shape = 'u8[131072]{0}', space=vmem, size = 0x20000, scoped, tag = 'input window, operand 5, single buffered']
    #allocation5 [shape = 's32[1]{0}', space=sflag, size = 0x4, scoped, tag = 'scoped memory for tpu_custom_call.1']
    #allocation6 [shape = 's32[1]{0}', space=sflag, size = 0x4, scoped, tag = 'scoped memory for tpu_custom_call.1']
    #allocation7 [shape = 'u8[262144]{0}', space=vmem, size = 0x40000, scoped, tag = 'input window, operand 6, single buffered']
    #allocation8 [shape = 's32[1]{0}', space=sflag, size = 0x4, scoped, tag = 'scoped memory for tpu_custom_call.1']
    #allocation9 [shape = 'u8[131072]{0}', space=vmem, size = 0x20000, scoped, tag = 'input window, operand 8, single buffered']
    #allocation10 [shape = 'u8[4096]{0}', space=vmem, size = 0x1000, scoped, tag = 'output window, operand 0, single buffered']
    %16 = vsyncpa [#allocation5], 0
    %17 = vsyncpa [#allocation8], 0
    %18 = vsyncpa [#allocation6], 0
    // Predicated region
    $region2: #{tpu_custom_call.1} parent=1 // pred_check
      _
    $region3: #{tpu_custom_call.1} parent=1 // pred_check_branch
      %20 = sbr.rel (0) target = $region5
    $region4: #{tpu_custom_call.1} parent=1 // pred_region
      _
    $region5: #{tpu_custom_call.1} parent=1 // pred_fallthru
      _
    // Predicated region
    $region6: #{tpu_custom_call.1} parent=1 // pred_check
      _
    $region7: #{tpu_custom_call.1} parent=1 // pred_check_branch
      %22 = sbr.rel (0) target = $region9
    $region8: #{tpu_custom_call.1} parent=1 // pred_region
      _
    $region9: #{tpu_custom_call.1} parent=1 // pred_fallthru
      _
    // Predicated region
    $region10: #{tpu_custom_call.1} parent=1 // pred_check
      _
    $region11: #{tpu_custom_call.1} parent=1 // pred_check_branch
      %24 = sbr.rel (0) target = $region13
    $region12: #{tpu_custom_call.1} parent=1 // pred_region
      _
    $region13: #{tpu_custom_call.1} parent=1 // pred_fallthru
      _
    // Predicated region
    $region14: #{tpu_custom_call.1} parent=1 // pred_check
      _
    $region15: #{tpu_custom_call.1} parent=1 // pred_check_branch
      %26 = sbr.rel (0) target = $region17
    $region16: #{tpu_custom_call.1} parent=1 // pred_region
      _
    $region17: #{tpu_custom_call.1} parent=1 // pred_fallthru
      _
    // Predicated region
    $region18: #{tpu_custom_call.1} parent=1 // pred_check
      _
    $region19: #{tpu_custom_call.1} parent=1 // pred_check_branch
      %28 = sbr.rel (0) target = $region21
    $region20: #{tpu_custom_call.1} parent=1 // pred_region
      _
    $region21: #{tpu_custom_call.1} parent=1 // pred_fallthru
      _
    // Predicated region
    $region22: #{tpu_custom_call.1} parent=1 // pred_check
      _
    $region23: #{tpu_custom_call.1} parent=1 // pred_check_branch
      %30 = sbr.rel (0) target = $region25
    $region24: #{tpu_custom_call.1} parent=1 // pred_region
      %s32 = ssub.s32 4096, 4096
      %33 = vsyncadd [#allocation5], %s32
      %s34 = sshll.u32 [#allocation4], 4
      %s35 = int_to_ptr.vmem [resolvable:$true] %s34
      %40 = dma.hbm_to_vmem [thread:$0]  %s5, 4096, %s35, [#allocation5], 256, 256, 16
    $region25: #{tpu_custom_call.1} parent=1 // pred_fallthru
      _
    // Predicated region
    $region26: #{tpu_custom_call.1} parent=1 // pred_check
      _
    $region27: #{tpu_custom_call.1} parent=1 // pred_check_branch
      %42 = sbr.rel (0) target = $region29
    $region28: #{tpu_custom_call.1} parent=1 // pred_region
      %s44 = ssub.s32 8192, 8192
      %45 = vsyncadd [#allocation8], %s44
      %s46 = sshll.u32 [#allocation7], 4
      %s47 = int_to_ptr.vmem [resolvable:$true] %s46
      %52 = dma.hbm_to_vmem [thread:$0]  %s6, 8192, %s47, [#allocation8], 256, 256, 16
    $region29: #{tpu_custom_call.1} parent=1 // pred_fallthru
      _
    // Predicated region
    $region30: #{tpu_custom_call.1} parent=1 // pred_check
      _
    $region31: #{tpu_custom_call.1} parent=1 // pred_check_branch
      %54 = sbr.rel (0) target = $region33
    $region32: #{tpu_custom_call.1} parent=1 // pred_region
      _
    $region33: #{tpu_custom_call.1} parent=1 // pred_fallthru
      _
    // Predicated region
    $region34: #{tpu_custom_call.1} parent=1 // pred_check
      _
    $region35: #{tpu_custom_call.1} parent=1 // pred_check_branch
      %56 = sbr.rel (0) target = $region37
    $region36: #{tpu_custom_call.1} parent=1 // pred_region
      %s58 = ssub.s32 4096, 4096
      %59 = vsyncadd [#allocation8], %s58
      %s60 = sshll.u32 [#allocation9], 4
      %s61 = int_to_ptr.vmem [resolvable:$true] %s60
      %66 = dma.hbm_to_vmem [thread:$0]  %s8, 4096, %s61, [#allocation8], 256, 256, 16
    $region37: #{tpu_custom_call.1} parent=1 // pred_fallthru
      _
    // Predicated region
    $region38: #{tpu_custom_call.1} parent=1 // pred_check
      _
    $region39: #{tpu_custom_call.1} parent=1 // pred_check_branch
      %68 = sbr.rel (0) target = $region41
    $region40: #{tpu_custom_call.1} parent=1 // pred_region
      _
    $region41: #{tpu_custom_call.1} parent=1 // pred_fallthru
      _
    // Predicated region
    $region42: #{tpu_custom_call.1} parent=1 // pred_check
      _
    $region43: #{tpu_custom_call.1} parent=1 // pred_check_branch
      %70 = sbr.rel (0) target = $region45
    $region44: #{tpu_custom_call.1} parent=1 // pred_region
      _
    $region45: #{tpu_custom_call.1} parent=1 // pred_fallthru
      _
    // Predicated region
    $region46: #{tpu_custom_call.1} parent=1 // pred_check
      _
    $region47: #{tpu_custom_call.1} parent=1 // pred_check_branch
      %72 = sbr.rel (0) target = $region49
    $region48: #{tpu_custom_call.1} parent=1 // pred_region
      %73 = dma.done [#allocation5], 4096
    $region49: #{tpu_custom_call.1} parent=1 // pred_fallthru
      _
    // Predicated region
    $region50: #{tpu_custom_call.1} parent=1 // pred_check
      _
    $region51: #{tpu_custom_call.1} parent=1 // pred_check_branch
      %75 = sbr.rel (0) target = $region53
    $region52: #{tpu_custom_call.1} parent=1 // pred_region
      %76 = dma.done [#allocation8], 8192
    $region53: #{tpu_custom_call.1} parent=1 // pred_fallthru
      _
    // Predicated region
    $region54: #{tpu_custom_call.1} parent=1 // pred_check
      _
    $region55: #{tpu_custom_call.1} parent=1 // pred_check_branch
      %78 = sbr.rel (0) target = $region57
    $region56: #{tpu_custom_call.1} parent=1 // pred_region
      %79 = dma.done [#allocation8], 4096
    $region57: #{tpu_custom_call.1} parent=1 // pred_fallthru
      _
    %v81 = vld [vmem:[%s0] sm:$0xff]
    %v82 = vld [vmem:[%s0 + $0x8] sm:$0xff]
    %v83 = vld [vmem:[%s0 + $0x10] sm:$0xff]
    %v84 = vld [vmem:[%s0 + $0x18] sm:$0xff]
    %v85 = vld [vmem:[%s0 + $0x20] sm:$0xff]
    %v86 = vld [vmem:[%s0 + $0x28] sm:$0xff]
    %v87 = vld [vmem:[%s0 + $0x30] sm:$0xff]
    %v88 = vld [vmem:[%s0 + $0x38] sm:$0xff]
    %v89 = vld [vmem:[%s0 + $0x40] sm:$0xff]
    %v90 = vld [vmem:[%s0 + $0x48] sm:$0xff]
    %v91 = vld [vmem:[%s0 + $0x50] sm:$0xff]
    %v92 = vld [vmem:[%s0 + $0x58] sm:$0xff]
    %v93 = vld [vmem:[%s2] sm:$0xf]
    %95 = vset.pattern.permute.xlu0 0
    %96 = vperm.xlu0 %95, %v81
    %v97 = vpop.permute.xlu0 %96
    %100 = vset.pattern.permute.xlu0 0
    %101 = vperm.xlu0 %100, %v82
    %v102 = vpop.permute.xlu0 %101
    %105 = vset.pattern.permute.xlu0 0
    %106 = vperm.xlu0 %105, %v83
    %v107 = vpop.permute.xlu0 %106
    %110 = vset.pattern.permute.xlu0 0
    %111 = vperm.xlu0 %110, %v84
    %v112 = vpop.permute.xlu0 %111
    %115 = vset.pattern.permute.xlu0 0
    %116 = vperm.xlu0 %115, %v85
    %v117 = vpop.permute.xlu0 %116
    %120 = vset.pattern.permute.xlu0 0
    %121 = vperm.xlu0 %120, %v86
    %v122 = vpop.permute.xlu0 %121
    %125 = vset.pattern.permute.xlu0 0
    %126 = vperm.xlu0 %125, %v87
    %v127 = vpop.permute.xlu0 %126
    %130 = vset.pattern.permute.xlu0 0
    %131 = vperm.xlu0 %130, %v88
    %v132 = vpop.permute.xlu0 %131
    %135 = vset.pattern.permute.xlu0 0
    %136 = vperm.xlu0 %135, %v89
    %v137 = vpop.permute.xlu0 %136
    %140 = vset.pattern.permute.xlu0 0
    %141 = vperm.xlu0 %140, %v90
    %v142 = vpop.permute.xlu0 %141
    %145 = vset.pattern.permute.xlu0 0
    %146 = vperm.xlu0 %145, %v91
    %v147 = vpop.permute.xlu0 %146
    %150 = vset.pattern.permute.xlu0 0
    %151 = vperm.xlu0 %150, %v92
    %v152 = vpop.permute.xlu0 %151
    %v155 = vlaneseq
    %v156 = vshrl.u32 %v155, 7
    %v157 = vsub.s32 0, %v156
    %v158 = vrot.slane %v93, %v157
    %v159 = vlaneseq
    %v160 = vshrl.u32 %v159, 7
    %v161 = vsub.s32 1, %v160
    %v162 = vrot.slane %v93, %v161
    %v163 = vlaneseq
    %v164 = vshrl.u32 %v163, 7
    %v165 = vsub.s32 2, %v164
    %v166 = vrot.slane %v93, %v165
    %v167 = vlaneseq
    %v168 = vshrl.u32 %v167, 7
    %v169 = vsub.s32 3, %v168
    %v170 = vrot.slane %v93, %v169
    %v175 = vmul.f32 %v97, %v158
    %v176 = vmul.f32 %v97, %v162
    %v177 = vmul.f32 %v97, %v166
    %v178 = vmul.f32 %v97, %v170
    %v179 = vmul.f32 %v102, %v158
    %v180 = vmul.f32 %v102, %v162
    %v181 = vmul.f32 %v102, %v166
    %v182 = vmul.f32 %v102, %v170
    %v183 = vmul.f32 %v107, %v158
    %v184 = vmul.f32 %v107, %v162
    %v185 = vmul.f32 %v107, %v166
    %v186 = vmul.f32 %v107, %v170
    %v187 = vmul.f32 %v112, %v158
    %v188 = vmul.f32 %v112, %v162
    %v189 = vmul.f32 %v112, %v166
    %v190 = vmul.f32 %v112, %v170
    %v191 = vmul.f32 %v117, %v158
    %v192 = vmul.f32 %v117, %v162
    %v193 = vmul.f32 %v117, %v166
    %v194 = vmul.f32 %v117, %v170
    %v195 = vmul.f32 %v122, %v158
    %v196 = vmul.f32 %v122, %v162
    %v197 = vmul.f32 %v122, %v166
    %v198 = vmul.f32 %v122, %v170
    %v199 = vmul.f32 %v127, %v158
    %v200 = vmul.f32 %v127, %v162
    %v201 = vmul.f32 %v127, %v166
    %v202 = vmul.f32 %v127, %v170
    %v203 = vmul.f32 %v132, %v158
    %v204 = vmul.f32 %v132, %v162
    %v205 = vmul.f32 %v132, %v166
    %v206 = vmul.f32 %v132, %v170
    %v207 = vmul.f32 %v137, %v158
    %v208 = vmul.f32 %v137, %v162
    %v209 = vmul.f32 %v137, %v166
    %v210 = vmul.f32 %v137, %v170
    %v211 = vmul.f32 %v142, %v158
    %v212 = vmul.f32 %v142, %v162
    %v213 = vmul.f32 %v142, %v166
    %v214 = vmul.f32 %v142, %v170
    %v215 = vmul.f32 %v147, %v158
    %v216 = vmul.f32 %v147, %v162
    %v217 = vmul.f32 %v147, %v166
    %v218 = vmul.f32 %v147, %v170
    %v219 = vmul.f32 %v152, %v158
    %v220 = vmul.f32 %v152, %v162
    %v221 = vmul.f32 %v152, %v166
    %v222 = vmul.f32 %v152, %v170
    %v223 = vld [vmem:[%s1] sm:$0xff]
    %v224 = vld [vmem:[%s1 + $0x8] sm:$0xff]
    %v225 = vld [vmem:[%s1 + $0x10] sm:$0xff]
    %v226 = vld [vmem:[%s1 + $0x18] sm:$0xff]
    %v227 = vld [vmem:[%s1 + $0x20] sm:$0xff]
    %v228 = vld [vmem:[%s1 + $0x28] sm:$0xff]
    %v229 = vld [vmem:[%s1 + $0x30] sm:$0xff]
    %v230 = vld [vmem:[%s1 + $0x38] sm:$0xff]
    %v231 = vld [vmem:[%s1 + $0x40] sm:$0xff]
    %v232 = vld [vmem:[%s1 + $0x48] sm:$0xff]
    %v233 = vld [vmem:[%s1 + $0x50] sm:$0xff]
    %v234 = vld [vmem:[%s1 + $0x58] sm:$0xff]
    %v235 = vld [vmem:[%s3] sm:$0xf]
    %237 = vset.pattern.permute.xlu0 0
    %238 = vperm.xlu0 %237, %v223
    %v239 = vpop.permute.xlu0 %238
    %242 = vset.pattern.permute.xlu0 0
    %243 = vperm.xlu0 %242, %v224
    %v244 = vpop.permute.xlu0 %243
    %247 = vset.pattern.permute.xlu0 0
    %248 = vperm.xlu0 %247, %v225
    %v249 = vpop.permute.xlu0 %248
    %252 = vset.pattern.permute.xlu0 0
    %253 = vperm.xlu0 %252, %v226
    %v254 = vpop.permute.xlu0 %253
    %257 = vset.pattern.permute.xlu0 0
    %258 = vperm.xlu0 %257, %v227
    %v259 = vpop.permute.xlu0 %258
    %262 = vset.pattern.permute.xlu0 0
    %263 = vperm.xlu0 %262, %v228
    %v264 = vpop.permute.xlu0 %263
    %267 = vset.pattern.permute.xlu0 0
    %268 = vperm.xlu0 %267, %v229
    %v269 = vpop.permute.xlu0 %268
    %272 = vset.pattern.permute.xlu0 0
    %273 = vperm.xlu0 %272, %v230
    %v274 = vpop.permute.xlu0 %273
    %277 = vset.pattern.permute.xlu0 0
    %278 = vperm.xlu0 %277, %v231
    %v279 = vpop.permute.xlu0 %278
    %282 = vset.pattern.permute.xlu0 0
    %283 = vperm.xlu0 %282, %v232
    %v284 = vpop.permute.xlu0 %283
    %287 = vset.pattern.permute.xlu0 0
    %288 = vperm.xlu0 %287, %v233
    %v289 = vpop.permute.xlu0 %288
    %292 = vset.pattern.permute.xlu0 0
    %293 = vperm.xlu0 %292, %v234
    %v294 = vpop.permute.xlu0 %293
    %v297 = vlaneseq
    %v298 = vshrl.u32 %v297, 7
    %v299 = vsub.s32 0, %v298
    %v300 = vrot.slane %v235, %v299
    %v301 = vlaneseq
    %v302 = vshrl.u32 %v301, 7
    %v303 = vsub.s32 1, %v302
    %v304 = vrot.slane %v235, %v303
    %v305 = vlaneseq
    %v306 = vshrl.u32 %v305, 7
    %v307 = vsub.s32 2, %v306
    %v308 = vrot.slane %v235, %v307
    %v309 = vlaneseq
    %v310 = vshrl.u32 %v309, 7
    %v311 = vsub.s32 3, %v310
    %v312 = vrot.slane %v235, %v311
    %v317 = vmul.f32 %v239, %v300
    %v318 = vmul.f32 %v239, %v304
    %v319 = vmul.f32 %v239, %v308
    %v320 = vmul.f32 %v239, %v312
    %v321 = vmul.f32 %v244, %v300
    %v322 = vmul.f32 %v244, %v304
    %v323 = vmul.f32 %v244, %v308
    %v324 = vmul.f32 %v244, %v312
    %v325 = vmul.f32 %v249, %v300
    %v326 = vmul.f32 %v249, %v304
    %v327 = vmul.f32 %v249, %v308
    %v328 = vmul.f32 %v249, %v312
    %v329 = vmul.f32 %v254, %v300
    %v330 = vmul.f32 %v254, %v304
    %v331 = vmul.f32 %v254, %v308
    %v332 = vmul.f32 %v254, %v312
    %v333 = vmul.f32 %v259, %v300
    %v334 = vmul.f32 %v259, %v304
    %v335 = vmul.f32 %v259, %v308
    %v336 = vmul.f32 %v259, %v312
    %v337 = vmul.f32 %v264, %v300
    %v338 = vmul.f32 %v264, %v304
    %v339 = vmul.f32 %v264, %v308
    %v340 = vmul.f32 %v264, %v312
    %v341 = vmul.f32 %v269, %v300
    %v342 = vmul.f32 %v269, %v304
    %v343 = vmul.f32 %v269, %v308
    %v344 = vmul.f32 %v269, %v312
    %v345 = vmul.f32 %v274, %v300
    %v346 = vmul.f32 %v274, %v304
    %v347 = vmul.f32 %v274, %v308
    %v348 = vmul.f32 %v274, %v312
    %v349 = vmul.f32 %v279, %v300
    %v350 = vmul.f32 %v279, %v304
    %v351 = vmul.f32 %v279, %v308
    %v352 = vmul.f32 %v279, %v312
    %v353 = vmul.f32 %v284, %v300
    %v354 = vmul.f32 %v284, %v304
    %v355 = vmul.f32 %v284, %v308
    %v356 = vmul.f32 %v284, %v312
    %v357 = vmul.f32 %v289, %v300
    %v358 = vmul.f32 %v289, %v304
    %v359 = vmul.f32 %v289, %v308
    %v360 = vmul.f32 %v289, %v312
    %v361 = vmul.f32 %v294, %v300
    %v362 = vmul.f32 %v294, %v304
    %v363 = vmul.f32 %v294, %v308
    %v364 = vmul.f32 %v294, %v312
    %v365 = vadd.f32 %v175, %v317
    %v366 = vadd.f32 %v176, %v318
    %v367 = vadd.f32 %v177, %v319
    %v368 = vadd.f32 %v178, %v320
    %v369 = vadd.f32 %v179, %v321
    %v370 = vadd.f32 %v180, %v322
    %v371 = vadd.f32 %v181, %v323
    %v372 = vadd.f32 %v182, %v324
    %v373 = vadd.f32 %v183, %v325
    %v374 = vadd.f32 %v184, %v326
    %v375 = vadd.f32 %v185, %v327
    %v376 = vadd.f32 %v186, %v328
    %v377 = vadd.f32 %v187, %v329
    %v378 = vadd.f32 %v188, %v330
    %v379 = vadd.f32 %v189, %v331
    %v380 = vadd.f32 %v190, %v332
    %v381 = vadd.f32 %v191, %v333
    %v382 = vadd.f32 %v192, %v334
    %v383 = vadd.f32 %v193, %v335
    %v384 = vadd.f32 %v194, %v336
    %v385 = vadd.f32 %v195, %v337
    %v386 = vadd.f32 %v196, %v338
    %v387 = vadd.f32 %v197, %v339
    %v388 = vadd.f32 %v198, %v340
    %v389 = vadd.f32 %v199, %v341
    %v390 = vadd.f32 %v200, %v342
    %v391 = vadd.f32 %v201, %v343
    %v392 = vadd.f32 %v202, %v344
    %v393 = vadd.f32 %v203, %v345
    %v394 = vadd.f32 %v204, %v346
    %v395 = vadd.f32 %v205, %v347
    %v396 = vadd.f32 %v206, %v348
    %v397 = vadd.f32 %v207, %v349
    %v398 = vadd.f32 %v208, %v350
    %v399 = vadd.f32 %v209, %v351
    %v400 = vadd.f32 %v210, %v352
    %v401 = vadd.f32 %v211, %v353
    %v402 = vadd.f32 %v212, %v354
    %v403 = vadd.f32 %v213, %v355
    %v404 = vadd.f32 %v214, %v356
    %v405 = vadd.f32 %v215, %v357
    %v406 = vadd.f32 %v216, %v358
    %v407 = vadd.f32 %v217, %v359
    %v408 = vadd.f32 %v218, %v360
    %v409 = vadd.f32 %v219, %v361
    %v410 = vadd.f32 %v220, %v362
    %v411 = vadd.f32 %v221, %v363
    %v412 = vadd.f32 %v222, %v364
    %v413 = vld [vmem:[%s4] sm:$0xf]
    %v415 = vlaneseq
    %v416 = vshrl.u32 %v415, 7
    %v417 = vsub.s32 0, %v416
    %v418 = vrot.slane %v413, %v417
    %v419 = vlaneseq
    %v420 = vshrl.u32 %v419, 7
    %v421 = vsub.s32 1, %v420
    %v422 = vrot.slane %v413, %v421
    %v423 = vlaneseq
    %v424 = vshrl.u32 %v423, 7
    %v425 = vsub.s32 2, %v424
    %v426 = vrot.slane %v413, %v425
    %v427 = vlaneseq
    %v428 = vshrl.u32 %v427, 7
    %v429 = vsub.s32 3, %v428
    %v430 = vrot.slane %v413, %v429
    %v435 = vadd.f32 %v365, %v418
    %v436 = vadd.f32 %v366, %v422
    %v437 = vadd.f32 %v367, %v426
    %v438 = vadd.f32 %v368, %v430
    %v439 = vadd.f32 %v369, %v418
    %v440 = vadd.f32 %v370, %v422
    %v441 = vadd.f32 %v371, %v426
    %v442 = vadd.f32 %v372, %v430
    %v443 = vadd.f32 %v373, %v418
    %v444 = vadd.f32 %v374, %v422
    %v445 = vadd.f32 %v375, %v426
    %v446 = vadd.f32 %v376, %v430
    %v447 = vadd.f32 %v377, %v418
    %v448 = vadd.f32 %v378, %v422
    %v449 = vadd.f32 %v379, %v426
    %v450 = vadd.f32 %v380, %v430
    %v451 = vadd.f32 %v381, %v418
    %v452 = vadd.f32 %v382, %v422
    %v453 = vadd.f32 %v383, %v426
    %v454 = vadd.f32 %v384, %v430
    %v455 = vadd.f32 %v385, %v418
    %v456 = vadd.f32 %v386, %v422
    %v457 = vadd.f32 %v387, %v426
    %v458 = vadd.f32 %v388, %v430
    %v459 = vadd.f32 %v389, %v418
    %v460 = vadd.f32 %v390, %v422
    %v461 = vadd.f32 %v391, %v426
    %v462 = vadd.f32 %v392, %v430
    %v463 = vadd.f32 %v393, %v418
    %v464 = vadd.f32 %v394, %v422
    %v465 = vadd.f32 %v395, %v426
    %v466 = vadd.f32 %v396, %v430
    %v467 = vadd.f32 %v397, %v418
    %v468 = vadd.f32 %v398, %v422
    %v469 = vadd.f32 %v399, %v426
    %v470 = vadd.f32 %v400, %v430
    %v471 = vadd.f32 %v401, %v418
    %v472 = vadd.f32 %v402, %v422
    %v473 = vadd.f32 %v403, %v426
    %v474 = vadd.f32 %v404, %v430
    %v475 = vadd.f32 %v405, %v418
    %v476 = vadd.f32 %v406, %v422
    %v477 = vadd.f32 %v407, %v426
    %v478 = vadd.f32 %v408, %v430
    %v479 = vadd.f32 %v409, %v418
    %v480 = vadd.f32 %v410, %v422
    %v481 = vadd.f32 %v411, %v426
    %v482 = vadd.f32 %v412, %v430
    %483 = vst [vmem:[#allocation2] sm:$0xff] %v435
    %484 = vst [vmem:[#allocation2 + $0x8] sm:$0xff] %v436
    %485 = vst [vmem:[#allocation2 + $0x10] sm:$0xff] %v437
    %486 = vst [vmem:[#allocation2 + $0x18] sm:$0xff] %v438
    %487 = vst [vmem:[#allocation2 + $0x20] sm:$0xff] %v439
    %488 = vst [vmem:[#allocation2 + $0x28] sm:$0xff] %v440
    %489 = vst [vmem:[#allocation2 + $0x30] sm:$0xff] %v441
    %490 = vst [vmem:[#allocation2 + $0x38] sm:$0xff] %v442
    %491 = vst [vmem:[#allocation2 + $0x40] sm:$0xff] %v443
    %492 = vst [vmem:[#allocation2 + $0x48] sm:$0xff] %v444
    %493 = vst [vmem:[#allocation2 + $0x50] sm:$0xff] %v445
    %494 = vst [vmem:[#allocation2 + $0x58] sm:$0xff] %v446
    %495 = vst [vmem:[#allocation2 + $0x60] sm:$0xff] %v447
    %496 = vst [vmem:[#allocation2 + $0x68] sm:$0xff] %v448
    %497 = vst [vmem:[#allocation2 + $0x70] sm:$0xff] %v449
    %498 = vst [vmem:[#allocation2 + $0x78] sm:$0xff] %v450
    %499 = vst [vmem:[#allocation2 + $0x80] sm:$0xff] %v451
    %500 = vst [vmem:[#allocation2 + $0x88] sm:$0xff] %v452
    %501 = vst [vmem:[#allocation2 + $0x90] sm:$0xff] %v453
    %502 = vst [vmem:[#allocation2 + $0x98] sm:$0xff] %v454
    %503 = vst [vmem:[#allocation2 + $0xa0] sm:$0xff] %v455
    %504 = vst [vmem:[#allocation2 + $0xa8] sm:$0xff] %v456
    %505 = vst [vmem:[#allocation2 + $0xb0] sm:$0xff] %v457
    %506 = vst [vmem:[#allocation2 + $0xb8] sm:$0xff] %v458
    %507 = vst [vmem:[#allocation2 + $0xc0] sm:$0xff] %v459
    %508 = vst [vmem:[#allocation2 + $0xc8] sm:$0xff] %v460
    %509 = vst [vmem:[#allocation2 + $0xd0] sm:$0xff] %v461
    %510 = vst [vmem:[#allocation2 + $0xd8] sm:$0xff] %v462
    %511 = vst [vmem:[#allocation2 + $0xe0] sm:$0xff] %v463
    %512 = vst [vmem:[#allocation2 + $0xe8] sm:$0xff] %v464
    %513 = vst [vmem:[#allocation2 + $0xf0] sm:$0xff] %v465
    %514 = vst [vmem:[#allocation2 + $0xf8] sm:$0xff] %v466
    %515 = vst [vmem:[#allocation2 + $0x100] sm:$0xff] %v467
    %516 = vst [vmem:[#allocation2 + $0x108] sm:$0xff] %v468
    %517 = vst [vmem:[#allocation2 + $0x110] sm:$0xff] %v469
    %518 = vst [vmem:[#allocation2 + $0x118] sm:$0xff] %v470
    %519 = vst [vmem:[#allocation2 + $0x120] sm:$0xff] %v471
    %520 = vst [vmem:[#allocation2 + $0x128] sm:$0xff] %v472
    %521 = vst [vmem:[#allocation2 + $0x130] sm:$0xff] %v473
    %522 = vst [vmem:[#allocation2 + $0x138] sm:$0xff] %v474
    %523 = vst [vmem:[#allocation2 + $0x140] sm:$0xff] %v475
    %524 = vst [vmem:[#allocation2 + $0x148] sm:$0xff] %v476
    %525 = vst [vmem:[#allocation2 + $0x150] sm:$0xff] %v477
    %526 = vst [vmem:[#allocation2 + $0x158] sm:$0xff] %v478
    %527 = vst [vmem:[#allocation2 + $0x160] sm:$0xff] %v479
    %528 = vst [vmem:[#allocation2 + $0x168] sm:$0xff] %v480
    %529 = vst [vmem:[#allocation2 + $0x170] sm:$0xff] %v481
    %530 = vst [vmem:[#allocation2 + $0x178] sm:$0xff] %v482
    %v531 = vld [vmem:[#allocation4] sm:$0xff]
    %v532 = vld [vmem:[#allocation4 + $0x8] sm:$0xff]
    %v533 = vld [vmem:[#allocation4 + $0x10] sm:$0xff]
    %v534 = vld [vmem:[#allocation4 + $0x18] sm:$0xff]
    %v535 = vld [vmem:[#allocation4 + $0x20] sm:$0xff]
    %v536 = vld [vmem:[#allocation4 + $0x28] sm:$0xff]
    %v537 = vld [vmem:[#allocation4 + $0x30] sm:$0xff]
    %v538 = vld [vmem:[#allocation4 + $0x38] sm:$0xff]
    %v539 = vld [vmem:[#allocation4 + $0x40] sm:$0xff]
    %v540 = vld [vmem:[#allocation4 + $0x48] sm:$0xff]
    %v541 = vld [vmem:[#allocation4 + $0x50] sm:$0xff]
    %v542 = vld [vmem:[#allocation4 + $0x58] sm:$0xff]
    %v543 = vld [vmem:[#allocation4 + $0x60] sm:$0xff]
    %v544 = vld [vmem:[#allocation4 + $0x68] sm:$0xff]
    %v545 = vld [vmem:[#allocation4 + $0x70] sm:$0xff]
    %v546 = vld [vmem:[#allocation4 + $0x78] sm:$0xff]
    %v547 = vld [vmem:[#allocation4 + $0x80] sm:$0xff]
    %v548 = vld [vmem:[#allocation4 + $0x88] sm:$0xff]
    %v549 = vld [vmem:[#allocation4 + $0x90] sm:$0xff]
    %v550 = vld [vmem:[#allocation4 + $0x98] sm:$0xff]
    %v551 = vld [vmem:[#allocation4 + $0xa0] sm:$0xff]
    %v552 = vld [vmem:[#allocation4 + $0xa8] sm:$0xff]
    %v553 = vld [vmem:[#allocation4 + $0xb0] sm:$0xff]
    %v554 = vld [vmem:[#allocation4 + $0xb8] sm:$0xff]
    %v555 = vld [vmem:[#allocation4 + $0xc0] sm:$0xff]
    %v556 = vld [vmem:[#allocation4 + $0xc8] sm:$0xff]
    %v557 = vld [vmem:[#allocation4 + $0xd0] sm:$0xff]
    %v558 = vld [vmem:[#allocation4 + $0xd8] sm:$0xff]
    %v559 = vld [vmem:[#allocation4 + $0xe0] sm:$0xff]
    %v560 = vld [vmem:[#allocation4 + $0xe8] sm:$0xff]
    %v561 = vld [vmem:[#allocation4 + $0xf0] sm:$0xff]
    %v562 = vld [vmem:[#allocation4 + $0xf8] sm:$0xff]
    %v595 = vunpack.c.l.b16 %v531
    %v596 = vunpack.c.h.b16 %v531
    %v597 = vunpack.c.l.b16 %v532
    %v598 = vunpack.c.h.b16 %v532
    %v599 = vunpack.c.l.b16 %v533
    %v600 = vunpack.c.h.b16 %v533
    %v601 = vunpack.c.l.b16 %v534
    %v602 = vunpack.c.h.b16 %v534
    %v603 = vunpack.c.l.b16 %v535
    %v604 = vunpack.c.h.b16 %v535
    %v605 = vunpack.c.l.b16 %v536
    %v606 = vunpack.c.h.b16 %v536
    %v607 = vunpack.c.l.b16 %v537
    %v608 = vunpack.c.h.b16 %v537
    %v609 = vunpack.c.l.b16 %v538
    %v610 = vunpack.c.h.b16 %v538
    %v611 = vunpack.c.l.b16 %v539
    %v612 = vunpack.c.h.b16 %v539
    %v613 = vunpack.c.l.b16 %v540
    %v614 = vunpack.c.h.b16 %v540
    %v615 = vunpack.c.l.b16 %v541
    %v616 = vunpack.c.h.b16 %v541
    %v617 = vunpack.c.l.b16 %v542
    %v618 = vunpack.c.h.b16 %v542
    %v619 = vunpack.c.l.b16 %v543
    %v620 = vunpack.c.h.b16 %v543
    %v621 = vunpack.c.l.b16 %v544
    %v622 = vunpack.c.h.b16 %v544
    %v623 = vunpack.c.l.b16 %v545
    %v624 = vunpack.c.h.b16 %v545
    %v625 = vunpack.c.l.b16 %v546
    %v626 = vunpack.c.h.b16 %v546
    %v627 = vunpack.c.l.b16 %v547
    %v628 = vunpack.c.h.b16 %v547
    %v629 = vunpack.c.l.b16 %v548
    %v630 = vunpack.c.h.b16 %v548
    %v631 = vunpack.c.l.b16 %v549
    %v632 = vunpack.c.h.b16 %v549
    %v633 = vunpack.c.l.b16 %v550
    %v634 = vunpack.c.h.b16 %v550
    %v635 = vunpack.c.l.b16 %v551
    %v636 = vunpack.c.h.b16 %v551
    %v637 = vunpack.c.l.b16 %v552
    %v638 = vunpack.c.h.b16 %v552
    %v639 = vunpack.c.l.b16 %v553
    %v640 = vunpack.c.h.b16 %v553
    %v641 = vunpack.c.l.b16 %v554
    %v642 = vunpack.c.h.b16 %v554
    %v643 = vunpack.c.l.b16 %v555
    %v644 = vunpack.c.h.b16 %v555
    %v645 = vunpack.c.l.b16 %v556
    %v646 = vunpack.c.h.b16 %v556
    %v647 = vunpack.c.l.b16 %v557
    %v648 = vunpack.c.h.b16 %v557
    %v649 = vunpack.c.l.b16 %v558
    %v650 = vunpack.c.h.b16 %v558
    %v651 = vunpack.c.l.b16 %v559
    %v652 = vunpack.c.h.b16 %v559
    %v653 = vunpack.c.l.b16 %v560
    %v654 = vunpack.c.h.b16 %v560
    %v655 = vunpack.c.l.b16 %v561
    %v656 = vunpack.c.h.b16 %v561
    %v657 = vunpack.c.l.b16 %v562
    %v658 = vunpack.c.h.b16 %v562
    %v659 = vpack.c.b16 %v599, %v595
    %v660 = vpack.c.b16 %v600, %v596
    %v661 = vpack.c.b16 %v601, %v597
    %v662 = vpack.c.b16 %v602, %v598
    %v663 = vpack.c.b16 %v607, %v603
    %v664 = vpack.c.b16 %v608, %v604
    %v665 = vpack.c.b16 %v609, %v605
    %v666 = vpack.c.b16 %v610, %v606
    %v667 = vpack.c.b16 %v615, %v611
    %v668 = vpack.c.b16 %v616, %v612
    %v669 = vpack.c.b16 %v617, %v613
    %v670 = vpack.c.b16 %v618, %v614
    %v671 = vpack.c.b16 %v623, %v619
    %v672 = vpack.c.b16 %v624, %v620
    %v673 = vpack.c.b16 %v625, %v621
    %v674 = vpack.c.b16 %v626, %v622
    %v675 = vpack.c.b16 %v631, %v627
    %v676 = vpack.c.b16 %v632, %v628
    %v677 = vpack.c.b16 %v633, %v629
    %v678 = vpack.c.b16 %v634, %v630
    %v679 = vpack.c.b16 %v639, %v635
    %v680 = vpack.c.b16 %v640, %v636
    %v681 = vpack.c.b16 %v641, %v637
    %v682 = vpack.c.b16 %v642, %v638
    %v683 = vpack.c.b16 %v647, %v643
    %v684 = vpack.c.b16 %v648, %v644
    %v685 = vpack.c.b16 %v649, %v645
    %v686 = vpack.c.b16 %v650, %v646
    %v687 = vpack.c.b16 %v655, %v651
    %v688 = vpack.c.b16 %v656, %v652
    %v689 = vpack.c.b16 %v657, %v653
    %v690 = vpack.c.b16 %v658, %v654
    %723 = vmatprep.subr.bf16.mxu0 %v660
    %724 = vmatpush1.bf16.msra.mxu0 %v659
    %725 = vmatprep.subr.bf16.mxu0 %v664
    %726 = vmatpush1.bf16.msra.mxu0 %v663
    %727 = vmatprep.subr.bf16.mxu0 %v668
    %728 = vmatpush1.bf16.msra.mxu0 %v667
    %729 = vmatprep.subr.bf16.mxu0 %v672
    %730 = vmatpush1.bf16.msra.mxu0 %v671
    %731 = vmatprep.subr.bf16.mxu0 %v676
    %732 = vmatpush1.bf16.msra.mxu0 %v675
    %733 = vmatprep.subr.bf16.mxu0 %v680
    %734 = vmatpush1.bf16.msra.mxu0 %v679
    %735 = vmatprep.subr.bf16.mxu0 %v684
    %736 = vmatpush1.bf16.msra.mxu0 %v683
    %737 = vmatprep.subr.bf16.mxu0 %v688
    %738 = vmatpush1.bf16.msra.mxu0 %v687
    %739 = vmatprep.subr.bf16.mxu0 0
    %740 = vmatpush1.bf16.msra.mxu0 0
    %741 = vmatprep.subr.bf16.mxu0 0
    %742 = vmatpush1.bf16.msra.mxu0 0
    %743 = vmatprep.subr.bf16.mxu0 0
    %744 = vmatpush1.bf16.msra.mxu0 0
    %745 = vmatprep.subr.bf16.mxu0 0
    %746 = vmatpush1.bf16.msra.mxu0 0
    %747 = vmatprep.subr.bf16.mxu0 0
    %748 = vmatpush1.bf16.msra.mxu0 0
    %749 = vmatprep.subr.bf16.mxu0 0
    %750 = vmatpush1.bf16.msra.mxu0 0
    %751 = vmatprep.subr.bf16.mxu0 0
    %752 = vmatpush1.bf16.msra.mxu0 0
    %753 = vmatprep.subr.bf16.mxu0 0
    %754 = vmatpush1.bf16.msra.mxu0 0
    %755 = vmatprep.mubr.bf16.mxu0 0
    %756 = vmatmul.mubr.bf16.gmra.mrb[0].mxu0 0
    %v757 = vpop.f32.mrb[0].mxu0
    %v758 = vadd.f32 0.0, %v757
    %v759 = vpop.f32.mrb[0].mxu0
    %v760 = vadd.f32 0.0, %v759
    %v761 = vpop.f32.mrb[0].mxu0
    %v762 = vpop.f32.mrb[0].mxu0
    %763 = vdwg.mxu0
    %764 = vmatprep.subr.bf16.mxu0 %v662
    %765 = vmatpush1.bf16.msra.mxu0 %v661
    %766 = vmatprep.subr.bf16.mxu0 %v666
    %767 = vmatpush1.bf16.msra.mxu0 %v665
    %768 = vmatprep.subr.bf16.mxu0 %v670
    %769 = vmatpush1.bf16.msra.mxu0 %v669
    %770 = vmatprep.subr.bf16.mxu0 %v674
    %771 = vmatpush1.bf16.msra.mxu0 %v673
    %772 = vmatprep.subr.bf16.mxu0 %v678
    %773 = vmatpush1.bf16.msra.mxu0 %v677
    %774 = vmatprep.subr.bf16.mxu0 %v682
    %775 = vmatpush1.bf16.msra.mxu0 %v681
    %776 = vmatprep.subr.bf16.mxu0 %v686
    %777 = vmatpush1.bf16.msra.mxu0 %v685
    %778 = vmatprep.subr.bf16.mxu0 %v690
    %779 = vmatpush1.bf16.msra.mxu0 %v689
    %780 = vmatprep.subr.bf16.mxu0 0
    %781 = vmatpush1.bf16.msra.mxu0 0
    %782 = vmatprep.subr.bf16.mxu0 0
    %783 = vmatpush1.bf16.msra.mxu0 0
    %784 = vmatprep.subr.bf16.mxu0 0
    %785 = vmatpush1.bf16.msra.mxu0 0
    %786 = vmatprep.subr.bf16.mxu0 0
    %787 = vmatpush1.bf16.msra.mxu0 0
    %788 = vmatprep.subr.bf16.mxu0 0
    %789 = vmatpush1.bf16.msra.mxu0 0
    %790 = vmatprep.subr.bf16.mxu0 0
    %791 = vmatpush1.bf16.msra.mxu0 0
    %792 = vmatprep.subr.bf16.mxu0 0
    %793 = vmatpush1.bf16.msra.mxu0 0
    %794 = vmatprep.subr.bf16.mxu0 0
    %795 = vmatpush1.bf16.msra.mxu0 0
    %796 = vmatprep.mubr.bf16.mxu0 0
    %797 = vmatmul.mubr.bf16.gmra.mrb[0].mxu0 0
    %v798 = vpop.f32.mrb[0].mxu0
    %v799 = vadd.f32 0.0, %v798
    %v800 = vpop.f32.mrb[0].mxu0
    %v801 = vadd.f32 0.0, %v800
    %v802 = vpop.f32.mrb[0].mxu0
    %v803 = vpop.f32.mrb[0].mxu0
    %804 = vdwg.mxu0
    %v805 = vld [vmem:[#allocation2] sm:$0xff]
    %v806 = vld [vmem:[#allocation2 + $0x8] sm:$0xff]
    %v807 = vld [vmem:[#allocation2 + $0x10] sm:$0xff]
    %v808 = vld [vmem:[#allocation2 + $0x18] sm:$0xff]
    %v809 = vadd.f32 %v805, %v758
    %v810 = vadd.f32 %v806, %v760
    %v811 = vadd.f32 %v807, %v799
    %v812 = vadd.f32 %v808, %v801
    %v813 = vxor.u32 %v809, 2147483648
    %v814 = vmul.f32 %v813, 1.442695
    %v815 = vpow.pop %v814
    %v816 = vadd.f32 %v815, 1.0
    %v817 = vrcp.pop %v816
    %v818 = vmul.f32 1.0, %v817
    %v819 = vxor.u32 %v810, 2147483648
    %v820 = vmul.f32 %v819, 1.442695
    %v821 = vpow.pop %v820
    %v822 = vadd.f32 %v821, 1.0
    %v823 = vrcp.pop %v822
    %v824 = vmul.f32 1.0, %v823
    %v825 = vtanh.pop %v811
    %v826 = vxor.u32 %v812, 2147483648
    %v827 = vmul.f32 %v826, 1.442695
    %v828 = vpow.pop %v827
    %v829 = vadd.f32 %v828, 1.0
    %v830 = vrcp.pop %v829
    %v831 = vmul.f32 1.0, %v830
    %v832 = vmul.f32 %v824, 0.0
    %v833 = vmul.f32 %v818, %v825
    %v834 = vadd.f32 %v832, %v833
    %v835 = vtanh.pop %v834
    %v836 = vmul.f32 %v831, %v835
    %837 = vst [vmem:[#allocation3] sm:$0xff] %v836
    %s838 = scalar_lea.vmem [#allocation3], 176
    %839 = vst [vmem:[%s838 + $0x8] sm:$0xff] %v836
    %v840 = vpack.c.bf16 %v836, %v836
    %v841 = vld [vmem:[#allocation4] sm:$0xff]
    %v842 = vld [vmem:[#allocation4 + $0x8] sm:$0xff]
    %v843 = vld [vmem:[#allocation4 + $0x10] sm:$0xff]
    %v844 = vld [vmem:[#allocation4 + $0x18] sm:$0xff]
    %v845 = vld [vmem:[#allocation4 + $0x20] sm:$0xff]
    %v846 = vld [vmem:[#allocation4 + $0x28] sm:$0xff]
    %v847 = vld [vmem:[#allocation4 + $0x30] sm:$0xff]
    %v848 = vld [vmem:[#allocation4 + $0x38] sm:$0xff]
    %v849 = vld [vmem:[#allocation4 + $0x40] sm:$0xff]
    %v850 = vld [vmem:[#allocation4 + $0x48] sm:$0xff]
    %v851 = vld [vmem:[#allocation4 + $0x50] sm:$0xff]
    %v852 = vld [vmem:[#allocation4 + $0x58] sm:$0xff]
    %v853 = vld [vmem:[#allocation4 + $0x60] sm:$0xff]
    %v854 = vld [vmem:[#allocation4 + $0x68] sm:$0xff]
    %v855 = vld [vmem:[#allocation4 + $0x70] sm:$0xff]
    %v856 = vld [vmem:[#allocation4 + $0x78] sm:$0xff]
    %v857 = vld [vmem:[#allocation4 + $0x80] sm:$0xff]
    %v858 = vld [vmem:[#allocation4 + $0x88] sm:$0xff]
    %v859 = vld [vmem:[#allocation4 + $0x90] sm:$0xff]
    %v860 = vld [vmem:[#allocation4 + $0x98] sm:$0xff]
    %v861 = vld [vmem:[#allocation4 + $0xa0] sm:$0xff]
    %v862 = vld [vmem:[#allocation4 + $0xa8] sm:$0xff]
    %v863 = vld [vmem:[#allocation4 + $0xb0] sm:$0xff]
    %v864 = vld [vmem:[#allocation4 + $0xb8] sm:$0xff]
    %v865 = vld [vmem:[#allocation4 + $0xc0] sm:$0xff]
    %v866 = vld [vmem:[#allocation4 + $0xc8] sm:$0xff]
    %v867 = vld [vmem:[#allocation4 + $0xd0] sm:$0xff]
    %v868 = vld [vmem:[#allocation4 + $0xd8] sm:$0xff]
    %v869 = vld [vmem:[#allocation4 + $0xe0] sm:$0xff]
    %v870 = vld [vmem:[#allocation4 + $0xe8] sm:$0xff]
    %v871 = vld [vmem:[#allocation4 + $0xf0] sm:$0xff]
    %v872 = vld [vmem:[#allocation4 + $0xf8] sm:$0xff]
    %v905 = vunpack.c.l.b16 %v841
    %v906 = vunpack.c.h.b16 %v841
    %v907 = vunpack.c.l.b16 %v842
    %v908 = vunpack.c.h.b16 %v842
    %v909 = vunpack.c.l.b16 %v843
    %v910 = vunpack.c.h.b16 %v843
    %v911 = vunpack.c.l.b16 %v844
    %v912 = vunpack.c.h.b16 %v844
    %v913 = vunpack.c.l.b16 %v845
    %v914 = vunpack.c.h.b16 %v845
    %v915 = vunpack.c.l.b16 %v846
    %v916 = vunpack.c.h.b16 %v846
    %v917 = vunpack.c.l.b16 %v847
    %v918 = vunpack.c.h.b16 %v847
    %v919 = vunpack.c.l.b16 %v848
    %v920 = vunpack.c.h.b16 %v848
    %v921 = vunpack.c.l.b16 %v849
    %v922 = vunpack.c.h.b16 %v849
    %v923 = vunpack.c.l.b16 %v850
    %v924 = vunpack.c.h.b16 %v850
    %v925 = vunpack.c.l.b16 %v851
    %v926 = vunpack.c.h.b16 %v851
    %v927 = vunpack.c.l.b16 %v852
    %v928 = vunpack.c.h.b16 %v852
    %v929 = vunpack.c.l.b16 %v853
    %v930 = vunpack.c.h.b16 %v853
    %v931 = vunpack.c.l.b16 %v854
    %v932 = vunpack.c.h.b16 %v854
    %v933 = vunpack.c.l.b16 %v855
    %v934 = vunpack.c.h.b16 %v855
    %v935 = vunpack.c.l.b16 %v856
    %v936 = vunpack.c.h.b16 %v856
    %v937 = vunpack.c.l.b16 %v857
    %v938 = vunpack.c.h.b16 %v857
    %v939 = vunpack.c.l.b16 %v858
    %v940 = vunpack.c.h.b16 %v858
    %v941 = vunpack.c.l.b16 %v859
    %v942 = vunpack.c.h.b16 %v859
    %v943 = vunpack.c.l.b16 %v860
    %v944 = vunpack.c.h.b16 %v860
    %v945 = vunpack.c.l.b16 %v861
    %v946 = vunpack.c.h.b16 %v861
    %v947 = vunpack.c.l.b16 %v862
    %v948 = vunpack.c.h.b16 %v862
    %v949 = vunpack.c.l.b16 %v863
    %v950 = vunpack.c.h.b16 %v863
    %v951 = vunpack.c.l.b16 %v864
    %v952 = vunpack.c.h.b16 %v864
    %v953 = vunpack.c.l.b16 %v865
    %v954 = vunpack.c.h.b16 %v865
    %v955 = vunpack.c.l.b16 %v866
    %v956 = vunpack.c.h.b16 %v866
    %v957 = vunpack.c.l.b16 %v867
    %v958 = vunpack.c.h.b16 %v867
    %v959 = vunpack.c.l.b16 %v868
    %v960 = vunpack.c.h.b16 %v868
    %v961 = vunpack.c.l.b16 %v869
    %v962 = vunpack.c.h.b16 %v869
    %v963 = vunpack.c.l.b16 %v870
    %v964 = vunpack.c.h.b16 %v870
    %v965 = vunpack.c.l.b16 %v871
    %v966 = vunpack.c.h.b16 %v871
    %v967 = vunpack.c.l.b16 %v872
    %v968 = vunpack.c.h.b16 %v872
    %v969 = vpack.c.b16 %v909, %v905
    %v970 = vpack.c.b16 %v910, %v906
    %v971 = vpack.c.b16 %v911, %v907
    %v972 = vpack.c.b16 %v912, %v908
    %v973 = vpack.c.b16 %v917, %v913
    %v974 = vpack.c.b16 %v918, %v914
    %v975 = vpack.c.b16 %v919, %v915
    %v976 = vpack.c.b16 %v920, %v916
    %v977 = vpack.c.b16 %v925, %v921
    %v978 = vpack.c.b16 %v926, %v922
    %v979 = vpack.c.b16 %v927, %v923
    %v980 = vpack.c.b16 %v928, %v924
    %v981 = vpack.c.b16 %v933, %v929
    %v982 = vpack.c.b16 %v934, %v930
    %v983 = vpack.c.b16 %v935, %v931
    %v984 = vpack.c.b16 %v936, %v932
    %v985 = vpack.c.b16 %v941, %v937
    %v986 = vpack.c.b16 %v942, %v938
    %v987 = vpack.c.b16 %v943, %v939
    %v988 = vpack.c.b16 %v944, %v940
    %v989 = vpack.c.b16 %v949, %v945
    %v990 = vpack.c.b16 %v950, %v946
    %v991 = vpack.c.b16 %v951, %v947
    %v992 = vpack.c.b16 %v952, %v948
    %v993 = vpack.c.b16 %v957, %v953
    %v994 = vpack.c.b16 %v958, %v954
    %v995 = vpack.c.b16 %v959, %v955
    %v996 = vpack.c.b16 %v960, %v956
    %v997 = vpack.c.b16 %v965, %v961
    %v998 = vpack.c.b16 %v966, %v962
    %v999 = vpack.c.b16 %v967, %v963
    %v1000 = vpack.c.b16 %v968, %v964
    %1033 = vmatprep.subr.bf16.mxu0 %v970
    %1034 = vmatpush1.bf16.msra.mxu0 %v969
    %1035 = vmatprep.subr.bf16.mxu0 %v974
    %1036 = vmatpush1.bf16.msra.mxu0 %v973
    %1037 = vmatprep.subr.bf16.mxu0 %v978
    %1038 = vmatpush1.bf16.msra.mxu0 %v977
    %1039 = vmatprep.subr.bf16.mxu0 %v982
    %1040 = vmatpush1.bf16.msra.mxu0 %v981
    %1041 = vmatprep.subr.bf16.mxu0 %v986
    %1042 = vmatpush1.bf16.msra.mxu0 %v985
    %1043 = vmatprep.subr.bf16.mxu0 %v990
    %1044 = vmatpush1.bf16.msra.mxu0 %v989
    %1045 = vmatprep.subr.bf16.mxu0 %v994
    %1046 = vmatpush1.bf16.msra.mxu0 %v993
    %1047 = vmatprep.subr.bf16.mxu0 %v998
    %1048 = vmatpush1.bf16.msra.mxu0 %v997
    %1049 = vmatprep.subr.bf16.mxu0 0
    %1050 = vmatpush1.bf16.msra.mxu0 0
    %1051 = vmatprep.subr.bf16.mxu0 0
    %1052 = vmatpush1.bf16.msra.mxu0 0
    %1053 = vmatprep.subr.bf16.mxu0 0
    %1054 = vmatpush1.bf16.msra.mxu0 0
    %1055 = vmatprep.subr.bf16.mxu0 0
    %1056 = vmatpush1.bf16.msra.mxu0 0
    %1057 = vmatprep.subr.bf16.mxu0 0
    %1058 = vmatpush1.bf16.msra.mxu0 0
    %1059 = vmatprep.subr.bf16.mxu0 0
    %1060 = vmatpush1.bf16.msra.mxu0 0
    %1061 = vmatprep.subr.bf16.mxu0 0
    %1062 = vmatpush1.bf16.msra.mxu0 0
    %1063 = vmatprep.subr.bf16.mxu0 0
    %1064 = vmatpush1.bf16.msra.mxu0 0
    %1065 = vmatprep.mubr.bf16.mxu0 0
    %1066 = vmatmul.mubr.bf16.gmra.mrb[0].mxu0 %v840
    %v1067 = vpop.f32.mrb[0].mxu0
    %v1068 = vadd.f32 0.0, %v1067
    %v1069 = vpop.f32.mrb[0].mxu0
    %v1070 = vadd.f32 0.0, %v1069
    %v1071 = vpop.f32.mrb[0].mxu0
    %v1072 = vpop.f32.mrb[0].mxu0
    %1073 = vdwg.mxu0
    %1074 = vmatprep.subr.bf16.mxu0 %v972
    %1075 = vmatpush1.bf16.msra.mxu0 %v971
    %1076 = vmatprep.subr.bf16.mxu0 %v976
    %1077 = vmatpush1.bf16.msra.mxu0 %v975
    %1078 = vmatprep.subr.bf16.mxu0 %v980
    %1079 = vmatpush1.bf16.msra.mxu0 %v979
    %1080 = vmatprep.subr.bf16.mxu0 %v984
    %1081 = vmatpush1.bf16.msra.mxu0 %v983
    %1082 = vmatprep.subr.bf16.mxu0 %v988
    %1083 = vmatpush1.bf16.msra.mxu0 %v987
    %1084 = vmatprep.subr.bf16.mxu0 %v992
    %1085 = vmatpush1.bf16.msra.mxu0 %v991
    %1086 = vmatprep.subr.bf16.mxu0 %v996
    %1087 = vmatpush1.bf16.msra.mxu0 %v995
    %1088 = vmatprep.subr.bf16.mxu0 %v1000
    %1089 = vmatpush1.bf16.msra.mxu0 %v999
    %1090 = vmatprep.subr.bf16.mxu0 0
    %1091 = vmatpush1.bf16.msra.mxu0 0
    %1092 = vmatprep.subr.bf16.mxu0 0
    %1093 = vmatpush1.bf16.msra.mxu0 0
    %1094 = vmatprep.subr.bf16.mxu0 0
    %1095 = vmatpush1.bf16.msra.mxu0 0
    %1096 = vmatprep.subr.bf16.mxu0 0
    %1097 = vmatpush1.bf16.msra.mxu0 0
    %1098 = vmatprep.subr.bf16.mxu0 0
    %1099 = vmatpush1.bf16.msra.mxu0 0
    %1100 = vmatprep.subr.bf16.mxu0 0
    %1101 = vmatpush1.bf16.msra.mxu0 0
    %1102 = vmatprep.subr.bf16.mxu0 0
    %1103 = vmatpush1.bf16.msra.mxu0 0
    %1104 = vmatprep.subr.bf16.mxu0 0
    %1105 = vmatpush1.bf16.msra.mxu0 0
    %1106 = vmatprep.mubr.bf16.mxu0 0
    %1107 = vmatmul.mubr.bf16.gmra.mrb[0].mxu0 %v840
    %v1108 = vpop.f32.mrb[0].mxu0
    %v1109 = vadd.f32 0.0, %v1108
    %v1110 = vpop.f32.mrb[0].mxu0
    %v1111 = vadd.f32 0.0, %v1110
    %v1112 = vpop.f32.mrb[0].mxu0
    %v1113 = vpop.f32.mrb[0].mxu0
    %1114 = vdwg.mxu0
    %s1115 = scalar_lea.vmem [#allocation2], 32
    %v1116 = vld [vmem:[%s1115] sm:$0xff]
    %v1117 = vld [vmem:[%s1115 + $0x8] sm:$0xff]
    %v1118 = vld [vmem:[%s1115 + $0x10] sm:$0xff]
    %v1119 = vld [vmem:[%s1115 + $0x18] sm:$0xff]
    %v1120 = vadd.f32 %v1116, %v1068
    %v1121 = vadd.f32 %v1117, %v1070
    %v1122 = vadd.f32 %v1118, %v1109
    %v1123 = vadd.f32 %v1119, %v1111
    %v1124 = vxor.u32 %v1120, 2147483648
    %v1125 = vmul.f32 %v1124, 1.442695
    %v1126 = vpow.pop %v1125
    %v1127 = vadd.f32 %v1126, 1.0
    %v1128 = vrcp.pop %v1127
    %v1129 = vmul.f32 1.0, %v1128
    %v1130 = vxor.u32 %v1121, 2147483648
    %v1131 = vmul.f32 %v1130, 1.442695
    %v1132 = vpow.pop %v1131
    %v1133 = vadd.f32 %v1132, 1.0
    %v1134 = vrcp.pop %v1133
    %v1135 = vmul.f32 1.0, %v1134
    %v1136 = vtanh.pop %v1122
    %v1137 = vxor.u32 %v1123, 2147483648
    %v1138 = vmul.f32 %v1137, 1.442695
    %v1139 = vpow.pop %v1138
    %v1140 = vadd.f32 %v1139, 1.0
    %v1141 = vrcp.pop %v1140
    %v1142 = vmul.f32 1.0, %v1141
    %v1143 = vmul.f32 %v1135, %v834
    %v1144 = vmul.f32 %v1129, %v1136
    %v1145 = vadd.f32 %v1143, %v1144
    %v1146 = vtanh.pop %v1145
    %v1147 = vmul.f32 %v1142, %v1146
    %s1148 = scalar_lea.vmem [#allocation3], 16
    %1149 = vst [vmem:[%s1148] sm:$0xff] %v1147
    %s1150 = scalar_lea.vmem [#allocation3], 160
    %1151 = vst [vmem:[%s1150 + $0x8] sm:$0xff] %v1147
    %v1152 = vpack.c.bf16 %v1147, %v1147
    %v1153 = vld [vmem:[#allocation4] sm:$0xff]
    %v1154 = vld [vmem:[#allocation4 + $0x8] sm:$0xff]
    %v1155 = vld [vmem:[#allocation4 + $0x10] sm:$0xff]
    %v1156 = vld [vmem:[#allocation4 + $0x18] sm:$0xff]
    %v1157 = vld [vmem:[#allocation4 + $0x20] sm:$0xff]
    %v1158 = vld [vmem:[#allocation4 + $0x28] sm:$0xff]
    %v1159 = vld [vmem:[#allocation4 + $0x30] sm:$0xff]
    %v1160 = vld [vmem:[#allocation4 + $0x38] sm:$0xff]
    %v1161 = vld [vmem:[#allocation4 + $0x40] sm:$0xff]
    %v1162 = vld [vmem:[#allocation4 + $0x48] sm:$0xff]
    %v1163 = vld [vmem:[#allocation4 + $0x50] sm:$0xff]
    %v1164 = vld [vmem:[#allocation4 + $0x58] sm:$0xff]
    %v1165 = vld [vmem:[#allocation4 + $0x60] sm:$0xff]
    %v1166 = vld [vmem:[#allocation4 + $0x68] sm:$0xff]
    %v1167 = vld [vmem:[#allocation4 + $0x70] sm:$0xff]
    %v1168 = vld [vmem:[#allocation4 + $0x78] sm:$0xff]
    %v1169 = vld [vmem:[#allocation4 + $0x80] sm:$0xff]
    %v1170 = vld [vmem:[#allocation4 + $0x88] sm:$0xff]
    %v1171 = vld [vmem:[#allocation4 + $0x90] sm:$0xff]
    %v1172 = vld [vmem:[#allocation4 + $0x98] sm:$0xff]
    %v1173 = vld [vmem:[#allocation4 + $0xa0] sm:$0xff]
    %v1174 = vld [vmem:[#allocation4 + $0xa8] sm:$0xff]
    %v1175 = vld [vmem:[#allocation4 + $0xb0] sm:$0xff]
    %v1176 = vld [vmem:[#allocation4 + $0xb8] sm:$0xff]
    %v1177 = vld [vmem:[#allocation4 + $0xc0] sm:$0xff]
    %v1178 = vld [vmem:[#allocation4 + $0xc8] sm:$0xff]
    %v1179 = vld [vmem:[#allocation4 + $0xd0] sm:$0xff]
    %v1180 = vld [vmem:[#allocation4 + $0xd8] sm:$0xff]
    %v1181 = vld [vmem:[#allocation4 + $0xe0] sm:$0xff]
    %v1182 = vld [vmem:[#allocation4 + $0xe8] sm:$0xff]
    %v1183 = vld [vmem:[#allocation4 + $0xf0] sm:$0xff]
    %v1184 = vld [vmem:[#allocation4 + $0xf8] sm:$0xff]
    %v1217 = vunpack.c.l.b16 %v1153
    %v1218 = vunpack.c.h.b16 %v1153
    %v1219 = vunpack.c.l.b16 %v1154
    %v1220 = vunpack.c.h.b16 %v1154
    %v1221 = vunpack.c.l.b16 %v1155
    %v1222 = vunpack.c.h.b16 %v1155
    %v1223 = vunpack.c.l.b16 %v1156
    %v1224 = vunpack.c.h.b16 %v1156
    %v1225 = vunpack.c.l.b16 %v1157
    %v1226 = vunpack.c.h.b16 %v1157
    %v1227 = vunpack.c.l.b16 %v1158
    %v1228 = vunpack.c.h.b16 %v1158
    %v1229 = vunpack.c.l.b16 %v1159
    %v1230 = vunpack.c.h.b16 %v1159
    %v1231 = vunpack.c.l.b16 %v1160
    %v1232 = vunpack.c.h.b16 %v1160
    %v1233 = vunpack.c.l.b16 %v1161
    %v1234 = vunpack.c.h.b16 %v1161
    %v1235 = vunpack.c.l.b16 %v1162
    %v1236 = vunpack.c.h.b16 %v1162
    %v1237 = vunpack.c.l.b16 %v1163
    %v1238 = vunpack.c.h.b16 %v1163
    %v1239 = vunpack.c.l.b16 %v1164
    %v1240 = vunpack.c.h.b16 %v1164
    %v1241 = vunpack.c.l.b16 %v1165
    %v1242 = vunpack.c.h.b16 %v1165
    %v1243 = vunpack.c.l.b16 %v1166
    %v1244 = vunpack.c.h.b16 %v1166
    %v1245 = vunpack.c.l.b16 %v1167
    %v1246 = vunpack.c.h.b16 %v1167
    %v1247 = vunpack.c.l.b16 %v1168
    %v1248 = vunpack.c.h.b16 %v1168
    %v1249 = vunpack.c.l.b16 %v1169
    %v1250 = vunpack.c.h.b16 %v1169
    %v1251 = vunpack.c.l.b16 %v1170
    %v1252 = vunpack.c.h.b16 %v1170
    %v1253 = vunpack.c.l.b16 %v1171
    %v1254 = vunpack.c.h.b16 %v1171
    %v1255 = vunpack.c.l.b16 %v1172
    %v1256 = vunpack.c.h.b16 %v1172
    %v1257 = vunpack.c.l.b16 %v1173
    %v1258 = vunpack.c.h.b16 %v1173
    %v1259 = vunpack.c.l.b16 %v1174
    %v1260 = vunpack.c.h.b16 %v1174
    %v1261 = vunpack.c.l.b16 %v1175
    %v1262 = vunpack.c.h.b16 %v1175
    %v1263 = vunpack.c.l.b16 %v1176
    %v1264 = vunpack.c.h.b16 %v1176
    %v1265 = vunpack.c.l.b16 %v1177
    %v1266 = vunpack.c.h.b16 %v1177
    %v1267 = vunpack.c.l.b16 %v1178
    %v1268 = vunpack.c.h.b16 %v1178
    %v1269 = vunpack.c.l.b16 %v1179
    %v1270 = vunpack.c.h.b16 %v1179
    %v1271 = vunpack.c.l.b16 %v1180
    %v1272 = vunpack.c.h.b16 %v1180
    %v1273 = vunpack.c.l.b16 %v1181
    %v1274 = vunpack.c.h.b16 %v1181
    %v1275 = vunpack.c.l.b16 %v1182
    %v1276 = vunpack.c.h.b16 %v1182
    %v1277 = vunpack.c.l.b16 %v1183
    %v1278 = vunpack.c.h.b16 %v1183
    %v1279 = vunpack.c.l.b16 %v1184
    %v1280 = vunpack.c.h.b16 %v1184
    %v1281 = vpack.c.b16 %v1221, %v1217
    %v1282 = vpack.c.b16 %v1222, %v1218
    %v1283 = vpack.c.b16 %v1223, %v1219
    %v1284 = vpack.c.b16 %v1224, %v1220
    %v1285 = vpack.c.b16 %v1229, %v1225
    %v1286 = vpack.c.b16 %v1230, %v1226
    %v1287 = vpack.c.b16 %v1231, %v1227
    %v1288 = vpack.c.b16 %v1232, %v1228
    %v1289 = vpack.c.b16 %v1237, %v1233
    %v1290 = vpack.c.b16 %v1238, %v1234
    %v1291 = vpack.c.b16 %v1239, %v1235
    %v1292 = vpack.c.b16 %v1240, %v1236
    %v1293 = vpack.c.b16 %v1245, %v1241
    %v1294 = vpack.c.b16 %v1246, %v1242
    %v1295 = vpack.c.b16 %v1247, %v1243
    %v1296 = vpack.c.b16 %v1248, %v1244
    %v1297 = vpack.c.b16 %v1253, %v1249
    %v1298 = vpack.c.b16 %v1254, %v1250
    %v1299 = vpack.c.b16 %v1255, %v1251
    %v1300 = vpack.c.b16 %v1256, %v1252
    %v1301 = vpack.c.b16 %v1261, %v1257
    %v1302 = vpack.c.b16 %v1262, %v1258
    %v1303 = vpack.c.b16 %v1263, %v1259
    %v1304 = vpack.c.b16 %v1264, %v1260
    %v1305 = vpack.c.b16 %v1269, %v1265
    %v1306 = vpack.c.b16 %v1270, %v1266
    %v1307 = vpack.c.b16 %v1271, %v1267
    %v1308 = vpack.c.b16 %v1272, %v1268
    %v1309 = vpack.c.b16 %v1277, %v1273
    %v1310 = vpack.c.b16 %v1278, %v1274
    %v1311 = vpack.c.b16 %v1279, %v1275
    %v1312 = vpack.c.b16 %v1280, %v1276
    %1345 = vmatprep.subr.bf16.mxu0 %v1282
    %1346 = vmatpush1.bf16.msra.mxu0 %v1281
    %1347 = vmatprep.subr.bf16.mxu0 %v1286
    %1348 = vmatpush1.bf16.msra.mxu0 %v1285
    %1349 = vmatprep.subr.bf16.mxu0 %v1290
    %1350 = vmatpush1.bf16.msra.mxu0 %v1289
    %1351 = vmatprep.subr.bf16.mxu0 %v1294
    %1352 = vmatpush1.bf16.msra.mxu0 %v1293
    %1353 = vmatprep.subr.bf16.mxu0 %v1298
    %1354 = vmatpush1.bf16.msra.mxu0 %v1297
    %1355 = vmatprep.subr.bf16.mxu0 %v1302
    %1356 = vmatpush1.bf16.msra.mxu0 %v1301
    %1357 = vmatprep.subr.bf16.mxu0 %v1306
    %1358 = vmatpush1.bf16.msra.mxu0 %v1305
    %1359 = vmatprep.subr.bf16.mxu0 %v1310
    %1360 = vmatpush1.bf16.msra.mxu0 %v1309
    %1361 = vmatprep.subr.bf16.mxu0 0
    %1362 = vmatpush1.bf16.msra.mxu0 0
    %1363 = vmatprep.subr.bf16.mxu0 0
    %1364 = vmatpush1.bf16.msra.mxu0 0
    %1365 = vmatprep.subr.bf16.mxu0 0
    %1366 = vmatpush1.bf16.msra.mxu0 0
    %1367 = vmatprep.subr.bf16.mxu0 0
    %1368 = vmatpush1.bf16.msra.mxu0 0
    %1369 = vmatprep.subr.bf16.mxu0 0
    %1370 = vmatpush1.bf16.msra.mxu0 0
    %1371 = vmatprep.subr.bf16.mxu0 0
    %1372 = vmatpush1.bf16.msra.mxu0 0
    %1373 = vmatprep.subr.bf16.mxu0 0
    %1374 = vmatpush1.bf16.msra.mxu0 0
    %1375 = vmatprep.subr.bf16.mxu0 0
    %1376 = vmatpush1.bf16.msra.mxu0 0
    %1377 = vmatprep.mubr.bf16.mxu0 0
    %1378 = vmatmul.mubr.bf16.gmra.mrb[0].mxu0 %v1152
    %v1379 = vpop.f32.mrb[0].mxu0
    %v1380 = vadd.f32 0.0, %v1379
    %v1381 = vpop.f32.mrb[0].mxu0
    %v1382 = vadd.f32 0.0, %v1381
    %v1383 = vpop.f32.mrb[0].mxu0
    %v1384 = vpop.f32.mrb[0].mxu0
    %1385 = vdwg.mxu0
    %1386 = vmatprep.subr.bf16.mxu0 %v1284
    %1387 = vmatpush1.bf16.msra.mxu0 %v1283
    %1388 = vmatprep.subr.bf16.mxu0 %v1288
    %1389 = vmatpush1.bf16.msra.mxu0 %v1287
    %1390 = vmatprep.subr.bf16.mxu0 %v1292
    %1391 = vmatpush1.bf16.msra.mxu0 %v1291
    %1392 = vmatprep.subr.bf16.mxu0 %v1296
    %1393 = vmatpush1.bf16.msra.mxu0 %v1295
    %1394 = vmatprep.subr.bf16.mxu0 %v1300
    %1395 = vmatpush1.bf16.msra.mxu0 %v1299
    %1396 = vmatprep.subr.bf16.mxu0 %v1304
    %1397 = vmatpush1.bf16.msra.mxu0 %v1303
    %1398 = vmatprep.subr.bf16.mxu0 %v1308
    %1399 = vmatpush1.bf16.msra.mxu0 %v1307
    %1400 = vmatprep.subr.bf16.mxu0 %v1312
    %1401 = vmatpush1.bf16.msra.mxu0 %v1311
    %1402 = vmatprep.subr.bf16.mxu0 0
    %1403 = vmatpush1.bf16.msra.mxu0 0
    %1404 = vmatprep.subr.bf16.mxu0 0
    %1405 = vmatpush1.bf16.msra.mxu0 0
    %1406 = vmatprep.subr.bf16.mxu0 0
    %1407 = vmatpush1.bf16.msra.mxu0 0
    %1408 = vmatprep.subr.bf16.mxu0 0
    %1409 = vmatpush1.bf16.msra.mxu0 0
    %1410 = vmatprep.subr.bf16.mxu0 0
    %1411 = vmatpush1.bf16.msra.mxu0 0
    %1412 = vmatprep.subr.bf16.mxu0 0
    %1413 = vmatpush1.bf16.msra.mxu0 0
    %1414 = vmatprep.subr.bf16.mxu0 0
    %1415 = vmatpush1.bf16.msra.mxu0 0
    %1416 = vmatprep.subr.bf16.mxu0 0
    %1417 = vmatpush1.bf16.msra.mxu0 0
    %1418 = vmatprep.mubr.bf16.mxu0 0
    %1419 = vmatmul.mubr.bf16.gmra.mrb[0].mxu0 %v1152
    %v1420 = vpop.f32.mrb[0].mxu0
    %v1421 = vadd.f32 0.0, %v1420
    %v1422 = vpop.f32.mrb[0].mxu0
    %v1423 = vadd.f32 0.0, %v1422
    %v1424 = vpop.f32.mrb[0].mxu0
    %v1425 = vpop.f32.mrb[0].mxu0
    %1426 = vdwg.mxu0
    %s1427 = scalar_lea.vmem [#allocation2], 64
    %v1428 = vld [vmem:[%s1427] sm:$0xff]
    %v1429 = vld [vmem:[%s1427 + $0x8] sm:$0xff]
    %v1430 = vld [vmem:[%s1427 + $0x10] sm:$0xff]
    %v1431 = vld [vmem:[%s1427 + $0x18] sm:$0xff]
    %v1432 = vadd.f32 %v1428, %v1380
    %v1433 = vadd.f32 %v1429, %v1382
    %v1434 = vadd.f32 %v1430, %v1421
    %v1435 = vadd.f32 %v1431, %v1423
    %v1436 = vxor.u32 %v1432, 2147483648
    %v1437 = vmul.f32 %v1436, 1.442695
    %v1438 = vpow.pop %v1437
    %v1439 = vadd.f32 %v1438, 1.0
    %v1440 = vrcp.pop %v1439
    %v1441 = vmul.f32 1.0, %v1440
    %v1442 = vxor.u32 %v1433, 2147483648
    %v1443 = vmul.f32 %v1442, 1.442695
    %v1444 = vpow.pop %v1443
    %v1445 = vadd.f32 %v1444, 1.0
    %v1446 = vrcp.pop %v1445
    %v1447 = vmul.f32 1.0, %v1446
    %v1448 = vtanh.pop %v1434
    %v1449 = vxor.u32 %v1435, 2147483648
    %v1450 = vmul.f32 %v1449, 1.442695
    %v1451 = vpow.pop %v1450
    %v1452 = vadd.f32 %v1451, 1.0
    %v1453 = vrcp.pop %v1452
    %v1454 = vmul.f32 1.0, %v1453
    %v1455 = vmul.f32 %v1447, %v1145
    %v1456 = vmul.f32 %v1441, %v1448
    %v1457 = vadd.f32 %v1455, %v1456
    %v1458 = vtanh.pop %v1457
    %v1459 = vmul.f32 %v1454, %v1458
    %s1460 = scalar_lea.vmem [#allocation3], 32
    %1461 = vst [vmem:[%s1460] sm:$0xff] %v1459
    %s1462 = scalar_lea.vmem [#allocation3], 144
    %1463 = vst [vmem:[%s1462 + $0x8] sm:$0xff] %v1459
    %v1464 = vpack.c.bf16 %v1459, %v1459
    %v1465 = vld [vmem:[#allocation4] sm:$0xff]
    %v1466 = vld [vmem:[#allocation4 + $0x8] sm:$0xff]
    %v1467 = vld [vmem:[#allocation4 + $0x10] sm:$0xff]
    %v1468 = vld [vmem:[#allocation4 + $0x18] sm:$0xff]
    %v1469 = vld [vmem:[#allocation4 + $0x20] sm:$0xff]
    %v1470 = vld [vmem:[#allocation4 + $0x28] sm:$0xff]
    %v1471 = vld [vmem:[#allocation4 + $0x30] sm:$0xff]
    %v1472 = vld [vmem:[#allocation4 + $0x38] sm:$0xff]
    %v1473 = vld [vmem:[#allocation4 + $0x40] sm:$0xff]
    %v1474 = vld [vmem:[#allocation4 + $0x48] sm:$0xff]
    %v1475 = vld [vmem:[#allocation4 + $0x50] sm:$0xff]
    %v1476 = vld [vmem:[#allocation4 + $0x58] sm:$0xff]
    %v1477 = vld [vmem:[#allocation4 + $0x60] sm:$0xff]
    %v1478 = vld [vmem:[#allocation4 + $0x68] sm:$0xff]
    %v1479 = vld [vmem:[#allocation4 + $0x70] sm:$0xff]
    %v1480 = vld [vmem:[#allocation4 + $0x78] sm:$0xff]
    %v1481 = vld [vmem:[#allocation4 + $0x80] sm:$0xff]
    %v1482 = vld [vmem:[#allocation4 + $0x88] sm:$0xff]
    %v1483 = vld [vmem:[#allocation4 + $0x90] sm:$0xff]
    %v1484 = vld [vmem:[#allocation4 + $0x98] sm:$0xff]
    %v1485 = vld [vmem:[#allocation4 + $0xa0] sm:$0xff]
    %v1486 = vld [vmem:[#allocation4 + $0xa8] sm:$0xff]
    %v1487 = vld [vmem:[#allocation4 + $0xb0] sm:$0xff]
    %v1488 = vld [vmem:[#allocation4 + $0xb8] sm:$0xff]
    %v1489 = vld [vmem:[#allocation4 + $0xc0] sm:$0xff]
    %v1490 = vld [vmem:[#allocation4 + $0xc8] sm:$0xff]
    %v1491 = vld [vmem:[#allocation4 + $0xd0] sm:$0xff]
    %v1492 = vld [vmem:[#allocation4 + $0xd8] sm:$0xff]
    %v1493 = vld [vmem:[#allocation4 + $0xe0] sm:$0xff]
    %v1494 = vld [vmem:[#allocation4 + $0xe8] sm:$0xff]
    %v1495 = vld [vmem:[#allocation4 + $0xf0] sm:$0xff]
    %v1496 = vld [vmem:[#allocation4 + $0xf8] sm:$0xff]
    %v1529 = vunpack.c.l.b16 %v1465
    %v1530 = vunpack.c.h.b16 %v1465
    %v1531 = vunpack.c.l.b16 %v1466
    %v1532 = vunpack.c.h.b16 %v1466
    %v1533 = vunpack.c.l.b16 %v1467
    %v1534 = vunpack.c.h.b16 %v1467
    %v1535 = vunpack.c.l.b16 %v1468
    %v1536 = vunpack.c.h.b16 %v1468
    %v1537 = vunpack.c.l.b16 %v1469
    %v1538 = vunpack.c.h.b16 %v1469
    %v1539 = vunpack.c.l.b16 %v1470
    %v1540 = vunpack.c.h.b16 %v1470
    %v1541 = vunpack.c.l.b16 %v1471
    %v1542 = vunpack.c.h.b16 %v1471
    %v1543 = vunpack.c.l.b16 %v1472
    %v1544 = vunpack.c.h.b16 %v1472
    %v1545 = vunpack.c.l.b16 %v1473
    %v1546 = vunpack.c.h.b16 %v1473
    %v1547 = vunpack.c.l.b16 %v1474
    %v1548 = vunpack.c.h.b16 %v1474
    %v1549 = vunpack.c.l.b16 %v1475
    %v1550 = vunpack.c.h.b16 %v1475
    %v1551 = vunpack.c.l.b16 %v1476
    %v1552 = vunpack.c.h.b16 %v1476
    %v1553 = vunpack.c.l.b16 %v1477
    %v1554 = vunpack.c.h.b16 %v1477
    %v1555 = vunpack.c.l.b16 %v1478
    %v1556 = vunpack.c.h.b16 %v1478
    %v1557 = vunpack.c.l.b16 %v1479
    %v1558 = vunpack.c.h.b16 %v1479
    %v1559 = vunpack.c.l.b16 %v1480
    %v1560 = vunpack.c.h.b16 %v1480
    %v1561 = vunpack.c.l.b16 %v1481
    %v1562 = vunpack.c.h.b16 %v1481
    %v1563 = vunpack.c.l.b16 %v1482
    %v1564 = vunpack.c.h.b16 %v1482
    %v1565 = vunpack.c.l.b16 %v1483
    %v1566 = vunpack.c.h.b16 %v1483
    %v1567 = vunpack.c.l.b16 %v1484
    %v1568 = vunpack.c.h.b16 %v1484
    %v1569 = vunpack.c.l.b16 %v1485
    %v1570 = vunpack.c.h.b16 %v1485
    %v1571 = vunpack.c.l.b16 %v1486
    %v1572 = vunpack.c.h.b16 %v1486
    %v1573 = vunpack.c.l.b16 %v1487
    %v1574 = vunpack.c.h.b16 %v1487
    %v1575 = vunpack.c.l.b16 %v1488
    %v1576 = vunpack.c.h.b16 %v1488
    %v1577 = vunpack.c.l.b16 %v1489
    %v1578 = vunpack.c.h.b16 %v1489
    %v1579 = vunpack.c.l.b16 %v1490
    %v1580 = vunpack.c.h.b16 %v1490
    %v1581 = vunpack.c.l.b16 %v1491
    %v1582 = vunpack.c.h.b16 %v1491
    %v1583 = vunpack.c.l.b16 %v1492
    %v1584 = vunpack.c.h.b16 %v1492
    %v1585 = vunpack.c.l.b16 %v1493
    %v1586 = vunpack.c.h.b16 %v1493
    %v1587 = vunpack.c.l.b16 %v1494
    %v1588 = vunpack.c.h.b16 %v1494
    %v1589 = vunpack.c.l.b16 %v1495
    %v1590 = vunpack.c.h.b16 %v1495
    %v1591 = vunpack.c.l.b16 %v1496
    %v1592 = vunpack.c.h.b16 %v1496
    %v1593 = vpack.c.b16 %v1533, %v1529
    %v1594 = vpack.c.b16 %v1534, %v1530
    %v1595 = vpack.c.b16 %v1535, %v1531
    %v1596 = vpack.c.b16 %v1536, %v1532
    %v1597 = vpack.c.b16 %v1541, %v1537
    %v1598 = vpack.c.b16 %v1542, %v1538
    %v1599 = vpack.c.b16 %v1543, %v1539
    %v1600 = vpack.c.b16 %v1544, %v1540
    %v1601 = vpack.c.b16 %v1549, %v1545
    %v1602 = vpack.c.b16 %v1550, %v1546
    %v1603 = vpack.c.b16 %v1551, %v1547
    %v1604 = vpack.c.b16 %v1552, %v1548
    %v1605 = vpack.c.b16 %v1557, %v1553
    %v1606 = vpack.c.b16 %v1558, %v1554
    %v1607 = vpack.c.b16 %v1559, %v1555
    %v1608 = vpack.c.b16 %v1560, %v1556
    %v1609 = vpack.c.b16 %v1565, %v1561
    %v1610 = vpack.c.b16 %v1566, %v1562
    %v1611 = vpack.c.b16 %v1567, %v1563
    %v1612 = vpack.c.b16 %v1568, %v1564
    %v1613 = vpack.c.b16 %v1573, %v1569
    %v1614 = vpack.c.b16 %v1574, %v1570
    %v1615 = vpack.c.b16 %v1575, %v1571
    %v1616 = vpack.c.b16 %v1576, %v1572
    %v1617 = vpack.c.b16 %v1581, %v1577
    %v1618 = vpack.c.b16 %v1582, %v1578
    %v1619 = vpack.c.b16 %v1583, %v1579
    %v1620 = vpack.c.b16 %v1584, %v1580
    %v1621 = vpack.c.b16 %v1589, %v1585
    %v1622 = vpack.c.b16 %v1590, %v1586
    %v1623 = vpack.c.b16 %v1591, %v1587
    %v1624 = vpack.c.b16 %v1592, %v1588
    %1657 = vmatprep.subr.bf16.mxu0 %v1594
    %1658 = vmatpush1.bf16.msra.mxu0 %v1593
    %1659 = vmatprep.subr.bf16.mxu0 %v1598
    %1660 = vmatpush1.bf16.msra.mxu0 %v1597
    %1661 = vmatprep.subr.bf16.mxu0 %v1602
    %1662 = vmatpush1.bf16.msra.mxu0 %v1601
    %1663 = vmatprep.subr.bf16.mxu0 %v1606
    %1664 = vmatpush1.bf16.msra.mxu0 %v1605
    %1665 = vmatprep.subr.bf16.mxu0 %v1610
    %1666 = vmatpush1.bf16.msra.mxu0 %v1609
    %1667 = vmatprep.subr.bf16.mxu0 %v1614
    %1668 = vmatpush1.bf16.msra.mxu0 %v1613
    %1669 = vmatprep.subr.bf16.mxu0 %v1618
    %1670 = vmatpush1.bf16.msra.mxu0 %v1617
    %1671 = vmatprep.subr.bf16.mxu0 %v1622
    %1672 = vmatpush1.bf16.msra.mxu0 %v1621
    %1673 = vmatprep.subr.bf16.mxu0 0
    %1674 = vmatpush1.bf16.msra.mxu0 0
    %1675 = vmatprep.subr.bf16.mxu0 0
    %1676 = vmatpush1.bf16.msra.mxu0 0
    %1677 = vmatprep.subr.bf16.mxu0 0
    %1678 = vmatpush1.bf16.msra.mxu0 0
    %1679 = vmatprep.subr.bf16.mxu0 0
    %1680 = vmatpush1.bf16.msra.mxu0 0
    %1681 = vmatprep.subr.bf16.mxu0 0
    %1682 = vmatpush1.bf16.msra.mxu0 0
    %1683 = vmatprep.subr.bf16.mxu0 0
    %1684 = vmatpush1.bf16.msra.mxu0 0
    %1685 = vmatprep.subr.bf16.mxu0 0
    %1686 = vmatpush1.bf16.msra.mxu0 0
    %1687 = vmatprep.subr.bf16.mxu0 0
    %1688 = vmatpush1.bf16.msra.mxu0 0
    %1689 = vmatprep.mubr.bf16.mxu0 0
    %1690 = vmatmul.mubr.bf16.gmra.mrb[0].mxu0 %v1464
    %v1691 = vpop.f32.mrb[0].mxu0
    %v1692 = vadd.f32 0.0, %v1691
    %v1693 = vpop.f32.mrb[0].mxu0
    %v1694 = vadd.f32 0.0, %v1693
    %v1695 = vpop.f32.mrb[0].mxu0
    %v1696 = vpop.f32.mrb[0].mxu0
    %1697 = vdwg.mxu0
    %1698 = vmatprep.subr.bf16.mxu0 %v1596
    %1699 = vmatpush1.bf16.msra.mxu0 %v1595
    %1700 = vmatprep.subr.bf16.mxu0 %v1600
    %1701 = vmatpush1.bf16.msra.mxu0 %v1599
    %1702 = vmatprep.subr.bf16.mxu0 %v1604
    %1703 = vmatpush1.bf16.msra.mxu0 %v1603
    %1704 = vmatprep.subr.bf16.mxu0 %v1608
    %1705 = vmatpush1.bf16.msra.mxu0 %v1607
    %1706 = vmatprep.subr.bf16.mxu0 %v1612
    %1707 = vmatpush1.bf16.msra.mxu0 %v1611
    %1708 = vmatprep.subr.bf16.mxu0 %v1616
    %1709 = vmatpush1.bf16.msra.mxu0 %v1615
    %1710 = vmatprep.subr.bf16.mxu0 %v1620
    %1711 = vmatpush1.bf16.msra.mxu0 %v1619
    %1712 = vmatprep.subr.bf16.mxu0 %v1624
    %1713 = vmatpush1.bf16.msra.mxu0 %v1623
    %1714 = vmatprep.subr.bf16.mxu0 0
    %1715 = vmatpush1.bf16.msra.mxu0 0
    %1716 = vmatprep.subr.bf16.mxu0 0
    %1717 = vmatpush1.bf16.msra.mxu0 0
    %1718 = vmatprep.subr.bf16.mxu0 0
    %1719 = vmatpush1.bf16.msra.mxu0 0
    %1720 = vmatprep.subr.bf16.mxu0 0
    %1721 = vmatpush1.bf16.msra.mxu0 0
    %1722 = vmatprep.subr.bf16.mxu0 0
    %1723 = vmatpush1.bf16.msra.mxu0 0
    %1724 = vmatprep.subr.bf16.mxu0 0
    %1725 = vmatpush1.bf16.msra.mxu0 0
    %1726 = vmatprep.subr.bf16.mxu0 0
    %1727 = vmatpush1.bf16.msra.mxu0 0
    %1728 = vmatprep.subr.bf16.mxu0 0
    %1729 = vmatpush1.bf16.msra.mxu0 0
    %1730 = vmatprep.mubr.bf16.mxu0 0
    %1731 = vmatmul.mubr.bf16.gmra.mrb[0].mxu0 %v1464
    %v1732 = vpop.f32.mrb[0].mxu0
    %v1733 = vadd.f32 0.0, %v1732
    %v1734 = vpop.f32.mrb[0].mxu0
    %v1735 = vadd.f32 0.0, %v1734
    %v1736 = vpop.f32.mrb[0].mxu0
    %v1737 = vpop.f32.mrb[0].mxu0
    %1738 = vdwg.mxu0
    %s1739 = scalar_lea.vmem [#allocation2], 96
    %v1740 = vld [vmem:[%s1739] sm:$0xff]
    %v1741 = vld [vmem:[%s1739 + $0x8] sm:$0xff]
    %v1742 = vld [vmem:[%s1739 + $0x10] sm:$0xff]
    %v1743 = vld [vmem:[%s1739 + $0x18] sm:$0xff]
    %v1744 = vadd.f32 %v1740, %v1692
    %v1745 = vadd.f32 %v1741, %v1694
    %v1746 = vadd.f32 %v1742, %v1733
    %v1747 = vadd.f32 %v1743, %v1735
    %v1748 = vxor.u32 %v1744, 2147483648
    %v1749 = vmul.f32 %v1748, 1.442695
    %v1750 = vpow.pop %v1749
    %v1751 = vadd.f32 %v1750, 1.0
    %v1752 = vrcp.pop %v1751
    %v1753 = vmul.f32 1.0, %v1752
    %v1754 = vxor.u32 %v1745, 2147483648
    %v1755 = vmul.f32 %v1754, 1.442695
    %v1756 = vpow.pop %v1755
    %v1757 = vadd.f32 %v1756, 1.0
    %v1758 = vrcp.pop %v1757
    %v1759 = vmul.f32 1.0, %v1758
    %v1760 = vtanh.pop %v1746
    %v1761 = vxor.u32 %v1747, 2147483648
    %v1762 = vmul.f32 %v1761, 1.442695
    %v1763 = vpow.pop %v1762
    %v1764 = vadd.f32 %v1763, 1.0
    %v1765 = vrcp.pop %v1764
    %v1766 = vmul.f32 1.0, %v1765
    %v1767 = vmul.f32 %v1759, %v1457
    %v1768 = vmul.f32 %v1753, %v1760
    %v1769 = vadd.f32 %v1767, %v1768
    %v1770 = vtanh.pop %v1769
    %v1771 = vmul.f32 %v1766, %v1770
    %s1772 = scalar_lea.vmem [#allocation3], 48
    %1773 = vst [vmem:[%s1772] sm:$0xff] %v1771
    %s1774 = scalar_lea.vmem [#allocation3], 128
    %1775 = vst [vmem:[%s1774 + $0x8] sm:$0xff] %v1771
    %v1776 = vpack.c.bf16 %v1771, %v1771
    %v1777 = vld [vmem:[#allocation4] sm:$0xff]
    %v1778 = vld [vmem:[#allocation4 + $0x8] sm:$0xff]
    %v1779 = vld [vmem:[#allocation4 + $0x10] sm:$0xff]
    %v1780 = vld [vmem:[#allocation4 + $0x18] sm:$0xff]
    %v1781 = vld [vmem:[#allocation4 + $0x20] sm:$0xff]
    %v1782 = vld [vmem:[#allocation4 + $0x28] sm:$0xff]
    %v1783 = vld [vmem:[#allocation4 + $0x30] sm:$0xff]
    %v1784 = vld [vmem:[#allocation4 + $0x38] sm:$0xff]
    %v1785 = vld [vmem:[#allocation4 + $0x40] sm:$0xff]
    %v1786 = vld [vmem:[#allocation4 + $0x48] sm:$0xff]
    %v1787 = vld [vmem:[#allocation4 + $0x50] sm:$0xff]
    %v1788 = vld [vmem:[#allocation4 + $0x58] sm:$0xff]
    %v1789 = vld [vmem:[#allocation4 + $0x60] sm:$0xff]
    %v1790 = vld [vmem:[#allocation4 + $0x68] sm:$0xff]
    %v1791 = vld [vmem:[#allocation4 + $0x70] sm:$0xff]
    %v1792 = vld [vmem:[#allocation4 + $0x78] sm:$0xff]
    %v1793 = vld [vmem:[#allocation4 + $0x80] sm:$0xff]
    %v1794 = vld [vmem:[#allocation4 + $0x88] sm:$0xff]
    %v1795 = vld [vmem:[#allocation4 + $0x90] sm:$0xff]
    %v1796 = vld [vmem:[#allocation4 + $0x98] sm:$0xff]
    %v1797 = vld [vmem:[#allocation4 + $0xa0] sm:$0xff]
    %v1798 = vld [vmem:[#allocation4 + $0xa8] sm:$0xff]
    %v1799 = vld [vmem:[#allocation4 + $0xb0] sm:$0xff]
    %v1800 = vld [vmem:[#allocation4 + $0xb8] sm:$0xff]
    %v1801 = vld [vmem:[#allocation4 + $0xc0] sm:$0xff]
    %v1802 = vld [vmem:[#allocation4 + $0xc8] sm:$0xff]
    %v1803 = vld [vmem:[#allocation4 + $0xd0] sm:$0xff]
    %v1804 = vld [vmem:[#allocation4 + $0xd8] sm:$0xff]
    %v1805 = vld [vmem:[#allocation4 + $0xe0] sm:$0xff]
    %v1806 = vld [vmem:[#allocation4 + $0xe8] sm:$0xff]
    %v1807 = vld [vmem:[#allocation4 + $0xf0] sm:$0xff]
    %v1808 = vld [vmem:[#allocation4 + $0xf8] sm:$0xff]
    %v1841 = vunpack.c.l.b16 %v1777
    %v1842 = vunpack.c.h.b16 %v1777
    %v1843 = vunpack.c.l.b16 %v1778
    %v1844 = vunpack.c.h.b16 %v1778
    %v1845 = vunpack.c.l.b16 %v1779
    %v1846 = vunpack.c.h.b16 %v1779
    %v1847 = vunpack.c.l.b16 %v1780
    %v1848 = vunpack.c.h.b16 %v1780
    %v1849 = vunpack.c.l.b16 %v1781
    %v1850 = vunpack.c.h.b16 %v1781
    %v1851 = vunpack.c.l.b16 %v1782
    %v1852 = vunpack.c.h.b16 %v1782
    %v1853 = vunpack.c.l.b16 %v1783
    %v1854 = vunpack.c.h.b16 %v1783
    %v1855 = vunpack.c.l.b16 %v1784
    %v1856 = vunpack.c.h.b16 %v1784
    %v1857 = vunpack.c.l.b16 %v1785
    %v1858 = vunpack.c.h.b16 %v1785
    %v1859 = vunpack.c.l.b16 %v1786
    %v1860 = vunpack.c.h.b16 %v1786
    %v1861 = vunpack.c.l.b16 %v1787
    %v1862 = vunpack.c.h.b16 %v1787
    %v1863 = vunpack.c.l.b16 %v1788
    %v1864 = vunpack.c.h.b16 %v1788
    %v1865 = vunpack.c.l.b16 %v1789
    %v1866 = vunpack.c.h.b16 %v1789
    %v1867 = vunpack.c.l.b16 %v1790
    %v1868 = vunpack.c.h.b16 %v1790
    %v1869 = vunpack.c.l.b16 %v1791
    %v1870 = vunpack.c.h.b16 %v1791
    %v1871 = vunpack.c.l.b16 %v1792
    %v1872 = vunpack.c.h.b16 %v1792
    %v1873 = vunpack.c.l.b16 %v1793
    %v1874 = vunpack.c.h.b16 %v1793
    %v1875 = vunpack.c.l.b16 %v1794
    %v1876 = vunpack.c.h.b16 %v1794
    %v1877 = vunpack.c.l.b16 %v1795
    %v1878 = vunpack.c.h.b16 %v1795
    %v1879 = vunpack.c.l.b16 %v1796
    %v1880 = vunpack.c.h.b16 %v1796
    %v1881 = vunpack.c.l.b16 %v1797
    %v1882 = vunpack.c.h.b16 %v1797
    %v1883 = vunpack.c.l.b16 %v1798
    %v1884 = vunpack.c.h.b16 %v1798
    %v1885 = vunpack.c.l.b16 %v1799
    %v1886 = vunpack.c.h.b16 %v1799
    %v1887 = vunpack.c.l.b16 %v1800
    %v1888 = vunpack.c.h.b16 %v1800
    %v1889 = vunpack.c.l.b16 %v1801
    %v1890 = vunpack.c.h.b16 %v1801
    %v1891 = vunpack.c.l.b16 %v1802
    %v1892 = vunpack.c.h.b16 %v1802
    %v1893 = vunpack.c.l.b16 %v1803
    %v1894 = vunpack.c.h.b16 %v1803
    %v1895 = vunpack.c.l.b16 %v1804
    %v1896 = vunpack.c.h.b16 %v1804
    %v1897 = vunpack.c.l.b16 %v1805
    %v1898 = vunpack.c.h.b16 %v1805
    %v1899 = vunpack.c.l.b16 %v1806
    %v1900 = vunpack.c.h.b16 %v1806
    %v1901 = vunpack.c.l.b16 %v1807
    %v1902 = vunpack.c.h.b16 %v1807
    %v1903 = vunpack.c.l.b16 %v1808
    %v1904 = vunpack.c.h.b16 %v1808
    %v1905 = vpack.c.b16 %v1845, %v1841
    %v1906 = vpack.c.b16 %v1846, %v1842
    %v1907 = vpack.c.b16 %v1847, %v1843
    %v1908 = vpack.c.b16 %v1848, %v1844
    %v1909 = vpack.c.b16 %v1853, %v1849
    %v1910 = vpack.c.b16 %v1854, %v1850
    %v1911 = vpack.c.b16 %v1855, %v1851
    %v1912 = vpack.c.b16 %v1856, %v1852
    %v1913 = vpack.c.b16 %v1861, %v1857
    %v1914 = vpack.c.b16 %v1862, %v1858
    %v1915 = vpack.c.b16 %v1863, %v1859
    %v1916 = vpack.c.b16 %v1864, %v1860
    %v1917 = vpack.c.b16 %v1869, %v1865
    %v1918 = vpack.c.b16 %v1870, %v1866
    %v1919 = vpack.c.b16 %v1871, %v1867
    %v1920 = vpack.c.b16 %v1872, %v1868
    %v1921 = vpack.c.b16 %v1877, %v1873
    %v1922 = vpack.c.b16 %v1878, %v1874
    %v1923 = vpack.c.b16 %v1879, %v1875
    %v1924 = vpack.c.b16 %v1880, %v1876
    %v1925 = vpack.c.b16 %v1885, %v1881
    %v1926 = vpack.c.b16 %v1886, %v1882
    %v1927 = vpack.c.b16 %v1887, %v1883
    %v1928 = vpack.c.b16 %v1888, %v1884
    %v1929 = vpack.c.b16 %v1893, %v1889
    %v1930 = vpack.c.b16 %v1894, %v1890
    %v1931 = vpack.c.b16 %v1895, %v1891
    %v1932 = vpack.c.b16 %v1896, %v1892
    %v1933 = vpack.c.b16 %v1901, %v1897
    %v1934 = vpack.c.b16 %v1902, %v1898
    %v1935 = vpack.c.b16 %v1903, %v1899
    %v1936 = vpack.c.b16 %v1904, %v1900
    %1969 = vmatprep.subr.bf16.mxu0 %v1906
    %1970 = vmatpush1.bf16.msra.mxu0 %v1905
    %1971 = vmatprep.subr.bf16.mxu0 %v1910
    %1972 = vmatpush1.bf16.msra.mxu0 %v1909
    %1973 = vmatprep.subr.bf16.mxu0 %v1914
    %1974 = vmatpush1.bf16.msra.mxu0 %v1913
    %1975 = vmatprep.subr.bf16.mxu0 %v1918
    %1976 = vmatpush1.bf16.msra.mxu0 %v1917
    %1977 = vmatprep.subr.bf16.mxu0 %v1922
    %1978 = vmatpush1.bf16.msra.mxu0 %v1921
    %1979 = vmatprep.subr.bf16.mxu0 %v1926
    %1980 = vmatpush1.bf16.msra.mxu0 %v1925
    %1981 = vmatprep.subr.bf16.mxu0 %v1930
    %1982 = vmatpush1.bf16.msra.mxu0 %v1929
    %1983 = vmatprep.subr.bf16.mxu0 %v1934
    %1984 = vmatpush1.bf16.msra.mxu0 %v1933
    %1985 = vmatprep.subr.bf16.mxu0 0
    %1986 = vmatpush1.bf16.msra.mxu0 0
    %1987 = vmatprep.subr.bf16.mxu0 0
    %1988 = vmatpush1.bf16.msra.mxu0 0
    %1989 = vmatprep.subr.bf16.mxu0 0
    %1990 = vmatpush1.bf16.msra.mxu0 0
    %1991 = vmatprep.subr.bf16.mxu0 0
    %1992 = vmatpush1.bf16.msra.mxu0 0
    %1993 = vmatprep.subr.bf16.mxu0 0
    %1994 = vmatpush1.bf16.msra.mxu0 0
    %1995 = vmatprep.subr.bf16.mxu0 0
    %1996 = vmatpush1.bf16.msra.mxu0 0
    %1997 = vmatprep.subr.bf16.mxu0 0
    %1998 = vmatpush1.bf16.msra.mxu0 0
    %1999 = vmatprep.subr.bf16.mxu0 0
    %2000 = vmatpush1.bf16.msra.mxu0 0
    %2001 = vmatprep.mubr.bf16.mxu0 0
    %2002 = vmatmul.mubr.bf16.gmra.mrb[0].mxu0 %v1776
    %v2003 = vpop.f32.mrb[0].mxu0
    %v2004 = vadd.f32 0.0, %v2003
    %v2005 = vpop.f32.mrb[0].mxu0
    %v2006 = vadd.f32 0.0, %v2005
    %v2007 = vpop.f32.mrb[0].mxu0
    %v2008 = vpop.f32.mrb[0].mxu0
    %2009 = vdwg.mxu0
    %2010 = vmatprep.subr.bf16.mxu0 %v1908
    %2011 = vmatpush1.bf16.msra.mxu0 %v1907
    %2012 = vmatprep.subr.bf16.mxu0 %v1912
    %2013 = vmatpush1.bf16.msra.mxu0 %v1911
    %2014 = vmatprep.subr.bf16.mxu0 %v1916
    %2015 = vmatpush1.bf16.msra.mxu0 %v1915
    %2016 = vmatprep.subr.bf16.mxu0 %v1920
    %2017 = vmatpush1.bf16.msra.mxu0 %v1919
    %2018 = vmatprep.subr.bf16.mxu0 %v1924
    %2019 = vmatpush1.bf16.msra.mxu0 %v1923
    %2020 = vmatprep.subr.bf16.mxu0 %v1928
    %2021 = vmatpush1.bf16.msra.mxu0 %v1927
    %2022 = vmatprep.subr.bf16.mxu0 %v1932
    %2023 = vmatpush1.bf16.msra.mxu0 %v1931
    %2024 = vmatprep.subr.bf16.mxu0 %v1936
    %2025 = vmatpush1.bf16.msra.mxu0 %v1935
    %2026 = vmatprep.subr.bf16.mxu0 0
    %2027 = vmatpush1.bf16.msra.mxu0 0
    %2028 = vmatprep.subr.bf16.mxu0 0
    %2029 = vmatpush1.bf16.msra.mxu0 0
    %2030 = vmatprep.subr.bf16.mxu0 0
    %2031 = vmatpush1.bf16.msra.mxu0 0
    %2032 = vmatprep.subr.bf16.mxu0 0
    %2033 = vmatpush1.bf16.msra.mxu0 0
    %2034 = vmatprep.subr.bf16.mxu0 0
    %2035 = vmatpush1.bf16.msra.mxu0 0
    %2036 = vmatprep.subr.bf16.mxu0 0
    %2037 = vmatpush1.bf16.msra.mxu0 0
    %2038 = vmatprep.subr.bf16.mxu0 0
    %2039 = vmatpush1.bf16.msra.mxu0 0
    %2040 = vmatprep.subr.bf16.mxu0 0
    %2041 = vmatpush1.bf16.msra.mxu0 0
    %2042 = vmatprep.mubr.bf16.mxu0 0
    %2043 = vmatmul.mubr.bf16.gmra.mrb[0].mxu0 %v1776
    %v2044 = vpop.f32.mrb[0].mxu0
    %v2045 = vadd.f32 0.0, %v2044
    %v2046 = vpop.f32.mrb[0].mxu0
    %v2047 = vadd.f32 0.0, %v2046
    %v2048 = vpop.f32.mrb[0].mxu0
    %v2049 = vpop.f32.mrb[0].mxu0
    %2050 = vdwg.mxu0
    %s2051 = scalar_lea.vmem [#allocation2], 128
    %v2052 = vld [vmem:[%s2051] sm:$0xff]
    %v2053 = vld [vmem:[%s2051 + $0x8] sm:$0xff]
    %v2054 = vld [vmem:[%s2051 + $0x10] sm:$0xff]
    %v2055 = vld [vmem:[%s2051 + $0x18] sm:$0xff]
    %v2056 = vadd.f32 %v2052, %v2004
    %v2057 = vadd.f32 %v2053, %v2006
    %v2058 = vadd.f32 %v2054, %v2045
    %v2059 = vadd.f32 %v2055, %v2047
    %v2060 = vxor.u32 %v2056, 2147483648
    %v2061 = vmul.f32 %v2060, 1.442695
    %v2062 = vpow.pop %v2061
    %v2063 = vadd.f32 %v2062, 1.0
    %v2064 = vrcp.pop %v2063
    %v2065 = vmul.f32 1.0, %v2064
    %v2066 = vxor.u32 %v2057, 2147483648
    %v2067 = vmul.f32 %v2066, 1.442695
    %v2068 = vpow.pop %v2067
    %v2069 = vadd.f32 %v2068, 1.0
    %v2070 = vrcp.pop %v2069
    %v2071 = vmul.f32 1.0, %v2070
    %v2072 = vtanh.pop %v2058
    %v2073 = vxor.u32 %v2059, 2147483648
    %v2074 = vmul.f32 %v2073, 1.442695
    %v2075 = vpow.pop %v2074
    %v2076 = vadd.f32 %v2075, 1.0
    %v2077 = vrcp.pop %v2076
    %v2078 = vmul.f32 1.0, %v2077
    %v2079 = vmul.f32 %v2071, %v1769
    %v2080 = vmul.f32 %v2065, %v2072
    %v2081 = vadd.f32 %v2079, %v2080
    %v2082 = vtanh.pop %v2081
    %v2083 = vmul.f32 %v2078, %v2082
    %s2084 = scalar_lea.vmem [#allocation3], 64
    %2085 = vst [vmem:[%s2084] sm:$0xff] %v2083
    %s2086 = scalar_lea.vmem [#allocation3], 112
    %2087 = vst [vmem:[%s2086 + $0x8] sm:$0xff] %v2083
    %v2088 = vpack.c.bf16 %v2083, %v2083
    %v2089 = vld [vmem:[#allocation4] sm:$0xff]
    %v2090 = vld [vmem:[#allocation4 + $0x8] sm:$0xff]
    %v2091 = vld [vmem:[#allocation4 + $0x10] sm:$0xff]
    %v2092 = vld [vmem:[#allocation4 + $0x18] sm:$0xff]
    %v2093 = vld [vmem:[#allocation4 + $0x20] sm:$0xff]
    %v2094 = vld [vmem:[#allocation4 + $0x28] sm:$0xff]
    %v2095 = vld [vmem:[#allocation4 + $0x30] sm:$0xff]
    %v2096 = vld [vmem:[#allocation4 + $0x38] sm:$0xff]
    %v2097 = vld [vmem:[#allocation4 + $0x40] sm:$0xff]
    %v2098 = vld [vmem:[#allocation4 + $0x48] sm:$0xff]
    %v2099 = vld [vmem:[#allocation4 + $0x50] sm:$0xff]
    %v2100 = vld [vmem:[#allocation4 + $0x58] sm:$0xff]
    %v2101 = vld [vmem:[#allocation4 + $0x60] sm:$0xff]
    %v2102 = vld [vmem:[#allocation4 + $0x68] sm:$0xff]
    %v2103 = vld [vmem:[#allocation4 + $0x70] sm:$0xff]
    %v2104 = vld [vmem:[#allocation4 + $0x78] sm:$0xff]
    %v2105 = vld [vmem:[#allocation4 + $0x80] sm:$0xff]
    %v2106 = vld [vmem:[#allocation4 + $0x88] sm:$0xff]
    %v2107 = vld [vmem:[#allocation4 + $0x90] sm:$0xff]
    %v2108 = vld [vmem:[#allocation4 + $0x98] sm:$0xff]
    %v2109 = vld [vmem:[#allocation4 + $0xa0] sm:$0xff]
    %v2110 = vld [vmem:[#allocation4 + $0xa8] sm:$0xff]
    %v2111 = vld [vmem:[#allocation4 + $0xb0] sm:$0xff]
    %v2112 = vld [vmem:[#allocation4 + $0xb8] sm:$0xff]
    %v2113 = vld [vmem:[#allocation4 + $0xc0] sm:$0xff]
    %v2114 = vld [vmem:[#allocation4 + $0xc8] sm:$0xff]
    %v2115 = vld [vmem:[#allocation4 + $0xd0] sm:$0xff]
    %v2116 = vld [vmem:[#allocation4 + $0xd8] sm:$0xff]
    %v2117 = vld [vmem:[#allocation4 + $0xe0] sm:$0xff]
    %v2118 = vld [vmem:[#allocation4 + $0xe8] sm:$0xff]
    %v2119 = vld [vmem:[#allocation4 + $0xf0] sm:$0xff]
    %v2120 = vld [vmem:[#allocation4 + $0xf8] sm:$0xff]
    %v2153 = vunpack.c.l.b16 %v2089
    %v2154 = vunpack.c.h.b16 %v2089
    %v2155 = vunpack.c.l.b16 %v2090
    %v2156 = vunpack.c.h.b16 %v2090
    %v2157 = vunpack.c.l.b16 %v2091
    %v2158 = vunpack.c.h.b16 %v2091
    %v2159 = vunpack.c.l.b16 %v2092
    %v2160 = vunpack.c.h.b16 %v2092
    %v2161 = vunpack.c.l.b16 %v2093
    %v2162 = vunpack.c.h.b16 %v2093
    %v2163 = vunpack.c.l.b16 %v2094
    %v2164 = vunpack.c.h.b16 %v2094
    %v2165 = vunpack.c.l.b16 %v2095
    %v2166 = vunpack.c.h.b16 %v2095
    %v2167 = vunpack.c.l.b16 %v2096
    %v2168 = vunpack.c.h.b16 %v2096
    %v2169 = vunpack.c.l.b16 %v2097
    %v2170 = vunpack.c.h.b16 %v2097
    %v2171 = vunpack.c.l.b16 %v2098
    %v2172 = vunpack.c.h.b16 %v2098
    %v2173 = vunpack.c.l.b16 %v2099
    %v2174 = vunpack.c.h.b16 %v2099
    %v2175 = vunpack.c.l.b16 %v2100
    %v2176 = vunpack.c.h.b16 %v2100
    %v2177 = vunpack.c.l.b16 %v2101
    %v2178 = vunpack.c.h.b16 %v2101
    %v2179 = vunpack.c.l.b16 %v2102
    %v2180 = vunpack.c.h.b16 %v2102
    %v2181 = vunpack.c.l.b16 %v2103
    %v2182 = vunpack.c.h.b16 %v2103
    %v2183 = vunpack.c.l.b16 %v2104
    %v2184 = vunpack.c.h.b16 %v2104
    %v2185 = vunpack.c.l.b16 %v2105
    %v2186 = vunpack.c.h.b16 %v2105
    %v2187 = vunpack.c.l.b16 %v2106
    %v2188 = vunpack.c.h.b16 %v2106
    %v2189 = vunpack.c.l.b16 %v2107
    %v2190 = vunpack.c.h.b16 %v2107
    %v2191 = vunpack.c.l.b16 %v2108
    %v2192 = vunpack.c.h.b16 %v2108
    %v2193 = vunpack.c.l.b16 %v2109
    %v2194 = vunpack.c.h.b16 %v2109
    %v2195 = vunpack.c.l.b16 %v2110
    %v2196 = vunpack.c.h.b16 %v2110
    %v2197 = vunpack.c.l.b16 %v2111
    %v2198 = vunpack.c.h.b16 %v2111
    %v2199 = vunpack.c.l.b16 %v2112
    %v2200 = vunpack.c.h.b16 %v2112
    %v2201 = vunpack.c.l.b16 %v2113
    %v2202 = vunpack.c.h.b16 %v2113
    %v2203 = vunpack.c.l.b16 %v2114
    %v2204 = vunpack.c.h.b16 %v2114
    %v2205 = vunpack.c.l.b16 %v2115
    %v2206 = vunpack.c.h.b16 %v2115
    %v2207 = vunpack.c.l.b16 %v2116
    %v2208 = vunpack.c.h.b16 %v2116
    %v2209 = vunpack.c.l.b16 %v2117
    %v2210 = vunpack.c.h.b16 %v2117
    %v2211 = vunpack.c.l.b16 %v2118
    %v2212 = vunpack.c.h.b16 %v2118
    %v2213 = vunpack.c.l.b16 %v2119
    %v2214 = vunpack.c.h.b16 %v2119
    %v2215 = vunpack.c.l.b16 %v2120
    %v2216 = vunpack.c.h.b16 %v2120
    %v2217 = vpack.c.b16 %v2157, %v2153
    %v2218 = vpack.c.b16 %v2158, %v2154
    %v2219 = vpack.c.b16 %v2159, %v2155
    %v2220 = vpack.c.b16 %v2160, %v2156
    %v2221 = vpack.c.b16 %v2165, %v2161
    %v2222 = vpack.c.b16 %v2166, %v2162
    %v2223 = vpack.c.b16 %v2167, %v2163
    %v2224 = vpack.c.b16 %v2168, %v2164
    %v2225 = vpack.c.b16 %v2173, %v2169
    %v2226 = vpack.c.b16 %v2174, %v2170
    %v2227 = vpack.c.b16 %v2175, %v2171
    %v2228 = vpack.c.b16 %v2176, %v2172
    %v2229 = vpack.c.b16 %v2181, %v2177
    %v2230 = vpack.c.b16 %v2182, %v2178
    %v2231 = vpack.c.b16 %v2183, %v2179
    %v2232 = vpack.c.b16 %v2184, %v2180
    %v2233 = vpack.c.b16 %v2189, %v2185
    %v2234 = vpack.c.b16 %v2190, %v2186
    %v2235 = vpack.c.b16 %v2191, %v2187
    %v2236 = vpack.c.b16 %v2192, %v2188
    %v2237 = vpack.c.b16 %v2197, %v2193
    %v2238 = vpack.c.b16 %v2198, %v2194
    %v2239 = vpack.c.b16 %v2199, %v2195
    %v2240 = vpack.c.b16 %v2200, %v2196
    %v2241 = vpack.c.b16 %v2205, %v2201
    %v2242 = vpack.c.b16 %v2206, %v2202
    %v2243 = vpack.c.b16 %v2207, %v2203
    %v2244 = vpack.c.b16 %v2208, %v2204
    %v2245 = vpack.c.b16 %v2213, %v2209
    %v2246 = vpack.c.b16 %v2214, %v2210
    %v2247 = vpack.c.b16 %v2215, %v2211
    %v2248 = vpack.c.b16 %v2216, %v2212
    %2281 = vmatprep.subr.bf16.mxu0 %v2218
    %2282 = vmatpush1.bf16.msra.mxu0 %v2217
    %2283 = vmatprep.subr.bf16.mxu0 %v2222
    %2284 = vmatpush1.bf16.msra.mxu0 %v2221
    %2285 = vmatprep.subr.bf16.mxu0 %v2226
    %2286 = vmatpush1.bf16.msra.mxu0 %v2225
    %2287 = vmatprep.subr.bf16.mxu0 %v2230
    %2288 = vmatpush1.bf16.msra.mxu0 %v2229
    %2289 = vmatprep.subr.bf16.mxu0 %v2234
    %2290 = vmatpush1.bf16.msra.mxu0 %v2233
    %2291 = vmatprep.subr.bf16.mxu0 %v2238
    %2292 = vmatpush1.bf16.msra.mxu0 %v2237
    %2293 = vmatprep.subr.bf16.mxu0 %v2242
    %2294 = vmatpush1.bf16.msra.mxu0 %v2241
    %2295 = vmatprep.subr.bf16.mxu0 %v2246
    %2296 = vmatpush1.bf16.msra.mxu0 %v2245
    %2297 = vmatprep.subr.bf16.mxu0 0
    %2298 = vmatpush1.bf16.msra.mxu0 0
    %2299 = vmatprep.subr.bf16.mxu0 0
    %2300 = vmatpush1.bf16.msra.mxu0 0
    %2301 = vmatprep.subr.bf16.mxu0 0
    %2302 = vmatpush1.bf16.msra.mxu0 0
    %2303 = vmatprep.subr.bf16.mxu0 0
    %2304 = vmatpush1.bf16.msra.mxu0 0
    %2305 = vmatprep.subr.bf16.mxu0 0
    %2306 = vmatpush1.bf16.msra.mxu0 0
    %2307 = vmatprep.subr.bf16.mxu0 0
    %2308 = vmatpush1.bf16.msra.mxu0 0
    %2309 = vmatprep.subr.bf16.mxu0 0
    %2310 = vmatpush1.bf16.msra.mxu0 0
    %2311 = vmatprep.subr.bf16.mxu0 0
    %2312 = vmatpush1.bf16.msra.mxu0 0
    %2313 = vmatprep.mubr.bf16.mxu0 0
    %2314 = vmatmul.mubr.bf16.gmra.mrb[0].mxu0 %v2088
    %v2315 = vpop.f32.mrb[0].mxu0
    %v2316 = vadd.f32 0.0, %v2315
    %v2317 = vpop.f32.mrb[0].mxu0
    %v2318 = vadd.f32 0.0, %v2317
    %v2319 = vpop.f32.mrb[0].mxu0
    %v2320 = vpop.f32.mrb[0].mxu0
    %2321 = vdwg.mxu0
    %2322 = vmatprep.subr.bf16.mxu0 %v2220
    %2323 = vmatpush1.bf16.msra.mxu0 %v2219
    %2324 = vmatprep.subr.bf16.mxu0 %v2224
    %2325 = vmatpush1.bf16.msra.mxu0 %v2223
    %2326 = vmatprep.subr.bf16.mxu0 %v2228
    %2327 = vmatpush1.bf16.msra.mxu0 %v2227
    %2328 = vmatprep.subr.bf16.mxu0 %v2232
    %2329 = vmatpush1.bf16.msra.mxu0 %v2231
    %2330 = vmatprep.subr.bf16.mxu0 %v2236
    %2331 = vmatpush1.bf16.msra.mxu0 %v2235
    %2332 = vmatprep.subr.bf16.mxu0 %v2240
    %2333 = vmatpush1.bf16.msra.mxu0 %v2239
    %2334 = vmatprep.subr.bf16.mxu0 %v2244
    %2335 = vmatpush1.bf16.msra.mxu0 %v2243
    %2336 = vmatprep.subr.bf16.mxu0 %v2248
    %2337 = vmatpush1.bf16.msra.mxu0 %v2247
    %2338 = vmatprep.subr.bf16.mxu0 0
    %2339 = vmatpush1.bf16.msra.mxu0 0
    %2340 = vmatprep.subr.bf16.mxu0 0
    %2341 = vmatpush1.bf16.msra.mxu0 0
    %2342 = vmatprep.subr.bf16.mxu0 0
    %2343 = vmatpush1.bf16.msra.mxu0 0
    %2344 = vmatprep.subr.bf16.mxu0 0
    %2345 = vmatpush1.bf16.msra.mxu0 0
    %2346 = vmatprep.subr.bf16.mxu0 0
    %2347 = vmatpush1.bf16.msra.mxu0 0
    %2348 = vmatprep.subr.bf16.mxu0 0
    %2349 = vmatpush1.bf16.msra.mxu0 0
    %2350 = vmatprep.subr.bf16.mxu0 0
    %2351 = vmatpush1.bf16.msra.mxu0 0
    %2352 = vmatprep.subr.bf16.mxu0 0
    %2353 = vmatpush1.bf16.msra.mxu0 0
    %2354 = vmatprep.mubr.bf16.mxu0 0
    %2355 = vmatmul.mubr.bf16.gmra.mrb[0].mxu0 %v2088
    %v2356 = vpop.f32.mrb[0].mxu0
    %v2357 = vadd.f32 0.0, %v2356
    %v2358 = vpop.f32.mrb[0].mxu0
    %v2359 = vadd.f32 0.0, %v2358
    %v2360 = vpop.f32.mrb[0].mxu0
    %v2361 = vpop.f32.mrb[0].mxu0
    %2362 = vdwg.mxu0
    %s2363 = scalar_lea.vmem [#allocation2], 160
    %v2364 = vld [vmem:[%s2363] sm:$0xff]
    %v2365 = vld [vmem:[%s2363 + $0x8] sm:$0xff]
    %v2366 = vld [vmem:[%s2363 + $0x10] sm:$0xff]
    %v2367 = vld [vmem:[%s2363 + $0x18] sm:$0xff]
    %v2368 = vadd.f32 %v2364, %v2316
    %v2369 = vadd.f32 %v2365, %v2318
    %v2370 = vadd.f32 %v2366, %v2357
    %v2371 = vadd.f32 %v2367, %v2359
    %v2372 = vxor.u32 %v2368, 2147483648
    %v2373 = vmul.f32 %v2372, 1.442695
    %v2374 = vpow.pop %v2373
    %v2375 = vadd.f32 %v2374, 1.0
    %v2376 = vrcp.pop %v2375
    %v2377 = vmul.f32 1.0, %v2376
    %v2378 = vxor.u32 %v2369, 2147483648
    %v2379 = vmul.f32 %v2378, 1.442695
    %v2380 = vpow.pop %v2379
    %v2381 = vadd.f32 %v2380, 1.0
    %v2382 = vrcp.pop %v2381
    %v2383 = vmul.f32 1.0, %v2382
    %v2384 = vtanh.pop %v2370
    %v2385 = vxor.u32 %v2371, 2147483648
    %v2386 = vmul.f32 %v2385, 1.442695
    %v2387 = vpow.pop %v2386
    %v2388 = vadd.f32 %v2387, 1.0
    %v2389 = vrcp.pop %v2388
    %v2390 = vmul.f32 1.0, %v2389
    %v2391 = vmul.f32 %v2383, %v2081
    %v2392 = vmul.f32 %v2377, %v2384
    %v2393 = vadd.f32 %v2391, %v2392
    %v2394 = vtanh.pop %v2393
    %v2395 = vmul.f32 %v2390, %v2394
    %s2396 = scalar_lea.vmem [#allocation3], 80
    %2397 = vst [vmem:[%s2396] sm:$0xff] %v2395
    %s2398 = scalar_lea.vmem [#allocation3], 96
    %2399 = vst [vmem:[%s2398 + $0x8] sm:$0xff] %v2395
    %v2400 = vpack.c.bf16 %v2395, %v2395
    %v2401 = vld [vmem:[#allocation4] sm:$0xff]
    %v2402 = vld [vmem:[#allocation4 + $0x8] sm:$0xff]
    %v2403 = vld [vmem:[#allocation4 + $0x10] sm:$0xff]
    %v2404 = vld [vmem:[#allocation4 + $0x18] sm:$0xff]
    %v2405 = vld [vmem:[#allocation4 + $0x20] sm:$0xff]
    %v2406 = vld [vmem:[#allocation4 + $0x28] sm:$0xff]
    %v2407 = vld [vmem:[#allocation4 + $0x30] sm:$0xff]
    %v2408 = vld [vmem:[#allocation4 + $0x38] sm:$0xff]
    %v2409 = vld [vmem:[#allocation4 + $0x40] sm:$0xff]
    %v2410 = vld [vmem:[#allocation4 + $0x48] sm:$0xff]
    %v2411 = vld [vmem:[#allocation4 + $0x50] sm:$0xff]
    %v2412 = vld [vmem:[#allocation4 + $0x58] sm:$0xff]
    %v2413 = vld [vmem:[#allocation4 + $0x60] sm:$0xff]
    %v2414 = vld [vmem:[#allocation4 + $0x68] sm:$0xff]
    %v2415 = vld [vmem:[#allocation4 + $0x70] sm:$0xff]
    %v2416 = vld [vmem:[#allocation4 + $0x78] sm:$0xff]
    %v2417 = vld [vmem:[#allocation4 + $0x80] sm:$0xff]
    %v2418 = vld [vmem:[#allocation4 + $0x88] sm:$0xff]
    %v2419 = vld [vmem:[#allocation4 + $0x90] sm:$0xff]
    %v2420 = vld [vmem:[#allocation4 + $0x98] sm:$0xff]
    %v2421 = vld [vmem:[#allocation4 + $0xa0] sm:$0xff]
    %v2422 = vld [vmem:[#allocation4 + $0xa8] sm:$0xff]
    %v2423 = vld [vmem:[#allocation4 + $0xb0] sm:$0xff]
    %v2424 = vld [vmem:[#allocation4 + $0xb8] sm:$0xff]
    %v2425 = vld [vmem:[#allocation4 + $0xc0] sm:$0xff]
    %v2426 = vld [vmem:[#allocation4 + $0xc8] sm:$0xff]
    %v2427 = vld [vmem:[#allocation4 + $0xd0] sm:$0xff]
    %v2428 = vld [vmem:[#allocation4 + $0xd8] sm:$0xff]
    %v2429 = vld [vmem:[#allocation4 + $0xe0] sm:$0xff]
    %v2430 = vld [vmem:[#allocation4 + $0xe8] sm:$0xff]
    %v2431 = vld [vmem:[#allocation4 + $0xf0] sm:$0xff]
    %v2432 = vld [vmem:[#allocation4 + $0xf8] sm:$0xff]
    %v2465 = vunpack.c.l.b16 %v2401
    %v2466 = vunpack.c.h.b16 %v2401
    %v2467 = vunpack.c.l.b16 %v2402
    %v2468 = vunpack.c.h.b16 %v2402
    %v2469 = vunpack.c.l.b16 %v2403
    %v2470 = vunpack.c.h.b16 %v2403
    %v2471 = vunpack.c.l.b16 %v2404
    %v2472 = vunpack.c.h.b16 %v2404
    %v2473 = vunpack.c.l.b16 %v2405
    %v2474 = vunpack.c.h.b16 %v2405
    %v2475 = vunpack.c.l.b16 %v2406
    %v2476 = vunpack.c.h.b16 %v2406
    %v2477 = vunpack.c.l.b16 %v2407
    %v2478 = vunpack.c.h.b16 %v2407
    %v2479 = vunpack.c.l.b16 %v2408
    %v2480 = vunpack.c.h.b16 %v2408
    %v2481 = vunpack.c.l.b16 %v2409
    %v2482 = vunpack.c.h.b16 %v2409
    %v2483 = vunpack.c.l.b16 %v2410
    %v2484 = vunpack.c.h.b16 %v2410
    %v2485 = vunpack.c.l.b16 %v2411
    %v2486 = vunpack.c.h.b16 %v2411
    %v2487 = vunpack.c.l.b16 %v2412
    %v2488 = vunpack.c.h.b16 %v2412
    %v2489 = vunpack.c.l.b16 %v2413
    %v2490 = vunpack.c.h.b16 %v2413
    %v2491 = vunpack.c.l.b16 %v2414
    %v2492 = vunpack.c.h.b16 %v2414
    %v2493 = vunpack.c.l.b16 %v2415
    %v2494 = vunpack.c.h.b16 %v2415
    %v2495 = vunpack.c.l.b16 %v2416
    %v2496 = vunpack.c.h.b16 %v2416
    %v2497 = vunpack.c.l.b16 %v2417
    %v2498 = vunpack.c.h.b16 %v2417
    %v2499 = vunpack.c.l.b16 %v2418
    %v2500 = vunpack.c.h.b16 %v2418
    %v2501 = vunpack.c.l.b16 %v2419
    %v2502 = vunpack.c.h.b16 %v2419
    %v2503 = vunpack.c.l.b16 %v2420
    %v2504 = vunpack.c.h.b16 %v2420
    %v2505 = vunpack.c.l.b16 %v2421
    %v2506 = vunpack.c.h.b16 %v2421
    %v2507 = vunpack.c.l.b16 %v2422
    %v2508 = vunpack.c.h.b16 %v2422
    %v2509 = vunpack.c.l.b16 %v2423
    %v2510 = vunpack.c.h.b16 %v2423
    %v2511 = vunpack.c.l.b16 %v2424
    %v2512 = vunpack.c.h.b16 %v2424
    %v2513 = vunpack.c.l.b16 %v2425
    %v2514 = vunpack.c.h.b16 %v2425
    %v2515 = vunpack.c.l.b16 %v2426
    %v2516 = vunpack.c.h.b16 %v2426
    %v2517 = vunpack.c.l.b16 %v2427
    %v2518 = vunpack.c.h.b16 %v2427
    %v2519 = vunpack.c.l.b16 %v2428
    %v2520 = vunpack.c.h.b16 %v2428
    %v2521 = vunpack.c.l.b16 %v2429
    %v2522 = vunpack.c.h.b16 %v2429
    %v2523 = vunpack.c.l.b16 %v2430
    %v2524 = vunpack.c.h.b16 %v2430
    %v2525 = vunpack.c.l.b16 %v2431
    %v2526 = vunpack.c.h.b16 %v2431
    %v2527 = vunpack.c.l.b16 %v2432
    %v2528 = vunpack.c.h.b16 %v2432
    %v2529 = vpack.c.b16 %v2469, %v2465
    %v2530 = vpack.c.b16 %v2470, %v2466
    %v2531 = vpack.c.b16 %v2471, %v2467
    %v2532 = vpack.c.b16 %v2472, %v2468
    %v2533 = vpack.c.b16 %v2477, %v2473
    %v2534 = vpack.c.b16 %v2478, %v2474
    %v2535 = vpack.c.b16 %v2479, %v2475
    %v2536 = vpack.c.b16 %v2480, %v2476
    %v2537 = vpack.c.b16 %v2485, %v2481
    %v2538 = vpack.c.b16 %v2486, %v2482
    %v2539 = vpack.c.b16 %v2487, %v2483
    %v2540 = vpack.c.b16 %v2488, %v2484
    %v2541 = vpack.c.b16 %v2493, %v2489
    %v2542 = vpack.c.b16 %v2494, %v2490
    %v2543 = vpack.c.b16 %v2495, %v2491
    %v2544 = vpack.c.b16 %v2496, %v2492
    %v2545 = vpack.c.b16 %v2501, %v2497
    %v2546 = vpack.c.b16 %v2502, %v2498
    %v2547 = vpack.c.b16 %v2503, %v2499
    %v2548 = vpack.c.b16 %v2504, %v2500
    %v2549 = vpack.c.b16 %v2509, %v2505
    %v2550 = vpack.c.b16 %v2510, %v2506
    %v2551 = vpack.c.b16 %v2511, %v2507
    %v2552 = vpack.c.b16 %v2512, %v2508
    %v2553 = vpack.c.b16 %v2517, %v2513
    %v2554 = vpack.c.b16 %v2518, %v2514
    %v2555 = vpack.c.b16 %v2519, %v2515
    %v2556 = vpack.c.b16 %v2520, %v2516
    %v2557 = vpack.c.b16 %v2525, %v2521
    %v2558 = vpack.c.b16 %v2526, %v2522
    %v2559 = vpack.c.b16 %v2527, %v2523
    %v2560 = vpack.c.b16 %v2528, %v2524
    %2593 = vmatprep.subr.bf16.mxu0 %v2530
    %2594 = vmatpush1.bf16.msra.mxu0 %v2529
    %2595 = vmatprep.subr.bf16.mxu0 %v2534
    %2596 = vmatpush1.bf16.msra.mxu0 %v2533
    %2597 = vmatprep.subr.bf16.mxu0 %v2538
    %2598 = vmatpush1.bf16.msra.mxu0 %v2537
    %2599 = vmatprep.subr.bf16.mxu0 %v2542
    %2600 = vmatpush1.bf16.msra.mxu0 %v2541
    %2601 = vmatprep.subr.bf16.mxu0 %v2546
    %2602 = vmatpush1.bf16.msra.mxu0 %v2545
    %2603 = vmatprep.subr.bf16.mxu0 %v2550
    %2604 = vmatpush1.bf16.msra.mxu0 %v2549
    %2605 = vmatprep.subr.bf16.mxu0 %v2554
    %2606 = vmatpush1.bf16.msra.mxu0 %v2553
    %2607 = vmatprep.subr.bf16.mxu0 %v2558
    %2608 = vmatpush1.bf16.msra.mxu0 %v2557
    %2609 = vmatprep.subr.bf16.mxu0 0
    %2610 = vmatpush1.bf16.msra.mxu0 0
    %2611 = vmatprep.subr.bf16.mxu0 0
    %2612 = vmatpush1.bf16.msra.mxu0 0
    %2613 = vmatprep.subr.bf16.mxu0 0
    %2614 = vmatpush1.bf16.msra.mxu0 0
    %2615 = vmatprep.subr.bf16.mxu0 0
    %2616 = vmatpush1.bf16.msra.mxu0 0
    %2617 = vmatprep.subr.bf16.mxu0 0
    %2618 = vmatpush1.bf16.msra.mxu0 0
    %2619 = vmatprep.subr.bf16.mxu0 0
    %2620 = vmatpush1.bf16.msra.mxu0 0
    %2621 = vmatprep.subr.bf16.mxu0 0
    %2622 = vmatpush1.bf16.msra.mxu0 0
    %2623 = vmatprep.subr.bf16.mxu0 0
    %2624 = vmatpush1.bf16.msra.mxu0 0
    %2625 = vmatprep.mubr.bf16.mxu0 0
    %2626 = vmatmul.mubr.bf16.gmra.mrb[0].mxu0 %v2400
    %v2627 = vpop.f32.mrb[0].mxu0
    %v2628 = vadd.f32 0.0, %v2627
    %v2629 = vpop.f32.mrb[0].mxu0
    %v2630 = vadd.f32 0.0, %v2629
    %v2631 = vpop.f32.mrb[0].mxu0
    %v2632 = vpop.f32.mrb[0].mxu0
    %2633 = vdwg.mxu0
    %2634 = vmatprep.subr.bf16.mxu0 %v2532
    %2635 = vmatpush1.bf16.msra.mxu0 %v2531
    %2636 = vmatprep.subr.bf16.mxu0 %v2536
    %2637 = vmatpush1.bf16.msra.mxu0 %v2535
    %2638 = vmatprep.subr.bf16.mxu0 %v2540
    %2639 = vmatpush1.bf16.msra.mxu0 %v2539
    %2640 = vmatprep.subr.bf16.mxu0 %v2544
    %2641 = vmatpush1.bf16.msra.mxu0 %v2543
    %2642 = vmatprep.subr.bf16.mxu0 %v2548
    %2643 = vmatpush1.bf16.msra.mxu0 %v2547
    %2644 = vmatprep.subr.bf16.mxu0 %v2552
    %2645 = vmatpush1.bf16.msra.mxu0 %v2551
    %2646 = vmatprep.subr.bf16.mxu0 %v2556
    %2647 = vmatpush1.bf16.msra.mxu0 %v2555
    %2648 = vmatprep.subr.bf16.mxu0 %v2560
    %2649 = vmatpush1.bf16.msra.mxu0 %v2559
    %2650 = vmatprep.subr.bf16.mxu0 0
    %2651 = vmatpush1.bf16.msra.mxu0 0
    %2652 = vmatprep.subr.bf16.mxu0 0
    %2653 = vmatpush1.bf16.msra.mxu0 0
    %2654 = vmatprep.subr.bf16.mxu0 0
    %2655 = vmatpush1.bf16.msra.mxu0 0
    %2656 = vmatprep.subr.bf16.mxu0 0
    %2657 = vmatpush1.bf16.msra.mxu0 0
    %2658 = vmatprep.subr.bf16.mxu0 0
    %2659 = vmatpush1.bf16.msra.mxu0 0
    %2660 = vmatprep.subr.bf16.mxu0 0
    %2661 = vmatpush1.bf16.msra.mxu0 0
    %2662 = vmatprep.subr.bf16.mxu0 0
    %2663 = vmatpush1.bf16.msra.mxu0 0
    %2664 = vmatprep.subr.bf16.mxu0 0
    %2665 = vmatpush1.bf16.msra.mxu0 0
    %2666 = vmatprep.mubr.bf16.mxu0 0
    %2667 = vmatmul.mubr.bf16.gmra.mrb[0].mxu0 %v2400
    %v2668 = vpop.f32.mrb[0].mxu0
    %v2669 = vadd.f32 0.0, %v2668
    %v2670 = vpop.f32.mrb[0].mxu0
    %v2671 = vadd.f32 0.0, %v2670
    %v2672 = vpop.f32.mrb[0].mxu0
    %v2673 = vpop.f32.mrb[0].mxu0
    %2674 = vdwg.mxu0
    %s2675 = scalar_lea.vmem [#allocation2], 192
    %v2676 = vld [vmem:[%s2675] sm:$0xff]
    %v2677 = vld [vmem:[%s2675 + $0x8] sm:$0xff]
    %v2678 = vld [vmem:[%s2675 + $0x10] sm:$0xff]
    %v2679 = vld [vmem:[%s2675 + $0x18] sm:$0xff]
    %v2680 = vadd.f32 %v2676, %v2628
    %v2681 = vadd.f32 %v2677, %v2630
    %v2682 = vadd.f32 %v2678, %v2669
    %v2683 = vadd.f32 %v2679, %v2671
    %v2684 = vxor.u32 %v2680, 2147483648
    %v2685 = vmul.f32 %v2684, 1.442695
    %v2686 = vpow.pop %v2685
    %v2687 = vadd.f32 %v2686, 1.0
    %v2688 = vrcp.pop %v2687
    %v2689 = vmul.f32 1.0, %v2688
    %v2690 = vxor.u32 %v2681, 2147483648
    %v2691 = vmul.f32 %v2690, 1.442695
    %v2692 = vpow.pop %v2691
    %v2693 = vadd.f32 %v2692, 1.0
    %v2694 = vrcp.pop %v2693
    %v2695 = vmul.f32 1.0, %v2694
    %v2696 = vtanh.pop %v2682
    %v2697 = vxor.u32 %v2683, 2147483648
    %v2698 = vmul.f32 %v2697, 1.442695
    %v2699 = vpow.pop %v2698
    %v2700 = vadd.f32 %v2699, 1.0
    %v2701 = vrcp.pop %v2700
    %v2702 = vmul.f32 1.0, %v2701
    %v2703 = vmul.f32 %v2695, %v2393
    %v2704 = vmul.f32 %v2689, %v2696
    %v2705 = vadd.f32 %v2703, %v2704
    %v2706 = vtanh.pop %v2705
    %v2707 = vmul.f32 %v2702, %v2706
    %2708 = vst [vmem:[%s2398] sm:$0xff] %v2707
    %2709 = vst [vmem:[%s2396 + $0x8] sm:$0xff] %v2707
    %v2710 = vpack.c.bf16 %v2707, %v2707
    %v2711 = vld [vmem:[#allocation4] sm:$0xff]
    %v2712 = vld [vmem:[#allocation4 + $0x8] sm:$0xff]
    %v2713 = vld [vmem:[#allocation4 + $0x10] sm:$0xff]
    %v2714 = vld [vmem:[#allocation4 + $0x18] sm:$0xff]
    %v2715 = vld [vmem:[#allocation4 + $0x20] sm:$0xff]
    %v2716 = vld [vmem:[#allocation4 + $0x28] sm:$0xff]
    %v2717 = vld [vmem:[#allocation4 + $0x30] sm:$0xff]
    %v2718 = vld [vmem:[#allocation4 + $0x38] sm:$0xff]
    %v2719 = vld [vmem:[#allocation4 + $0x40] sm:$0xff]
    %v2720 = vld [vmem:[#allocation4 + $0x48] sm:$0xff]
    %v2721 = vld [vmem:[#allocation4 + $0x50] sm:$0xff]
    %v2722 = vld [vmem:[#allocation4 + $0x58] sm:$0xff]
    %v2723 = vld [vmem:[#allocation4 + $0x60] sm:$0xff]
    %v2724 = vld [vmem:[#allocation4 + $0x68] sm:$0xff]
    %v2725 = vld [vmem:[#allocation4 + $0x70] sm:$0xff]
    %v2726 = vld [vmem:[#allocation4 + $0x78] sm:$0xff]
    %v2727 = vld [vmem:[#allocation4 + $0x80] sm:$0xff]
    %v2728 = vld [vmem:[#allocation4 + $0x88] sm:$0xff]
    %v2729 = vld [vmem:[#allocation4 + $0x90] sm:$0xff]
    %v2730 = vld [vmem:[#allocation4 + $0x98] sm:$0xff]
    %v2731 = vld [vmem:[#allocation4 + $0xa0] sm:$0xff]
    %v2732 = vld [vmem:[#allocation4 + $0xa8] sm:$0xff]
    %v2733 = vld [vmem:[#allocation4 + $0xb0] sm:$0xff]
    %v2734 = vld [vmem:[#allocation4 + $0xb8] sm:$0xff]
    %v2735 = vld [vmem:[#allocation4 + $0xc0] sm:$0xff]
    %v2736 = vld [vmem:[#allocation4 + $0xc8] sm:$0xff]
    %v2737 = vld [vmem:[#allocation4 + $0xd0] sm:$0xff]
    %v2738 = vld [vmem:[#allocation4 + $0xd8] sm:$0xff]
    %v2739 = vld [vmem:[#allocation4 + $0xe0] sm:$0xff]
    %v2740 = vld [vmem:[#allocation4 + $0xe8] sm:$0xff]
    %v2741 = vld [vmem:[#allocation4 + $0xf0] sm:$0xff]
    %v2742 = vld [vmem:[#allocation4 + $0xf8] sm:$0xff]
    %v2775 = vunpack.c.l.b16 %v2711
    %v2776 = vunpack.c.h.b16 %v2711
    %v2777 = vunpack.c.l.b16 %v2712
    %v2778 = vunpack.c.h.b16 %v2712
    %v2779 = vunpack.c.l.b16 %v2713
    %v2780 = vunpack.c.h.b16 %v2713
    %v2781 = vunpack.c.l.b16 %v2714
    %v2782 = vunpack.c.h.b16 %v2714
    %v2783 = vunpack.c.l.b16 %v2715
    %v2784 = vunpack.c.h.b16 %v2715
    %v2785 = vunpack.c.l.b16 %v2716
    %v2786 = vunpack.c.h.b16 %v2716
    %v2787 = vunpack.c.l.b16 %v2717
    %v2788 = vunpack.c.h.b16 %v2717
    %v2789 = vunpack.c.l.b16 %v2718
    %v2790 = vunpack.c.h.b16 %v2718
    %v2791 = vunpack.c.l.b16 %v2719
    %v2792 = vunpack.c.h.b16 %v2719
    %v2793 = vunpack.c.l.b16 %v2720
    %v2794 = vunpack.c.h.b16 %v2720
    %v2795 = vunpack.c.l.b16 %v2721
    %v2796 = vunpack.c.h.b16 %v2721
    %v2797 = vunpack.c.l.b16 %v2722
    %v2798 = vunpack.c.h.b16 %v2722
    %v2799 = vunpack.c.l.b16 %v2723
    %v2800 = vunpack.c.h.b16 %v2723
    %v2801 = vunpack.c.l.b16 %v2724
    %v2802 = vunpack.c.h.b16 %v2724
    %v2803 = vunpack.c.l.b16 %v2725
    %v2804 = vunpack.c.h.b16 %v2725
    %v2805 = vunpack.c.l.b16 %v2726
    %v2806 = vunpack.c.h.b16 %v2726
    %v2807 = vunpack.c.l.b16 %v2727
    %v2808 = vunpack.c.h.b16 %v2727
    %v2809 = vunpack.c.l.b16 %v2728
    %v2810 = vunpack.c.h.b16 %v2728
    %v2811 = vunpack.c.l.b16 %v2729
    %v2812 = vunpack.c.h.b16 %v2729
    %v2813 = vunpack.c.l.b16 %v2730
    %v2814 = vunpack.c.h.b16 %v2730
    %v2815 = vunpack.c.l.b16 %v2731
    %v2816 = vunpack.c.h.b16 %v2731
    %v2817 = vunpack.c.l.b16 %v2732
    %v2818 = vunpack.c.h.b16 %v2732
    %v2819 = vunpack.c.l.b16 %v2733
    %v2820 = vunpack.c.h.b16 %v2733
    %v2821 = vunpack.c.l.b16 %v2734
    %v2822 = vunpack.c.h.b16 %v2734
    %v2823 = vunpack.c.l.b16 %v2735
    %v2824 = vunpack.c.h.b16 %v2735
    %v2825 = vunpack.c.l.b16 %v2736
    %v2826 = vunpack.c.h.b16 %v2736
    %v2827 = vunpack.c.l.b16 %v2737
    %v2828 = vunpack.c.h.b16 %v2737
    %v2829 = vunpack.c.l.b16 %v2738
    %v2830 = vunpack.c.h.b16 %v2738
    %v2831 = vunpack.c.l.b16 %v2739
    %v2832 = vunpack.c.h.b16 %v2739
    %v2833 = vunpack.c.l.b16 %v2740
    %v2834 = vunpack.c.h.b16 %v2740
    %v2835 = vunpack.c.l.b16 %v2741
    %v2836 = vunpack.c.h.b16 %v2741
    %v2837 = vunpack.c.l.b16 %v2742
    %v2838 = vunpack.c.h.b16 %v2742
    %v2839 = vpack.c.b16 %v2779, %v2775
    %v2840 = vpack.c.b16 %v2780, %v2776
    %v2841 = vpack.c.b16 %v2781, %v2777
    %v2842 = vpack.c.b16 %v2782, %v2778
    %v2843 = vpack.c.b16 %v2787, %v2783
    %v2844 = vpack.c.b16 %v2788, %v2784
    %v2845 = vpack.c.b16 %v2789, %v2785
    %v2846 = vpack.c.b16 %v2790, %v2786
    %v2847 = vpack.c.b16 %v2795, %v2791
    %v2848 = vpack.c.b16 %v2796, %v2792
    %v2849 = vpack.c.b16 %v2797, %v2793
    %v2850 = vpack.c.b16 %v2798, %v2794
    %v2851 = vpack.c.b16 %v2803, %v2799
    %v2852 = vpack.c.b16 %v2804, %v2800
    %v2853 = vpack.c.b16 %v2805, %v2801
    %v2854 = vpack.c.b16 %v2806, %v2802
    %v2855 = vpack.c.b16 %v2811, %v2807
    %v2856 = vpack.c.b16 %v2812, %v2808
    %v2857 = vpack.c.b16 %v2813, %v2809
    %v2858 = vpack.c.b16 %v2814, %v2810
    %v2859 = vpack.c.b16 %v2819, %v2815
    %v2860 = vpack.c.b16 %v2820, %v2816
    %v2861 = vpack.c.b16 %v2821, %v2817
    %v2862 = vpack.c.b16 %v2822, %v2818
    %v2863 = vpack.c.b16 %v2827, %v2823
    %v2864 = vpack.c.b16 %v2828, %v2824
    %v2865 = vpack.c.b16 %v2829, %v2825
    %v2866 = vpack.c.b16 %v2830, %v2826
    %v2867 = vpack.c.b16 %v2835, %v2831
    %v2868 = vpack.c.b16 %v2836, %v2832
    %v2869 = vpack.c.b16 %v2837, %v2833
    %v2870 = vpack.c.b16 %v2838, %v2834
    %2903 = vmatprep.subr.bf16.mxu0 %v2840
    %2904 = vmatpush1.bf16.msra.mxu0 %v2839
    %2905 = vmatprep.subr.bf16.mxu0 %v2844
    %2906 = vmatpush1.bf16.msra.mxu0 %v2843
    %2907 = vmatprep.subr.bf16.mxu0 %v2848
    %2908 = vmatpush1.bf16.msra.mxu0 %v2847
    %2909 = vmatprep.subr.bf16.mxu0 %v2852
    %2910 = vmatpush1.bf16.msra.mxu0 %v2851
    %2911 = vmatprep.subr.bf16.mxu0 %v2856
    %2912 = vmatpush1.bf16.msra.mxu0 %v2855
    %2913 = vmatprep.subr.bf16.mxu0 %v2860
    %2914 = vmatpush1.bf16.msra.mxu0 %v2859
    %2915 = vmatprep.subr.bf16.mxu0 %v2864
    %2916 = vmatpush1.bf16.msra.mxu0 %v2863
    %2917 = vmatprep.subr.bf16.mxu0 %v2868
    %2918 = vmatpush1.bf16.msra.mxu0 %v2867
    %2919 = vmatprep.subr.bf16.mxu0 0
    %2920 = vmatpush1.bf16.msra.mxu0 0
    %2921 = vmatprep.subr.bf16.mxu0 0
    %2922 = vmatpush1.bf16.msra.mxu0 0
    %2923 = vmatprep.subr.bf16.mxu0 0
    %2924 = vmatpush1.bf16.msra.mxu0 0
    %2925 = vmatprep.subr.bf16.mxu0 0
    %2926 = vmatpush1.bf16.msra.mxu0 0
    %2927 = vmatprep.subr.bf16.mxu0 0
    %2928 = vmatpush1.bf16.msra.mxu0 0
    %2929 = vmatprep.subr.bf16.mxu0 0
    %2930 = vmatpush1.bf16.msra.mxu0 0
    %2931 = vmatprep.subr.bf16.mxu0 0
    %2932 = vmatpush1.bf16.msra.mxu0 0
    %2933 = vmatprep.subr.bf16.mxu0 0
    %2934 = vmatpush1.bf16.msra.mxu0 0
    %2935 = vmatprep.mubr.bf16.mxu0 0
    %2936 = vmatmul.mubr.bf16.gmra.mrb[0].mxu0 %v2710
    %v2937 = vpop.f32.mrb[0].mxu0
    %v2938 = vadd.f32 0.0, %v2937
    %v2939 = vpop.f32.mrb[0].mxu0
    %v2940 = vadd.f32 0.0, %v2939
    %v2941 = vpop.f32.mrb[0].mxu0
    %v2942 = vpop.f32.mrb[0].mxu0
    %2943 = vdwg.mxu0
    %2944 = vmatprep.subr.bf16.mxu0 %v2842
    %2945 = vmatpush1.bf16.msra.mxu0 %v2841
    %2946 = vmatprep.subr.bf16.mxu0 %v2846
    %2947 = vmatpush1.bf16.msra.mxu0 %v2845
    %2948 = vmatprep.subr.bf16.mxu0 %v2850
    %2949 = vmatpush1.bf16.msra.mxu0 %v2849
    %2950 = vmatprep.subr.bf16.mxu0 %v2854
    %2951 = vmatpush1.bf16.msra.mxu0 %v2853
    %2952 = vmatprep.subr.bf16.mxu0 %v2858
    %2953 = vmatpush1.bf16.msra.mxu0 %v2857
    %2954 = vmatprep.subr.bf16.mxu0 %v2862
    %2955 = vmatpush1.bf16.msra.mxu0 %v2861
    %2956 = vmatprep.subr.bf16.mxu0 %v2866
    %2957 = vmatpush1.bf16.msra.mxu0 %v2865
    %2958 = vmatprep.subr.bf16.mxu0 %v2870
    %2959 = vmatpush1.bf16.msra.mxu0 %v2869
    %2960 = vmatprep.subr.bf16.mxu0 0
    %2961 = vmatpush1.bf16.msra.mxu0 0
    %2962 = vmatprep.subr.bf16.mxu0 0
    %2963 = vmatpush1.bf16.msra.mxu0 0
    %2964 = vmatprep.subr.bf16.mxu0 0
    %2965 = vmatpush1.bf16.msra.mxu0 0
    %2966 = vmatprep.subr.bf16.mxu0 0
    %2967 = vmatpush1.bf16.msra.mxu0 0
    %2968 = vmatprep.subr.bf16.mxu0 0
    %2969 = vmatpush1.bf16.msra.mxu0 0
    %2970 = vmatprep.subr.bf16.mxu0 0
    %2971 = vmatpush1.bf16.msra.mxu0 0
    %2972 = vmatprep.subr.bf16.mxu0 0
    %2973 = vmatpush1.bf16.msra.mxu0 0
    %2974 = vmatprep.subr.bf16.mxu0 0
    %2975 = vmatpush1.bf16.msra.mxu0 0
    %2976 = vmatprep.mubr.bf16.mxu0 0
    %2977 = vmatmul.mubr.bf16.gmra.mrb[0].mxu0 %v2710
    %v2978 = vpop.f32.mrb[0].mxu0
    %v2979 = vadd.f32 0.0, %v2978
    %v2980 = vpop.f32.mrb[0].mxu0
    %v2981 = vadd.f32 0.0, %v2980
    %v2982 = vpop.f32.mrb[0].mxu0
    %v2983 = vpop.f32.mrb[0].mxu0
    %2984 = vdwg.mxu0
    %s2985 = scalar_lea.vmem [#allocation2], 224
    %v2986 = vld [vmem:[%s2985] sm:$0xff]
    %v2987 = vld [vmem:[%s2985 + $0x8] sm:$0xff]
    %v2988 = vld [vmem:[%s2985 + $0x10] sm:$0xff]
    %v2989 = vld [vmem:[%s2985 + $0x18] sm:$0xff]
    %v2990 = vadd.f32 %v2986, %v2938
    %v2991 = vadd.f32 %v2987, %v2940
    %v2992 = vadd.f32 %v2988, %v2979
    %v2993 = vadd.f32 %v2989, %v2981
    %v2994 = vxor.u32 %v2990, 2147483648
    %v2995 = vmul.f32 %v2994, 1.442695
    %v2996 = vpow.pop %v2995
    %v2997 = vadd.f32 %v2996, 1.0
    %v2998 = vrcp.pop %v2997
    %v2999 = vmul.f32 1.0, %v2998
    %v3000 = vxor.u32 %v2991, 2147483648
    %v3001 = vmul.f32 %v3000, 1.442695
    %v3002 = vpow.pop %v3001
    %v3003 = vadd.f32 %v3002, 1.0
    %v3004 = vrcp.pop %v3003
    %v3005 = vmul.f32 1.0, %v3004
    %v3006 = vtanh.pop %v2992
    %v3007 = vxor.u32 %v2993, 2147483648
    %v3008 = vmul.f32 %v3007, 1.442695
    %v3009 = vpow.pop %v3008
    %v3010 = vadd.f32 %v3009, 1.0
    %v3011 = vrcp.pop %v3010
    %v3012 = vmul.f32 1.0, %v3011
    %v3013 = vmul.f32 %v3005, %v2705
    %v3014 = vmul.f32 %v2999, %v3006
    %v3015 = vadd.f32 %v3013, %v3014
    %v3016 = vtanh.pop %v3015
    %v3017 = vmul.f32 %v3012, %v3016
    %3018 = vst [vmem:[%s2086] sm:$0xff] %v3017
    %3019 = vst [vmem:[%s2084 + $0x8] sm:$0xff] %v3017
    %v3020 = vpack.c.bf16 %v3017, %v3017
    %v3021 = vld [vmem:[#allocation4] sm:$0xff]
    %v3022 = vld [vmem:[#allocation4 + $0x8] sm:$0xff]
    %v3023 = vld [vmem:[#allocation4 + $0x10] sm:$0xff]
    %v3024 = vld [vmem:[#allocation4 + $0x18] sm:$0xff]
    %v3025 = vld [vmem:[#allocation4 + $0x20] sm:$0xff]
    %v3026 = vld [vmem:[#allocation4 + $0x28] sm:$0xff]
    %v3027 = vld [vmem:[#allocation4 + $0x30] sm:$0xff]
    %v3028 = vld [vmem:[#allocation4 + $0x38] sm:$0xff]
    %v3029 = vld [vmem:[#allocation4 + $0x40] sm:$0xff]
    %v3030 = vld [vmem:[#allocation4 + $0x48] sm:$0xff]
    %v3031 = vld [vmem:[#allocation4 + $0x50] sm:$0xff]
    %v3032 = vld [vmem:[#allocation4 + $0x58] sm:$0xff]
    %v3033 = vld [vmem:[#allocation4 + $0x60] sm:$0xff]
    %v3034 = vld [vmem:[#allocation4 + $0x68] sm:$0xff]
    %v3035 = vld [vmem:[#allocation4 + $0x70] sm:$0xff]
    %v3036 = vld [vmem:[#allocation4 + $0x78] sm:$0xff]
    %v3037 = vld [vmem:[#allocation4 + $0x80] sm:$0xff]
    %v3038 = vld [vmem:[#allocation4 + $0x88] sm:$0xff]
    %v3039 = vld [vmem:[#allocation4 + $0x90] sm:$0xff]
    %v3040 = vld [vmem:[#allocation4 + $0x98] sm:$0xff]
    %v3041 = vld [vmem:[#allocation4 + $0xa0] sm:$0xff]
    %v3042 = vld [vmem:[#allocation4 + $0xa8] sm:$0xff]
    %v3043 = vld [vmem:[#allocation4 + $0xb0] sm:$0xff]
    %v3044 = vld [vmem:[#allocation4 + $0xb8] sm:$0xff]
    %v3045 = vld [vmem:[#allocation4 + $0xc0] sm:$0xff]
    %v3046 = vld [vmem:[#allocation4 + $0xc8] sm:$0xff]
    %v3047 = vld [vmem:[#allocation4 + $0xd0] sm:$0xff]
    %v3048 = vld [vmem:[#allocation4 + $0xd8] sm:$0xff]
    %v3049 = vld [vmem:[#allocation4 + $0xe0] sm:$0xff]
    %v3050 = vld [vmem:[#allocation4 + $0xe8] sm:$0xff]
    %v3051 = vld [vmem:[#allocation4 + $0xf0] sm:$0xff]
    %v3052 = vld [vmem:[#allocation4 + $0xf8] sm:$0xff]
    %v3085 = vunpack.c.l.b16 %v3021
    %v3086 = vunpack.c.h.b16 %v3021
    %v3087 = vunpack.c.l.b16 %v3022
    %v3088 = vunpack.c.h.b16 %v3022
    %v3089 = vunpack.c.l.b16 %v3023
    %v3090 = vunpack.c.h.b16 %v3023
    %v3091 = vunpack.c.l.b16 %v3024
    %v3092 = vunpack.c.h.b16 %v3024
    %v3093 = vunpack.c.l.b16 %v3025
    %v3094 = vunpack.c.h.b16 %v3025
    %v3095 = vunpack.c.l.b16 %v3026
    %v3096 = vunpack.c.h.b16 %v3026
    %v3097 = vunpack.c.l.b16 %v3027
    %v3098 = vunpack.c.h.b16 %v3027
    %v3099 = vunpack.c.l.b16 %v3028
    %v3100 = vunpack.c.h.b16 %v3028
    %v3101 = vunpack.c.l.b16 %v3029
    %v3102 = vunpack.c.h.b16 %v3029
    %v3103 = vunpack.c.l.b16 %v3030
    %v3104 = vunpack.c.h.b16 %v3030
    %v3105 = vunpack.c.l.b16 %v3031
    %v3106 = vunpack.c.h.b16 %v3031
    %v3107 = vunpack.c.l.b16 %v3032
    %v3108 = vunpack.c.h.b16 %v3032
    %v3109 = vunpack.c.l.b16 %v3033
    %v3110 = vunpack.c.h.b16 %v3033
    %v3111 = vunpack.c.l.b16 %v3034
    %v3112 = vunpack.c.h.b16 %v3034
    %v3113 = vunpack.c.l.b16 %v3035
    %v3114 = vunpack.c.h.b16 %v3035
    %v3115 = vunpack.c.l.b16 %v3036
    %v3116 = vunpack.c.h.b16 %v3036
    %v3117 = vunpack.c.l.b16 %v3037
    %v3118 = vunpack.c.h.b16 %v3037
    %v3119 = vunpack.c.l.b16 %v3038
    %v3120 = vunpack.c.h.b16 %v3038
    %v3121 = vunpack.c.l.b16 %v3039
    %v3122 = vunpack.c.h.b16 %v3039
    %v3123 = vunpack.c.l.b16 %v3040
    %v3124 = vunpack.c.h.b16 %v3040
    %v3125 = vunpack.c.l.b16 %v3041
    %v3126 = vunpack.c.h.b16 %v3041
    %v3127 = vunpack.c.l.b16 %v3042
    %v3128 = vunpack.c.h.b16 %v3042
    %v3129 = vunpack.c.l.b16 %v3043
    %v3130 = vunpack.c.h.b16 %v3043
    %v3131 = vunpack.c.l.b16 %v3044
    %v3132 = vunpack.c.h.b16 %v3044
    %v3133 = vunpack.c.l.b16 %v3045
    %v3134 = vunpack.c.h.b16 %v3045
    %v3135 = vunpack.c.l.b16 %v3046
    %v3136 = vunpack.c.h.b16 %v3046
    %v3137 = vunpack.c.l.b16 %v3047
    %v3138 = vunpack.c.h.b16 %v3047
    %v3139 = vunpack.c.l.b16 %v3048
    %v3140 = vunpack.c.h.b16 %v3048
    %v3141 = vunpack.c.l.b16 %v3049
    %v3142 = vunpack.c.h.b16 %v3049
    %v3143 = vunpack.c.l.b16 %v3050
    %v3144 = vunpack.c.h.b16 %v3050
    %v3145 = vunpack.c.l.b16 %v3051
    %v3146 = vunpack.c.h.b16 %v3051
    %v3147 = vunpack.c.l.b16 %v3052
    %v3148 = vunpack.c.h.b16 %v3052
    %v3149 = vpack.c.b16 %v3089, %v3085
    %v3150 = vpack.c.b16 %v3090, %v3086
    %v3151 = vpack.c.b16 %v3091, %v3087
    %v3152 = vpack.c.b16 %v3092, %v3088
    %v3153 = vpack.c.b16 %v3097, %v3093
    %v3154 = vpack.c.b16 %v3098, %v3094
    %v3155 = vpack.c.b16 %v3099, %v3095
    %v3156 = vpack.c.b16 %v3100, %v3096
    %v3157 = vpack.c.b16 %v3105, %v3101
    %v3158 = vpack.c.b16 %v3106, %v3102
    %v3159 = vpack.c.b16 %v3107, %v3103
    %v3160 = vpack.c.b16 %v3108, %v3104
    %v3161 = vpack.c.b16 %v3113, %v3109
    %v3162 = vpack.c.b16 %v3114, %v3110
    %v3163 = vpack.c.b16 %v3115, %v3111
    %v3164 = vpack.c.b16 %v3116, %v3112
    %v3165 = vpack.c.b16 %v3121, %v3117
    %v3166 = vpack.c.b16 %v3122, %v3118
    %v3167 = vpack.c.b16 %v3123, %v3119
    %v3168 = vpack.c.b16 %v3124, %v3120
    %v3169 = vpack.c.b16 %v3129, %v3125
    %v3170 = vpack.c.b16 %v3130, %v3126
    %v3171 = vpack.c.b16 %v3131, %v3127
    %v3172 = vpack.c.b16 %v3132, %v3128
    %v3173 = vpack.c.b16 %v3137, %v3133
    %v3174 = vpack.c.b16 %v3138, %v3134
    %v3175 = vpack.c.b16 %v3139, %v3135
    %v3176 = vpack.c.b16 %v3140, %v3136
    %v3177 = vpack.c.b16 %v3145, %v3141
    %v3178 = vpack.c.b16 %v3146, %v3142
    %v3179 = vpack.c.b16 %v3147, %v3143
    %v3180 = vpack.c.b16 %v3148, %v3144
    %3213 = vmatprep.subr.bf16.mxu0 %v3150
    %3214 = vmatpush1.bf16.msra.mxu0 %v3149
    %3215 = vmatprep.subr.bf16.mxu0 %v3154
    %3216 = vmatpush1.bf16.msra.mxu0 %v3153
    %3217 = vmatprep.subr.bf16.mxu0 %v3158
    %3218 = vmatpush1.bf16.msra.mxu0 %v3157
    %3219 = vmatprep.subr.bf16.mxu0 %v3162
    %3220 = vmatpush1.bf16.msra.mxu0 %v3161
    %3221 = vmatprep.subr.bf16.mxu0 %v3166
    %3222 = vmatpush1.bf16.msra.mxu0 %v3165
    %3223 = vmatprep.subr.bf16.mxu0 %v3170
    %3224 = vmatpush1.bf16.msra.mxu0 %v3169
    %3225 = vmatprep.subr.bf16.mxu0 %v3174
    %3226 = vmatpush1.bf16.msra.mxu0 %v3173
    %3227 = vmatprep.subr.bf16.mxu0 %v3178
    %3228 = vmatpush1.bf16.msra.mxu0 %v3177
    %3229 = vmatprep.subr.bf16.mxu0 0
    %3230 = vmatpush1.bf16.msra.mxu0 0
    %3231 = vmatprep.subr.bf16.mxu0 0
    %3232 = vmatpush1.bf16.msra.mxu0 0
    %3233 = vmatprep.subr.bf16.mxu0 0
    %3234 = vmatpush1.bf16.msra.mxu0 0
    %3235 = vmatprep.subr.bf16.mxu0 0
    %3236 = vmatpush1.bf16.msra.mxu0 0
    %3237 = vmatprep.subr.bf16.mxu0 0
    %3238 = vmatpush1.bf16.msra.mxu0 0
    %3239 = vmatprep.subr.bf16.mxu0 0
    %3240 = vmatpush1.bf16.msra.mxu0 0
    %3241 = vmatprep.subr.bf16.mxu0 0
    %3242 = vmatpush1.bf16.msra.mxu0 0
    %3243 = vmatprep.subr.bf16.mxu0 0
    %3244 = vmatpush1.bf16.msra.mxu0 0
    %3245 = vmatprep.mubr.bf16.mxu0 0
    %3246 = vmatmul.mubr.bf16.gmra.mrb[0].mxu0 %v3020
    %v3247 = vpop.f32.mrb[0].mxu0
    %v3248 = vadd.f32 0.0, %v3247
    %v3249 = vpop.f32.mrb[0].mxu0
    %v3250 = vadd.f32 0.0, %v3249
    %v3251 = vpop.f32.mrb[0].mxu0
    %v3252 = vpop.f32.mrb[0].mxu0
    %3253 = vdwg.mxu0
    %3254 = vmatprep.subr.bf16.mxu0 %v3152
    %3255 = vmatpush1.bf16.msra.mxu0 %v3151
    %3256 = vmatprep.subr.bf16.mxu0 %v3156
    %3257 = vmatpush1.bf16.msra.mxu0 %v3155
    %3258 = vmatprep.subr.bf16.mxu0 %v3160
    %3259 = vmatpush1.bf16.msra.mxu0 %v3159
    %3260 = vmatprep.subr.bf16.mxu0 %v3164
    %3261 = vmatpush1.bf16.msra.mxu0 %v3163
    %3262 = vmatprep.subr.bf16.mxu0 %v3168
    %3263 = vmatpush1.bf16.msra.mxu0 %v3167
    %3264 = vmatprep.subr.bf16.mxu0 %v3172
    %3265 = vmatpush1.bf16.msra.mxu0 %v3171
    %3266 = vmatprep.subr.bf16.mxu0 %v3176
    %3267 = vmatpush1.bf16.msra.mxu0 %v3175
    %3268 = vmatprep.subr.bf16.mxu0 %v3180
    %3269 = vmatpush1.bf16.msra.mxu0 %v3179
    %3270 = vmatprep.subr.bf16.mxu0 0
    %3271 = vmatpush1.bf16.msra.mxu0 0
    %3272 = vmatprep.subr.bf16.mxu0 0
    %3273 = vmatpush1.bf16.msra.mxu0 0
    %3274 = vmatprep.subr.bf16.mxu0 0
    %3275 = vmatpush1.bf16.msra.mxu0 0
    %3276 = vmatprep.subr.bf16.mxu0 0
    %3277 = vmatpush1.bf16.msra.mxu0 0
    %3278 = vmatprep.subr.bf16.mxu0 0
    %3279 = vmatpush1.bf16.msra.mxu0 0
    %3280 = vmatprep.subr.bf16.mxu0 0
    %3281 = vmatpush1.bf16.msra.mxu0 0
    %3282 = vmatprep.subr.bf16.mxu0 0
    %3283 = vmatpush1.bf16.msra.mxu0 0
    %3284 = vmatprep.subr.bf16.mxu0 0
    %3285 = vmatpush1.bf16.msra.mxu0 0
    %3286 = vmatprep.mubr.bf16.mxu0 0
    %3287 = vmatmul.mubr.bf16.gmra.mrb[0].mxu0 %v3020
    %v3288 = vpop.f32.mrb[0].mxu0
    %v3289 = vadd.f32 0.0, %v3288
    %v3290 = vpop.f32.mrb[0].mxu0
    %v3291 = vadd.f32 0.0, %v3290
    %v3292 = vpop.f32.mrb[0].mxu0
    %v3293 = vpop.f32.mrb[0].mxu0
    %3294 = vdwg.mxu0
    %s3295 = scalar_lea.vmem [#allocation2], 256
    %v3296 = vld [vmem:[%s3295] sm:$0xff]
    %v3297 = vld [vmem:[%s3295 + $0x8] sm:$0xff]
    %v3298 = vld [vmem:[%s3295 + $0x10] sm:$0xff]
    %v3299 = vld [vmem:[%s3295 + $0x18] sm:$0xff]
    %v3300 = vadd.f32 %v3296, %v3248
    %v3301 = vadd.f32 %v3297, %v3250
    %v3302 = vadd.f32 %v3298, %v3289
    %v3303 = vadd.f32 %v3299, %v3291
    %v3304 = vxor.u32 %v3300, 2147483648
    %v3305 = vmul.f32 %v3304, 1.442695
    %v3306 = vpow.pop %v3305
    %v3307 = vadd.f32 %v3306, 1.0
    %v3308 = vrcp.pop %v3307
    %v3309 = vmul.f32 1.0, %v3308
    %v3310 = vxor.u32 %v3301, 2147483648
    %v3311 = vmul.f32 %v3310, 1.442695
    %v3312 = vpow.pop %v3311
    %v3313 = vadd.f32 %v3312, 1.0
    %v3314 = vrcp.pop %v3313
    %v3315 = vmul.f32 1.0, %v3314
    %v3316 = vtanh.pop %v3302
    %v3317 = vxor.u32 %v3303, 2147483648
    %v3318 = vmul.f32 %v3317, 1.442695
    %v3319 = vpow.pop %v3318
    %v3320 = vadd.f32 %v3319, 1.0
    %v3321 = vrcp.pop %v3320
    %v3322 = vmul.f32 1.0, %v3321
    %v3323 = vmul.f32 %v3315, %v3015
    %v3324 = vmul.f32 %v3309, %v3316
    %v3325 = vadd.f32 %v3323, %v3324
    %v3326 = vtanh.pop %v3325
    %v3327 = vmul.f32 %v3322, %v3326
    %3328 = vst [vmem:[%s1774] sm:$0xff] %v3327
    %3329 = vst [vmem:[%s1772 + $0x8] sm:$0xff] %v3327
    %v3330 = vpack.c.bf16 %v3327, %v3327
    %v3331 = vld [vmem:[#allocation4] sm:$0xff]
    %v3332 = vld [vmem:[#allocation4 + $0x8] sm:$0xff]
    %v3333 = vld [vmem:[#allocation4 + $0x10] sm:$0xff]
    %v3334 = vld [vmem:[#allocation4 + $0x18] sm:$0xff]
    %v3335 = vld [vmem:[#allocation4 + $0x20] sm:$0xff]
    %v3336 = vld [vmem:[#allocation4 + $0x28] sm:$0xff]
    %v3337 = vld [vmem:[#allocation4 + $0x30] sm:$0xff]
    %v3338 = vld [vmem:[#allocation4 + $0x38] sm:$0xff]
    %v3339 = vld [vmem:[#allocation4 + $0x40] sm:$0xff]
    %v3340 = vld [vmem:[#allocation4 + $0x48] sm:$0xff]
    %v3341 = vld [vmem:[#allocation4 + $0x50] sm:$0xff]
    %v3342 = vld [vmem:[#allocation4 + $0x58] sm:$0xff]
    %v3343 = vld [vmem:[#allocation4 + $0x60] sm:$0xff]
    %v3344 = vld [vmem:[#allocation4 + $0x68] sm:$0xff]
    %v3345 = vld [vmem:[#allocation4 + $0x70] sm:$0xff]
    %v3346 = vld [vmem:[#allocation4 + $0x78] sm:$0xff]
    %v3347 = vld [vmem:[#allocation4 + $0x80] sm:$0xff]
    %v3348 = vld [vmem:[#allocation4 + $0x88] sm:$0xff]
    %v3349 = vld [vmem:[#allocation4 + $0x90] sm:$0xff]
    %v3350 = vld [vmem:[#allocation4 + $0x98] sm:$0xff]
    %v3351 = vld [vmem:[#allocation4 + $0xa0] sm:$0xff]
    %v3352 = vld [vmem:[#allocation4 + $0xa8] sm:$0xff]
    %v3353 = vld [vmem:[#allocation4 + $0xb0] sm:$0xff]
    %v3354 = vld [vmem:[#allocation4 + $0xb8] sm:$0xff]
    %v3355 = vld [vmem:[#allocation4 + $0xc0] sm:$0xff]
    %v3356 = vld [vmem:[#allocation4 + $0xc8] sm:$0xff]
    %v3357 = vld [vmem:[#allocation4 + $0xd0] sm:$0xff]
    %v3358 = vld [vmem:[#allocation4 + $0xd8] sm:$0xff]
    %v3359 = vld [vmem:[#allocation4 + $0xe0] sm:$0xff]
    %v3360 = vld [vmem:[#allocation4 + $0xe8] sm:$0xff]
    %v3361 = vld [vmem:[#allocation4 + $0xf0] sm:$0xff]
    %v3362 = vld [vmem:[#allocation4 + $0xf8] sm:$0xff]
    %v3395 = vunpack.c.l.b16 %v3331
    %v3396 = vunpack.c.h.b16 %v3331
    %v3397 = vunpack.c.l.b16 %v3332
    %v3398 = vunpack.c.h.b16 %v3332
    %v3399 = vunpack.c.l.b16 %v3333
    %v3400 = vunpack.c.h.b16 %v3333
    %v3401 = vunpack.c.l.b16 %v3334
    %v3402 = vunpack.c.h.b16 %v3334
    %v3403 = vunpack.c.l.b16 %v3335
    %v3404 = vunpack.c.h.b16 %v3335
    %v3405 = vunpack.c.l.b16 %v3336
    %v3406 = vunpack.c.h.b16 %v3336
    %v3407 = vunpack.c.l.b16 %v3337
    %v3408 = vunpack.c.h.b16 %v3337
    %v3409 = vunpack.c.l.b16 %v3338
    %v3410 = vunpack.c.h.b16 %v3338
    %v3411 = vunpack.c.l.b16 %v3339
    %v3412 = vunpack.c.h.b16 %v3339
    %v3413 = vunpack.c.l.b16 %v3340
    %v3414 = vunpack.c.h.b16 %v3340
    %v3415 = vunpack.c.l.b16 %v3341
    %v3416 = vunpack.c.h.b16 %v3341
    %v3417 = vunpack.c.l.b16 %v3342
    %v3418 = vunpack.c.h.b16 %v3342
    %v3419 = vunpack.c.l.b16 %v3343
    %v3420 = vunpack.c.h.b16 %v3343
    %v3421 = vunpack.c.l.b16 %v3344
    %v3422 = vunpack.c.h.b16 %v3344
    %v3423 = vunpack.c.l.b16 %v3345
    %v3424 = vunpack.c.h.b16 %v3345
    %v3425 = vunpack.c.l.b16 %v3346
    %v3426 = vunpack.c.h.b16 %v3346
    %v3427 = vunpack.c.l.b16 %v3347
    %v3428 = vunpack.c.h.b16 %v3347
    %v3429 = vunpack.c.l.b16 %v3348
    %v3430 = vunpack.c.h.b16 %v3348
    %v3431 = vunpack.c.l.b16 %v3349
    %v3432 = vunpack.c.h.b16 %v3349
    %v3433 = vunpack.c.l.b16 %v3350
    %v3434 = vunpack.c.h.b16 %v3350
    %v3435 = vunpack.c.l.b16 %v3351
    %v3436 = vunpack.c.h.b16 %v3351
    %v3437 = vunpack.c.l.b16 %v3352
    %v3438 = vunpack.c.h.b16 %v3352
    %v3439 = vunpack.c.l.b16 %v3353
    %v3440 = vunpack.c.h.b16 %v3353
    %v3441 = vunpack.c.l.b16 %v3354
    %v3442 = vunpack.c.h.b16 %v3354
    %v3443 = vunpack.c.l.b16 %v3355
    %v3444 = vunpack.c.h.b16 %v3355
    %v3445 = vunpack.c.l.b16 %v3356
    %v3446 = vunpack.c.h.b16 %v3356
    %v3447 = vunpack.c.l.b16 %v3357
    %v3448 = vunpack.c.h.b16 %v3357
    %v3449 = vunpack.c.l.b16 %v3358
    %v3450 = vunpack.c.h.b16 %v3358
    %v3451 = vunpack.c.l.b16 %v3359
    %v3452 = vunpack.c.h.b16 %v3359
    %v3453 = vunpack.c.l.b16 %v3360
    %v3454 = vunpack.c.h.b16 %v3360
    %v3455 = vunpack.c.l.b16 %v3361
    %v3456 = vunpack.c.h.b16 %v3361
    %v3457 = vunpack.c.l.b16 %v3362
    %v3458 = vunpack.c.h.b16 %v3362
    %v3459 = vpack.c.b16 %v3399, %v3395
    %v3460 = vpack.c.b16 %v3400, %v3396
    %v3461 = vpack.c.b16 %v3401, %v3397
    %v3462 = vpack.c.b16 %v3402, %v3398
    %v3463 = vpack.c.b16 %v3407, %v3403
    %v3464 = vpack.c.b16 %v3408, %v3404
    %v3465 = vpack.c.b16 %v3409, %v3405
    %v3466 = vpack.c.b16 %v3410, %v3406
    %v3467 = vpack.c.b16 %v3415, %v3411
    %v3468 = vpack.c.b16 %v3416, %v3412
    %v3469 = vpack.c.b16 %v3417, %v3413
    %v3470 = vpack.c.b16 %v3418, %v3414
    %v3471 = vpack.c.b16 %v3423, %v3419
    %v3472 = vpack.c.b16 %v3424, %v3420
    %v3473 = vpack.c.b16 %v3425, %v3421
    %v3474 = vpack.c.b16 %v3426, %v3422
    %v3475 = vpack.c.b16 %v3431, %v3427
    %v3476 = vpack.c.b16 %v3432, %v3428
    %v3477 = vpack.c.b16 %v3433, %v3429
    %v3478 = vpack.c.b16 %v3434, %v3430
    %v3479 = vpack.c.b16 %v3439, %v3435
    %v3480 = vpack.c.b16 %v3440, %v3436
    %v3481 = vpack.c.b16 %v3441, %v3437
    %v3482 = vpack.c.b16 %v3442, %v3438
    %v3483 = vpack.c.b16 %v3447, %v3443
    %v3484 = vpack.c.b16 %v3448, %v3444
    %v3485 = vpack.c.b16 %v3449, %v3445
    %v3486 = vpack.c.b16 %v3450, %v3446
    %v3487 = vpack.c.b16 %v3455, %v3451
    %v3488 = vpack.c.b16 %v3456, %v3452
    %v3489 = vpack.c.b16 %v3457, %v3453
    %v3490 = vpack.c.b16 %v3458, %v3454
    %3523 = vmatprep.subr.bf16.mxu0 %v3460
    %3524 = vmatpush1.bf16.msra.mxu0 %v3459
    %3525 = vmatprep.subr.bf16.mxu0 %v3464
    %3526 = vmatpush1.bf16.msra.mxu0 %v3463
    %3527 = vmatprep.subr.bf16.mxu0 %v3468
    %3528 = vmatpush1.bf16.msra.mxu0 %v3467
    %3529 = vmatprep.subr.bf16.mxu0 %v3472
    %3530 = vmatpush1.bf16.msra.mxu0 %v3471
    %3531 = vmatprep.subr.bf16.mxu0 %v3476
    %3532 = vmatpush1.bf16.msra.mxu0 %v3475
    %3533 = vmatprep.subr.bf16.mxu0 %v3480
    %3534 = vmatpush1.bf16.msra.mxu0 %v3479
    %3535 = vmatprep.subr.bf16.mxu0 %v3484
    %3536 = vmatpush1.bf16.msra.mxu0 %v3483
    %3537 = vmatprep.subr.bf16.mxu0 %v3488
    %3538 = vmatpush1.bf16.msra.mxu0 %v3487
    %3539 = vmatprep.subr.bf16.mxu0 0
    %3540 = vmatpush1.bf16.msra.mxu0 0
    %3541 = vmatprep.subr.bf16.mxu0 0
    %3542 = vmatpush1.bf16.msra.mxu0 0
    %3543 = vmatprep.subr.bf16.mxu0 0
    %3544 = vmatpush1.bf16.msra.mxu0 0
    %3545 = vmatprep.subr.bf16.mxu0 0
    %3546 = vmatpush1.bf16.msra.mxu0 0
    %3547 = vmatprep.subr.bf16.mxu0 0
    %3548 = vmatpush1.bf16.msra.mxu0 0
    %3549 = vmatprep.subr.bf16.mxu0 0
    %3550 = vmatpush1.bf16.msra.mxu0 0
    %3551 = vmatprep.subr.bf16.mxu0 0
    %3552 = vmatpush1.bf16.msra.mxu0 0
    %3553 = vmatprep.subr.bf16.mxu0 0
    %3554 = vmatpush1.bf16.msra.mxu0 0
    %3555 = vmatprep.mubr.bf16.mxu0 0
    %3556 = vmatmul.mubr.bf16.gmra.mrb[0].mxu0 %v3330
    %v3557 = vpop.f32.mrb[0].mxu0
    %v3558 = vadd.f32 0.0, %v3557
    %v3559 = vpop.f32.mrb[0].mxu0
    %v3560 = vadd.f32 0.0, %v3559
    %v3561 = vpop.f32.mrb[0].mxu0
    %v3562 = vpop.f32.mrb[0].mxu0
    %3563 = vdwg.mxu0
    %3564 = vmatprep.subr.bf16.mxu0 %v3462
    %3565 = vmatpush1.bf16.msra.mxu0 %v3461
    %3566 = vmatprep.subr.bf16.mxu0 %v3466
    %3567 = vmatpush1.bf16.msra.mxu0 %v3465
    %3568 = vmatprep.subr.bf16.mxu0 %v3470
    %3569 = vmatpush1.bf16.msra.mxu0 %v3469
    %3570 = vmatprep.subr.bf16.mxu0 %v3474
    %3571 = vmatpush1.bf16.msra.mxu0 %v3473
    %3572 = vmatprep.subr.bf16.mxu0 %v3478
    %3573 = vmatpush1.bf16.msra.mxu0 %v3477
    %3574 = vmatprep.subr.bf16.mxu0 %v3482
    %3575 = vmatpush1.bf16.msra.mxu0 %v3481
    %3576 = vmatprep.subr.bf16.mxu0 %v3486
    %3577 = vmatpush1.bf16.msra.mxu0 %v3485
    %3578 = vmatprep.subr.bf16.mxu0 %v3490
    %3579 = vmatpush1.bf16.msra.mxu0 %v3489
    %3580 = vmatprep.subr.bf16.mxu0 0
    %3581 = vmatpush1.bf16.msra.mxu0 0
    %3582 = vmatprep.subr.bf16.mxu0 0
    %3583 = vmatpush1.bf16.msra.mxu0 0
    %3584 = vmatprep.subr.bf16.mxu0 0
    %3585 = vmatpush1.bf16.msra.mxu0 0
    %3586 = vmatprep.subr.bf16.mxu0 0
    %3587 = vmatpush1.bf16.msra.mxu0 0
    %3588 = vmatprep.subr.bf16.mxu0 0
    %3589 = vmatpush1.bf16.msra.mxu0 0
    %3590 = vmatprep.subr.bf16.mxu0 0
    %3591 = vmatpush1.bf16.msra.mxu0 0
    %3592 = vmatprep.subr.bf16.mxu0 0
    %3593 = vmatpush1.bf16.msra.mxu0 0
    %3594 = vmatprep.subr.bf16.mxu0 0
    %3595 = vmatpush1.bf16.msra.mxu0 0
    %3596 = vmatprep.mubr.bf16.mxu0 0
    %3597 = vmatmul.mubr.bf16.gmra.mrb[0].mxu0 %v3330
    %v3598 = vpop.f32.mrb[0].mxu0
    %v3599 = vadd.f32 0.0, %v3598
    %v3600 = vpop.f32.mrb[0].mxu0
    %v3601 = vadd.f32 0.0, %v3600
    %v3602 = vpop.f32.mrb[0].mxu0
    %v3603 = vpop.f32.mrb[0].mxu0
    %3604 = vdwg.mxu0
    %s3605 = scalar_lea.vmem [#allocation2], 288
    %v3606 = vld [vmem:[%s3605] sm:$0xff]
    %v3607 = vld [vmem:[%s3605 + $0x8] sm:$0xff]
    %v3608 = vld [vmem:[%s3605 + $0x10] sm:$0xff]
    %v3609 = vld [vmem:[%s3605 + $0x18] sm:$0xff]
    %v3610 = vadd.f32 %v3606, %v3558
    %v3611 = vadd.f32 %v3607, %v3560
    %v3612 = vadd.f32 %v3608, %v3599
    %v3613 = vadd.f32 %v3609, %v3601
    %v3614 = vxor.u32 %v3610, 2147483648
    %v3615 = vmul.f32 %v3614, 1.442695
    %v3616 = vpow.pop %v3615
    %v3617 = vadd.f32 %v3616, 1.0
    %v3618 = vrcp.pop %v3617
    %v3619 = vmul.f32 1.0, %v3618
    %v3620 = vxor.u32 %v3611, 2147483648
    %v3621 = vmul.f32 %v3620, 1.442695
    %v3622 = vpow.pop %v3621
    %v3623 = vadd.f32 %v3622, 1.0
    %v3624 = vrcp.pop %v3623
    %v3625 = vmul.f32 1.0, %v3624
    %v3626 = vtanh.pop %v3612
    %v3627 = vxor.u32 %v3613, 2147483648
    %v3628 = vmul.f32 %v3627, 1.442695
    %v3629 = vpow.pop %v3628
    %v3630 = vadd.f32 %v3629, 1.0
    %v3631 = vrcp.pop %v3630
    %v3632 = vmul.f32 1.0, %v3631
    %v3633 = vmul.f32 %v3625, %v3325
    %v3634 = vmul.f32 %v3619, %v3626
    %v3635 = vadd.f32 %v3633, %v3634
    %v3636 = vtanh.pop %v3635
    %v3637 = vmul.f32 %v3632, %v3636
    %3638 = vst [vmem:[%s1462] sm:$0xff] %v3637
    %3639 = vst [vmem:[%s1460 + $0x8] sm:$0xff] %v3637
    %v3640 = vpack.c.bf16 %v3637, %v3637
    %v3641 = vld [vmem:[#allocation4] sm:$0xff]
    %v3642 = vld [vmem:[#allocation4 + $0x8] sm:$0xff]
    %v3643 = vld [vmem:[#allocation4 + $0x10] sm:$0xff]
    %v3644 = vld [vmem:[#allocation4 + $0x18] sm:$0xff]
    %v3645 = vld [vmem:[#allocation4 + $0x20] sm:$0xff]
    %v3646 = vld [vmem:[#allocation4 + $0x28] sm:$0xff]
    %v3647 = vld [vmem:[#allocation4 + $0x30] sm:$0xff]
    %v3648 = vld [vmem:[#allocation4 + $0x38] sm:$0xff]
    %v3649 = vld [vmem:[#allocation4 + $0x40] sm:$0xff]
    %v3650 = vld [vmem:[#allocation4 + $0x48] sm:$0xff]
    %v3651 = vld [vmem:[#allocation4 + $0x50] sm:$0xff]
    %v3652 = vld [vmem:[#allocation4 + $0x58] sm:$0xff]
    %v3653 = vld [vmem:[#allocation4 + $0x60] sm:$0xff]
    %v3654 = vld [vmem:[#allocation4 + $0x68] sm:$0xff]
    %v3655 = vld [vmem:[#allocation4 + $0x70] sm:$0xff]
    %v3656 = vld [vmem:[#allocation4 + $0x78] sm:$0xff]
    %v3657 = vld [vmem:[#allocation4 + $0x80] sm:$0xff]
    %v3658 = vld [vmem:[#allocation4 + $0x88] sm:$0xff]
    %v3659 = vld [vmem:[#allocation4 + $0x90] sm:$0xff]
    %v3660 = vld [vmem:[#allocation4 + $0x98] sm:$0xff]
    %v3661 = vld [vmem:[#allocation4 + $0xa0] sm:$0xff]
    %v3662 = vld [vmem:[#allocation4 + $0xa8] sm:$0xff]
    %v3663 = vld [vmem:[#allocation4 + $0xb0] sm:$0xff]
    %v3664 = vld [vmem:[#allocation4 + $0xb8] sm:$0xff]
    %v3665 = vld [vmem:[#allocation4 + $0xc0] sm:$0xff]
    %v3666 = vld [vmem:[#allocation4 + $0xc8] sm:$0xff]
    %v3667 = vld [vmem:[#allocation4 + $0xd0] sm:$0xff]
    %v3668 = vld [vmem:[#allocation4 + $0xd8] sm:$0xff]
    %v3669 = vld [vmem:[#allocation4 + $0xe0] sm:$0xff]
    %v3670 = vld [vmem:[#allocation4 + $0xe8] sm:$0xff]
    %v3671 = vld [vmem:[#allocation4 + $0xf0] sm:$0xff]
    %v3672 = vld [vmem:[#allocation4 + $0xf8] sm:$0xff]
    %v3705 = vunpack.c.l.b16 %v3641
    %v3706 = vunpack.c.h.b16 %v3641
    %v3707 = vunpack.c.l.b16 %v3642
    %v3708 = vunpack.c.h.b16 %v3642
    %v3709 = vunpack.c.l.b16 %v3643
    %v3710 = vunpack.c.h.b16 %v3643
    %v3711 = vunpack.c.l.b16 %v3644
    %v3712 = vunpack.c.h.b16 %v3644
    %v3713 = vunpack.c.l.b16 %v3645
    %v3714 = vunpack.c.h.b16 %v3645
    %v3715 = vunpack.c.l.b16 %v3646
    %v3716 = vunpack.c.h.b16 %v3646
    %v3717 = vunpack.c.l.b16 %v3647
    %v3718 = vunpack.c.h.b16 %v3647
    %v3719 = vunpack.c.l.b16 %v3648
    %v3720 = vunpack.c.h.b16 %v3648
    %v3721 = vunpack.c.l.b16 %v3649
    %v3722 = vunpack.c.h.b16 %v3649
    %v3723 = vunpack.c.l.b16 %v3650
    %v3724 = vunpack.c.h.b16 %v3650
    %v3725 = vunpack.c.l.b16 %v3651
    %v3726 = vunpack.c.h.b16 %v3651
    %v3727 = vunpack.c.l.b16 %v3652
    %v3728 = vunpack.c.h.b16 %v3652
    %v3729 = vunpack.c.l.b16 %v3653
    %v3730 = vunpack.c.h.b16 %v3653
    %v3731 = vunpack.c.l.b16 %v3654
    %v3732 = vunpack.c.h.b16 %v3654
    %v3733 = vunpack.c.l.b16 %v3655
    %v3734 = vunpack.c.h.b16 %v3655
    %v3735 = vunpack.c.l.b16 %v3656
    %v3736 = vunpack.c.h.b16 %v3656
    %v3737 = vunpack.c.l.b16 %v3657
    %v3738 = vunpack.c.h.b16 %v3657
    %v3739 = vunpack.c.l.b16 %v3658
    %v3740 = vunpack.c.h.b16 %v3658
    %v3741 = vunpack.c.l.b16 %v3659
    %v3742 = vunpack.c.h.b16 %v3659
    %v3743 = vunpack.c.l.b16 %v3660
    %v3744 = vunpack.c.h.b16 %v3660
    %v3745 = vunpack.c.l.b16 %v3661
    %v3746 = vunpack.c.h.b16 %v3661
    %v3747 = vunpack.c.l.b16 %v3662
    %v3748 = vunpack.c.h.b16 %v3662
    %v3749 = vunpack.c.l.b16 %v3663
    %v3750 = vunpack.c.h.b16 %v3663
    %v3751 = vunpack.c.l.b16 %v3664
    %v3752 = vunpack.c.h.b16 %v3664
    %v3753 = vunpack.c.l.b16 %v3665
    %v3754 = vunpack.c.h.b16 %v3665
    %v3755 = vunpack.c.l.b16 %v3666
    %v3756 = vunpack.c.h.b16 %v3666
    %v3757 = vunpack.c.l.b16 %v3667
    %v3758 = vunpack.c.h.b16 %v3667
    %v3759 = vunpack.c.l.b16 %v3668
    %v3760 = vunpack.c.h.b16 %v3668
    %v3761 = vunpack.c.l.b16 %v3669
    %v3762 = vunpack.c.h.b16 %v3669
    %v3763 = vunpack.c.l.b16 %v3670
    %v3764 = vunpack.c.h.b16 %v3670
    %v3765 = vunpack.c.l.b16 %v3671
    %v3766 = vunpack.c.h.b16 %v3671
    %v3767 = vunpack.c.l.b16 %v3672
    %v3768 = vunpack.c.h.b16 %v3672
    %v3769 = vpack.c.b16 %v3709, %v3705
    %v3770 = vpack.c.b16 %v3710, %v3706
    %v3771 = vpack.c.b16 %v3711, %v3707
    %v3772 = vpack.c.b16 %v3712, %v3708
    %v3773 = vpack.c.b16 %v3717, %v3713
    %v3774 = vpack.c.b16 %v3718, %v3714
    %v3775 = vpack.c.b16 %v3719, %v3715
    %v3776 = vpack.c.b16 %v3720, %v3716
    %v3777 = vpack.c.b16 %v3725, %v3721
    %v3778 = vpack.c.b16 %v3726, %v3722
    %v3779 = vpack.c.b16 %v3727, %v3723
    %v3780 = vpack.c.b16 %v3728, %v3724
    %v3781 = vpack.c.b16 %v3733, %v3729
    %v3782 = vpack.c.b16 %v3734, %v3730
    %v3783 = vpack.c.b16 %v3735, %v3731
    %v3784 = vpack.c.b16 %v3736, %v3732
    %v3785 = vpack.c.b16 %v3741, %v3737
    %v3786 = vpack.c.b16 %v3742, %v3738
    %v3787 = vpack.c.b16 %v3743, %v3739
    %v3788 = vpack.c.b16 %v3744, %v3740
    %v3789 = vpack.c.b16 %v3749, %v3745
    %v3790 = vpack.c.b16 %v3750, %v3746
    %v3791 = vpack.c.b16 %v3751, %v3747
    %v3792 = vpack.c.b16 %v3752, %v3748
    %v3793 = vpack.c.b16 %v3757, %v3753
    %v3794 = vpack.c.b16 %v3758, %v3754
    %v3795 = vpack.c.b16 %v3759, %v3755
    %v3796 = vpack.c.b16 %v3760, %v3756
    %v3797 = vpack.c.b16 %v3765, %v3761
    %v3798 = vpack.c.b16 %v3766, %v3762
    %v3799 = vpack.c.b16 %v3767, %v3763
    %v3800 = vpack.c.b16 %v3768, %v3764
    %3833 = vmatprep.subr.bf16.mxu0 %v3770
    %3834 = vmatpush1.bf16.msra.mxu0 %v3769
    %3835 = vmatprep.subr.bf16.mxu0 %v3774
    %3836 = vmatpush1.bf16.msra.mxu0 %v3773
    %3837 = vmatprep.subr.bf16.mxu0 %v3778
    %3838 = vmatpush1.bf16.msra.mxu0 %v3777
    %3839 = vmatprep.subr.bf16.mxu0 %v3782
    %3840 = vmatpush1.bf16.msra.mxu0 %v3781
    %3841 = vmatprep.subr.bf16.mxu0 %v3786
    %3842 = vmatpush1.bf16.msra.mxu0 %v3785
    %3843 = vmatprep.subr.bf16.mxu0 %v3790
    %3844 = vmatpush1.bf16.msra.mxu0 %v3789
    %3845 = vmatprep.subr.bf16.mxu0 %v3794
    %3846 = vmatpush1.bf16.msra.mxu0 %v3793
    %3847 = vmatprep.subr.bf16.mxu0 %v3798
    %3848 = vmatpush1.bf16.msra.mxu0 %v3797
    %3849 = vmatprep.subr.bf16.mxu0 0
    %3850 = vmatpush1.bf16.msra.mxu0 0
    %3851 = vmatprep.subr.bf16.mxu0 0
    %3852 = vmatpush1.bf16.msra.mxu0 0
    %3853 = vmatprep.subr.bf16.mxu0 0
    %3854 = vmatpush1.bf16.msra.mxu0 0
    %3855 = vmatprep.subr.bf16.mxu0 0
    %3856 = vmatpush1.bf16.msra.mxu0 0
    %3857 = vmatprep.subr.bf16.mxu0 0
    %3858 = vmatpush1.bf16.msra.mxu0 0
    %3859 = vmatprep.subr.bf16.mxu0 0
    %3860 = vmatpush1.bf16.msra.mxu0 0
    %3861 = vmatprep.subr.bf16.mxu0 0
    %3862 = vmatpush1.bf16.msra.mxu0 0
    %3863 = vmatprep.subr.bf16.mxu0 0
    %3864 = vmatpush1.bf16.msra.mxu0 0
    %3865 = vmatprep.mubr.bf16.mxu0 0
    %3866 = vmatmul.mubr.bf16.gmra.mrb[0].mxu0 %v3640
    %v3867 = vpop.f32.mrb[0].mxu0
    %v3868 = vadd.f32 0.0, %v3867
    %v3869 = vpop.f32.mrb[0].mxu0
    %v3870 = vadd.f32 0.0, %v3869
    %v3871 = vpop.f32.mrb[0].mxu0
    %v3872 = vpop.f32.mrb[0].mxu0
    %3873 = vdwg.mxu0
    %3874 = vmatprep.subr.bf16.mxu0 %v3772
    %3875 = vmatpush1.bf16.msra.mxu0 %v3771
    %3876 = vmatprep.subr.bf16.mxu0 %v3776
    %3877 = vmatpush1.bf16.msra.mxu0 %v3775
    %3878 = vmatprep.subr.bf16.mxu0 %v3780
    %3879 = vmatpush1.bf16.msra.mxu0 %v3779
    %3880 = vmatprep.subr.bf16.mxu0 %v3784
    %3881 = vmatpush1.bf16.msra.mxu0 %v3783
    %3882 = vmatprep.subr.bf16.mxu0 %v3788
    %3883 = vmatpush1.bf16.msra.mxu0 %v3787
    %3884 = vmatprep.subr.bf16.mxu0 %v3792
    %3885 = vmatpush1.bf16.msra.mxu0 %v3791
    %3886 = vmatprep.subr.bf16.mxu0 %v3796
    %3887 = vmatpush1.bf16.msra.mxu0 %v3795
    %3888 = vmatprep.subr.bf16.mxu0 %v3800
    %3889 = vmatpush1.bf16.msra.mxu0 %v3799
    %3890 = vmatprep.subr.bf16.mxu0 0
    %3891 = vmatpush1.bf16.msra.mxu0 0
    %3892 = vmatprep.subr.bf16.mxu0 0
    %3893 = vmatpush1.bf16.msra.mxu0 0
    %3894 = vmatprep.subr.bf16.mxu0 0
    %3895 = vmatpush1.bf16.msra.mxu0 0
    %3896 = vmatprep.subr.bf16.mxu0 0
    %3897 = vmatpush1.bf16.msra.mxu0 0
    %3898 = vmatprep.subr.bf16.mxu0 0
    %3899 = vmatpush1.bf16.msra.mxu0 0
    %3900 = vmatprep.subr.bf16.mxu0 0
    %3901 = vmatpush1.bf16.msra.mxu0 0
    %3902 = vmatprep.subr.bf16.mxu0 0
    %3903 = vmatpush1.bf16.msra.mxu0 0
    %3904 = vmatprep.subr.bf16.mxu0 0
    %3905 = vmatpush1.bf16.msra.mxu0 0
    %3906 = vmatprep.mubr.bf16.mxu0 0
    %3907 = vmatmul.mubr.bf16.gmra.mrb[0].mxu0 %v3640
    %v3908 = vpop.f32.mrb[0].mxu0
    %v3909 = vadd.f32 0.0, %v3908
    %v3910 = vpop.f32.mrb[0].mxu0
    %v3911 = vadd.f32 0.0, %v3910
    %v3912 = vpop.f32.mrb[0].mxu0
    %v3913 = vpop.f32.mrb[0].mxu0
    %3914 = vdwg.mxu0
    %s3915 = scalar_lea.vmem [#allocation2], 320
    %v3916 = vld [vmem:[%s3915] sm:$0xff]
    %v3917 = vld [vmem:[%s3915 + $0x8] sm:$0xff]
    %v3918 = vld [vmem:[%s3915 + $0x10] sm:$0xff]
    %v3919 = vld [vmem:[%s3915 + $0x18] sm:$0xff]
    %v3920 = vadd.f32 %v3916, %v3868
    %v3921 = vadd.f32 %v3917, %v3870
    %v3922 = vadd.f32 %v3918, %v3909
    %v3923 = vadd.f32 %v3919, %v3911
    %v3924 = vxor.u32 %v3920, 2147483648
    %v3925 = vmul.f32 %v3924, 1.442695
    %v3926 = vpow.pop %v3925
    %v3927 = vadd.f32 %v3926, 1.0
    %v3928 = vrcp.pop %v3927
    %v3929 = vmul.f32 1.0, %v3928
    %v3930 = vxor.u32 %v3921, 2147483648
    %v3931 = vmul.f32 %v3930, 1.442695
    %v3932 = vpow.pop %v3931
    %v3933 = vadd.f32 %v3932, 1.0
    %v3934 = vrcp.pop %v3933
    %v3935 = vmul.f32 1.0, %v3934
    %v3936 = vtanh.pop %v3922
    %v3937 = vxor.u32 %v3923, 2147483648
    %v3938 = vmul.f32 %v3937, 1.442695
    %v3939 = vpow.pop %v3938
    %v3940 = vadd.f32 %v3939, 1.0
    %v3941 = vrcp.pop %v3940
    %v3942 = vmul.f32 1.0, %v3941
    %v3943 = vmul.f32 %v3935, %v3635
    %v3944 = vmul.f32 %v3929, %v3936
    %v3945 = vadd.f32 %v3943, %v3944
    %v3946 = vtanh.pop %v3945
    %v3947 = vmul.f32 %v3942, %v3946
    %3948 = vst [vmem:[%s1150] sm:$0xff] %v3947
    %3949 = vst [vmem:[%s1148 + $0x8] sm:$0xff] %v3947
    %v3950 = vpack.c.bf16 %v3947, %v3947
    %v3951 = vld [vmem:[#allocation4] sm:$0xff]
    %v3952 = vld [vmem:[#allocation4 + $0x8] sm:$0xff]
    %v3953 = vld [vmem:[#allocation4 + $0x10] sm:$0xff]
    %v3954 = vld [vmem:[#allocation4 + $0x18] sm:$0xff]
    %v3955 = vld [vmem:[#allocation4 + $0x20] sm:$0xff]
    %v3956 = vld [vmem:[#allocation4 + $0x28] sm:$0xff]
    %v3957 = vld [vmem:[#allocation4 + $0x30] sm:$0xff]
    %v3958 = vld [vmem:[#allocation4 + $0x38] sm:$0xff]
    %v3959 = vld [vmem:[#allocation4 + $0x40] sm:$0xff]
    %v3960 = vld [vmem:[#allocation4 + $0x48] sm:$0xff]
    %v3961 = vld [vmem:[#allocation4 + $0x50] sm:$0xff]
    %v3962 = vld [vmem:[#allocation4 + $0x58] sm:$0xff]
    %v3963 = vld [vmem:[#allocation4 + $0x60] sm:$0xff]
    %v3964 = vld [vmem:[#allocation4 + $0x68] sm:$0xff]
    %v3965 = vld [vmem:[#allocation4 + $0x70] sm:$0xff]
    %v3966 = vld [vmem:[#allocation4 + $0x78] sm:$0xff]
    %v3967 = vld [vmem:[#allocation4 + $0x80] sm:$0xff]
    %v3968 = vld [vmem:[#allocation4 + $0x88] sm:$0xff]
    %v3969 = vld [vmem:[#allocation4 + $0x90] sm:$0xff]
    %v3970 = vld [vmem:[#allocation4 + $0x98] sm:$0xff]
    %v3971 = vld [vmem:[#allocation4 + $0xa0] sm:$0xff]
    %v3972 = vld [vmem:[#allocation4 + $0xa8] sm:$0xff]
    %v3973 = vld [vmem:[#allocation4 + $0xb0] sm:$0xff]
    %v3974 = vld [vmem:[#allocation4 + $0xb8] sm:$0xff]
    %v3975 = vld [vmem:[#allocation4 + $0xc0] sm:$0xff]
    %v3976 = vld [vmem:[#allocation4 + $0xc8] sm:$0xff]
    %v3977 = vld [vmem:[#allocation4 + $0xd0] sm:$0xff]
    %v3978 = vld [vmem:[#allocation4 + $0xd8] sm:$0xff]
    %v3979 = vld [vmem:[#allocation4 + $0xe0] sm:$0xff]
    %v3980 = vld [vmem:[#allocation4 + $0xe8] sm:$0xff]
    %v3981 = vld [vmem:[#allocation4 + $0xf0] sm:$0xff]
    %v3982 = vld [vmem:[#allocation4 + $0xf8] sm:$0xff]
    %v4015 = vunpack.c.l.b16 %v3951
    %v4016 = vunpack.c.h.b16 %v3951
    %v4017 = vunpack.c.l.b16 %v3952
    %v4018 = vunpack.c.h.b16 %v3952
    %v4019 = vunpack.c.l.b16 %v3953
    %v4020 = vunpack.c.h.b16 %v3953
    %v4021 = vunpack.c.l.b16 %v3954
    %v4022 = vunpack.c.h.b16 %v3954
    %v4023 = vunpack.c.l.b16 %v3955
    %v4024 = vunpack.c.h.b16 %v3955
    %v4025 = vunpack.c.l.b16 %v3956
    %v4026 = vunpack.c.h.b16 %v3956
    %v4027 = vunpack.c.l.b16 %v3957
    %v4028 = vunpack.c.h.b16 %v3957
    %v4029 = vunpack.c.l.b16 %v3958
    %v4030 = vunpack.c.h.b16 %v3958
    %v4031 = vunpack.c.l.b16 %v3959
    %v4032 = vunpack.c.h.b16 %v3959
    %v4033 = vunpack.c.l.b16 %v3960
    %v4034 = vunpack.c.h.b16 %v3960
    %v4035 = vunpack.c.l.b16 %v3961
    %v4036 = vunpack.c.h.b16 %v3961
    %v4037 = vunpack.c.l.b16 %v3962
    %v4038 = vunpack.c.h.b16 %v3962
    %v4039 = vunpack.c.l.b16 %v3963
    %v4040 = vunpack.c.h.b16 %v3963
    %v4041 = vunpack.c.l.b16 %v3964
    %v4042 = vunpack.c.h.b16 %v3964
    %v4043 = vunpack.c.l.b16 %v3965
    %v4044 = vunpack.c.h.b16 %v3965
    %v4045 = vunpack.c.l.b16 %v3966
    %v4046 = vunpack.c.h.b16 %v3966
    %v4047 = vunpack.c.l.b16 %v3967
    %v4048 = vunpack.c.h.b16 %v3967
    %v4049 = vunpack.c.l.b16 %v3968
    %v4050 = vunpack.c.h.b16 %v3968
    %v4051 = vunpack.c.l.b16 %v3969
    %v4052 = vunpack.c.h.b16 %v3969
    %v4053 = vunpack.c.l.b16 %v3970
    %v4054 = vunpack.c.h.b16 %v3970
    %v4055 = vunpack.c.l.b16 %v3971
    %v4056 = vunpack.c.h.b16 %v3971
    %v4057 = vunpack.c.l.b16 %v3972
    %v4058 = vunpack.c.h.b16 %v3972
    %v4059 = vunpack.c.l.b16 %v3973
    %v4060 = vunpack.c.h.b16 %v3973
    %v4061 = vunpack.c.l.b16 %v3974
    %v4062 = vunpack.c.h.b16 %v3974
    %v4063 = vunpack.c.l.b16 %v3975
    %v4064 = vunpack.c.h.b16 %v3975
    %v4065 = vunpack.c.l.b16 %v3976
    %v4066 = vunpack.c.h.b16 %v3976
    %v4067 = vunpack.c.l.b16 %v3977
    %v4068 = vunpack.c.h.b16 %v3977
    %v4069 = vunpack.c.l.b16 %v3978
    %v4070 = vunpack.c.h.b16 %v3978
    %v4071 = vunpack.c.l.b16 %v3979
    %v4072 = vunpack.c.h.b16 %v3979
    %v4073 = vunpack.c.l.b16 %v3980
    %v4074 = vunpack.c.h.b16 %v3980
    %v4075 = vunpack.c.l.b16 %v3981
    %v4076 = vunpack.c.h.b16 %v3981
    %v4077 = vunpack.c.l.b16 %v3982
    %v4078 = vunpack.c.h.b16 %v3982
    %v4079 = vpack.c.b16 %v4019, %v4015
    %v4080 = vpack.c.b16 %v4020, %v4016
    %v4081 = vpack.c.b16 %v4021, %v4017
    %v4082 = vpack.c.b16 %v4022, %v4018
    %v4083 = vpack.c.b16 %v4027, %v4023
    %v4084 = vpack.c.b16 %v4028, %v4024
    %v4085 = vpack.c.b16 %v4029, %v4025
    %v4086 = vpack.c.b16 %v4030, %v4026
    %v4087 = vpack.c.b16 %v4035, %v4031
    %v4088 = vpack.c.b16 %v4036, %v4032
    %v4089 = vpack.c.b16 %v4037, %v4033
    %v4090 = vpack.c.b16 %v4038, %v4034
    %v4091 = vpack.c.b16 %v4043, %v4039
    %v4092 = vpack.c.b16 %v4044, %v4040
    %v4093 = vpack.c.b16 %v4045, %v4041
    %v4094 = vpack.c.b16 %v4046, %v4042
    %v4095 = vpack.c.b16 %v4051, %v4047
    %v4096 = vpack.c.b16 %v4052, %v4048
    %v4097 = vpack.c.b16 %v4053, %v4049
    %v4098 = vpack.c.b16 %v4054, %v4050
    %v4099 = vpack.c.b16 %v4059, %v4055
    %v4100 = vpack.c.b16 %v4060, %v4056
    %v4101 = vpack.c.b16 %v4061, %v4057
    %v4102 = vpack.c.b16 %v4062, %v4058
    %v4103 = vpack.c.b16 %v4067, %v4063
    %v4104 = vpack.c.b16 %v4068, %v4064
    %v4105 = vpack.c.b16 %v4069, %v4065
    %v4106 = vpack.c.b16 %v4070, %v4066
    %v4107 = vpack.c.b16 %v4075, %v4071
    %v4108 = vpack.c.b16 %v4076, %v4072
    %v4109 = vpack.c.b16 %v4077, %v4073
    %v4110 = vpack.c.b16 %v4078, %v4074
    %4143 = vmatprep.subr.bf16.mxu0 %v4080
    %4144 = vmatpush1.bf16.msra.mxu0 %v4079
    %4145 = vmatprep.subr.bf16.mxu0 %v4084
    %4146 = vmatpush1.bf16.msra.mxu0 %v4083
    %4147 = vmatprep.subr.bf16.mxu0 %v4088
    %4148 = vmatpush1.bf16.msra.mxu0 %v4087
    %4149 = vmatprep.subr.bf16.mxu0 %v4092
    %4150 = vmatpush1.bf16.msra.mxu0 %v4091
    %4151 = vmatprep.subr.bf16.mxu0 %v4096
    %4152 = vmatpush1.bf16.msra.mxu0 %v4095
    %4153 = vmatprep.subr.bf16.mxu0 %v4100
    %4154 = vmatpush1.bf16.msra.mxu0 %v4099
    %4155 = vmatprep.subr.bf16.mxu0 %v4104
    %4156 = vmatpush1.bf16.msra.mxu0 %v4103
    %4157 = vmatprep.subr.bf16.mxu0 %v4108
    %4158 = vmatpush1.bf16.msra.mxu0 %v4107
    %4159 = vmatprep.subr.bf16.mxu0 0
    %4160 = vmatpush1.bf16.msra.mxu0 0
    %4161 = vmatprep.subr.bf16.mxu0 0
    %4162 = vmatpush1.bf16.msra.mxu0 0
    %4163 = vmatprep.subr.bf16.mxu0 0
    %4164 = vmatpush1.bf16.msra.mxu0 0
    %4165 = vmatprep.subr.bf16.mxu0 0
    %4166 = vmatpush1.bf16.msra.mxu0 0
    %4167 = vmatprep.subr.bf16.mxu0 0
    %4168 = vmatpush1.bf16.msra.mxu0 0
    %4169 = vmatprep.subr.bf16.mxu0 0
    %4170 = vmatpush1.bf16.msra.mxu0 0
    %4171 = vmatprep.subr.bf16.mxu0 0
    %4172 = vmatpush1.bf16.msra.mxu0 0
    %4173 = vmatprep.subr.bf16.mxu0 0
    %4174 = vmatpush1.bf16.msra.mxu0 0
    %4175 = vmatprep.mubr.bf16.mxu0 0
    %4176 = vmatmul.mubr.bf16.gmra.mrb[0].mxu0 %v3950
    %v4177 = vpop.f32.mrb[0].mxu0
    %v4178 = vadd.f32 0.0, %v4177
    %v4179 = vpop.f32.mrb[0].mxu0
    %v4180 = vadd.f32 0.0, %v4179
    %v4181 = vpop.f32.mrb[0].mxu0
    %v4182 = vpop.f32.mrb[0].mxu0
    %4183 = vdwg.mxu0
    %4184 = vmatprep.subr.bf16.mxu0 %v4082
    %4185 = vmatpush1.bf16.msra.mxu0 %v4081
    %4186 = vmatprep.subr.bf16.mxu0 %v4086
    %4187 = vmatpush1.bf16.msra.mxu0 %v4085
    %4188 = vmatprep.subr.bf16.mxu0 %v4090
    %4189 = vmatpush1.bf16.msra.mxu0 %v4089
    %4190 = vmatprep.subr.bf16.mxu0 %v4094
    %4191 = vmatpush1.bf16.msra.mxu0 %v4093
    %4192 = vmatprep.subr.bf16.mxu0 %v4098
    %4193 = vmatpush1.bf16.msra.mxu0 %v4097
    %4194 = vmatprep.subr.bf16.mxu0 %v4102
    %4195 = vmatpush1.bf16.msra.mxu0 %v4101
    %4196 = vmatprep.subr.bf16.mxu0 %v4106
    %4197 = vmatpush1.bf16.msra.mxu0 %v4105
    %4198 = vmatprep.subr.bf16.mxu0 %v4110
    %4199 = vmatpush1.bf16.msra.mxu0 %v4109
    %4200 = vmatprep.subr.bf16.mxu0 0
    %4201 = vmatpush1.bf16.msra.mxu0 0
    %4202 = vmatprep.subr.bf16.mxu0 0
    %4203 = vmatpush1.bf16.msra.mxu0 0
    %4204 = vmatprep.subr.bf16.mxu0 0
    %4205 = vmatpush1.bf16.msra.mxu0 0
    %4206 = vmatprep.subr.bf16.mxu0 0
    %4207 = vmatpush1.bf16.msra.mxu0 0
    %4208 = vmatprep.subr.bf16.mxu0 0
    %4209 = vmatpush1.bf16.msra.mxu0 0
    %4210 = vmatprep.subr.bf16.mxu0 0
    %4211 = vmatpush1.bf16.msra.mxu0 0
    %4212 = vmatprep.subr.bf16.mxu0 0
    %4213 = vmatpush1.bf16.msra.mxu0 0
    %4214 = vmatprep.subr.bf16.mxu0 0
    %4215 = vmatpush1.bf16.msra.mxu0 0
    %4216 = vmatprep.mubr.bf16.mxu0 0
    %4217 = vmatmul.mubr.bf16.gmra.mrb[0].mxu0 %v3950
    %v4218 = vpop.f32.mrb[0].mxu0
    %v4219 = vadd.f32 0.0, %v4218
    %v4220 = vpop.f32.mrb[0].mxu0
    %v4221 = vadd.f32 0.0, %v4220
    %v4222 = vpop.f32.mrb[0].mxu0
    %v4223 = vpop.f32.mrb[0].mxu0
    %4224 = vdwg.mxu0
    %s4225 = scalar_lea.vmem [#allocation2], 352
    %v4226 = vld [vmem:[%s4225] sm:$0xff]
    %v4227 = vld [vmem:[%s4225 + $0x8] sm:$0xff]
    %v4228 = vld [vmem:[%s4225 + $0x10] sm:$0xff]
    %v4229 = vld [vmem:[%s4225 + $0x18] sm:$0xff]
    %v4230 = vadd.f32 %v4226, %v4178
    %v4231 = vadd.f32 %v4227, %v4180
    %v4232 = vadd.f32 %v4228, %v4219
    %v4233 = vadd.f32 %v4229, %v4221
    %v4234 = vxor.u32 %v4230, 2147483648
    %v4235 = vmul.f32 %v4234, 1.442695
    %v4236 = vpow.pop %v4235
    %v4237 = vadd.f32 %v4236, 1.0
    %v4238 = vrcp.pop %v4237
    %v4239 = vmul.f32 1.0, %v4238
    %v4240 = vxor.u32 %v4231, 2147483648
    %v4241 = vmul.f32 %v4240, 1.442695
    %v4242 = vpow.pop %v4241
    %v4243 = vadd.f32 %v4242, 1.0
    %v4244 = vrcp.pop %v4243
    %v4245 = vmul.f32 1.0, %v4244
    %v4246 = vtanh.pop %v4232
    %v4247 = vxor.u32 %v4233, 2147483648
    %v4248 = vmul.f32 %v4247, 1.442695
    %v4249 = vpow.pop %v4248
    %v4250 = vadd.f32 %v4249, 1.0
    %v4251 = vrcp.pop %v4250
    %v4252 = vmul.f32 1.0, %v4251
    %v4253 = vmul.f32 %v4245, %v3945
    %v4254 = vmul.f32 %v4239, %v4246
    %v4255 = vadd.f32 %v4253, %v4254
    %v4256 = vtanh.pop %v4255
    %v4257 = vmul.f32 %v4252, %v4256
    %4258 = vst [vmem:[%s838] sm:$0xff] %v4257
    %4259 = vst [vmem:[#allocation3 + $0x8] sm:$0xff] %v4257
    %v4260 = vld [vmem:[#allocation3] sm:$0xff]
    %v4261 = vld [vmem:[#allocation3 + $0x8] sm:$0xff]
    %v4262 = vld [vmem:[#allocation3 + $0x10] sm:$0xff]
    %v4263 = vld [vmem:[#allocation3 + $0x18] sm:$0xff]
    %v4264 = vld [vmem:[#allocation3 + $0x20] sm:$0xff]
    %v4265 = vld [vmem:[#allocation3 + $0x28] sm:$0xff]
    %v4266 = vld [vmem:[#allocation3 + $0x30] sm:$0xff]
    %v4267 = vld [vmem:[#allocation3 + $0x38] sm:$0xff]
    %v4268 = vld [vmem:[#allocation3 + $0x40] sm:$0xff]
    %v4269 = vld [vmem:[#allocation3 + $0x48] sm:$0xff]
    %v4270 = vld [vmem:[#allocation3 + $0x50] sm:$0xff]
    %v4271 = vld [vmem:[#allocation3 + $0x58] sm:$0xff]
    %v4272 = vld [vmem:[#allocation3 + $0x60] sm:$0xff]
    %v4273 = vld [vmem:[#allocation3 + $0x68] sm:$0xff]
    %v4274 = vld [vmem:[#allocation3 + $0x70] sm:$0xff]
    %v4275 = vld [vmem:[#allocation3 + $0x78] sm:$0xff]
    %v4276 = vld [vmem:[#allocation3 + $0x80] sm:$0xff]
    %v4277 = vld [vmem:[#allocation3 + $0x88] sm:$0xff]
    %v4278 = vld [vmem:[#allocation3 + $0x90] sm:$0xff]
    %v4279 = vld [vmem:[#allocation3 + $0x98] sm:$0xff]
    %v4280 = vld [vmem:[#allocation3 + $0xa0] sm:$0xff]
    %v4281 = vld [vmem:[#allocation3 + $0xa8] sm:$0xff]
    %v4282 = vld [vmem:[#allocation3 + $0xb0] sm:$0xff]
    %v4283 = vld [vmem:[#allocation3 + $0xb8] sm:$0xff]
    %v4284 = vpack.c.bf16 %v4262, %v4260
    %v4285 = vpack.c.bf16 %v4263, %v4261
    %v4286 = vpack.c.bf16 %v4266, %v4264
    %v4287 = vpack.c.bf16 %v4267, %v4265
    %v4288 = vpack.c.bf16 %v4270, %v4268
    %v4289 = vpack.c.bf16 %v4271, %v4269
    %v4290 = vpack.c.bf16 %v4274, %v4272
    %v4291 = vpack.c.bf16 %v4275, %v4273
    %v4292 = vpack.c.bf16 %v4278, %v4276
    %v4293 = vpack.c.bf16 %v4279, %v4277
    %v4294 = vpack.c.bf16 %v4282, %v4280
    %v4295 = vpack.c.bf16 %v4283, %v4281
    %v4296 = vld [vmem:[#allocation7] sm:$0xff]
    %v4297 = vld [vmem:[#allocation7 + $0x8] sm:$0xff]
    %v4298 = vld [vmem:[#allocation7 + $0x10] sm:$0xff]
    %v4299 = vld [vmem:[#allocation7 + $0x18] sm:$0xff]
    %v4300 = vld [vmem:[#allocation7 + $0x20] sm:$0xff]
    %v4301 = vld [vmem:[#allocation7 + $0x28] sm:$0xff]
    %v4302 = vld [vmem:[#allocation7 + $0x30] sm:$0xff]
    %v4303 = vld [vmem:[#allocation7 + $0x38] sm:$0xff]
    %v4304 = vld [vmem:[#allocation7 + $0x40] sm:$0xff]
    %v4305 = vld [vmem:[#allocation7 + $0x48] sm:$0xff]
    %v4306 = vld [vmem:[#allocation7 + $0x50] sm:$0xff]
    %v4307 = vld [vmem:[#allocation7 + $0x58] sm:$0xff]
    %v4308 = vld [vmem:[#allocation7 + $0x60] sm:$0xff]
    %v4309 = vld [vmem:[#allocation7 + $0x68] sm:$0xff]
    %v4310 = vld [vmem:[#allocation7 + $0x70] sm:$0xff]
    %v4311 = vld [vmem:[#allocation7 + $0x78] sm:$0xff]
    %v4312 = vld [vmem:[#allocation7 + $0x80] sm:$0xff]
    %v4313 = vld [vmem:[#allocation7 + $0x88] sm:$0xff]
    %v4314 = vld [vmem:[#allocation7 + $0x90] sm:$0xff]
    %v4315 = vld [vmem:[#allocation7 + $0x98] sm:$0xff]
    %v4316 = vld [vmem:[#allocation7 + $0xa0] sm:$0xff]
    %v4317 = vld [vmem:[#allocation7 + $0xa8] sm:$0xff]
    %v4318 = vld [vmem:[#allocation7 + $0xb0] sm:$0xff]
    %v4319 = vld [vmem:[#allocation7 + $0xb8] sm:$0xff]
    %v4320 = vld [vmem:[#allocation7 + $0xc0] sm:$0xff]
    %v4321 = vld [vmem:[#allocation7 + $0xc8] sm:$0xff]
    %v4322 = vld [vmem:[#allocation7 + $0xd0] sm:$0xff]
    %v4323 = vld [vmem:[#allocation7 + $0xd8] sm:$0xff]
    %v4324 = vld [vmem:[#allocation7 + $0xe0] sm:$0xff]
    %v4325 = vld [vmem:[#allocation7 + $0xe8] sm:$0xff]
    %v4326 = vld [vmem:[#allocation7 + $0xf0] sm:$0xff]
    %v4327 = vld [vmem:[#allocation7 + $0xf8] sm:$0xff]
    %v4328 = vld [vmem:[#allocation7 + $0x100] sm:$0xff]
    %v4329 = vld [vmem:[#allocation7 + $0x108] sm:$0xff]
    %v4330 = vld [vmem:[#allocation7 + $0x110] sm:$0xff]
    %v4331 = vld [vmem:[#allocation7 + $0x118] sm:$0xff]
    %v4332 = vld [vmem:[#allocation7 + $0x120] sm:$0xff]
    %v4333 = vld [vmem:[#allocation7 + $0x128] sm:$0xff]
    %v4334 = vld [vmem:[#allocation7 + $0x130] sm:$0xff]
    %v4335 = vld [vmem:[#allocation7 + $0x138] sm:$0xff]
    %v4336 = vld [vmem:[#allocation7 + $0x140] sm:$0xff]
    %v4337 = vld [vmem:[#allocation7 + $0x148] sm:$0xff]
    %v4338 = vld [vmem:[#allocation7 + $0x150] sm:$0xff]
    %v4339 = vld [vmem:[#allocation7 + $0x158] sm:$0xff]
    %v4340 = vld [vmem:[#allocation7 + $0x160] sm:$0xff]
    %v4341 = vld [vmem:[#allocation7 + $0x168] sm:$0xff]
    %v4342 = vld [vmem:[#allocation7 + $0x170] sm:$0xff]
    %v4343 = vld [vmem:[#allocation7 + $0x178] sm:$0xff]
    %v4344 = vld [vmem:[#allocation7 + $0x180] sm:$0xff]
    %v4345 = vld [vmem:[#allocation7 + $0x188] sm:$0xff]
    %v4346 = vld [vmem:[#allocation7 + $0x190] sm:$0xff]
    %v4347 = vld [vmem:[#allocation7 + $0x198] sm:$0xff]
    %v4348 = vld [vmem:[#allocation7 + $0x1a0] sm:$0xff]
    %v4349 = vld [vmem:[#allocation7 + $0x1a8] sm:$0xff]
    %v4350 = vld [vmem:[#allocation7 + $0x1b0] sm:$0xff]
    %v4351 = vld [vmem:[#allocation7 + $0x1b8] sm:$0xff]
    %v4352 = vld [vmem:[#allocation7 + $0x1c0] sm:$0xff]
    %v4353 = vld [vmem:[#allocation7 + $0x1c8] sm:$0xff]
    %v4354 = vld [vmem:[#allocation7 + $0x1d0] sm:$0xff]
    %v4355 = vld [vmem:[#allocation7 + $0x1d8] sm:$0xff]
    %v4356 = vld [vmem:[#allocation7 + $0x1e0] sm:$0xff]
    %v4357 = vld [vmem:[#allocation7 + $0x1e8] sm:$0xff]
    %v4358 = vld [vmem:[#allocation7 + $0x1f0] sm:$0xff]
    %v4359 = vld [vmem:[#allocation7 + $0x1f8] sm:$0xff]
    %v4360 = vld [vmem:[%s7] sm:$0xf]
    %v4362 = vlaneseq
    %v4363 = vshrl.u32 %v4362, 7
    %v4364 = vsub.s32 0, %v4363
    %v4365 = vrot.slane %v4360, %v4364
    %v4366 = vlaneseq
    %v4367 = vshrl.u32 %v4366, 7
    %v4368 = vsub.s32 1, %v4367
    %v4369 = vrot.slane %v4360, %v4368
    %v4370 = vlaneseq
    %v4371 = vshrl.u32 %v4370, 7
    %v4372 = vsub.s32 2, %v4371
    %v4373 = vrot.slane %v4360, %v4372
    %v4374 = vlaneseq
    %v4375 = vshrl.u32 %v4374, 7
    %v4376 = vsub.s32 3, %v4375
    %v4377 = vrot.slane %v4360, %v4376
    %v4446 = vunpack.c.l.b16 %v4296
    %v4447 = vunpack.c.h.b16 %v4296
    %v4448 = vunpack.c.l.b16 %v4297
    %v4449 = vunpack.c.h.b16 %v4297
    %v4450 = vunpack.c.l.b16 %v4298
    %v4451 = vunpack.c.h.b16 %v4298
    %v4452 = vunpack.c.l.b16 %v4299
    %v4453 = vunpack.c.h.b16 %v4299
    %v4454 = vunpack.c.l.b16 %v4300
    %v4455 = vunpack.c.h.b16 %v4300
    %v4456 = vunpack.c.l.b16 %v4301
    %v4457 = vunpack.c.h.b16 %v4301
    %v4458 = vunpack.c.l.b16 %v4302
    %v4459 = vunpack.c.h.b16 %v4302
    %v4460 = vunpack.c.l.b16 %v4303
    %v4461 = vunpack.c.h.b16 %v4303
    %v4462 = vunpack.c.l.b16 %v4304
    %v4463 = vunpack.c.h.b16 %v4304
    %v4464 = vunpack.c.l.b16 %v4305
    %v4465 = vunpack.c.h.b16 %v4305
    %v4466 = vunpack.c.l.b16 %v4306
    %v4467 = vunpack.c.h.b16 %v4306
    %v4468 = vunpack.c.l.b16 %v4307
    %v4469 = vunpack.c.h.b16 %v4307
    %v4470 = vunpack.c.l.b16 %v4308
    %v4471 = vunpack.c.h.b16 %v4308
    %v4472 = vunpack.c.l.b16 %v4309
    %v4473 = vunpack.c.h.b16 %v4309
    %v4474 = vunpack.c.l.b16 %v4310
    %v4475 = vunpack.c.h.b16 %v4310
    %v4476 = vunpack.c.l.b16 %v4311
    %v4477 = vunpack.c.h.b16 %v4311
    %v4478 = vunpack.c.l.b16 %v4312
    %v4479 = vunpack.c.h.b16 %v4312
    %v4480 = vunpack.c.l.b16 %v4313
    %v4481 = vunpack.c.h.b16 %v4313
    %v4482 = vunpack.c.l.b16 %v4314
    %v4483 = vunpack.c.h.b16 %v4314
    %v4484 = vunpack.c.l.b16 %v4315
    %v4485 = vunpack.c.h.b16 %v4315
    %v4486 = vunpack.c.l.b16 %v4316
    %v4487 = vunpack.c.h.b16 %v4316
    %v4488 = vunpack.c.l.b16 %v4317
    %v4489 = vunpack.c.h.b16 %v4317
    %v4490 = vunpack.c.l.b16 %v4318
    %v4491 = vunpack.c.h.b16 %v4318
    %v4492 = vunpack.c.l.b16 %v4319
    %v4493 = vunpack.c.h.b16 %v4319
    %v4494 = vunpack.c.l.b16 %v4320
    %v4495 = vunpack.c.h.b16 %v4320
    %v4496 = vunpack.c.l.b16 %v4321
    %v4497 = vunpack.c.h.b16 %v4321
    %v4498 = vunpack.c.l.b16 %v4322
    %v4499 = vunpack.c.h.b16 %v4322
    %v4500 = vunpack.c.l.b16 %v4323
    %v4501 = vunpack.c.h.b16 %v4323
    %v4502 = vunpack.c.l.b16 %v4324
    %v4503 = vunpack.c.h.b16 %v4324
    %v4504 = vunpack.c.l.b16 %v4325
    %v4505 = vunpack.c.h.b16 %v4325
    %v4506 = vunpack.c.l.b16 %v4326
    %v4507 = vunpack.c.h.b16 %v4326
    %v4508 = vunpack.c.l.b16 %v4327
    %v4509 = vunpack.c.h.b16 %v4327
    %v4510 = vunpack.c.l.b16 %v4328
    %v4511 = vunpack.c.h.b16 %v4328
    %v4512 = vunpack.c.l.b16 %v4329
    %v4513 = vunpack.c.h.b16 %v4329
    %v4514 = vunpack.c.l.b16 %v4330
    %v4515 = vunpack.c.h.b16 %v4330
    %v4516 = vunpack.c.l.b16 %v4331
    %v4517 = vunpack.c.h.b16 %v4331
    %v4518 = vunpack.c.l.b16 %v4332
    %v4519 = vunpack.c.h.b16 %v4332
    %v4520 = vunpack.c.l.b16 %v4333
    %v4521 = vunpack.c.h.b16 %v4333
    %v4522 = vunpack.c.l.b16 %v4334
    %v4523 = vunpack.c.h.b16 %v4334
    %v4524 = vunpack.c.l.b16 %v4335
    %v4525 = vunpack.c.h.b16 %v4335
    %v4526 = vunpack.c.l.b16 %v4336
    %v4527 = vunpack.c.h.b16 %v4336
    %v4528 = vunpack.c.l.b16 %v4337
    %v4529 = vunpack.c.h.b16 %v4337
    %v4530 = vunpack.c.l.b16 %v4338
    %v4531 = vunpack.c.h.b16 %v4338
    %v4532 = vunpack.c.l.b16 %v4339
    %v4533 = vunpack.c.h.b16 %v4339
    %v4534 = vunpack.c.l.b16 %v4340
    %v4535 = vunpack.c.h.b16 %v4340
    %v4536 = vunpack.c.l.b16 %v4341
    %v4537 = vunpack.c.h.b16 %v4341
    %v4538 = vunpack.c.l.b16 %v4342
    %v4539 = vunpack.c.h.b16 %v4342
    %v4540 = vunpack.c.l.b16 %v4343
    %v4541 = vunpack.c.h.b16 %v4343
    %v4542 = vunpack.c.l.b16 %v4344
    %v4543 = vunpack.c.h.b16 %v4344
    %v4544 = vunpack.c.l.b16 %v4345
    %v4545 = vunpack.c.h.b16 %v4345
    %v4546 = vunpack.c.l.b16 %v4346
    %v4547 = vunpack.c.h.b16 %v4346
    %v4548 = vunpack.c.l.b16 %v4347
    %v4549 = vunpack.c.h.b16 %v4347
    %v4550 = vunpack.c.l.b16 %v4348
    %v4551 = vunpack.c.h.b16 %v4348
    %v4552 = vunpack.c.l.b16 %v4349
    %v4553 = vunpack.c.h.b16 %v4349
    %v4554 = vunpack.c.l.b16 %v4350
    %v4555 = vunpack.c.h.b16 %v4350
    %v4556 = vunpack.c.l.b16 %v4351
    %v4557 = vunpack.c.h.b16 %v4351
    %v4558 = vunpack.c.l.b16 %v4352
    %v4559 = vunpack.c.h.b16 %v4352
    %v4560 = vunpack.c.l.b16 %v4353
    %v4561 = vunpack.c.h.b16 %v4353
    %v4562 = vunpack.c.l.b16 %v4354
    %v4563 = vunpack.c.h.b16 %v4354
    %v4564 = vunpack.c.l.b16 %v4355
    %v4565 = vunpack.c.h.b16 %v4355
    %v4566 = vunpack.c.l.b16 %v4356
    %v4567 = vunpack.c.h.b16 %v4356
    %v4568 = vunpack.c.l.b16 %v4357
    %v4569 = vunpack.c.h.b16 %v4357
    %v4570 = vunpack.c.l.b16 %v4358
    %v4571 = vunpack.c.h.b16 %v4358
    %v4572 = vunpack.c.l.b16 %v4359
    %v4573 = vunpack.c.h.b16 %v4359
    %v4574 = vpack.c.b16 %v4450, %v4446
    %v4575 = vpack.c.b16 %v4451, %v4447
    %v4576 = vpack.c.b16 %v4452, %v4448
    %v4577 = vpack.c.b16 %v4453, %v4449
    %v4578 = vpack.c.b16 %v4458, %v4454
    %v4579 = vpack.c.b16 %v4459, %v4455
    %v4580 = vpack.c.b16 %v4460, %v4456
    %v4581 = vpack.c.b16 %v4461, %v4457
    %v4582 = vpack.c.b16 %v4466, %v4462
    %v4583 = vpack.c.b16 %v4467, %v4463
    %v4584 = vpack.c.b16 %v4468, %v4464
    %v4585 = vpack.c.b16 %v4469, %v4465
    %v4586 = vpack.c.b16 %v4474, %v4470
    %v4587 = vpack.c.b16 %v4475, %v4471
    %v4588 = vpack.c.b16 %v4476, %v4472
    %v4589 = vpack.c.b16 %v4477, %v4473
    %v4590 = vpack.c.b16 %v4482, %v4478
    %v4591 = vpack.c.b16 %v4483, %v4479
    %v4592 = vpack.c.b16 %v4484, %v4480
    %v4593 = vpack.c.b16 %v4485, %v4481
    %v4594 = vpack.c.b16 %v4490, %v4486
    %v4595 = vpack.c.b16 %v4491, %v4487
    %v4596 = vpack.c.b16 %v4492, %v4488
    %v4597 = vpack.c.b16 %v4493, %v4489
    %v4598 = vpack.c.b16 %v4498, %v4494
    %v4599 = vpack.c.b16 %v4499, %v4495
    %v4600 = vpack.c.b16 %v4500, %v4496
    %v4601 = vpack.c.b16 %v4501, %v4497
    %v4602 = vpack.c.b16 %v4506, %v4502
    %v4603 = vpack.c.b16 %v4507, %v4503
    %v4604 = vpack.c.b16 %v4508, %v4504
    %v4605 = vpack.c.b16 %v4509, %v4505
    %v4606 = vpack.c.b16 %v4514, %v4510
    %v4607 = vpack.c.b16 %v4515, %v4511
    %v4608 = vpack.c.b16 %v4516, %v4512
    %v4609 = vpack.c.b16 %v4517, %v4513
    %v4610 = vpack.c.b16 %v4522, %v4518
    %v4611 = vpack.c.b16 %v4523, %v4519
    %v4612 = vpack.c.b16 %v4524, %v4520
    %v4613 = vpack.c.b16 %v4525, %v4521
    %v4614 = vpack.c.b16 %v4530, %v4526
    %v4615 = vpack.c.b16 %v4531, %v4527
    %v4616 = vpack.c.b16 %v4532, %v4528
    %v4617 = vpack.c.b16 %v4533, %v4529
    %v4618 = vpack.c.b16 %v4538, %v4534
    %v4619 = vpack.c.b16 %v4539, %v4535
    %v4620 = vpack.c.b16 %v4540, %v4536
    %v4621 = vpack.c.b16 %v4541, %v4537
    %v4622 = vpack.c.b16 %v4546, %v4542
    %v4623 = vpack.c.b16 %v4547, %v4543
    %v4624 = vpack.c.b16 %v4548, %v4544
    %v4625 = vpack.c.b16 %v4549, %v4545
    %v4626 = vpack.c.b16 %v4554, %v4550
    %v4627 = vpack.c.b16 %v4555, %v4551
    %v4628 = vpack.c.b16 %v4556, %v4552
    %v4629 = vpack.c.b16 %v4557, %v4553
    %v4630 = vpack.c.b16 %v4562, %v4558
    %v4631 = vpack.c.b16 %v4563, %v4559
    %v4632 = vpack.c.b16 %v4564, %v4560
    %v4633 = vpack.c.b16 %v4565, %v4561
    %v4634 = vpack.c.b16 %v4570, %v4566
    %v4635 = vpack.c.b16 %v4571, %v4567
    %v4636 = vpack.c.b16 %v4572, %v4568
    %v4637 = vpack.c.b16 %v4573, %v4569
    %4702 = vmatprep.subr.bf16.mxu0 %v4575
    %4703 = vmatpush1.bf16.msra.mxu0 %v4574
    %4704 = vmatprep.subr.bf16.mxu0 %v4579
    %4705 = vmatpush1.bf16.msra.mxu0 %v4578
    %4706 = vmatprep.subr.bf16.mxu0 %v4583
    %4707 = vmatpush1.bf16.msra.mxu0 %v4582
    %4708 = vmatprep.subr.bf16.mxu0 %v4587
    %4709 = vmatpush1.bf16.msra.mxu0 %v4586
    %4710 = vmatprep.subr.bf16.mxu0 %v4591
    %4711 = vmatpush1.bf16.msra.mxu0 %v4590
    %4712 = vmatprep.subr.bf16.mxu0 %v4595
    %4713 = vmatpush1.bf16.msra.mxu0 %v4594
    %4714 = vmatprep.subr.bf16.mxu0 %v4599
    %4715 = vmatpush1.bf16.msra.mxu0 %v4598
    %4716 = vmatprep.subr.bf16.mxu0 %v4603
    %4717 = vmatpush1.bf16.msra.mxu0 %v4602
    %4718 = vmatprep.subr.bf16.mxu0 %v4607
    %4719 = vmatpush1.bf16.msra.mxu0 %v4606
    %4720 = vmatprep.subr.bf16.mxu0 %v4611
    %4721 = vmatpush1.bf16.msra.mxu0 %v4610
    %4722 = vmatprep.subr.bf16.mxu0 %v4615
    %4723 = vmatpush1.bf16.msra.mxu0 %v4614
    %4724 = vmatprep.subr.bf16.mxu0 %v4619
    %4725 = vmatpush1.bf16.msra.mxu0 %v4618
    %4726 = vmatprep.subr.bf16.mxu0 %v4623
    %4727 = vmatpush1.bf16.msra.mxu0 %v4622
    %4728 = vmatprep.subr.bf16.mxu0 %v4627
    %4729 = vmatpush1.bf16.msra.mxu0 %v4626
    %4730 = vmatprep.subr.bf16.mxu0 %v4631
    %4731 = vmatpush1.bf16.msra.mxu0 %v4630
    %4732 = vmatprep.subr.bf16.mxu0 %v4635
    %4733 = vmatpush1.bf16.msra.mxu0 %v4634
    %4734 = vmatprep.mubr.bf16.mxu0 %v4285
    %4735 = vmatmul.mubr.bf16.gmra.mrb[0].mxu0 %v4284
    %v4736 = vpop.f32.mrb[0].mxu0
    %v4737 = vadd.f32 %v4365, %v4736
    %v4738 = vpop.f32.mrb[0].mxu0
    %v4739 = vadd.f32 %v4369, %v4738
    %v4740 = vpop.f32.mrb[0].mxu0
    %v4741 = vadd.f32 %v4365, %v4740
    %v4742 = vpop.f32.mrb[0].mxu0
    %v4743 = vadd.f32 %v4369, %v4742
    %4744 = vmatprep.mubr.bf16.mxu0 %v4287
    %4745 = vmatmul.mubr.bf16.gmra.mrb[0].mxu0 %v4286
    %v4746 = vpop.f32.mrb[0].mxu0
    %v4747 = vadd.f32 %v4365, %v4746
    %v4748 = vpop.f32.mrb[0].mxu0
    %v4749 = vadd.f32 %v4369, %v4748
    %v4750 = vpop.f32.mrb[0].mxu0
    %v4751 = vadd.f32 %v4365, %v4750
    %v4752 = vpop.f32.mrb[0].mxu0
    %v4753 = vadd.f32 %v4369, %v4752
    %4754 = vmatprep.mubr.bf16.mxu0 %v4289
    %4755 = vmatmul.mubr.bf16.gmra.mrb[0].mxu0 %v4288
    %v4756 = vpop.f32.mrb[0].mxu0
    %v4757 = vadd.f32 %v4365, %v4756
    %v4758 = vpop.f32.mrb[0].mxu0
    %v4759 = vadd.f32 %v4369, %v4758
    %v4760 = vpop.f32.mrb[0].mxu0
    %v4761 = vadd.f32 %v4365, %v4760
    %v4762 = vpop.f32.mrb[0].mxu0
    %v4763 = vadd.f32 %v4369, %v4762
    %4764 = vmatprep.mubr.bf16.mxu0 %v4291
    %4765 = vmatmul.mubr.bf16.gmra.mrb[0].mxu0 %v4290
    %v4766 = vpop.f32.mrb[0].mxu0
    %v4767 = vadd.f32 %v4365, %v4766
    %v4768 = vpop.f32.mrb[0].mxu0
    %v4769 = vadd.f32 %v4369, %v4768
    %v4770 = vpop.f32.mrb[0].mxu0
    %v4771 = vadd.f32 %v4365, %v4770
    %v4772 = vpop.f32.mrb[0].mxu0
    %v4773 = vadd.f32 %v4369, %v4772
    %4774 = vmatprep.mubr.bf16.mxu0 %v4293
    %4775 = vmatmul.mubr.bf16.gmra.mrb[0].mxu0 %v4292
    %v4776 = vpop.f32.mrb[0].mxu0
    %v4777 = vadd.f32 %v4365, %v4776
    %v4778 = vpop.f32.mrb[0].mxu0
    %v4779 = vadd.f32 %v4369, %v4778
    %v4780 = vpop.f32.mrb[0].mxu0
    %v4781 = vadd.f32 %v4365, %v4780
    %v4782 = vpop.f32.mrb[0].mxu0
    %v4783 = vadd.f32 %v4369, %v4782
    %4784 = vmatprep.mubr.bf16.mxu0 %v4295
    %4785 = vmatmul.mubr.bf16.gmra.mrb[0].mxu0 %v4294
    %v4786 = vpop.f32.mrb[0].mxu0
    %v4787 = vadd.f32 %v4365, %v4786
    %v4788 = vpop.f32.mrb[0].mxu0
    %v4789 = vadd.f32 %v4369, %v4788
    %v4790 = vpop.f32.mrb[0].mxu0
    %v4791 = vadd.f32 %v4365, %v4790
    %v4792 = vpop.f32.mrb[0].mxu0
    %v4793 = vadd.f32 %v4369, %v4792
    %4794 = vdwg.mxu0
    %4795 = vmatprep.subr.bf16.mxu0 %v4577
    %4796 = vmatpush1.bf16.msra.mxu0 %v4576
    %4797 = vmatprep.subr.bf16.mxu0 %v4581
    %4798 = vmatpush1.bf16.msra.mxu0 %v4580
    %4799 = vmatprep.subr.bf16.mxu0 %v4585
    %4800 = vmatpush1.bf16.msra.mxu0 %v4584
    %4801 = vmatprep.subr.bf16.mxu0 %v4589
    %4802 = vmatpush1.bf16.msra.mxu0 %v4588
    %4803 = vmatprep.subr.bf16.mxu0 %v4593
    %4804 = vmatpush1.bf16.msra.mxu0 %v4592
    %4805 = vmatprep.subr.bf16.mxu0 %v4597
    %4806 = vmatpush1.bf16.msra.mxu0 %v4596
    %4807 = vmatprep.subr.bf16.mxu0 %v4601
    %4808 = vmatpush1.bf16.msra.mxu0 %v4600
    %4809 = vmatprep.subr.bf16.mxu0 %v4605
    %4810 = vmatpush1.bf16.msra.mxu0 %v4604
    %4811 = vmatprep.subr.bf16.mxu0 %v4609
    %4812 = vmatpush1.bf16.msra.mxu0 %v4608
    %4813 = vmatprep.subr.bf16.mxu0 %v4613
    %4814 = vmatpush1.bf16.msra.mxu0 %v4612
    %4815 = vmatprep.subr.bf16.mxu0 %v4617
    %4816 = vmatpush1.bf16.msra.mxu0 %v4616
    %4817 = vmatprep.subr.bf16.mxu0 %v4621
    %4818 = vmatpush1.bf16.msra.mxu0 %v4620
    %4819 = vmatprep.subr.bf16.mxu0 %v4625
    %4820 = vmatpush1.bf16.msra.mxu0 %v4624
    %4821 = vmatprep.subr.bf16.mxu0 %v4629
    %4822 = vmatpush1.bf16.msra.mxu0 %v4628
    %4823 = vmatprep.subr.bf16.mxu0 %v4633
    %4824 = vmatpush1.bf16.msra.mxu0 %v4632
    %4825 = vmatprep.subr.bf16.mxu0 %v4637
    %4826 = vmatpush1.bf16.msra.mxu0 %v4636
    %4827 = vmatprep.mubr.bf16.mxu0 %v4285
    %4828 = vmatmul.mubr.bf16.gmra.mrb[0].mxu0 %v4284
    %v4829 = vpop.f32.mrb[0].mxu0
    %v4830 = vadd.f32 %v4373, %v4829
    %v4831 = vpop.f32.mrb[0].mxu0
    %v4832 = vadd.f32 %v4377, %v4831
    %v4833 = vpop.f32.mrb[0].mxu0
    %v4834 = vadd.f32 %v4373, %v4833
    %v4835 = vpop.f32.mrb[0].mxu0
    %v4836 = vadd.f32 %v4377, %v4835
    %4837 = vmatprep.mubr.bf16.mxu0 %v4287
    %4838 = vmatmul.mubr.bf16.gmra.mrb[0].mxu0 %v4286
    %v4839 = vpop.f32.mrb[0].mxu0
    %v4840 = vadd.f32 %v4373, %v4839
    %v4841 = vpop.f32.mrb[0].mxu0
    %v4842 = vadd.f32 %v4377, %v4841
    %v4843 = vpop.f32.mrb[0].mxu0
    %v4844 = vadd.f32 %v4373, %v4843
    %v4845 = vpop.f32.mrb[0].mxu0
    %v4846 = vadd.f32 %v4377, %v4845
    %4847 = vmatprep.mubr.bf16.mxu0 %v4289
    %4848 = vmatmul.mubr.bf16.gmra.mrb[0].mxu0 %v4288
    %v4849 = vpop.f32.mrb[0].mxu0
    %v4850 = vadd.f32 %v4373, %v4849
    %v4851 = vpop.f32.mrb[0].mxu0
    %v4852 = vadd.f32 %v4377, %v4851
    %v4853 = vpop.f32.mrb[0].mxu0
    %v4854 = vadd.f32 %v4373, %v4853
    %v4855 = vpop.f32.mrb[0].mxu0
    %v4856 = vadd.f32 %v4377, %v4855
    %4857 = vmatprep.mubr.bf16.mxu0 %v4291
    %4858 = vmatmul.mubr.bf16.gmra.mrb[0].mxu0 %v4290
    %v4859 = vpop.f32.mrb[0].mxu0
    %v4860 = vadd.f32 %v4373, %v4859
    %v4861 = vpop.f32.mrb[0].mxu0
    %v4862 = vadd.f32 %v4377, %v4861
    %v4863 = vpop.f32.mrb[0].mxu0
    %v4864 = vadd.f32 %v4373, %v4863
    %v4865 = vpop.f32.mrb[0].mxu0
    %v4866 = vadd.f32 %v4377, %v4865
    %4867 = vmatprep.mubr.bf16.mxu0 %v4293
    %4868 = vmatmul.mubr.bf16.gmra.mrb[0].mxu0 %v4292
    %v4869 = vpop.f32.mrb[0].mxu0
    %v4870 = vadd.f32 %v4373, %v4869
    %v4871 = vpop.f32.mrb[0].mxu0
    %v4872 = vadd.f32 %v4377, %v4871
    %v4873 = vpop.f32.mrb[0].mxu0
    %v4874 = vadd.f32 %v4373, %v4873
    %v4875 = vpop.f32.mrb[0].mxu0
    %v4876 = vadd.f32 %v4377, %v4875
    %4877 = vmatprep.mubr.bf16.mxu0 %v4295
    %4878 = vmatmul.mubr.bf16.gmra.mrb[0].mxu0 %v4294
    %v4879 = vpop.f32.mrb[0].mxu0
    %v4880 = vadd.f32 %v4373, %v4879
    %v4881 = vpop.f32.mrb[0].mxu0
    %v4882 = vadd.f32 %v4377, %v4881
    %v4883 = vpop.f32.mrb[0].mxu0
    %v4884 = vadd.f32 %v4373, %v4883
    %v4885 = vpop.f32.mrb[0].mxu0
    %v4886 = vadd.f32 %v4377, %v4885
    %4887 = vdwg.mxu0
    %4888 = vst [vmem:[#allocation2] sm:$0xff] %v4737
    %4889 = vst [vmem:[#allocation2 + $0x8] sm:$0xff] %v4739
    %4890 = vst [vmem:[#allocation2 + $0x10] sm:$0xff] %v4830
    %4891 = vst [vmem:[#allocation2 + $0x18] sm:$0xff] %v4832
    %4892 = vst [vmem:[#allocation2 + $0x20] sm:$0xff] %v4741
    %4893 = vst [vmem:[#allocation2 + $0x28] sm:$0xff] %v4743
    %4894 = vst [vmem:[#allocation2 + $0x30] sm:$0xff] %v4834
    %4895 = vst [vmem:[#allocation2 + $0x38] sm:$0xff] %v4836
    %4896 = vst [vmem:[#allocation2 + $0x40] sm:$0xff] %v4747
    %4897 = vst [vmem:[#allocation2 + $0x48] sm:$0xff] %v4749
    %4898 = vst [vmem:[#allocation2 + $0x50] sm:$0xff] %v4840
    %4899 = vst [vmem:[#allocation2 + $0x58] sm:$0xff] %v4842
    %4900 = vst [vmem:[#allocation2 + $0x60] sm:$0xff] %v4751
    %4901 = vst [vmem:[#allocation2 + $0x68] sm:$0xff] %v4753
    %4902 = vst [vmem:[#allocation2 + $0x70] sm:$0xff] %v4844
    %4903 = vst [vmem:[#allocation2 + $0x78] sm:$0xff] %v4846
    %4904 = vst [vmem:[#allocation2 + $0x80] sm:$0xff] %v4757
    %4905 = vst [vmem:[#allocation2 + $0x88] sm:$0xff] %v4759
    %4906 = vst [vmem:[#allocation2 + $0x90] sm:$0xff] %v4850
    %4907 = vst [vmem:[#allocation2 + $0x98] sm:$0xff] %v4852
    %4908 = vst [vmem:[#allocation2 + $0xa0] sm:$0xff] %v4761
    %4909 = vst [vmem:[#allocation2 + $0xa8] sm:$0xff] %v4763
    %4910 = vst [vmem:[#allocation2 + $0xb0] sm:$0xff] %v4854
    %4911 = vst [vmem:[#allocation2 + $0xb8] sm:$0xff] %v4856
    %4912 = vst [vmem:[#allocation2 + $0xc0] sm:$0xff] %v4767
    %4913 = vst [vmem:[#allocation2 + $0xc8] sm:$0xff] %v4769
    %4914 = vst [vmem:[#allocation2 + $0xd0] sm:$0xff] %v4860
    %4915 = vst [vmem:[#allocation2 + $0xd8] sm:$0xff] %v4862
    %4916 = vst [vmem:[#allocation2 + $0xe0] sm:$0xff] %v4771
    %4917 = vst [vmem:[#allocation2 + $0xe8] sm:$0xff] %v4773
    %4918 = vst [vmem:[#allocation2 + $0xf0] sm:$0xff] %v4864
    %4919 = vst [vmem:[#allocation2 + $0xf8] sm:$0xff] %v4866
    %4920 = vst [vmem:[#allocation2 + $0x100] sm:$0xff] %v4777
    %4921 = vst [vmem:[#allocation2 + $0x108] sm:$0xff] %v4779
    %4922 = vst [vmem:[#allocation2 + $0x110] sm:$0xff] %v4870
    %4923 = vst [vmem:[#allocation2 + $0x118] sm:$0xff] %v4872
    %4924 = vst [vmem:[#allocation2 + $0x120] sm:$0xff] %v4781
    %4925 = vst [vmem:[#allocation2 + $0x128] sm:$0xff] %v4783
    %4926 = vst [vmem:[#allocation2 + $0x130] sm:$0xff] %v4874
    %4927 = vst [vmem:[#allocation2 + $0x138] sm:$0xff] %v4876
    %4928 = vst [vmem:[#allocation2 + $0x140] sm:$0xff] %v4787
    %4929 = vst [vmem:[#allocation2 + $0x148] sm:$0xff] %v4789
    %4930 = vst [vmem:[#allocation2 + $0x150] sm:$0xff] %v4880
    %4931 = vst [vmem:[#allocation2 + $0x158] sm:$0xff] %v4882
    %4932 = vst [vmem:[#allocation2 + $0x160] sm:$0xff] %v4791
    %4933 = vst [vmem:[#allocation2 + $0x168] sm:$0xff] %v4793
    %4934 = vst [vmem:[#allocation2 + $0x170] sm:$0xff] %v4884
    %4935 = vst [vmem:[#allocation2 + $0x178] sm:$0xff] %v4886
    %v4936 = vld [vmem:[#allocation9] sm:$0xff]
    %v4937 = vld [vmem:[#allocation9 + $0x8] sm:$0xff]
    %v4938 = vld [vmem:[#allocation9 + $0x10] sm:$0xff]
    %v4939 = vld [vmem:[#allocation9 + $0x18] sm:$0xff]
    %v4940 = vld [vmem:[#allocation9 + $0x20] sm:$0xff]
    %v4941 = vld [vmem:[#allocation9 + $0x28] sm:$0xff]
    %v4942 = vld [vmem:[#allocation9 + $0x30] sm:$0xff]
    %v4943 = vld [vmem:[#allocation9 + $0x38] sm:$0xff]
    %v4944 = vld [vmem:[#allocation9 + $0x40] sm:$0xff]
    %v4945 = vld [vmem:[#allocation9 + $0x48] sm:$0xff]
    %v4946 = vld [vmem:[#allocation9 + $0x50] sm:$0xff]
    %v4947 = vld [vmem:[#allocation9 + $0x58] sm:$0xff]
    %v4948 = vld [vmem:[#allocation9 + $0x60] sm:$0xff]
    %v4949 = vld [vmem:[#allocation9 + $0x68] sm:$0xff]
    %v4950 = vld [vmem:[#allocation9 + $0x70] sm:$0xff]
    %v4951 = vld [vmem:[#allocation9 + $0x78] sm:$0xff]
    %v4952 = vld [vmem:[#allocation9 + $0x80] sm:$0xff]
    %v4953 = vld [vmem:[#allocation9 + $0x88] sm:$0xff]
    %v4954 = vld [vmem:[#allocation9 + $0x90] sm:$0xff]
    %v4955 = vld [vmem:[#allocation9 + $0x98] sm:$0xff]
    %v4956 = vld [vmem:[#allocation9 + $0xa0] sm:$0xff]
    %v4957 = vld [vmem:[#allocation9 + $0xa8] sm:$0xff]
    %v4958 = vld [vmem:[#allocation9 + $0xb0] sm:$0xff]
    %v4959 = vld [vmem:[#allocation9 + $0xb8] sm:$0xff]
    %v4960 = vld [vmem:[#allocation9 + $0xc0] sm:$0xff]
    %v4961 = vld [vmem:[#allocation9 + $0xc8] sm:$0xff]
    %v4962 = vld [vmem:[#allocation9 + $0xd0] sm:$0xff]
    %v4963 = vld [vmem:[#allocation9 + $0xd8] sm:$0xff]
    %v4964 = vld [vmem:[#allocation9 + $0xe0] sm:$0xff]
    %v4965 = vld [vmem:[#allocation9 + $0xe8] sm:$0xff]
    %v4966 = vld [vmem:[#allocation9 + $0xf0] sm:$0xff]
    %v4967 = vld [vmem:[#allocation9 + $0xf8] sm:$0xff]
    %v5000 = vunpack.c.l.b16 %v4936
    %v5001 = vunpack.c.h.b16 %v4936
    %v5002 = vunpack.c.l.b16 %v4937
    %v5003 = vunpack.c.h.b16 %v4937
    %v5004 = vunpack.c.l.b16 %v4938
    %v5005 = vunpack.c.h.b16 %v4938
    %v5006 = vunpack.c.l.b16 %v4939
    %v5007 = vunpack.c.h.b16 %v4939
    %v5008 = vunpack.c.l.b16 %v4940
    %v5009 = vunpack.c.h.b16 %v4940
    %v5010 = vunpack.c.l.b16 %v4941
    %v5011 = vunpack.c.h.b16 %v4941
    %v5012 = vunpack.c.l.b16 %v4942
    %v5013 = vunpack.c.h.b16 %v4942
    %v5014 = vunpack.c.l.b16 %v4943
    %v5015 = vunpack.c.h.b16 %v4943
    %v5016 = vunpack.c.l.b16 %v4944
    %v5017 = vunpack.c.h.b16 %v4944
    %v5018 = vunpack.c.l.b16 %v4945
    %v5019 = vunpack.c.h.b16 %v4945
    %v5020 = vunpack.c.l.b16 %v4946
    %v5021 = vunpack.c.h.b16 %v4946
    %v5022 = vunpack.c.l.b16 %v4947
    %v5023 = vunpack.c.h.b16 %v4947
    %v5024 = vunpack.c.l.b16 %v4948
    %v5025 = vunpack.c.h.b16 %v4948
    %v5026 = vunpack.c.l.b16 %v4949
    %v5027 = vunpack.c.h.b16 %v4949
    %v5028 = vunpack.c.l.b16 %v4950
    %v5029 = vunpack.c.h.b16 %v4950
    %v5030 = vunpack.c.l.b16 %v4951
    %v5031 = vunpack.c.h.b16 %v4951
    %v5032 = vunpack.c.l.b16 %v4952
    %v5033 = vunpack.c.h.b16 %v4952
    %v5034 = vunpack.c.l.b16 %v4953
    %v5035 = vunpack.c.h.b16 %v4953
    %v5036 = vunpack.c.l.b16 %v4954
    %v5037 = vunpack.c.h.b16 %v4954
    %v5038 = vunpack.c.l.b16 %v4955
    %v5039 = vunpack.c.h.b16 %v4955
    %v5040 = vunpack.c.l.b16 %v4956
    %v5041 = vunpack.c.h.b16 %v4956
    %v5042 = vunpack.c.l.b16 %v4957
    %v5043 = vunpack.c.h.b16 %v4957
    %v5044 = vunpack.c.l.b16 %v4958
    %v5045 = vunpack.c.h.b16 %v4958
    %v5046 = vunpack.c.l.b16 %v4959
    %v5047 = vunpack.c.h.b16 %v4959
    %v5048 = vunpack.c.l.b16 %v4960
    %v5049 = vunpack.c.h.b16 %v4960
    %v5050 = vunpack.c.l.b16 %v4961
    %v5051 = vunpack.c.h.b16 %v4961
    %v5052 = vunpack.c.l.b16 %v4962
    %v5053 = vunpack.c.h.b16 %v4962
    %v5054 = vunpack.c.l.b16 %v4963
    %v5055 = vunpack.c.h.b16 %v4963
    %v5056 = vunpack.c.l.b16 %v4964
    %v5057 = vunpack.c.h.b16 %v4964
    %v5058 = vunpack.c.l.b16 %v4965
    %v5059 = vunpack.c.h.b16 %v4965
    %v5060 = vunpack.c.l.b16 %v4966
    %v5061 = vunpack.c.h.b16 %v4966
    %v5062 = vunpack.c.l.b16 %v4967
    %v5063 = vunpack.c.h.b16 %v4967
    %v5064 = vpack.c.b16 %v5004, %v5000
    %v5065 = vpack.c.b16 %v5005, %v5001
    %v5066 = vpack.c.b16 %v5006, %v5002
    %v5067 = vpack.c.b16 %v5007, %v5003
    %v5068 = vpack.c.b16 %v5012, %v5008
    %v5069 = vpack.c.b16 %v5013, %v5009
    %v5070 = vpack.c.b16 %v5014, %v5010
    %v5071 = vpack.c.b16 %v5015, %v5011
    %v5072 = vpack.c.b16 %v5020, %v5016
    %v5073 = vpack.c.b16 %v5021, %v5017
    %v5074 = vpack.c.b16 %v5022, %v5018
    %v5075 = vpack.c.b16 %v5023, %v5019
    %v5076 = vpack.c.b16 %v5028, %v5024
    %v5077 = vpack.c.b16 %v5029, %v5025
    %v5078 = vpack.c.b16 %v5030, %v5026
    %v5079 = vpack.c.b16 %v5031, %v5027
    %v5080 = vpack.c.b16 %v5036, %v5032
    %v5081 = vpack.c.b16 %v5037, %v5033
    %v5082 = vpack.c.b16 %v5038, %v5034
    %v5083 = vpack.c.b16 %v5039, %v5035
    %v5084 = vpack.c.b16 %v5044, %v5040
    %v5085 = vpack.c.b16 %v5045, %v5041
    %v5086 = vpack.c.b16 %v5046, %v5042
    %v5087 = vpack.c.b16 %v5047, %v5043
    %v5088 = vpack.c.b16 %v5052, %v5048
    %v5089 = vpack.c.b16 %v5053, %v5049
    %v5090 = vpack.c.b16 %v5054, %v5050
    %v5091 = vpack.c.b16 %v5055, %v5051
    %v5092 = vpack.c.b16 %v5060, %v5056
    %v5093 = vpack.c.b16 %v5061, %v5057
    %v5094 = vpack.c.b16 %v5062, %v5058
    %v5095 = vpack.c.b16 %v5063, %v5059
    %5128 = vmatprep.subr.bf16.mxu0 %v5065
    %5129 = vmatpush1.bf16.msra.mxu0 %v5064
    %5130 = vmatprep.subr.bf16.mxu0 %v5069
    %5131 = vmatpush1.bf16.msra.mxu0 %v5068
    %5132 = vmatprep.subr.bf16.mxu0 %v5073
    %5133 = vmatpush1.bf16.msra.mxu0 %v5072
    %5134 = vmatprep.subr.bf16.mxu0 %v5077
    %5135 = vmatpush1.bf16.msra.mxu0 %v5076
    %5136 = vmatprep.subr.bf16.mxu0 %v5081
    %5137 = vmatpush1.bf16.msra.mxu0 %v5080
    %5138 = vmatprep.subr.bf16.mxu0 %v5085
    %5139 = vmatpush1.bf16.msra.mxu0 %v5084
    %5140 = vmatprep.subr.bf16.mxu0 %v5089
    %5141 = vmatpush1.bf16.msra.mxu0 %v5088
    %5142 = vmatprep.subr.bf16.mxu0 %v5093
    %5143 = vmatpush1.bf16.msra.mxu0 %v5092
    %5144 = vmatprep.subr.bf16.mxu0 0
    %5145 = vmatpush1.bf16.msra.mxu0 0
    %5146 = vmatprep.subr.bf16.mxu0 0
    %5147 = vmatpush1.bf16.msra.mxu0 0
    %5148 = vmatprep.subr.bf16.mxu0 0
    %5149 = vmatpush1.bf16.msra.mxu0 0
    %5150 = vmatprep.subr.bf16.mxu0 0
    %5151 = vmatpush1.bf16.msra.mxu0 0
    %5152 = vmatprep.subr.bf16.mxu0 0
    %5153 = vmatpush1.bf16.msra.mxu0 0
    %5154 = vmatprep.subr.bf16.mxu0 0
    %5155 = vmatpush1.bf16.msra.mxu0 0
    %5156 = vmatprep.subr.bf16.mxu0 0
    %5157 = vmatpush1.bf16.msra.mxu0 0
    %5158 = vmatprep.subr.bf16.mxu0 0
    %5159 = vmatpush1.bf16.msra.mxu0 0
    %5160 = vmatprep.mubr.bf16.mxu0 0
    %5161 = vmatmul.mubr.bf16.gmra.mrb[0].mxu0 0
    %v5162 = vpop.f32.mrb[0].mxu0
    %v5163 = vadd.f32 0.0, %v5162
    %v5164 = vpop.f32.mrb[0].mxu0
    %v5165 = vadd.f32 0.0, %v5164
    %v5166 = vpop.f32.mrb[0].mxu0
    %v5167 = vpop.f32.mrb[0].mxu0
    %5168 = vdwg.mxu0
    %5169 = vmatprep.subr.bf16.mxu0 %v5067
    %5170 = vmatpush1.bf16.msra.mxu0 %v5066
    %5171 = vmatprep.subr.bf16.mxu0 %v5071
    %5172 = vmatpush1.bf16.msra.mxu0 %v5070
    %5173 = vmatprep.subr.bf16.mxu0 %v5075
    %5174 = vmatpush1.bf16.msra.mxu0 %v5074
    %5175 = vmatprep.subr.bf16.mxu0 %v5079
    %5176 = vmatpush1.bf16.msra.mxu0 %v5078
    %5177 = vmatprep.subr.bf16.mxu0 %v5083
    %5178 = vmatpush1.bf16.msra.mxu0 %v5082
    %5179 = vmatprep.subr.bf16.mxu0 %v5087
    %5180 = vmatpush1.bf16.msra.mxu0 %v5086
    %5181 = vmatprep.subr.bf16.mxu0 %v5091
    %5182 = vmatpush1.bf16.msra.mxu0 %v5090
    %5183 = vmatprep.subr.bf16.mxu0 %v5095
    %5184 = vmatpush1.bf16.msra.mxu0 %v5094
    %5185 = vmatprep.subr.bf16.mxu0 0
    %5186 = vmatpush1.bf16.msra.mxu0 0
    %5187 = vmatprep.subr.bf16.mxu0 0
    %5188 = vmatpush1.bf16.msra.mxu0 0
    %5189 = vmatprep.subr.bf16.mxu0 0
    %5190 = vmatpush1.bf16.msra.mxu0 0
    %5191 = vmatprep.subr.bf16.mxu0 0
    %5192 = vmatpush1.bf16.msra.mxu0 0
    %5193 = vmatprep.subr.bf16.mxu0 0
    %5194 = vmatpush1.bf16.msra.mxu0 0
    %5195 = vmatprep.subr.bf16.mxu0 0
    %5196 = vmatpush1.bf16.msra.mxu0 0
    %5197 = vmatprep.subr.bf16.mxu0 0
    %5198 = vmatpush1.bf16.msra.mxu0 0
    %5199 = vmatprep.subr.bf16.mxu0 0
    %5200 = vmatpush1.bf16.msra.mxu0 0
    %5201 = vmatprep.mubr.bf16.mxu0 0
    %5202 = vmatmul.mubr.bf16.gmra.mrb[0].mxu0 0
    %v5203 = vpop.f32.mrb[0].mxu0
    %v5204 = vadd.f32 0.0, %v5203
    %v5205 = vpop.f32.mrb[0].mxu0
    %v5206 = vadd.f32 0.0, %v5205
    %v5207 = vpop.f32.mrb[0].mxu0
    %v5208 = vpop.f32.mrb[0].mxu0
    %5209 = vdwg.mxu0
    %v5210 = vld [vmem:[#allocation2] sm:$0xff]
    %v5211 = vld [vmem:[#allocation2 + $0x8] sm:$0xff]
    %v5212 = vld [vmem:[#allocation2 + $0x10] sm:$0xff]
    %v5213 = vld [vmem:[#allocation2 + $0x18] sm:$0xff]
    %v5214 = vadd.f32 %v5210, %v5163
    %v5215 = vadd.f32 %v5211, %v5165
    %v5216 = vadd.f32 %v5212, %v5204
    %v5217 = vadd.f32 %v5213, %v5206
    %v5218 = vxor.u32 %v5214, 2147483648
    %v5219 = vmul.f32 %v5218, 1.442695
    %v5220 = vpow.pop %v5219
    %v5221 = vadd.f32 %v5220, 1.0
    %v5222 = vrcp.pop %v5221
    %v5223 = vmul.f32 1.0, %v5222
    %v5224 = vxor.u32 %v5215, 2147483648
    %v5225 = vmul.f32 %v5224, 1.442695
    %v5226 = vpow.pop %v5225
    %v5227 = vadd.f32 %v5226, 1.0
    %v5228 = vrcp.pop %v5227
    %v5229 = vmul.f32 1.0, %v5228
    %v5230 = vtanh.pop %v5216
    %v5231 = vxor.u32 %v5217, 2147483648
    %v5232 = vmul.f32 %v5231, 1.442695
    %v5233 = vpow.pop %v5232
    %v5234 = vadd.f32 %v5233, 1.0
    %v5235 = vrcp.pop %v5234
    %v5236 = vmul.f32 1.0, %v5235
    %v5237 = vmul.f32 %v5229, 0.0
    %v5238 = vmul.f32 %v5223, %v5230
    %v5239 = vadd.f32 %v5237, %v5238
    %v5240 = vtanh.pop %v5239
    %v5241 = vmul.f32 %v5236, %v5240
    %v5242 = vpack.c.bf16 %v5241, %v5241
    %5243 = vmatprep.subr.bf16.mxu0 %v5065
    %5244 = vmatpush1.bf16.msra.mxu0 %v5064
    %5245 = vmatprep.subr.bf16.mxu0 %v5069
    %5246 = vmatpush1.bf16.msra.mxu0 %v5068
    %5247 = vmatprep.subr.bf16.mxu0 %v5073
    %5248 = vmatpush1.bf16.msra.mxu0 %v5072
    %5249 = vmatprep.subr.bf16.mxu0 %v5077
    %5250 = vmatpush1.bf16.msra.mxu0 %v5076
    %5251 = vmatprep.subr.bf16.mxu0 %v5081
    %5252 = vmatpush1.bf16.msra.mxu0 %v5080
    %5253 = vmatprep.subr.bf16.mxu0 %v5085
    %5254 = vmatpush1.bf16.msra.mxu0 %v5084
    %5255 = vmatprep.subr.bf16.mxu0 %v5089
    %5256 = vmatpush1.bf16.msra.mxu0 %v5088
    %5257 = vmatprep.subr.bf16.mxu0 %v5093
    %5258 = vmatpush1.bf16.msra.mxu0 %v5092
    %5259 = vmatprep.subr.bf16.mxu0 0
    %5260 = vmatpush1.bf16.msra.mxu0 0
    %5261 = vmatprep.subr.bf16.mxu0 0
    %5262 = vmatpush1.bf16.msra.mxu0 0
    %5263 = vmatprep.subr.bf16.mxu0 0
    %5264 = vmatpush1.bf16.msra.mxu0 0
    %5265 = vmatprep.subr.bf16.mxu0 0
    %5266 = vmatpush1.bf16.msra.mxu0 0
    %5267 = vmatprep.subr.bf16.mxu0 0
    %5268 = vmatpush1.bf16.msra.mxu0 0
    %5269 = vmatprep.subr.bf16.mxu0 0
    %5270 = vmatpush1.bf16.msra.mxu0 0
    %5271 = vmatprep.subr.bf16.mxu0 0
    %5272 = vmatpush1.bf16.msra.mxu0 0
    %5273 = vmatprep.subr.bf16.mxu0 0
    %5274 = vmatpush1.bf16.msra.mxu0 0
    %5275 = vmatprep.mubr.bf16.mxu0 0
    %5276 = vmatmul.mubr.bf16.gmra.mrb[0].mxu0 %v5242
    %v5277 = vpop.f32.mrb[0].mxu0
    %v5278 = vadd.f32 0.0, %v5277
    %v5279 = vpop.f32.mrb[0].mxu0
    %v5280 = vadd.f32 0.0, %v5279
    %v5281 = vpop.f32.mrb[0].mxu0
    %v5282 = vpop.f32.mrb[0].mxu0
    %5283 = vdwg.mxu0
    %5284 = vmatprep.subr.bf16.mxu0 %v5067
    %5285 = vmatpush1.bf16.msra.mxu0 %v5066
    %5286 = vmatprep.subr.bf16.mxu0 %v5071
    %5287 = vmatpush1.bf16.msra.mxu0 %v5070
    %5288 = vmatprep.subr.bf16.mxu0 %v5075
    %5289 = vmatpush1.bf16.msra.mxu0 %v5074
    %5290 = vmatprep.subr.bf16.mxu0 %v5079
    %5291 = vmatpush1.bf16.msra.mxu0 %v5078
    %5292 = vmatprep.subr.bf16.mxu0 %v5083
    %5293 = vmatpush1.bf16.msra.mxu0 %v5082
    %5294 = vmatprep.subr.bf16.mxu0 %v5087
    %5295 = vmatpush1.bf16.msra.mxu0 %v5086
    %5296 = vmatprep.subr.bf16.mxu0 %v5091
    %5297 = vmatpush1.bf16.msra.mxu0 %v5090
    %5298 = vmatprep.subr.bf16.mxu0 %v5095
    %5299 = vmatpush1.bf16.msra.mxu0 %v5094
    %5300 = vmatprep.subr.bf16.mxu0 0
    %5301 = vmatpush1.bf16.msra.mxu0 0
    %5302 = vmatprep.subr.bf16.mxu0 0
    %5303 = vmatpush1.bf16.msra.mxu0 0
    %5304 = vmatprep.subr.bf16.mxu0 0
    %5305 = vmatpush1.bf16.msra.mxu0 0
    %5306 = vmatprep.subr.bf16.mxu0 0
    %5307 = vmatpush1.bf16.msra.mxu0 0
    %5308 = vmatprep.subr.bf16.mxu0 0
    %5309 = vmatpush1.bf16.msra.mxu0 0
    %5310 = vmatprep.subr.bf16.mxu0 0
    %5311 = vmatpush1.bf16.msra.mxu0 0
    %5312 = vmatprep.subr.bf16.mxu0 0
    %5313 = vmatpush1.bf16.msra.mxu0 0
    %5314 = vmatprep.subr.bf16.mxu0 0
    %5315 = vmatpush1.bf16.msra.mxu0 0
    %5316 = vmatprep.mubr.bf16.mxu0 0
    %5317 = vmatmul.mubr.bf16.gmra.mrb[0].mxu0 %v5242
    %v5318 = vpop.f32.mrb[0].mxu0
    %v5319 = vadd.f32 0.0, %v5318
    %v5320 = vpop.f32.mrb[0].mxu0
    %v5321 = vadd.f32 0.0, %v5320
    %v5322 = vpop.f32.mrb[0].mxu0
    %v5323 = vpop.f32.mrb[0].mxu0
    %5324 = vdwg.mxu0
    %v5325 = vld [vmem:[%s1115] sm:$0xff]
    %v5326 = vld [vmem:[%s1115 + $0x8] sm:$0xff]
    %v5327 = vld [vmem:[%s1115 + $0x10] sm:$0xff]
    %v5328 = vld [vmem:[%s1115 + $0x18] sm:$0xff]
    %v5329 = vadd.f32 %v5325, %v5278
    %v5330 = vadd.f32 %v5326, %v5280
    %v5331 = vadd.f32 %v5327, %v5319
    %v5332 = vadd.f32 %v5328, %v5321
    %v5333 = vxor.u32 %v5329, 2147483648
    %v5334 = vmul.f32 %v5333, 1.442695
    %v5335 = vpow.pop %v5334
    %v5336 = vadd.f32 %v5335, 1.0
    %v5337 = vrcp.pop %v5336
    %v5338 = vmul.f32 1.0, %v5337
    %v5339 = vxor.u32 %v5330, 2147483648
    %v5340 = vmul.f32 %v5339, 1.442695
    %v5341 = vpow.pop %v5340
    %v5342 = vadd.f32 %v5341, 1.0
    %v5343 = vrcp.pop %v5342
    %v5344 = vmul.f32 1.0, %v5343
    %v5345 = vtanh.pop %v5331
    %v5346 = vxor.u32 %v5332, 2147483648
    %v5347 = vmul.f32 %v5346, 1.442695
    %v5348 = vpow.pop %v5347
    %v5349 = vadd.f32 %v5348, 1.0
    %v5350 = vrcp.pop %v5349
    %v5351 = vmul.f32 1.0, %v5350
    %v5352 = vmul.f32 %v5344, %v5239
    %v5353 = vmul.f32 %v5338, %v5345
    %v5354 = vadd.f32 %v5352, %v5353
    %v5355 = vtanh.pop %v5354
    %v5356 = vmul.f32 %v5351, %v5355
    %v5357 = vpack.c.bf16 %v5356, %v5356
    %5358 = vmatprep.subr.bf16.mxu0 %v5065
    %5359 = vmatpush1.bf16.msra.mxu0 %v5064
    %5360 = vmatprep.subr.bf16.mxu0 %v5069
    %5361 = vmatpush1.bf16.msra.mxu0 %v5068
    %5362 = vmatprep.subr.bf16.mxu0 %v5073
    %5363 = vmatpush1.bf16.msra.mxu0 %v5072
    %5364 = vmatprep.subr.bf16.mxu0 %v5077
    %5365 = vmatpush1.bf16.msra.mxu0 %v5076
    %5366 = vmatprep.subr.bf16.mxu0 %v5081
    %5367 = vmatpush1.bf16.msra.mxu0 %v5080
    %5368 = vmatprep.subr.bf16.mxu0 %v5085
    %5369 = vmatpush1.bf16.msra.mxu0 %v5084
    %5370 = vmatprep.subr.bf16.mxu0 %v5089
    %5371 = vmatpush1.bf16.msra.mxu0 %v5088
    %5372 = vmatprep.subr.bf16.mxu0 %v5093
    %5373 = vmatpush1.bf16.msra.mxu0 %v5092
    %5374 = vmatprep.subr.bf16.mxu0 0
    %5375 = vmatpush1.bf16.msra.mxu0 0
    %5376 = vmatprep.subr.bf16.mxu0 0
    %5377 = vmatpush1.bf16.msra.mxu0 0
    %5378 = vmatprep.subr.bf16.mxu0 0
    %5379 = vmatpush1.bf16.msra.mxu0 0
    %5380 = vmatprep.subr.bf16.mxu0 0
    %5381 = vmatpush1.bf16.msra.mxu0 0
    %5382 = vmatprep.subr.bf16.mxu0 0
    %5383 = vmatpush1.bf16.msra.mxu0 0
    %5384 = vmatprep.subr.bf16.mxu0 0
    %5385 = vmatpush1.bf16.msra.mxu0 0
    %5386 = vmatprep.subr.bf16.mxu0 0
    %5387 = vmatpush1.bf16.msra.mxu0 0
    %5388 = vmatprep.subr.bf16.mxu0 0
    %5389 = vmatpush1.bf16.msra.mxu0 0
    %5390 = vmatprep.mubr.bf16.mxu0 0
    %5391 = vmatmul.mubr.bf16.gmra.mrb[0].mxu0 %v5357
    %v5392 = vpop.f32.mrb[0].mxu0
    %v5393 = vadd.f32 0.0, %v5392
    %v5394 = vpop.f32.mrb[0].mxu0
    %v5395 = vadd.f32 0.0, %v5394
    %v5396 = vpop.f32.mrb[0].mxu0
    %v5397 = vpop.f32.mrb[0].mxu0
    %5398 = vdwg.mxu0
    %5399 = vmatprep.subr.bf16.mxu0 %v5067
    %5400 = vmatpush1.bf16.msra.mxu0 %v5066
    %5401 = vmatprep.subr.bf16.mxu0 %v5071
    %5402 = vmatpush1.bf16.msra.mxu0 %v5070
    %5403 = vmatprep.subr.bf16.mxu0 %v5075
    %5404 = vmatpush1.bf16.msra.mxu0 %v5074
    %5405 = vmatprep.subr.bf16.mxu0 %v5079
    %5406 = vmatpush1.bf16.msra.mxu0 %v5078
    %5407 = vmatprep.subr.bf16.mxu0 %v5083
    %5408 = vmatpush1.bf16.msra.mxu0 %v5082
    %5409 = vmatprep.subr.bf16.mxu0 %v5087
    %5410 = vmatpush1.bf16.msra.mxu0 %v5086
    %5411 = vmatprep.subr.bf16.mxu0 %v5091
    %5412 = vmatpush1.bf16.msra.mxu0 %v5090
    %5413 = vmatprep.subr.bf16.mxu0 %v5095
    %5414 = vmatpush1.bf16.msra.mxu0 %v5094
    %5415 = vmatprep.subr.bf16.mxu0 0
    %5416 = vmatpush1.bf16.msra.mxu0 0
    %5417 = vmatprep.subr.bf16.mxu0 0
    %5418 = vmatpush1.bf16.msra.mxu0 0
    %5419 = vmatprep.subr.bf16.mxu0 0
    %5420 = vmatpush1.bf16.msra.mxu0 0
    %5421 = vmatprep.subr.bf16.mxu0 0
    %5422 = vmatpush1.bf16.msra.mxu0 0
    %5423 = vmatprep.subr.bf16.mxu0 0
    %5424 = vmatpush1.bf16.msra.mxu0 0
    %5425 = vmatprep.subr.bf16.mxu0 0
    %5426 = vmatpush1.bf16.msra.mxu0 0
    %5427 = vmatprep.subr.bf16.mxu0 0
    %5428 = vmatpush1.bf16.msra.mxu0 0
    %5429 = vmatprep.subr.bf16.mxu0 0
    %5430 = vmatpush1.bf16.msra.mxu0 0
    %5431 = vmatprep.mubr.bf16.mxu0 0
    %5432 = vmatmul.mubr.bf16.gmra.mrb[0].mxu0 %v5357
    %v5433 = vpop.f32.mrb[0].mxu0
    %v5434 = vadd.f32 0.0, %v5433
    %v5435 = vpop.f32.mrb[0].mxu0
    %v5436 = vadd.f32 0.0, %v5435
    %v5437 = vpop.f32.mrb[0].mxu0
    %v5438 = vpop.f32.mrb[0].mxu0
    %5439 = vdwg.mxu0
    %v5440 = vld [vmem:[%s1427] sm:$0xff]
    %v5441 = vld [vmem:[%s1427 + $0x8] sm:$0xff]
    %v5442 = vld [vmem:[%s1427 + $0x10] sm:$0xff]
    %v5443 = vld [vmem:[%s1427 + $0x18] sm:$0xff]
    %v5444 = vadd.f32 %v5440, %v5393
    %v5445 = vadd.f32 %v5441, %v5395
    %v5446 = vadd.f32 %v5442, %v5434
    %v5447 = vadd.f32 %v5443, %v5436
    %v5448 = vxor.u32 %v5444, 2147483648
    %v5449 = vmul.f32 %v5448, 1.442695
    %v5450 = vpow.pop %v5449
    %v5451 = vadd.f32 %v5450, 1.0
    %v5452 = vrcp.pop %v5451
    %v5453 = vmul.f32 1.0, %v5452
    %v5454 = vxor.u32 %v5445, 2147483648
    %v5455 = vmul.f32 %v5454, 1.442695
    %v5456 = vpow.pop %v5455
    %v5457 = vadd.f32 %v5456, 1.0
    %v5458 = vrcp.pop %v5457
    %v5459 = vmul.f32 1.0, %v5458
    %v5460 = vtanh.pop %v5446
    %v5461 = vxor.u32 %v5447, 2147483648
    %v5462 = vmul.f32 %v5461, 1.442695
    %v5463 = vpow.pop %v5462
    %v5464 = vadd.f32 %v5463, 1.0
    %v5465 = vrcp.pop %v5464
    %v5466 = vmul.f32 1.0, %v5465
    %v5467 = vmul.f32 %v5459, %v5354
    %v5468 = vmul.f32 %v5453, %v5460
    %v5469 = vadd.f32 %v5467, %v5468
    %v5470 = vtanh.pop %v5469
    %v5471 = vmul.f32 %v5466, %v5470
    %v5472 = vpack.c.bf16 %v5471, %v5471
    %5473 = vmatprep.subr.bf16.mxu0 %v5065
    %5474 = vmatpush1.bf16.msra.mxu0 %v5064
    %5475 = vmatprep.subr.bf16.mxu0 %v5069
    %5476 = vmatpush1.bf16.msra.mxu0 %v5068
    %5477 = vmatprep.subr.bf16.mxu0 %v5073
    %5478 = vmatpush1.bf16.msra.mxu0 %v5072
    %5479 = vmatprep.subr.bf16.mxu0 %v5077
    %5480 = vmatpush1.bf16.msra.mxu0 %v5076
    %5481 = vmatprep.subr.bf16.mxu0 %v5081
    %5482 = vmatpush1.bf16.msra.mxu0 %v5080
    %5483 = vmatprep.subr.bf16.mxu0 %v5085
    %5484 = vmatpush1.bf16.msra.mxu0 %v5084
    %5485 = vmatprep.subr.bf16.mxu0 %v5089
    %5486 = vmatpush1.bf16.msra.mxu0 %v5088
    %5487 = vmatprep.subr.bf16.mxu0 %v5093
    %5488 = vmatpush1.bf16.msra.mxu0 %v5092
    %5489 = vmatprep.subr.bf16.mxu0 0
    %5490 = vmatpush1.bf16.msra.mxu0 0
    %5491 = vmatprep.subr.bf16.mxu0 0
    %5492 = vmatpush1.bf16.msra.mxu0 0
    %5493 = vmatprep.subr.bf16.mxu0 0
    %5494 = vmatpush1.bf16.msra.mxu0 0
    %5495 = vmatprep.subr.bf16.mxu0 0
    %5496 = vmatpush1.bf16.msra.mxu0 0
    %5497 = vmatprep.subr.bf16.mxu0 0
    %5498 = vmatpush1.bf16.msra.mxu0 0
    %5499 = vmatprep.subr.bf16.mxu0 0
    %5500 = vmatpush1.bf16.msra.mxu0 0
    %5501 = vmatprep.subr.bf16.mxu0 0
    %5502 = vmatpush1.bf16.msra.mxu0 0
    %5503 = vmatprep.subr.bf16.mxu0 0
    %5504 = vmatpush1.bf16.msra.mxu0 0
    %5505 = vmatprep.mubr.bf16.mxu0 0
    %5506 = vmatmul.mubr.bf16.gmra.mrb[0].mxu0 %v5472
    %v5507 = vpop.f32.mrb[0].mxu0
    %v5508 = vadd.f32 0.0, %v5507
    %v5509 = vpop.f32.mrb[0].mxu0
    %v5510 = vadd.f32 0.0, %v5509
    %v5511 = vpop.f32.mrb[0].mxu0
    %v5512 = vpop.f32.mrb[0].mxu0
    %5513 = vdwg.mxu0
    %5514 = vmatprep.subr.bf16.mxu0 %v5067
    %5515 = vmatpush1.bf16.msra.mxu0 %v5066
    %5516 = vmatprep.subr.bf16.mxu0 %v5071
    %5517 = vmatpush1.bf16.msra.mxu0 %v5070
    %5518 = vmatprep.subr.bf16.mxu0 %v5075
    %5519 = vmatpush1.bf16.msra.mxu0 %v5074
    %5520 = vmatprep.subr.bf16.mxu0 %v5079
    %5521 = vmatpush1.bf16.msra.mxu0 %v5078
    %5522 = vmatprep.subr.bf16.mxu0 %v5083
    %5523 = vmatpush1.bf16.msra.mxu0 %v5082
    %5524 = vmatprep.subr.bf16.mxu0 %v5087
    %5525 = vmatpush1.bf16.msra.mxu0 %v5086
    %5526 = vmatprep.subr.bf16.mxu0 %v5091
    %5527 = vmatpush1.bf16.msra.mxu0 %v5090
    %5528 = vmatprep.subr.bf16.mxu0 %v5095
    %5529 = vmatpush1.bf16.msra.mxu0 %v5094
    %5530 = vmatprep.subr.bf16.mxu0 0
    %5531 = vmatpush1.bf16.msra.mxu0 0
    %5532 = vmatprep.subr.bf16.mxu0 0
    %5533 = vmatpush1.bf16.msra.mxu0 0
    %5534 = vmatprep.subr.bf16.mxu0 0
    %5535 = vmatpush1.bf16.msra.mxu0 0
    %5536 = vmatprep.subr.bf16.mxu0 0
    %5537 = vmatpush1.bf16.msra.mxu0 0
    %5538 = vmatprep.subr.bf16.mxu0 0
    %5539 = vmatpush1.bf16.msra.mxu0 0
    %5540 = vmatprep.subr.bf16.mxu0 0
    %5541 = vmatpush1.bf16.msra.mxu0 0
    %5542 = vmatprep.subr.bf16.mxu0 0
    %5543 = vmatpush1.bf16.msra.mxu0 0
    %5544 = vmatprep.subr.bf16.mxu0 0
    %5545 = vmatpush1.bf16.msra.mxu0 0
    %5546 = vmatprep.mubr.bf16.mxu0 0
    %5547 = vmatmul.mubr.bf16.gmra.mrb[0].mxu0 %v5472
    %v5548 = vpop.f32.mrb[0].mxu0
    %v5549 = vadd.f32 0.0, %v5548
    %v5550 = vpop.f32.mrb[0].mxu0
    %v5551 = vadd.f32 0.0, %v5550
    %v5552 = vpop.f32.mrb[0].mxu0
    %v5553 = vpop.f32.mrb[0].mxu0
    %5554 = vdwg.mxu0
    %v5555 = vld [vmem:[%s1739] sm:$0xff]
    %v5556 = vld [vmem:[%s1739 + $0x8] sm:$0xff]
    %v5557 = vld [vmem:[%s1739 + $0x10] sm:$0xff]
    %v5558 = vld [vmem:[%s1739 + $0x18] sm:$0xff]
    %v5559 = vadd.f32 %v5555, %v5508
    %v5560 = vadd.f32 %v5556, %v5510
    %v5561 = vadd.f32 %v5557, %v5549
    %v5562 = vadd.f32 %v5558, %v5551
    %v5563 = vxor.u32 %v5559, 2147483648
    %v5564 = vmul.f32 %v5563, 1.442695
    %v5565 = vpow.pop %v5564
    %v5566 = vadd.f32 %v5565, 1.0
    %v5567 = vrcp.pop %v5566
    %v5568 = vmul.f32 1.0, %v5567
    %v5569 = vxor.u32 %v5560, 2147483648
    %v5570 = vmul.f32 %v5569, 1.442695
    %v5571 = vpow.pop %v5570
    %v5572 = vadd.f32 %v5571, 1.0
    %v5573 = vrcp.pop %v5572
    %v5574 = vmul.f32 1.0, %v5573
    %v5575 = vtanh.pop %v5561
    %v5576 = vxor.u32 %v5562, 2147483648
    %v5577 = vmul.f32 %v5576, 1.442695
    %v5578 = vpow.pop %v5577
    %v5579 = vadd.f32 %v5578, 1.0
    %v5580 = vrcp.pop %v5579
    %v5581 = vmul.f32 1.0, %v5580
    %v5582 = vmul.f32 %v5574, %v5469
    %v5583 = vmul.f32 %v5568, %v5575
    %v5584 = vadd.f32 %v5582, %v5583
    %v5585 = vtanh.pop %v5584
    %v5586 = vmul.f32 %v5581, %v5585
    %v5587 = vpack.c.bf16 %v5586, %v5586
    %5588 = vmatprep.subr.bf16.mxu0 %v5065
    %5589 = vmatpush1.bf16.msra.mxu0 %v5064
    %5590 = vmatprep.subr.bf16.mxu0 %v5069
    %5591 = vmatpush1.bf16.msra.mxu0 %v5068
    %5592 = vmatprep.subr.bf16.mxu0 %v5073
    %5593 = vmatpush1.bf16.msra.mxu0 %v5072
    %5594 = vmatprep.subr.bf16.mxu0 %v5077
    %5595 = vmatpush1.bf16.msra.mxu0 %v5076
    %5596 = vmatprep.subr.bf16.mxu0 %v5081
    %5597 = vmatpush1.bf16.msra.mxu0 %v5080
    %5598 = vmatprep.subr.bf16.mxu0 %v5085
    %5599 = vmatpush1.bf16.msra.mxu0 %v5084
    %5600 = vmatprep.subr.bf16.mxu0 %v5089
    %5601 = vmatpush1.bf16.msra.mxu0 %v5088
    %5602 = vmatprep.subr.bf16.mxu0 %v5093
    %5603 = vmatpush1.bf16.msra.mxu0 %v5092
    %5604 = vmatprep.subr.bf16.mxu0 0
    %5605 = vmatpush1.bf16.msra.mxu0 0
    %5606 = vmatprep.subr.bf16.mxu0 0
    %5607 = vmatpush1.bf16.msra.mxu0 0
    %5608 = vmatprep.subr.bf16.mxu0 0
    %5609 = vmatpush1.bf16.msra.mxu0 0
    %5610 = vmatprep.subr.bf16.mxu0 0
    %5611 = vmatpush1.bf16.msra.mxu0 0
    %5612 = vmatprep.subr.bf16.mxu0 0
    %5613 = vmatpush1.bf16.msra.mxu0 0
    %5614 = vmatprep.subr.bf16.mxu0 0
    %5615 = vmatpush1.bf16.msra.mxu0 0
    %5616 = vmatprep.subr.bf16.mxu0 0
    %5617 = vmatpush1.bf16.msra.mxu0 0
    %5618 = vmatprep.subr.bf16.mxu0 0
    %5619 = vmatpush1.bf16.msra.mxu0 0
    %5620 = vmatprep.mubr.bf16.mxu0 0
    %5621 = vmatmul.mubr.bf16.gmra.mrb[0].mxu0 %v5587
    %v5622 = vpop.f32.mrb[0].mxu0
    %v5623 = vadd.f32 0.0, %v5622
    %v5624 = vpop.f32.mrb[0].mxu0
    %v5625 = vadd.f32 0.0, %v5624
    %v5626 = vpop.f32.mrb[0].mxu0
    %v5627 = vpop.f32.mrb[0].mxu0
    %5628 = vdwg.mxu0
    %5629 = vmatprep.subr.bf16.mxu0 %v5067
    %5630 = vmatpush1.bf16.msra.mxu0 %v5066
    %5631 = vmatprep.subr.bf16.mxu0 %v5071
    %5632 = vmatpush1.bf16.msra.mxu0 %v5070
    %5633 = vmatprep.subr.bf16.mxu0 %v5075
    %5634 = vmatpush1.bf16.msra.mxu0 %v5074
    %5635 = vmatprep.subr.bf16.mxu0 %v5079
    %5636 = vmatpush1.bf16.msra.mxu0 %v5078
    %5637 = vmatprep.subr.bf16.mxu0 %v5083
    %5638 = vmatpush1.bf16.msra.mxu0 %v5082
    %5639 = vmatprep.subr.bf16.mxu0 %v5087
    %5640 = vmatpush1.bf16.msra.mxu0 %v5086
    %5641 = vmatprep.subr.bf16.mxu0 %v5091
    %5642 = vmatpush1.bf16.msra.mxu0 %v5090
    %5643 = vmatprep.subr.bf16.mxu0 %v5095
    %5644 = vmatpush1.bf16.msra.mxu0 %v5094
    %5645 = vmatprep.subr.bf16.mxu0 0
    %5646 = vmatpush1.bf16.msra.mxu0 0
    %5647 = vmatprep.subr.bf16.mxu0 0
    %5648 = vmatpush1.bf16.msra.mxu0 0
    %5649 = vmatprep.subr.bf16.mxu0 0
    %5650 = vmatpush1.bf16.msra.mxu0 0
    %5651 = vmatprep.subr.bf16.mxu0 0
    %5652 = vmatpush1.bf16.msra.mxu0 0
    %5653 = vmatprep.subr.bf16.mxu0 0
    %5654 = vmatpush1.bf16.msra.mxu0 0
    %5655 = vmatprep.subr.bf16.mxu0 0
    %5656 = vmatpush1.bf16.msra.mxu0 0
    %5657 = vmatprep.subr.bf16.mxu0 0
    %5658 = vmatpush1.bf16.msra.mxu0 0
    %5659 = vmatprep.subr.bf16.mxu0 0
    %5660 = vmatpush1.bf16.msra.mxu0 0
    %5661 = vmatprep.mubr.bf16.mxu0 0
    %5662 = vmatmul.mubr.bf16.gmra.mrb[0].mxu0 %v5587
    %v5663 = vpop.f32.mrb[0].mxu0
    %v5664 = vadd.f32 0.0, %v5663
    %v5665 = vpop.f32.mrb[0].mxu0
    %v5666 = vadd.f32 0.0, %v5665
    %v5667 = vpop.f32.mrb[0].mxu0
    %v5668 = vpop.f32.mrb[0].mxu0
    %5669 = vdwg.mxu0
    %v5670 = vld [vmem:[%s2051] sm:$0xff]
    %v5671 = vld [vmem:[%s2051 + $0x8] sm:$0xff]
    %v5672 = vld [vmem:[%s2051 + $0x10] sm:$0xff]
    %v5673 = vld [vmem:[%s2051 + $0x18] sm:$0xff]
    %v5674 = vadd.f32 %v5670, %v5623
    %v5675 = vadd.f32 %v5671, %v5625
    %v5676 = vadd.f32 %v5672, %v5664
    %v5677 = vadd.f32 %v5673, %v5666
    %v5678 = vxor.u32 %v5674, 2147483648
    %v5679 = vmul.f32 %v5678, 1.442695
    %v5680 = vpow.pop %v5679
    %v5681 = vadd.f32 %v5680, 1.0
    %v5682 = vrcp.pop %v5681
    %v5683 = vmul.f32 1.0, %v5682
    %v5684 = vxor.u32 %v5675, 2147483648
    %v5685 = vmul.f32 %v5684, 1.442695
    %v5686 = vpow.pop %v5685
    %v5687 = vadd.f32 %v5686, 1.0
    %v5688 = vrcp.pop %v5687
    %v5689 = vmul.f32 1.0, %v5688
    %v5690 = vtanh.pop %v5676
    %v5691 = vxor.u32 %v5677, 2147483648
    %v5692 = vmul.f32 %v5691, 1.442695
    %v5693 = vpow.pop %v5692
    %v5694 = vadd.f32 %v5693, 1.0
    %v5695 = vrcp.pop %v5694
    %v5696 = vmul.f32 1.0, %v5695
    %v5697 = vmul.f32 %v5689, %v5584
    %v5698 = vmul.f32 %v5683, %v5690
    %v5699 = vadd.f32 %v5697, %v5698
    %v5700 = vtanh.pop %v5699
    %v5701 = vmul.f32 %v5696, %v5700
    %v5702 = vpack.c.bf16 %v5701, %v5701
    %5703 = vmatprep.subr.bf16.mxu0 %v5065
    %5704 = vmatpush1.bf16.msra.mxu0 %v5064
    %5705 = vmatprep.subr.bf16.mxu0 %v5069
    %5706 = vmatpush1.bf16.msra.mxu0 %v5068
    %5707 = vmatprep.subr.bf16.mxu0 %v5073
    %5708 = vmatpush1.bf16.msra.mxu0 %v5072
    %5709 = vmatprep.subr.bf16.mxu0 %v5077
    %5710 = vmatpush1.bf16.msra.mxu0 %v5076
    %5711 = vmatprep.subr.bf16.mxu0 %v5081
    %5712 = vmatpush1.bf16.msra.mxu0 %v5080
    %5713 = vmatprep.subr.bf16.mxu0 %v5085
    %5714 = vmatpush1.bf16.msra.mxu0 %v5084
    %5715 = vmatprep.subr.bf16.mxu0 %v5089
    %5716 = vmatpush1.bf16.msra.mxu0 %v5088
    %5717 = vmatprep.subr.bf16.mxu0 %v5093
    %5718 = vmatpush1.bf16.msra.mxu0 %v5092
    %5719 = vmatprep.subr.bf16.mxu0 0
    %5720 = vmatpush1.bf16.msra.mxu0 0
    %5721 = vmatprep.subr.bf16.mxu0 0
    %5722 = vmatpush1.bf16.msra.mxu0 0
    %5723 = vmatprep.subr.bf16.mxu0 0
    %5724 = vmatpush1.bf16.msra.mxu0 0
    %5725 = vmatprep.subr.bf16.mxu0 0
    %5726 = vmatpush1.bf16.msra.mxu0 0
    %5727 = vmatprep.subr.bf16.mxu0 0
    %5728 = vmatpush1.bf16.msra.mxu0 0
    %5729 = vmatprep.subr.bf16.mxu0 0
    %5730 = vmatpush1.bf16.msra.mxu0 0
    %5731 = vmatprep.subr.bf16.mxu0 0
    %5732 = vmatpush1.bf16.msra.mxu0 0
    %5733 = vmatprep.subr.bf16.mxu0 0
    %5734 = vmatpush1.bf16.msra.mxu0 0
    %5735 = vmatprep.mubr.bf16.mxu0 0
    %5736 = vmatmul.mubr.bf16.gmra.mrb[0].mxu0 %v5702
    %v5737 = vpop.f32.mrb[0].mxu0
    %v5738 = vadd.f32 0.0, %v5737
    %v5739 = vpop.f32.mrb[0].mxu0
    %v5740 = vadd.f32 0.0, %v5739
    %v5741 = vpop.f32.mrb[0].mxu0
    %v5742 = vpop.f32.mrb[0].mxu0
    %5743 = vdwg.mxu0
    %5744 = vmatprep.subr.bf16.mxu0 %v5067
    %5745 = vmatpush1.bf16.msra.mxu0 %v5066
    %5746 = vmatprep.subr.bf16.mxu0 %v5071
    %5747 = vmatpush1.bf16.msra.mxu0 %v5070
    %5748 = vmatprep.subr.bf16.mxu0 %v5075
    %5749 = vmatpush1.bf16.msra.mxu0 %v5074
    %5750 = vmatprep.subr.bf16.mxu0 %v5079
    %5751 = vmatpush1.bf16.msra.mxu0 %v5078
    %5752 = vmatprep.subr.bf16.mxu0 %v5083
    %5753 = vmatpush1.bf16.msra.mxu0 %v5082
    %5754 = vmatprep.subr.bf16.mxu0 %v5087
    %5755 = vmatpush1.bf16.msra.mxu0 %v5086
    %5756 = vmatprep.subr.bf16.mxu0 %v5091
    %5757 = vmatpush1.bf16.msra.mxu0 %v5090
    %5758 = vmatprep.subr.bf16.mxu0 %v5095
    %5759 = vmatpush1.bf16.msra.mxu0 %v5094
    %5760 = vmatprep.subr.bf16.mxu0 0
    %5761 = vmatpush1.bf16.msra.mxu0 0
    %5762 = vmatprep.subr.bf16.mxu0 0
    %5763 = vmatpush1.bf16.msra.mxu0 0
    %5764 = vmatprep.subr.bf16.mxu0 0
    %5765 = vmatpush1.bf16.msra.mxu0 0
    %5766 = vmatprep.subr.bf16.mxu0 0
    %5767 = vmatpush1.bf16.msra.mxu0 0
    %5768 = vmatprep.subr.bf16.mxu0 0
    %5769 = vmatpush1.bf16.msra.mxu0 0
    %5770 = vmatprep.subr.bf16.mxu0 0
    %5771 = vmatpush1.bf16.msra.mxu0 0
    %5772 = vmatprep.subr.bf16.mxu0 0
    %5773 = vmatpush1.bf16.msra.mxu0 0
    %5774 = vmatprep.subr.bf16.mxu0 0
    %5775 = vmatpush1.bf16.msra.mxu0 0
    %5776 = vmatprep.mubr.bf16.mxu0 0
    %5777 = vmatmul.mubr.bf16.gmra.mrb[0].mxu0 %v5702
    %v5778 = vpop.f32.mrb[0].mxu0
    %v5779 = vadd.f32 0.0, %v5778
    %v5780 = vpop.f32.mrb[0].mxu0
    %v5781 = vadd.f32 0.0, %v5780
    %v5782 = vpop.f32.mrb[0].mxu0
    %v5783 = vpop.f32.mrb[0].mxu0
    %5784 = vdwg.mxu0
    %v5785 = vld [vmem:[%s2363] sm:$0xff]
    %v5786 = vld [vmem:[%s2363 + $0x8] sm:$0xff]
    %v5787 = vld [vmem:[%s2363 + $0x10] sm:$0xff]
    %v5788 = vld [vmem:[%s2363 + $0x18] sm:$0xff]
    %v5789 = vadd.f32 %v5785, %v5738
    %v5790 = vadd.f32 %v5786, %v5740
    %v5791 = vadd.f32 %v5787, %v5779
    %v5792 = vadd.f32 %v5788, %v5781
    %v5793 = vxor.u32 %v5789, 2147483648
    %v5794 = vmul.f32 %v5793, 1.442695
    %v5795 = vpow.pop %v5794
    %v5796 = vadd.f32 %v5795, 1.0
    %v5797 = vrcp.pop %v5796
    %v5798 = vmul.f32 1.0, %v5797
    %v5799 = vxor.u32 %v5790, 2147483648
    %v5800 = vmul.f32 %v5799, 1.442695
    %v5801 = vpow.pop %v5800
    %v5802 = vadd.f32 %v5801, 1.0
    %v5803 = vrcp.pop %v5802
    %v5804 = vmul.f32 1.0, %v5803
    %v5805 = vtanh.pop %v5791
    %v5806 = vxor.u32 %v5792, 2147483648
    %v5807 = vmul.f32 %v5806, 1.442695
    %v5808 = vpow.pop %v5807
    %v5809 = vadd.f32 %v5808, 1.0
    %v5810 = vrcp.pop %v5809
    %v5811 = vmul.f32 1.0, %v5810
    %v5812 = vmul.f32 %v5804, %v5699
    %v5813 = vmul.f32 %v5798, %v5805
    %v5814 = vadd.f32 %v5812, %v5813
    %v5815 = vtanh.pop %v5814
    %v5816 = vmul.f32 %v5811, %v5815
    %v5817 = vpack.c.bf16 %v5816, %v5816
    %5818 = vmatprep.subr.bf16.mxu0 %v5065
    %5819 = vmatpush1.bf16.msra.mxu0 %v5064
    %5820 = vmatprep.subr.bf16.mxu0 %v5069
    %5821 = vmatpush1.bf16.msra.mxu0 %v5068
    %5822 = vmatprep.subr.bf16.mxu0 %v5073
    %5823 = vmatpush1.bf16.msra.mxu0 %v5072
    %5824 = vmatprep.subr.bf16.mxu0 %v5077
    %5825 = vmatpush1.bf16.msra.mxu0 %v5076
    %5826 = vmatprep.subr.bf16.mxu0 %v5081
    %5827 = vmatpush1.bf16.msra.mxu0 %v5080
    %5828 = vmatprep.subr.bf16.mxu0 %v5085
    %5829 = vmatpush1.bf16.msra.mxu0 %v5084
    %5830 = vmatprep.subr.bf16.mxu0 %v5089
    %5831 = vmatpush1.bf16.msra.mxu0 %v5088
    %5832 = vmatprep.subr.bf16.mxu0 %v5093
    %5833 = vmatpush1.bf16.msra.mxu0 %v5092
    %5834 = vmatprep.subr.bf16.mxu0 0
    %5835 = vmatpush1.bf16.msra.mxu0 0
    %5836 = vmatprep.subr.bf16.mxu0 0
    %5837 = vmatpush1.bf16.msra.mxu0 0
    %5838 = vmatprep.subr.bf16.mxu0 0
    %5839 = vmatpush1.bf16.msra.mxu0 0
    %5840 = vmatprep.subr.bf16.mxu0 0
    %5841 = vmatpush1.bf16.msra.mxu0 0
    %5842 = vmatprep.subr.bf16.mxu0 0
    %5843 = vmatpush1.bf16.msra.mxu0 0
    %5844 = vmatprep.subr.bf16.mxu0 0
    %5845 = vmatpush1.bf16.msra.mxu0 0
    %5846 = vmatprep.subr.bf16.mxu0 0
    %5847 = vmatpush1.bf16.msra.mxu0 0
    %5848 = vmatprep.subr.bf16.mxu0 0
    %5849 = vmatpush1.bf16.msra.mxu0 0
    %5850 = vmatprep.mubr.bf16.mxu0 0
    %5851 = vmatmul.mubr.bf16.gmra.mrb[0].mxu0 %v5817
    %v5852 = vpop.f32.mrb[0].mxu0
    %v5853 = vadd.f32 0.0, %v5852
    %v5854 = vpop.f32.mrb[0].mxu0
    %v5855 = vadd.f32 0.0, %v5854
    %v5856 = vpop.f32.mrb[0].mxu0
    %v5857 = vpop.f32.mrb[0].mxu0
    %5858 = vdwg.mxu0
    %5859 = vmatprep.subr.bf16.mxu0 %v5067
    %5860 = vmatpush1.bf16.msra.mxu0 %v5066
    %5861 = vmatprep.subr.bf16.mxu0 %v5071
    %5862 = vmatpush1.bf16.msra.mxu0 %v5070
    %5863 = vmatprep.subr.bf16.mxu0 %v5075
    %5864 = vmatpush1.bf16.msra.mxu0 %v5074
    %5865 = vmatprep.subr.bf16.mxu0 %v5079
    %5866 = vmatpush1.bf16.msra.mxu0 %v5078
    %5867 = vmatprep.subr.bf16.mxu0 %v5083
    %5868 = vmatpush1.bf16.msra.mxu0 %v5082
    %5869 = vmatprep.subr.bf16.mxu0 %v5087
    %5870 = vmatpush1.bf16.msra.mxu0 %v5086
    %5871 = vmatprep.subr.bf16.mxu0 %v5091
    %5872 = vmatpush1.bf16.msra.mxu0 %v5090
    %5873 = vmatprep.subr.bf16.mxu0 %v5095
    %5874 = vmatpush1.bf16.msra.mxu0 %v5094
    %5875 = vmatprep.subr.bf16.mxu0 0
    %5876 = vmatpush1.bf16.msra.mxu0 0
    %5877 = vmatprep.subr.bf16.mxu0 0
    %5878 = vmatpush1.bf16.msra.mxu0 0
    %5879 = vmatprep.subr.bf16.mxu0 0
    %5880 = vmatpush1.bf16.msra.mxu0 0
    %5881 = vmatprep.subr.bf16.mxu0 0
    %5882 = vmatpush1.bf16.msra.mxu0 0
    %5883 = vmatprep.subr.bf16.mxu0 0
    %5884 = vmatpush1.bf16.msra.mxu0 0
    %5885 = vmatprep.subr.bf16.mxu0 0
    %5886 = vmatpush1.bf16.msra.mxu0 0
    %5887 = vmatprep.subr.bf16.mxu0 0
    %5888 = vmatpush1.bf16.msra.mxu0 0
    %5889 = vmatprep.subr.bf16.mxu0 0
    %5890 = vmatpush1.bf16.msra.mxu0 0
    %5891 = vmatprep.mubr.bf16.mxu0 0
    %5892 = vmatmul.mubr.bf16.gmra.mrb[0].mxu0 %v5817
    %v5893 = vpop.f32.mrb[0].mxu0
    %v5894 = vadd.f32 0.0, %v5893
    %v5895 = vpop.f32.mrb[0].mxu0
    %v5896 = vadd.f32 0.0, %v5895
    %v5897 = vpop.f32.mrb[0].mxu0
    %v5898 = vpop.f32.mrb[0].mxu0
    %5899 = vdwg.mxu0
    %v5900 = vld [vmem:[%s2675] sm:$0xff]
    %v5901 = vld [vmem:[%s2675 + $0x8] sm:$0xff]
    %v5902 = vld [vmem:[%s2675 + $0x10] sm:$0xff]
    %v5903 = vld [vmem:[%s2675 + $0x18] sm:$0xff]
    %v5904 = vadd.f32 %v5900, %v5853
    %v5905 = vadd.f32 %v5901, %v5855
    %v5906 = vadd.f32 %v5902, %v5894
    %v5907 = vadd.f32 %v5903, %v5896
    %v5908 = vxor.u32 %v5904, 2147483648
    %v5909 = vmul.f32 %v5908, 1.442695
    %v5910 = vpow.pop %v5909
    %v5911 = vadd.f32 %v5910, 1.0
    %v5912 = vrcp.pop %v5911
    %v5913 = vmul.f32 1.0, %v5912
    %v5914 = vxor.u32 %v5905, 2147483648
    %v5915 = vmul.f32 %v5914, 1.442695
    %v5916 = vpow.pop %v5915
    %v5917 = vadd.f32 %v5916, 1.0
    %v5918 = vrcp.pop %v5917
    %v5919 = vmul.f32 1.0, %v5918
    %v5920 = vtanh.pop %v5906
    %v5921 = vxor.u32 %v5907, 2147483648
    %v5922 = vmul.f32 %v5921, 1.442695
    %v5923 = vpow.pop %v5922
    %v5924 = vadd.f32 %v5923, 1.0
    %v5925 = vrcp.pop %v5924
    %v5926 = vmul.f32 1.0, %v5925
    %v5927 = vmul.f32 %v5919, %v5814
    %v5928 = vmul.f32 %v5913, %v5920
    %v5929 = vadd.f32 %v5927, %v5928
    %v5930 = vtanh.pop %v5929
    %v5931 = vmul.f32 %v5926, %v5930
    %v5932 = vpack.c.bf16 %v5931, %v5931
    %5933 = vmatprep.subr.bf16.mxu0 %v5065
    %5934 = vmatpush1.bf16.msra.mxu0 %v5064
    %5935 = vmatprep.subr.bf16.mxu0 %v5069
    %5936 = vmatpush1.bf16.msra.mxu0 %v5068
    %5937 = vmatprep.subr.bf16.mxu0 %v5073
    %5938 = vmatpush1.bf16.msra.mxu0 %v5072
    %5939 = vmatprep.subr.bf16.mxu0 %v5077
    %5940 = vmatpush1.bf16.msra.mxu0 %v5076
    %5941 = vmatprep.subr.bf16.mxu0 %v5081
    %5942 = vmatpush1.bf16.msra.mxu0 %v5080
    %5943 = vmatprep.subr.bf16.mxu0 %v5085
    %5944 = vmatpush1.bf16.msra.mxu0 %v5084
    %5945 = vmatprep.subr.bf16.mxu0 %v5089
    %5946 = vmatpush1.bf16.msra.mxu0 %v5088
    %5947 = vmatprep.subr.bf16.mxu0 %v5093
    %5948 = vmatpush1.bf16.msra.mxu0 %v5092
    %5949 = vmatprep.subr.bf16.mxu0 0
    %5950 = vmatpush1.bf16.msra.mxu0 0
    %5951 = vmatprep.subr.bf16.mxu0 0
    %5952 = vmatpush1.bf16.msra.mxu0 0
    %5953 = vmatprep.subr.bf16.mxu0 0
    %5954 = vmatpush1.bf16.msra.mxu0 0
    %5955 = vmatprep.subr.bf16.mxu0 0
    %5956 = vmatpush1.bf16.msra.mxu0 0
    %5957 = vmatprep.subr.bf16.mxu0 0
    %5958 = vmatpush1.bf16.msra.mxu0 0
    %5959 = vmatprep.subr.bf16.mxu0 0
    %5960 = vmatpush1.bf16.msra.mxu0 0
    %5961 = vmatprep.subr.bf16.mxu0 0
    %5962 = vmatpush1.bf16.msra.mxu0 0
    %5963 = vmatprep.subr.bf16.mxu0 0
    %5964 = vmatpush1.bf16.msra.mxu0 0
    %5965 = vmatprep.mubr.bf16.mxu0 0
    %5966 = vmatmul.mubr.bf16.gmra.mrb[0].mxu0 %v5932
    %v5967 = vpop.f32.mrb[0].mxu0
    %v5968 = vadd.f32 0.0, %v5967
    %v5969 = vpop.f32.mrb[0].mxu0
    %v5970 = vadd.f32 0.0, %v5969
    %v5971 = vpop.f32.mrb[0].mxu0
    %v5972 = vpop.f32.mrb[0].mxu0
    %5973 = vdwg.mxu0
    %5974 = vmatprep.subr.bf16.mxu0 %v5067
    %5975 = vmatpush1.bf16.msra.mxu0 %v5066
    %5976 = vmatprep.subr.bf16.mxu0 %v5071
    %5977 = vmatpush1.bf16.msra.mxu0 %v5070
    %5978 = vmatprep.subr.bf16.mxu0 %v5075
    %5979 = vmatpush1.bf16.msra.mxu0 %v5074
    %5980 = vmatprep.subr.bf16.mxu0 %v5079
    %5981 = vmatpush1.bf16.msra.mxu0 %v5078
    %5982 = vmatprep.subr.bf16.mxu0 %v5083
    %5983 = vmatpush1.bf16.msra.mxu0 %v5082
    %5984 = vmatprep.subr.bf16.mxu0 %v5087
    %5985 = vmatpush1.bf16.msra.mxu0 %v5086
    %5986 = vmatprep.subr.bf16.mxu0 %v5091
    %5987 = vmatpush1.bf16.msra.mxu0 %v5090
    %5988 = vmatprep.subr.bf16.mxu0 %v5095
    %5989 = vmatpush1.bf16.msra.mxu0 %v5094
    %5990 = vmatprep.subr.bf16.mxu0 0
    %5991 = vmatpush1.bf16.msra.mxu0 0
    %5992 = vmatprep.subr.bf16.mxu0 0
    %5993 = vmatpush1.bf16.msra.mxu0 0
    %5994 = vmatprep.subr.bf16.mxu0 0
    %5995 = vmatpush1.bf16.msra.mxu0 0
    %5996 = vmatprep.subr.bf16.mxu0 0
    %5997 = vmatpush1.bf16.msra.mxu0 0
    %5998 = vmatprep.subr.bf16.mxu0 0
    %5999 = vmatpush1.bf16.msra.mxu0 0
    %6000 = vmatprep.subr.bf16.mxu0 0
    %6001 = vmatpush1.bf16.msra.mxu0 0
    %6002 = vmatprep.subr.bf16.mxu0 0
    %6003 = vmatpush1.bf16.msra.mxu0 0
    %6004 = vmatprep.subr.bf16.mxu0 0
    %6005 = vmatpush1.bf16.msra.mxu0 0
    %6006 = vmatprep.mubr.bf16.mxu0 0
    %6007 = vmatmul.mubr.bf16.gmra.mrb[0].mxu0 %v5932
    %v6008 = vpop.f32.mrb[0].mxu0
    %v6009 = vadd.f32 0.0, %v6008
    %v6010 = vpop.f32.mrb[0].mxu0
    %v6011 = vadd.f32 0.0, %v6010
    %v6012 = vpop.f32.mrb[0].mxu0
    %v6013 = vpop.f32.mrb[0].mxu0
    %6014 = vdwg.mxu0
    %v6015 = vld [vmem:[%s2985] sm:$0xff]
    %v6016 = vld [vmem:[%s2985 + $0x8] sm:$0xff]
    %v6017 = vld [vmem:[%s2985 + $0x10] sm:$0xff]
    %v6018 = vld [vmem:[%s2985 + $0x18] sm:$0xff]
    %v6019 = vadd.f32 %v6015, %v5968
    %v6020 = vadd.f32 %v6016, %v5970
    %v6021 = vadd.f32 %v6017, %v6009
    %v6022 = vadd.f32 %v6018, %v6011
    %v6023 = vxor.u32 %v6019, 2147483648
    %v6024 = vmul.f32 %v6023, 1.442695
    %v6025 = vpow.pop %v6024
    %v6026 = vadd.f32 %v6025, 1.0
    %v6027 = vrcp.pop %v6026
    %v6028 = vmul.f32 1.0, %v6027
    %v6029 = vxor.u32 %v6020, 2147483648
    %v6030 = vmul.f32 %v6029, 1.442695
    %v6031 = vpow.pop %v6030
    %v6032 = vadd.f32 %v6031, 1.0
    %v6033 = vrcp.pop %v6032
    %v6034 = vmul.f32 1.0, %v6033
    %v6035 = vtanh.pop %v6021
    %v6036 = vxor.u32 %v6022, 2147483648
    %v6037 = vmul.f32 %v6036, 1.442695
    %v6038 = vpow.pop %v6037
    %v6039 = vadd.f32 %v6038, 1.0
    %v6040 = vrcp.pop %v6039
    %v6041 = vmul.f32 1.0, %v6040
    %v6042 = vmul.f32 %v6034, %v5929
    %v6043 = vmul.f32 %v6028, %v6035
    %v6044 = vadd.f32 %v6042, %v6043
    %v6045 = vtanh.pop %v6044
    %v6046 = vmul.f32 %v6041, %v6045
    %v6047 = vpack.c.bf16 %v6046, %v6046
    %6048 = vmatprep.subr.bf16.mxu0 %v5065
    %6049 = vmatpush1.bf16.msra.mxu0 %v5064
    %6050 = vmatprep.subr.bf16.mxu0 %v5069
    %6051 = vmatpush1.bf16.msra.mxu0 %v5068
    %6052 = vmatprep.subr.bf16.mxu0 %v5073
    %6053 = vmatpush1.bf16.msra.mxu0 %v5072
    %6054 = vmatprep.subr.bf16.mxu0 %v5077
    %6055 = vmatpush1.bf16.msra.mxu0 %v5076
    %6056 = vmatprep.subr.bf16.mxu0 %v5081
    %6057 = vmatpush1.bf16.msra.mxu0 %v5080
    %6058 = vmatprep.subr.bf16.mxu0 %v5085
    %6059 = vmatpush1.bf16.msra.mxu0 %v5084
    %6060 = vmatprep.subr.bf16.mxu0 %v5089
    %6061 = vmatpush1.bf16.msra.mxu0 %v5088
    %6062 = vmatprep.subr.bf16.mxu0 %v5093
    %6063 = vmatpush1.bf16.msra.mxu0 %v5092
    %6064 = vmatprep.subr.bf16.mxu0 0
    %6065 = vmatpush1.bf16.msra.mxu0 0
    %6066 = vmatprep.subr.bf16.mxu0 0
    %6067 = vmatpush1.bf16.msra.mxu0 0
    %6068 = vmatprep.subr.bf16.mxu0 0
    %6069 = vmatpush1.bf16.msra.mxu0 0
    %6070 = vmatprep.subr.bf16.mxu0 0
    %6071 = vmatpush1.bf16.msra.mxu0 0
    %6072 = vmatprep.subr.bf16.mxu0 0
    %6073 = vmatpush1.bf16.msra.mxu0 0
    %6074 = vmatprep.subr.bf16.mxu0 0
    %6075 = vmatpush1.bf16.msra.mxu0 0
    %6076 = vmatprep.subr.bf16.mxu0 0
    %6077 = vmatpush1.bf16.msra.mxu0 0
    %6078 = vmatprep.subr.bf16.mxu0 0
    %6079 = vmatpush1.bf16.msra.mxu0 0
    %6080 = vmatprep.mubr.bf16.mxu0 0
    %6081 = vmatmul.mubr.bf16.gmra.mrb[0].mxu0 %v6047
    %v6082 = vpop.f32.mrb[0].mxu0
    %v6083 = vadd.f32 0.0, %v6082
    %v6084 = vpop.f32.mrb[0].mxu0
    %v6085 = vadd.f32 0.0, %v6084
    %v6086 = vpop.f32.mrb[0].mxu0
    %v6087 = vpop.f32.mrb[0].mxu0
    %6088 = vdwg.mxu0
    %6089 = vmatprep.subr.bf16.mxu0 %v5067
    %6090 = vmatpush1.bf16.msra.mxu0 %v5066
    %6091 = vmatprep.subr.bf16.mxu0 %v5071
    %6092 = vmatpush1.bf16.msra.mxu0 %v5070
    %6093 = vmatprep.subr.bf16.mxu0 %v5075
    %6094 = vmatpush1.bf16.msra.mxu0 %v5074
    %6095 = vmatprep.subr.bf16.mxu0 %v5079
    %6096 = vmatpush1.bf16.msra.mxu0 %v5078
    %6097 = vmatprep.subr.bf16.mxu0 %v5083
    %6098 = vmatpush1.bf16.msra.mxu0 %v5082
    %6099 = vmatprep.subr.bf16.mxu0 %v5087
    %6100 = vmatpush1.bf16.msra.mxu0 %v5086
    %6101 = vmatprep.subr.bf16.mxu0 %v5091
    %6102 = vmatpush1.bf16.msra.mxu0 %v5090
    %6103 = vmatprep.subr.bf16.mxu0 %v5095
    %6104 = vmatpush1.bf16.msra.mxu0 %v5094
    %6105 = vmatprep.subr.bf16.mxu0 0
    %6106 = vmatpush1.bf16.msra.mxu0 0
    %6107 = vmatprep.subr.bf16.mxu0 0
    %6108 = vmatpush1.bf16.msra.mxu0 0
    %6109 = vmatprep.subr.bf16.mxu0 0
    %6110 = vmatpush1.bf16.msra.mxu0 0
    %6111 = vmatprep.subr.bf16.mxu0 0
    %6112 = vmatpush1.bf16.msra.mxu0 0
    %6113 = vmatprep.subr.bf16.mxu0 0
    %6114 = vmatpush1.bf16.msra.mxu0 0
    %6115 = vmatprep.subr.bf16.mxu0 0
    %6116 = vmatpush1.bf16.msra.mxu0 0
    %6117 = vmatprep.subr.bf16.mxu0 0
    %6118 = vmatpush1.bf16.msra.mxu0 0
    %6119 = vmatprep.subr.bf16.mxu0 0
    %6120 = vmatpush1.bf16.msra.mxu0 0
    %6121 = vmatprep.mubr.bf16.mxu0 0
    %6122 = vmatmul.mubr.bf16.gmra.mrb[0].mxu0 %v6047
    %v6123 = vpop.f32.mrb[0].mxu0
    %v6124 = vadd.f32 0.0, %v6123
    %v6125 = vpop.f32.mrb[0].mxu0
    %v6126 = vadd.f32 0.0, %v6125
    %v6127 = vpop.f32.mrb[0].mxu0
    %v6128 = vpop.f32.mrb[0].mxu0
    %6129 = vdwg.mxu0
    %v6130 = vld [vmem:[%s3295] sm:$0xff]
    %v6131 = vld [vmem:[%s3295 + $0x8] sm:$0xff]
    %v6132 = vld [vmem:[%s3295 + $0x10] sm:$0xff]
    %v6133 = vld [vmem:[%s3295 + $0x18] sm:$0xff]
    %v6134 = vadd.f32 %v6130, %v6083
    %v6135 = vadd.f32 %v6131, %v6085
    %v6136 = vadd.f32 %v6132, %v6124
    %v6137 = vadd.f32 %v6133, %v6126
    %v6138 = vxor.u32 %v6134, 2147483648
    %v6139 = vmul.f32 %v6138, 1.442695
    %v6140 = vpow.pop %v6139
    %v6141 = vadd.f32 %v6140, 1.0
    %v6142 = vrcp.pop %v6141
    %v6143 = vmul.f32 1.0, %v6142
    %v6144 = vxor.u32 %v6135, 2147483648
    %v6145 = vmul.f32 %v6144, 1.442695
    %v6146 = vpow.pop %v6145
    %v6147 = vadd.f32 %v6146, 1.0
    %v6148 = vrcp.pop %v6147
    %v6149 = vmul.f32 1.0, %v6148
    %v6150 = vtanh.pop %v6136
    %v6151 = vxor.u32 %v6137, 2147483648
    %v6152 = vmul.f32 %v6151, 1.442695
    %v6153 = vpow.pop %v6152
    %v6154 = vadd.f32 %v6153, 1.0
    %v6155 = vrcp.pop %v6154
    %v6156 = vmul.f32 1.0, %v6155
    %v6157 = vmul.f32 %v6149, %v6044
    %v6158 = vmul.f32 %v6143, %v6150
    %v6159 = vadd.f32 %v6157, %v6158
    %v6160 = vtanh.pop %v6159
    %v6161 = vmul.f32 %v6156, %v6160
    %v6162 = vpack.c.bf16 %v6161, %v6161
    %6163 = vmatprep.subr.bf16.mxu0 %v5065
    %6164 = vmatpush1.bf16.msra.mxu0 %v5064
    %6165 = vmatprep.subr.bf16.mxu0 %v5069
    %6166 = vmatpush1.bf16.msra.mxu0 %v5068
    %6167 = vmatprep.subr.bf16.mxu0 %v5073
    %6168 = vmatpush1.bf16.msra.mxu0 %v5072
    %6169 = vmatprep.subr.bf16.mxu0 %v5077
    %6170 = vmatpush1.bf16.msra.mxu0 %v5076
    %6171 = vmatprep.subr.bf16.mxu0 %v5081
    %6172 = vmatpush1.bf16.msra.mxu0 %v5080
    %6173 = vmatprep.subr.bf16.mxu0 %v5085
    %6174 = vmatpush1.bf16.msra.mxu0 %v5084
    %6175 = vmatprep.subr.bf16.mxu0 %v5089
    %6176 = vmatpush1.bf16.msra.mxu0 %v5088
    %6177 = vmatprep.subr.bf16.mxu0 %v5093
    %6178 = vmatpush1.bf16.msra.mxu0 %v5092
    %6179 = vmatprep.subr.bf16.mxu0 0
    %6180 = vmatpush1.bf16.msra.mxu0 0
    %6181 = vmatprep.subr.bf16.mxu0 0
    %6182 = vmatpush1.bf16.msra.mxu0 0
    %6183 = vmatprep.subr.bf16.mxu0 0
    %6184 = vmatpush1.bf16.msra.mxu0 0
    %6185 = vmatprep.subr.bf16.mxu0 0
    %6186 = vmatpush1.bf16.msra.mxu0 0
    %6187 = vmatprep.subr.bf16.mxu0 0
    %6188 = vmatpush1.bf16.msra.mxu0 0
    %6189 = vmatprep.subr.bf16.mxu0 0
    %6190 = vmatpush1.bf16.msra.mxu0 0
    %6191 = vmatprep.subr.bf16.mxu0 0
    %6192 = vmatpush1.bf16.msra.mxu0 0
    %6193 = vmatprep.subr.bf16.mxu0 0
    %6194 = vmatpush1.bf16.msra.mxu0 0
    %6195 = vmatprep.mubr.bf16.mxu0 0
    %6196 = vmatmul.mubr.bf16.gmra.mrb[0].mxu0 %v6162
    %v6197 = vpop.f32.mrb[0].mxu0
    %v6198 = vadd.f32 0.0, %v6197
    %v6199 = vpop.f32.mrb[0].mxu0
    %v6200 = vadd.f32 0.0, %v6199
    %v6201 = vpop.f32.mrb[0].mxu0
    %v6202 = vpop.f32.mrb[0].mxu0
    %6203 = vdwg.mxu0
    %6204 = vmatprep.subr.bf16.mxu0 %v5067
    %6205 = vmatpush1.bf16.msra.mxu0 %v5066
    %6206 = vmatprep.subr.bf16.mxu0 %v5071
    %6207 = vmatpush1.bf16.msra.mxu0 %v5070
    %6208 = vmatprep.subr.bf16.mxu0 %v5075
    %6209 = vmatpush1.bf16.msra.mxu0 %v5074
    %6210 = vmatprep.subr.bf16.mxu0 %v5079
    %6211 = vmatpush1.bf16.msra.mxu0 %v5078
    %6212 = vmatprep.subr.bf16.mxu0 %v5083
    %6213 = vmatpush1.bf16.msra.mxu0 %v5082
    %6214 = vmatprep.subr.bf16.mxu0 %v5087
    %6215 = vmatpush1.bf16.msra.mxu0 %v5086
    %6216 = vmatprep.subr.bf16.mxu0 %v5091
    %6217 = vmatpush1.bf16.msra.mxu0 %v5090
    %6218 = vmatprep.subr.bf16.mxu0 %v5095
    %6219 = vmatpush1.bf16.msra.mxu0 %v5094
    %6220 = vmatprep.subr.bf16.mxu0 0
    %6221 = vmatpush1.bf16.msra.mxu0 0
    %6222 = vmatprep.subr.bf16.mxu0 0
    %6223 = vmatpush1.bf16.msra.mxu0 0
    %6224 = vmatprep.subr.bf16.mxu0 0
    %6225 = vmatpush1.bf16.msra.mxu0 0
    %6226 = vmatprep.subr.bf16.mxu0 0
    %6227 = vmatpush1.bf16.msra.mxu0 0
    %6228 = vmatprep.subr.bf16.mxu0 0
    %6229 = vmatpush1.bf16.msra.mxu0 0
    %6230 = vmatprep.subr.bf16.mxu0 0
    %6231 = vmatpush1.bf16.msra.mxu0 0
    %6232 = vmatprep.subr.bf16.mxu0 0
    %6233 = vmatpush1.bf16.msra.mxu0 0
    %6234 = vmatprep.subr.bf16.mxu0 0
    %6235 = vmatpush1.bf16.msra.mxu0 0
    %6236 = vmatprep.mubr.bf16.mxu0 0
    %6237 = vmatmul.mubr.bf16.gmra.mrb[0].mxu0 %v6162
    %v6238 = vpop.f32.mrb[0].mxu0
    %v6239 = vadd.f32 0.0, %v6238
    %v6240 = vpop.f32.mrb[0].mxu0
    %v6241 = vadd.f32 0.0, %v6240
    %v6242 = vpop.f32.mrb[0].mxu0
    %v6243 = vpop.f32.mrb[0].mxu0
    %6244 = vdwg.mxu0
    %v6245 = vld [vmem:[%s3605] sm:$0xff]
    %v6246 = vld [vmem:[%s3605 + $0x8] sm:$0xff]
    %v6247 = vld [vmem:[%s3605 + $0x10] sm:$0xff]
    %v6248 = vld [vmem:[%s3605 + $0x18] sm:$0xff]
    %v6249 = vadd.f32 %v6245, %v6198
    %v6250 = vadd.f32 %v6246, %v6200
    %v6251 = vadd.f32 %v6247, %v6239
    %v6252 = vadd.f32 %v6248, %v6241
    %v6253 = vxor.u32 %v6249, 2147483648
    %v6254 = vmul.f32 %v6253, 1.442695
    %v6255 = vpow.pop %v6254
    %v6256 = vadd.f32 %v6255, 1.0
    %v6257 = vrcp.pop %v6256
    %v6258 = vmul.f32 1.0, %v6257
    %v6259 = vxor.u32 %v6250, 2147483648
    %v6260 = vmul.f32 %v6259, 1.442695
    %v6261 = vpow.pop %v6260
    %v6262 = vadd.f32 %v6261, 1.0
    %v6263 = vrcp.pop %v6262
    %v6264 = vmul.f32 1.0, %v6263
    %v6265 = vtanh.pop %v6251
    %v6266 = vxor.u32 %v6252, 2147483648
    %v6267 = vmul.f32 %v6266, 1.442695
    %v6268 = vpow.pop %v6267
    %v6269 = vadd.f32 %v6268, 1.0
    %v6270 = vrcp.pop %v6269
    %v6271 = vmul.f32 1.0, %v6270
    %v6272 = vmul.f32 %v6264, %v6159
    %v6273 = vmul.f32 %v6258, %v6265
    %v6274 = vadd.f32 %v6272, %v6273
    %v6275 = vtanh.pop %v6274
    %v6276 = vmul.f32 %v6271, %v6275
    %v6277 = vpack.c.bf16 %v6276, %v6276
    %6278 = vmatprep.subr.bf16.mxu0 %v5065
    %6279 = vmatpush1.bf16.msra.mxu0 %v5064
    %6280 = vmatprep.subr.bf16.mxu0 %v5069
    %6281 = vmatpush1.bf16.msra.mxu0 %v5068
    %6282 = vmatprep.subr.bf16.mxu0 %v5073
    %6283 = vmatpush1.bf16.msra.mxu0 %v5072
    %6284 = vmatprep.subr.bf16.mxu0 %v5077
    %6285 = vmatpush1.bf16.msra.mxu0 %v5076
    %6286 = vmatprep.subr.bf16.mxu0 %v5081
    %6287 = vmatpush1.bf16.msra.mxu0 %v5080
    %6288 = vmatprep.subr.bf16.mxu0 %v5085
    %6289 = vmatpush1.bf16.msra.mxu0 %v5084
    %6290 = vmatprep.subr.bf16.mxu0 %v5089
    %6291 = vmatpush1.bf16.msra.mxu0 %v5088
    %6292 = vmatprep.subr.bf16.mxu0 %v5093
    %6293 = vmatpush1.bf16.msra.mxu0 %v5092
    %6294 = vmatprep.subr.bf16.mxu0 0
    %6295 = vmatpush1.bf16.msra.mxu0 0
    %6296 = vmatprep.subr.bf16.mxu0 0
    %6297 = vmatpush1.bf16.msra.mxu0 0
    %6298 = vmatprep.subr.bf16.mxu0 0
    %6299 = vmatpush1.bf16.msra.mxu0 0
    %6300 = vmatprep.subr.bf16.mxu0 0
    %6301 = vmatpush1.bf16.msra.mxu0 0
    %6302 = vmatprep.subr.bf16.mxu0 0
    %6303 = vmatpush1.bf16.msra.mxu0 0
    %6304 = vmatprep.subr.bf16.mxu0 0
    %6305 = vmatpush1.bf16.msra.mxu0 0
    %6306 = vmatprep.subr.bf16.mxu0 0
    %6307 = vmatpush1.bf16.msra.mxu0 0
    %6308 = vmatprep.subr.bf16.mxu0 0
    %6309 = vmatpush1.bf16.msra.mxu0 0
    %6310 = vmatprep.mubr.bf16.mxu0 0
    %6311 = vmatmul.mubr.bf16.gmra.mrb[0].mxu0 %v6277
    %v6312 = vpop.f32.mrb[0].mxu0
    %v6313 = vadd.f32 0.0, %v6312
    %v6314 = vpop.f32.mrb[0].mxu0
    %v6315 = vadd.f32 0.0, %v6314
    %v6316 = vpop.f32.mrb[0].mxu0
    %v6317 = vpop.f32.mrb[0].mxu0
    %6318 = vdwg.mxu0
    %6319 = vmatprep.subr.bf16.mxu0 %v5067
    %6320 = vmatpush1.bf16.msra.mxu0 %v5066
    %6321 = vmatprep.subr.bf16.mxu0 %v5071
    %6322 = vmatpush1.bf16.msra.mxu0 %v5070
    %6323 = vmatprep.subr.bf16.mxu0 %v5075
    %6324 = vmatpush1.bf16.msra.mxu0 %v5074
    %6325 = vmatprep.subr.bf16.mxu0 %v5079
    %6326 = vmatpush1.bf16.msra.mxu0 %v5078
    %6327 = vmatprep.subr.bf16.mxu0 %v5083
    %6328 = vmatpush1.bf16.msra.mxu0 %v5082
    %6329 = vmatprep.subr.bf16.mxu0 %v5087
    %6330 = vmatpush1.bf16.msra.mxu0 %v5086
    %6331 = vmatprep.subr.bf16.mxu0 %v5091
    %6332 = vmatpush1.bf16.msra.mxu0 %v5090
    %6333 = vmatprep.subr.bf16.mxu0 %v5095
    %6334 = vmatpush1.bf16.msra.mxu0 %v5094
    %6335 = vmatprep.subr.bf16.mxu0 0
    %6336 = vmatpush1.bf16.msra.mxu0 0
    %6337 = vmatprep.subr.bf16.mxu0 0
    %6338 = vmatpush1.bf16.msra.mxu0 0
    %6339 = vmatprep.subr.bf16.mxu0 0
    %6340 = vmatpush1.bf16.msra.mxu0 0
    %6341 = vmatprep.subr.bf16.mxu0 0
    %6342 = vmatpush1.bf16.msra.mxu0 0
    %6343 = vmatprep.subr.bf16.mxu0 0
    %6344 = vmatpush1.bf16.msra.mxu0 0
    %6345 = vmatprep.subr.bf16.mxu0 0
    %6346 = vmatpush1.bf16.msra.mxu0 0
    %6347 = vmatprep.subr.bf16.mxu0 0
    %6348 = vmatpush1.bf16.msra.mxu0 0
    %6349 = vmatprep.subr.bf16.mxu0 0
    %6350 = vmatpush1.bf16.msra.mxu0 0
    %6351 = vmatprep.mubr.bf16.mxu0 0
    %6352 = vmatmul.mubr.bf16.gmra.mrb[0].mxu0 %v6277
    %v6353 = vpop.f32.mrb[0].mxu0
    %v6354 = vadd.f32 0.0, %v6353
    %v6355 = vpop.f32.mrb[0].mxu0
    %v6356 = vadd.f32 0.0, %v6355
    %v6357 = vpop.f32.mrb[0].mxu0
    %v6358 = vpop.f32.mrb[0].mxu0
    %6359 = vdwg.mxu0
    %v6360 = vld [vmem:[%s3915] sm:$0xff]
    %v6361 = vld [vmem:[%s3915 + $0x8] sm:$0xff]
    %v6362 = vld [vmem:[%s3915 + $0x10] sm:$0xff]
    %v6363 = vld [vmem:[%s3915 + $0x18] sm:$0xff]
    %v6364 = vadd.f32 %v6360, %v6313
    %v6365 = vadd.f32 %v6361, %v6315
    %v6366 = vadd.f32 %v6362, %v6354
    %v6367 = vadd.f32 %v6363, %v6356
    %v6368 = vxor.u32 %v6364, 2147483648
    %v6369 = vmul.f32 %v6368, 1.442695
    %v6370 = vpow.pop %v6369
    %v6371 = vadd.f32 %v6370, 1.0
    %v6372 = vrcp.pop %v6371
    %v6373 = vmul.f32 1.0, %v6372
    %v6374 = vxor.u32 %v6365, 2147483648
    %v6375 = vmul.f32 %v6374, 1.442695
    %v6376 = vpow.pop %v6375
    %v6377 = vadd.f32 %v6376, 1.0
    %v6378 = vrcp.pop %v6377
    %v6379 = vmul.f32 1.0, %v6378
    %v6380 = vtanh.pop %v6366
    %v6381 = vxor.u32 %v6367, 2147483648
    %v6382 = vmul.f32 %v6381, 1.442695
    %v6383 = vpow.pop %v6382
    %v6384 = vadd.f32 %v6383, 1.0
    %v6385 = vrcp.pop %v6384
    %v6386 = vmul.f32 1.0, %v6385
    %v6387 = vmul.f32 %v6379, %v6274
    %v6388 = vmul.f32 %v6373, %v6380
    %v6389 = vadd.f32 %v6387, %v6388
    %v6390 = vtanh.pop %v6389
    %v6391 = vmul.f32 %v6386, %v6390
    %v6392 = vpack.c.bf16 %v6391, %v6391
    %6393 = vmatprep.subr.bf16.mxu0 %v5065
    %6394 = vmatpush1.bf16.msra.mxu0 %v5064
    %6395 = vmatprep.subr.bf16.mxu0 %v5069
    %6396 = vmatpush1.bf16.msra.mxu0 %v5068
    %6397 = vmatprep.subr.bf16.mxu0 %v5073
    %6398 = vmatpush1.bf16.msra.mxu0 %v5072
    %6399 = vmatprep.subr.bf16.mxu0 %v5077
    %6400 = vmatpush1.bf16.msra.mxu0 %v5076
    %6401 = vmatprep.subr.bf16.mxu0 %v5081
    %6402 = vmatpush1.bf16.msra.mxu0 %v5080
    %6403 = vmatprep.subr.bf16.mxu0 %v5085
    %6404 = vmatpush1.bf16.msra.mxu0 %v5084
    %6405 = vmatprep.subr.bf16.mxu0 %v5089
    %6406 = vmatpush1.bf16.msra.mxu0 %v5088
    %6407 = vmatprep.subr.bf16.mxu0 %v5093
    %6408 = vmatpush1.bf16.msra.mxu0 %v5092
    %6409 = vmatprep.subr.bf16.mxu0 0
    %6410 = vmatpush1.bf16.msra.mxu0 0
    %6411 = vmatprep.subr.bf16.mxu0 0
    %6412 = vmatpush1.bf16.msra.mxu0 0
    %6413 = vmatprep.subr.bf16.mxu0 0
    %6414 = vmatpush1.bf16.msra.mxu0 0
    %6415 = vmatprep.subr.bf16.mxu0 0
    %6416 = vmatpush1.bf16.msra.mxu0 0
    %6417 = vmatprep.subr.bf16.mxu0 0
    %6418 = vmatpush1.bf16.msra.mxu0 0
    %6419 = vmatprep.subr.bf16.mxu0 0
    %6420 = vmatpush1.bf16.msra.mxu0 0
    %6421 = vmatprep.subr.bf16.mxu0 0
    %6422 = vmatpush1.bf16.msra.mxu0 0
    %6423 = vmatprep.subr.bf16.mxu0 0
    %6424 = vmatpush1.bf16.msra.mxu0 0
    %6425 = vmatprep.mubr.bf16.mxu0 0
    %6426 = vmatmul.mubr.bf16.gmra.mrb[0].mxu0 %v6392
    %v6427 = vpop.f32.mrb[0].mxu0
    %v6428 = vadd.f32 0.0, %v6427
    %v6429 = vpop.f32.mrb[0].mxu0
    %v6430 = vadd.f32 0.0, %v6429
    %v6431 = vpop.f32.mrb[0].mxu0
    %v6432 = vpop.f32.mrb[0].mxu0
    %6433 = vdwg.mxu0
    %6434 = vmatprep.subr.bf16.mxu0 %v5067
    %6435 = vmatpush1.bf16.msra.mxu0 %v5066
    %6436 = vmatprep.subr.bf16.mxu0 %v5071
    %6437 = vmatpush1.bf16.msra.mxu0 %v5070
    %6438 = vmatprep.subr.bf16.mxu0 %v5075
    %6439 = vmatpush1.bf16.msra.mxu0 %v5074
    %6440 = vmatprep.subr.bf16.mxu0 %v5079
    %6441 = vmatpush1.bf16.msra.mxu0 %v5078
    %6442 = vmatprep.subr.bf16.mxu0 %v5083
    %6443 = vmatpush1.bf16.msra.mxu0 %v5082
    %6444 = vmatprep.subr.bf16.mxu0 %v5087
    %6445 = vmatpush1.bf16.msra.mxu0 %v5086
    %6446 = vmatprep.subr.bf16.mxu0 %v5091
    %6447 = vmatpush1.bf16.msra.mxu0 %v5090
    %6448 = vmatprep.subr.bf16.mxu0 %v5095
    %6449 = vmatpush1.bf16.msra.mxu0 %v5094
    %6450 = vmatprep.subr.bf16.mxu0 0
    %6451 = vmatpush1.bf16.msra.mxu0 0
    %6452 = vmatprep.subr.bf16.mxu0 0
    %6453 = vmatpush1.bf16.msra.mxu0 0
    %6454 = vmatprep.subr.bf16.mxu0 0
    %6455 = vmatpush1.bf16.msra.mxu0 0
    %6456 = vmatprep.subr.bf16.mxu0 0
    %6457 = vmatpush1.bf16.msra.mxu0 0
    %6458 = vmatprep.subr.bf16.mxu0 0
    %6459 = vmatpush1.bf16.msra.mxu0 0
    %6460 = vmatprep.subr.bf16.mxu0 0
    %6461 = vmatpush1.bf16.msra.mxu0 0
    %6462 = vmatprep.subr.bf16.mxu0 0
    %6463 = vmatpush1.bf16.msra.mxu0 0
    %6464 = vmatprep.subr.bf16.mxu0 0
    %6465 = vmatpush1.bf16.msra.mxu0 0
    %6466 = vmatprep.mubr.bf16.mxu0 0
    %6467 = vmatmul.mubr.bf16.gmra.mrb[0].mxu0 %v6392
    %v6468 = vpop.f32.mrb[0].mxu0
    %v6469 = vadd.f32 0.0, %v6468
    %v6470 = vpop.f32.mrb[0].mxu0
    %v6471 = vadd.f32 0.0, %v6470
    %v6472 = vpop.f32.mrb[0].mxu0
    %v6473 = vpop.f32.mrb[0].mxu0
    %6474 = vdwg.mxu0
    %v6475 = vld [vmem:[%s4225] sm:$0xff]
    %v6476 = vld [vmem:[%s4225 + $0x8] sm:$0xff]
    %v6477 = vld [vmem:[%s4225 + $0x10] sm:$0xff]
    %v6478 = vld [vmem:[%s4225 + $0x18] sm:$0xff]
    %v6479 = vadd.f32 %v6475, %v6428
    %v6480 = vadd.f32 %v6476, %v6430
    %v6481 = vadd.f32 %v6477, %v6469
    %v6482 = vadd.f32 %v6478, %v6471
    %v6483 = vxor.u32 %v6479, 2147483648
    %v6484 = vmul.f32 %v6483, 1.442695
    %v6485 = vpow.pop %v6484
    %v6486 = vadd.f32 %v6485, 1.0
    %v6487 = vrcp.pop %v6486
    %v6488 = vmul.f32 1.0, %v6487
    %v6489 = vxor.u32 %v6480, 2147483648
    %v6490 = vmul.f32 %v6489, 1.442695
    %v6491 = vpow.pop %v6490
    %v6492 = vadd.f32 %v6491, 1.0
    %v6493 = vrcp.pop %v6492
    %v6494 = vmul.f32 1.0, %v6493
    %v6495 = vtanh.pop %v6481
    %v6496 = vxor.u32 %v6482, 2147483648
    %v6497 = vmul.f32 %v6496, 1.442695
    %v6498 = vpow.pop %v6497
    %v6499 = vadd.f32 %v6498, 1.0
    %v6500 = vrcp.pop %v6499
    %v6501 = vmul.f32 1.0, %v6500
    %v6502 = vmul.f32 %v6494, %v6389
    %v6503 = vmul.f32 %v6488, %v6495
    %v6504 = vadd.f32 %v6502, %v6503
    %v6505 = vtanh.pop %v6504
    %v6506 = vmul.f32 %v6501, %v6505
    %v6507 = vpack.c.bf16 %v6506, %v6506
    %v6508 = vld [vmem:[%s9] sm:$0xf]
    %v6509 = vld [vmem:[%s9 + $0x4] sm:$0xf]
    %v6510 = vld [vmem:[%s9 + $0x8] sm:$0xf]
    %v6511 = vld [vmem:[%s9 + $0xc] sm:$0xf]
    %v6512 = vld [vmem:[%s9 + $0x10] sm:$0xf]
    %v6513 = vld [vmem:[%s9 + $0x14] sm:$0xf]
    %v6514 = vld [vmem:[%s9 + $0x18] sm:$0xf]
    %v6515 = vld [vmem:[%s9 + $0x1c] sm:$0xf]
    %v6516 = vld [vmem:[%s9 + $0x20] sm:$0xf]
    %v6517 = vld [vmem:[%s9 + $0x24] sm:$0xf]
    %v6518 = vld [vmem:[%s9 + $0x28] sm:$0xf]
    %v6519 = vld [vmem:[%s9 + $0x2c] sm:$0xf]
    %v6520 = vld [vmem:[%s9 + $0x30] sm:$0xf]
    %v6521 = vld [vmem:[%s9 + $0x34] sm:$0xf]
    %v6522 = vld [vmem:[%s9 + $0x38] sm:$0xf]
    %v6523 = vld [vmem:[%s9 + $0x3c] sm:$0xf]
    %v6524 = vld [vmem:[%s9 + $0x40] sm:$0xf]
    %v6525 = vld [vmem:[%s9 + $0x44] sm:$0xf]
    %v6526 = vld [vmem:[%s9 + $0x48] sm:$0xf]
    %v6527 = vld [vmem:[%s9 + $0x4c] sm:$0xf]
    %v6528 = vld [vmem:[%s9 + $0x50] sm:$0xf]
    %v6529 = vld [vmem:[%s9 + $0x54] sm:$0xf]
    %v6530 = vld [vmem:[%s9 + $0x58] sm:$0xf]
    %v6531 = vld [vmem:[%s9 + $0x5c] sm:$0xf]
    %v6532 = vld [vmem:[%s9 + $0x60] sm:$0xf]
    %v6533 = vld [vmem:[%s9 + $0x64] sm:$0xf]
    %v6534 = vld [vmem:[%s9 + $0x68] sm:$0xf]
    %v6535 = vld [vmem:[%s9 + $0x6c] sm:$0xf]
    %v6536 = vld [vmem:[%s9 + $0x70] sm:$0xf]
    %v6537 = vld [vmem:[%s9 + $0x74] sm:$0xf]
    %v6538 = vld [vmem:[%s9 + $0x78] sm:$0xf]
    %v6539 = vld [vmem:[%s9 + $0x7c] sm:$0xf]
    %v6540 = vld [vmem:[%s10] sm:$0x1]
    %v6542 = vlaneseq
    %v6543 = vshrl.u32 %v6542, 7
    %v6544 = vsub.s32 0, %v6543
    %v6545 = vrot.slane %v6540, %v6544
    %v6579 = vunpack.c.l.b16 %v6508
    %v6580 = vunpack.c.l.b16 %v6509
    %v6581 = vunpack.c.l.b16 %v6510
    %v6582 = vunpack.c.l.b16 %v6511
    %v6583 = vunpack.c.l.b16 %v6512
    %v6584 = vunpack.c.l.b16 %v6513
    %v6585 = vunpack.c.l.b16 %v6514
    %v6586 = vunpack.c.l.b16 %v6515
    %v6587 = vunpack.c.l.b16 %v6516
    %v6588 = vunpack.c.l.b16 %v6517
    %v6589 = vunpack.c.l.b16 %v6518
    %v6590 = vunpack.c.l.b16 %v6519
    %v6591 = vunpack.c.l.b16 %v6520
    %v6592 = vunpack.c.l.b16 %v6521
    %v6593 = vunpack.c.l.b16 %v6522
    %v6594 = vunpack.c.l.b16 %v6523
    %v6595 = vunpack.c.l.b16 %v6524
    %v6596 = vunpack.c.l.b16 %v6525
    %v6597 = vunpack.c.l.b16 %v6526
    %v6598 = vunpack.c.l.b16 %v6527
    %v6599 = vunpack.c.l.b16 %v6528
    %v6600 = vunpack.c.l.b16 %v6529
    %v6601 = vunpack.c.l.b16 %v6530
    %v6602 = vunpack.c.l.b16 %v6531
    %v6603 = vunpack.c.l.b16 %v6532
    %v6604 = vunpack.c.l.b16 %v6533
    %v6605 = vunpack.c.l.b16 %v6534
    %v6606 = vunpack.c.l.b16 %v6535
    %v6607 = vunpack.c.l.b16 %v6536
    %v6608 = vunpack.c.l.b16 %v6537
    %v6609 = vunpack.c.l.b16 %v6538
    %v6610 = vunpack.c.l.b16 %v6539
    %v6611 = vpack.c.b16 %v6580, %v6579
    %v6612 = vpack.c.b16 %v6582, %v6581
    %v6613 = vpack.c.b16 %v6584, %v6583
    %v6614 = vpack.c.b16 %v6586, %v6585
    %v6615 = vpack.c.b16 %v6588, %v6587
    %v6616 = vpack.c.b16 %v6590, %v6589
    %v6617 = vpack.c.b16 %v6592, %v6591
    %v6618 = vpack.c.b16 %v6594, %v6593
    %v6619 = vpack.c.b16 %v6596, %v6595
    %v6620 = vpack.c.b16 %v6598, %v6597
    %v6621 = vpack.c.b16 %v6600, %v6599
    %v6622 = vpack.c.b16 %v6602, %v6601
    %v6623 = vpack.c.b16 %v6604, %v6603
    %v6624 = vpack.c.b16 %v6606, %v6605
    %v6625 = vpack.c.b16 %v6608, %v6607
    %v6626 = vpack.c.b16 %v6610, %v6609
    %6643 = vmatprep.subr.bf16.mxu0 0
    %6644 = vmatpush1.bf16.msra.mxu0 %v6611
    %6645 = vmatprep.subr.bf16.mxu0 0
    %6646 = vmatpush1.bf16.msra.mxu0 %v6612
    %6647 = vmatprep.subr.bf16.mxu0 0
    %6648 = vmatpush1.bf16.msra.mxu0 %v6613
    %6649 = vmatprep.subr.bf16.mxu0 0
    %6650 = vmatpush1.bf16.msra.mxu0 %v6614
    %6651 = vmatprep.subr.bf16.mxu0 0
    %6652 = vmatpush1.bf16.msra.mxu0 %v6615
    %6653 = vmatprep.subr.bf16.mxu0 0
    %6654 = vmatpush1.bf16.msra.mxu0 %v6616
    %6655 = vmatprep.subr.bf16.mxu0 0
    %6656 = vmatpush1.bf16.msra.mxu0 %v6617
    %6657 = vmatprep.subr.bf16.mxu0 0
    %6658 = vmatpush1.bf16.msra.mxu0 %v6618
    %6659 = vmatprep.subr.bf16.mxu0 0
    %6660 = vmatpush1.bf16.msra.mxu0 %v6619
    %6661 = vmatprep.subr.bf16.mxu0 0
    %6662 = vmatpush1.bf16.msra.mxu0 %v6620
    %6663 = vmatprep.subr.bf16.mxu0 0
    %6664 = vmatpush1.bf16.msra.mxu0 %v6621
    %6665 = vmatprep.subr.bf16.mxu0 0
    %6666 = vmatpush1.bf16.msra.mxu0 %v6622
    %6667 = vmatprep.subr.bf16.mxu0 0
    %6668 = vmatpush1.bf16.msra.mxu0 %v6623
    %6669 = vmatprep.subr.bf16.mxu0 0
    %6670 = vmatpush1.bf16.msra.mxu0 %v6624
    %6671 = vmatprep.subr.bf16.mxu0 0
    %6672 = vmatpush1.bf16.msra.mxu0 %v6625
    %6673 = vmatprep.subr.bf16.mxu0 0
    %6674 = vmatpush1.bf16.msra.mxu0 %v6626
    %6675 = vmatprep.mubr.bf16.mxu0 %v5242
    %6676 = vmatmul.mubr.bf16.gmra.mrb[0].mxu0 %v6507
    %v6677 = vpop.f32.mrb[0].mxu0
    %v6678 = vadd.f32 %v6545, %v6677
    %v6679 = vpop.f32.mrb[0].mxu0
    %v6680 = vpop.f32.mrb[0].mxu0
    %v6681 = vpop.f32.mrb[0].mxu0
    %6682 = vdwg.mxu0
    %6683 = vst [vmem:[#allocation10] sm:$0xff] %v6678
    // Predicated region
    $region58: #{tpu_custom_call.1} parent=1 // pred_check
      _
    $region59: #{tpu_custom_call.1} parent=1 // pred_check_branch
      %6685 = sbr.rel (0) target = $region61
    $region60: #{tpu_custom_call.1} parent=1 // pred_region
      %s6687 = ssub.s32 128, 128
      %6688 = vsyncadd [#allocation6], %s6687
      %s6690 = sshll.u32 [#allocation10], 4
      %s6691 = int_to_ptr.vmem [resolvable:$true] %s6690
      %6693 = dma.vmem_to_hbm [thread:$0]  %s6691, 128, %s11, [#allocation6]
    $region61: #{tpu_custom_call.1} parent=1 // pred_fallthru
      _
    // Predicated region
    $region62: #{tpu_custom_call.1} parent=1 // pred_check
      _
    $region63: #{tpu_custom_call.1} parent=1 // pred_check_branch
      %6695 = sbr.rel (0) target = $region65
    $region64: #{tpu_custom_call.1} parent=1 // pred_region
      %6696 = dma.done [#allocation6], 128
    $region65: #{tpu_custom_call.1} parent=1 // pred_fallthru
      _
    %6697 = vsyncpa [#allocation5], 1
    %6698 = vsyncpa [#allocation8], 1
    %6699 = vsyncpa [#allocation6], 1

</llo_original>
